<compile_context>
chip_gen: v5e
topology: v5e:2x2
jax: 0.10.0
libtpu: 0.0.40
codegen_flags: <defaults>
</compile_context>

<pallas_src>
import functools

import jax
import jax.numpy as jnp
from jax.experimental import pallas as pl
from jax.experimental.pallas import tpu as pltpu

CHANNELS = 3
# Original net is 340x240 (680/scale x 480/scale, scale=2).  We use a small
# spatial size the encoder/decoder round-trips exactly, like the original:
# 52 -> 22 -> 11 -> 9 -> 4 -> 10 -> 23 -> 52 ;  40 -> 16 -> 8 -> 6 -> 3 -> 7 -> 17 -> 40
IMG_H = 52
IMG_W = 40


def _round_up(x, m):
    return (x + m - 1) // m * m


def _cdiv(a, b):
    return -(-a // b)


def _detect_multi_tensorcore():
    """True on chips exposing 2 TensorCores to one pallas_call (v7x megacore)."""
    try:
        kind = jax.devices()[0].device_kind.lower()
    except Exception:
        return False
    return "v7" in kind


_MULTI_TC = _detect_multi_tensorcore()


# ----------------------------- Pallas kernels -----------------------------

def _matmul_single_k_kernel(a_ref, b_ref, bias_ref, o_ref, *, act):
    """K fits one tile (every layer here): no scratch, no predicated phases."""
    y = jnp.dot(a_ref[...], b_ref[...], preferred_element_type=jnp.float32)
    y = y + bias_ref[...]
    if act == "relu":
        y = jnp.maximum(y, 0.0)
    elif act == "tanh_post":
        # fused decoder epilogue: tanh -> 0.5*(x+1) -> clamp(0,1) -> *255
        y = jnp.clip(0.5 * (jnp.tanh(y) + 1.0), 0.0, 1.0) * 255.0
    o_ref[...] = y.astype(o_ref.dtype)


def _matmul_multi_k_kernel(a_ref, b_ref, bias_ref, o_ref, acc_ref, *, act):
    """Fallback when K needs several tiles (unused at these shapes)."""
    @pl.when(pl.program_id(2) == 0)
    def _():
        acc_ref[...] = jnp.zeros_like(acc_ref) + bias_ref[...]

    acc_ref[...] += jnp.dot(a_ref[...], b_ref[...],
                            preferred_element_type=jnp.float32)

    @pl.when(pl.program_id(2) == pl.num_programs(2) - 1)
    def _():
        y = acc_ref[...]
        if act == "relu":
            y = jnp.maximum(y, 0.0)
        elif act == "tanh_post":
            y = jnp.clip(0.5 * (jnp.tanh(y) + 1.0), 0.0, 1.0) * 255.0
        o_ref[...] = y.astype(o_ref.dtype)


def _pick_tm(M, multi_tc):
    if multi_tc and M >= 256:
        # >=2 balanced M tiles so both TensorCores get work via "parallel" i.
        nt = max(2, _cdiv(M, 512))
    else:
        # 1-TC chips (v5e/v6e): single M tile per layer (grid steps cost ~0.35us
        # each and buy nothing without a second core).
        nt = _cdiv(M, 1024)
    return _round_up(_cdiv(M, nt), 16)


def matmul_bias_act(a, b, bias, act="none", out_dtype=jnp.bfloat16):
    """(M,K) @ (K,N) + bias with fused activation.

    Operands cast to bf16 (AMP-style), f32 accumulation.  K fits a single tile
    for every layer of this net, so the no-scratch kernel is used; tiles are
    chosen per call and padding is skipped when shapes are already aligned.
    """
    M, K = a.shape
    _, N = b.shape

    tm = _pick_tm(M, _MULTI_TC)
    Mp = _round_up(M, tm)
    # tk capped so the worst-case double-buffered working set stays ~3 MiB,
    # comfortably under v5e's 16 MiB scoped-VMEM default.
    tk = min(_round_up(K, 128), 1024)
    Kp = _round_up(K, tk)
    tn = min(_round_up(N, 128), 512)
    Np = _round_up(N, tn)
    if _MULTI_TC and Mp // tm == 1 and Np >= 256:
        tn = 128  # split the j axis instead so v7x's second core isn't idle

    a_p = a.astype(jnp.bfloat16)
    if (Mp, Kp) != (M, K):
        a_p = jnp.pad(a_p, ((0, Mp - M), (0, Kp - K)))
    b_p = b.astype(jnp.bfloat16)
    if (Kp, Np) != (K, N):
        b_p = jnp.pad(b_p, ((0, Kp - K), (0, Np - N)))
    bias_p = bias.reshape(1, -1).astype(jnp.float32)
    if Np != N:
        bias_p = jnp.pad(bias_p, ((0, 0), (0, Np - N)))

    if Kp == tk:
        out = pl.pallas_call(
            functools.partial(_matmul_single_k_kernel, act=act),
            out_shape=jax.ShapeDtypeStruct((Mp, Np), out_dtype),
            grid_spec=pltpu.PrefetchScalarGridSpec(
                num_scalar_prefetch=0,
                grid=(Mp // tm, Np // tn),
                in_specs=[
                    pl.BlockSpec((tm, Kp), lambda i, j: (i, 0)),
                    pl.BlockSpec((Kp, tn), lambda i, j: (0, j)),
                    pl.BlockSpec((1, tn), lambda i, j: (0, j)),
                ],
                out_specs=pl.BlockSpec((tm, tn), lambda i, j: (i, j)),
            ),
            compiler_params=pltpu.CompilerParams(
                dimension_semantics=("parallel", "parallel")),
        )(a_p, b_p, bias_p)
    else:
        out = pl.pallas_call(
            functools.partial(_matmul_multi_k_kernel, act=act),
            out_shape=jax.ShapeDtypeStruct((Mp, Np), out_dtype),
            grid_spec=pltpu.PrefetchScalarGridSpec(
                num_scalar_prefetch=0,
                grid=(Mp // tm, Np // tn, Kp // tk),
                in_specs=[
                    pl.BlockSpec((tm, tk), lambda i, j, k: (i, k)),
                    pl.BlockSpec((tk, tn), lambda i, j, k: (k, j)),
                    pl.BlockSpec((1, tn), lambda i, j, k: (0, j)),
                ],
                out_specs=pl.BlockSpec((tm, tn), lambda i, j, k: (i, j)),
                scratch_shapes=[pltpu.VMEM((tm, tn), jnp.float32)],
            ),
            compiler_params=pltpu.CompilerParams(
                dimension_semantics=("parallel", "parallel", "arbitrary")),
        )(a_p, b_p, bias_p)

    if (Mp, Np) != (M, N):
        out = out[:M, :N]
    return out


# --------------------------------- glue ops ---------------------------------

def maxpool_2x2(x):
    """nn.MaxPool2d(2, stride=2), floor mode.  Pure XLA reshape+max: per review
    the standalone pallas_call on ~45 KB was pure launch overhead."""
    N, H, W, C = x.shape
    H2, W2 = H // 2, W // 2
    x = x[:, :2 * H2, :2 * W2, :].reshape(N, H2, 2, W2, 2, C)
    return jnp.max(x, axis=(2, 4))


def _im2col_nhwc(x, kh, kw, stride):
    N, H, W, C = x.shape
    oh = (H - kh) // stride + 1
    ow = (W - kw) // stride + 1
    cols = []
    for i in range(kh):
        for j in range(kw):
            cols.append(x[:, i:i + stride * (oh - 1) + 1:stride,
                          j:j + stride * (ow - 1) + 1:stride, :])
    p = jnp.stack(cols, axis=3)                    # (N, oh, ow, kh*kw, C)
    return p.reshape(N * oh * ow, kh * kw * C), oh, ow


def conv2d_nhwc(x, w, bias, stride, act, out_dtype=jnp.bfloat16):
    """x: (N,H,W,Cin), w: (Cout,Cin,kh,kw) -> (N,oh,ow,Cout)."""
    N = x.shape[0]
    Cout, Cin, kh, kw = w.shape
    p, oh, ow = _im2col_nhwc(x, kh, kw, stride)
    wm = w.transpose(2, 3, 1, 0).reshape(kh * kw * Cin, Cout)   # rows (ky,kx,Cin)
    out = matmul_bias_act(p, wm, bias, act=act, out_dtype=out_dtype)
    return out.reshape(N, oh, ow, Cout)


def conv_transpose2d_nhwc(x, w_t, bias, stride, act, out_dtype=jnp.bfloat16):
    """x: (N,H,W,Cin), w_t: (Cin,Cout,kh,kw) (torch ConvTranspose2d layout).

    All stride*stride output phases share ONE im2col matrix: each phase's
    sub-kernel (taps ky%s==py, kx%s==px) is zero-padded at the high end to the
    per-layer max (mky,mkx), flipped into standard-conv orientation, and the
    phases are concatenated along the output-channel axis (bias replicated per
    phase block).  Phase outputs are interleaved with a single reshape/transpose
    and cropped to (OH, OW); the crop removes exactly the rows/cols a phase
    doesn't own, so no masking is needed.
    """
    Cin, Cout, kh, kw = w_t.shape
    N, H, W, _ = x.shape
    s = stride
    OH, OW = (H - 1) * s + kh, (W - 1) * s + kw
    mky = max(len(range(py, kh, s)) for py in range(s))
    mkx = max(len(range(px, kw, s)) for px in range(s))

    cols = []
    for py in range(s):
        for px in range(s):
            ws = w_t[:, :, py::s, px::s]                    # (Cin, Cout, my, mx)
            my, mx = ws.shape[2], ws.shape[3]
            ws = jnp.pad(ws, ((0, 0), (0, 0), (0, mky - my), (0, mkx - mx)))
            ws = jnp.flip(ws, axis=(2, 3))                  # conv orientation
            cols.append(ws.transpose(2, 3, 0, 1).reshape(mky * mkx * Cin, Cout))
    w_all = jnp.concatenate(cols, axis=1)                   # (K, s*s*Cout)
    bias_all = jnp.tile(bias, s * s)

    xp = jnp.pad(x, ((0, 0), (mky - 1, mky - 1), (mkx - 1, mkx - 1), (0, 0)))
    p, qy, qx = _im2col_nhwc(xp, mky, mkx, 1)               # qy=H+mky-1, qx=W+mkx-1
    out = matmul_bias_act(p, w_all, bias_all, act=act, out_dtype=out_dtype)

    # (n, qy, qx, py, px, c) -> (n, qy, py, qx, px, c) -> rows oy = qy*s+py.
    out = out.reshape(N, qy, qx, s, s, Cout)
    out = out.transpose(0, 1, 3, 2, 4, 5).reshape(N, qy * s, qx * s, Cout)
    return out[:, :OH, :OW, :]


# ---------------------------- parameters & forward ----------------------------

def init_params(key):
    def conv_p(k, cout, cin, kh, kw):
        k1, k2 = jax.random.split(k)
        w = jax.random.normal(k1, (cout, cin, kh, kw), jnp.float32) * 0.05
        b = jax.random.normal(k2, (cout,), jnp.float32) * 0.05
        return w, b

    def tconv_p(k, cin, cout, kh, kw):
        k1, k2 = jax.random.split(k)
        w = jax.random.normal(k1, (cin, cout, kh, kw), jnp.float32) * 0.05
        b = jax.random.normal(k2, (cout,), jnp.float32) * 0.05
        return w, b

    ks = jax.random.split(key, 5)
    return {
        "conv1": conv_p(ks[0], 64, 3, 9, 9),          # Conv2d(3, 64, 9, stride=2)
        "conv2": conv_p(ks[1], 32, 64, 3, 3),         # Conv2d(64, 32, 3, stride=1)
        "tconv1": tconv_p(ks[2], 32, 32, 4, 3),       # ConvTranspose2d(32, 32, (4,3), stride=2)
        "tconv2": tconv_p(ks[3], 32, 64, 5, 5),       # ConvTranspose2d(32, 64, 5, stride=2)
        "tconv3": tconv_p(ks[4], 64, 3, 8, 8),        # ConvTranspose2d(64, 3, 8, stride=2)
        "mean": jnp.array([0.5, 0.5, 0.5], jnp.float32),
        "std": jnp.array([0.5, 0.5, 0.5], jnp.float32),
    }


def cnnae_forward(params, x):
    # NCHW (torch layout) -> NHWC once at the boundary; cast to bf16 once
    # (AMP-style) so every layer's im2col / pad runs at half width.
    x = x.transpose(0, 2, 3, 1).astype(jnp.bfloat16)

    # Fold (x - mean) / std into conv1 (per-channel affine absorbed by the conv).
    w1, b1 = params["conv1"]
    w1 = w1 / params["std"][None, :, None, None]
    b1 = b1 - jnp.einsum("oihw,i->o", w1, params["mean"])

    # encoder
    x = conv2d_nhwc(x, w1, b1, stride=2, act="relu")
    x = maxpool_2x2(x)
    x = conv2d_nhwc(x, *params["conv2"], stride=1, act="relu")
    x = maxpool_2x2(x)
    # decoder (last layer fuses tanh + 0.5*(x+1) + clamp(0,1) + *255, emits f32)
    x = conv_transpose2d_nhwc(x, *params["tconv1"], stride=2, act="relu")
    x = conv_transpose2d_nhwc(x, *params["tconv2"], stride=2, act="relu")
    x = conv_transpose2d_nhwc(x, *params["tconv3"], stride=2, act="tanh_post",
                              out_dtype=jnp.float32)

    # NHWC -> NCHW, then x_p.view(-1, channels, img_height, img_width)
    x = x.transpose(0, 3, 1, 2)
    return x.reshape(-1, CHANNELS, IMG_H, IMG_W)


if __name__ == "__main__":
    key = jax.random.PRNGKey(0)
    pkey, xkey = jax.random.split(key)
    params = init_params(pkey)
    x = jax.random.uniform(xkey, (2, CHANNELS, IMG_H, IMG_W),
                           dtype=jnp.float32, minval=0.0, maxval=1.0)

    fwd = jax.jit(cnnae_forward)
    out = fwd(params, x)
    jax.block_until_ready(out)
    assert out.shape == (2, CHANNELS, IMG_H, IMG_W), out.shape
    print("KERNEL_OK")
</pallas_src>

<mosaic_0001>
module attributes {stable_mosaic.version = 11 : i64} {
  func.func @_matmul_single_k_kernel(%arg0: i32, %arg1: i32, %arg2: memref<704x256xbf16, #tpu.memory_space<vmem>>, %arg3: memref<256x128xbf16, #tpu.memory_space<vmem>>, %arg4: memref<1x128xf32, #tpu.memory_space<vmem>>, %arg5: memref<704x128xbf16, #tpu.memory_space<vmem>>) attributes {dimension_semantics = [#tpu.dimension_semantics<parallel>, #tpu.dimension_semantics<parallel>], iteration_bounds = array<i64: 1, 1>, scalar_prefetch = 0 : i64, scratch_operands = 0 : i64, tpu.core_type = #tpu.core_type<tc>, window_params = [{transform_indices = @transform_0, window_bounds = array<i64: 704, 256>}, {transform_indices = @transform_1, window_bounds = array<i64: 256, 128>}, {transform_indices = @transform_2, window_bounds = array<i64: 1, 128>}, {transform_indices = @transform_3, window_bounds = array<i64: 704, 128>}]} {
    %c0 = arith.constant 0 : index
    %c0_0 = arith.constant 0 : index
    %0 = vector.load %arg2[%c0, %c0_0] : memref<704x256xbf16, #tpu.memory_space<vmem>>, vector<704x256xbf16>
    %c0_1 = arith.constant 0 : index
    %c0_2 = arith.constant 0 : index
    %1 = vector.load %arg3[%c0_1, %c0_2] : memref<256x128xbf16, #tpu.memory_space<vmem>>, vector<256x128xbf16>
    %cst = arith.constant dense<0.000000e+00> : vector<704x128xf32>
    %2 = tpu.matmul %0, %1, %cst {dimension_numbers = #tpu.dot_dimension_numbers<[1], [0], [0], [1], [0, 0, 1, 1], [], []>} : vector<704x256xbf16>, vector<256x128xbf16>, vector<704x128xf32> -> vector<704x128xf32>
    %c0_3 = arith.constant 0 : index
    %c0_4 = arith.constant 0 : index
    %3 = vector.load %arg4[%c0_3, %c0_4] : memref<1x128xf32, #tpu.memory_space<vmem>>, vector<1x128xf32>
    %4 = vector.broadcast %3 : vector<1x128xf32> to vector<704x128xf32>
    %5 = arith.addf %2, %4 : vector<704x128xf32>
    %cst_5 = arith.constant 0.000000e+00 : f32
    %6 = vector.broadcast %cst_5 : f32 to vector<704x128xf32>
    %7 = arith.maximumf %5, %6 : vector<704x128xf32>
    %8 = arith.truncf %7 : vector<704x128xf32> to vector<704x128xbf16>
    %c0_6 = arith.constant 0 : index
    %c0_7 = arith.constant 0 : index
    %9 = vector.load %arg5[%c0_6, %c0_7] : memref<704x128xbf16, #tpu.memory_space<vmem>>, vector<704x128xbf16>
    tpu.vector_store %arg5[%c0_6, %c0_7], %8 {strides = array<i32>} : memref<704x128xbf16, #tpu.memory_space<vmem>>, vector<704x128xbf16>,
    return
  }
  func.func @transform_0(%arg0: i32, %arg1: i32) -> (i32, i32) {
    %c0_i32 = arith.constant 0 : i32
    %c0_i32_0 = arith.constant 0 : i32
    return %arg0, %c0_i32 : i32, i32
  }
  func.func @transform_1(%arg0: i32, %arg1: i32) -> (i32, i32) {
    %c0_i32 = arith.constant 0 : i32
    %c0_i32_0 = arith.constant 0 : i32
    return %c0_i32, %arg1 : i32, i32
  }
  func.func @transform_2(%arg0: i32, %arg1: i32) -> (i32, i32) {
    %c0_i32 = arith.constant 0 : i32
    %c0_i32_0 = arith.constant 0 : i32
    return %c0_i32, %arg1 : i32, i32
  }
  func.func @transform_3(%arg0: i32, %arg1: i32) -> (i32, i32) {
    %c0_i32 = arith.constant 0 : i32
    return %arg0, %arg1 : i32, i32
  }
}

module attributes {stable_mosaic.version = 11 : i64} {
  func.func @_matmul_single_k_kernel(%arg0: i32, %arg1: i32, %arg2: memref<112x640xbf16, #tpu.memory_space<vmem>>, %arg3: memref<640x128xbf16, #tpu.memory_space<vmem>>, %arg4: memref<1x128xf32, #tpu.memory_space<vmem>>, %arg5: memref<112x128xbf16, #tpu.memory_space<vmem>>) attributes {dimension_semantics = [#tpu.dimension_semantics<parallel>, #tpu.dimension_semantics<parallel>], iteration_bounds = array<i64: 1, 1>, scalar_prefetch = 0 : i64, scratch_operands = 0 : i64, tpu.core_type = #tpu.core_type<tc>, window_params = [{transform_indices = @transform_0, window_bounds = array<i64: 112, 640>}, {transform_indices = @transform_1, window_bounds = array<i64: 640, 128>}, {transform_indices = @transform_2, window_bounds = array<i64: 1, 128>}, {transform_indices = @transform_3, window_bounds = array<i64: 112, 128>}]} {
    %c0 = arith.constant 0 : index
    %c0_0 = arith.constant 0 : index
    %0 = vector.load %arg2[%c0, %c0_0] : memref<112x640xbf16, #tpu.memory_space<vmem>>, vector<112x640xbf16>
    %c0_1 = arith.constant 0 : index
    %c0_2 = arith.constant 0 : index
    %1 = vector.load %arg3[%c0_1, %c0_2] : memref<640x128xbf16, #tpu.memory_space<vmem>>, vector<640x128xbf16>
    %cst = arith.constant dense<0.000000e+00> : vector<112x128xf32>
    %2 = tpu.matmul %0, %1, %cst {dimension_numbers = #tpu.dot_dimension_numbers<[1], [0], [0], [1], [0, 0, 1, 1], [], []>} : vector<112x640xbf16>, vector<640x128xbf16>, vector<112x128xf32> -> vector<112x128xf32>
    %c0_3 = arith.constant 0 : index
    %c0_4 = arith.constant 0 : index
    %3 = vector.load %arg4[%c0_3, %c0_4] : memref<1x128xf32, #tpu.memory_space<vmem>>, vector<1x128xf32>
    %4 = vector.broadcast %3 : vector<1x128xf32> to vector<112x128xf32>
    %5 = arith.addf %2, %4 : vector<112x128xf32>
    %cst_5 = arith.constant 0.000000e+00 : f32
    %6 = vector.broadcast %cst_5 : f32 to vector<112x128xf32>
    %7 = arith.maximumf %5, %6 : vector<112x128xf32>
    %8 = arith.truncf %7 : vector<112x128xf32> to vector<112x128xbf16>
    %c0_6 = arith.constant 0 : index
    %c0_7 = arith.constant 0 : index
    %9 = vector.load %arg5[%c0_6, %c0_7] : memref<112x128xbf16, #tpu.memory_space<vmem>>, vector<112x128xbf16>
    tpu.vector_store %arg5[%c0_6, %c0_7], %8 {strides = array<i32>} : memref<112x128xbf16, #tpu.memory_space<vmem>>, vector<112x128xbf16>,
    return
  }
  func.func @transform_0(%arg0: i32, %arg1: i32) -> (i32, i32) {
    %c0_i32 = arith.constant 0 : i32
    %c0_i32_0 = arith.constant 0 : i32
    return %arg0, %c0_i32 : i32, i32
  }
  func.func @transform_1(%arg0: i32, %arg1: i32) -> (i32, i32) {
    %c0_i32 = arith.constant 0 : i32
    %c0_i32_0 = arith.constant 0 : i32
    return %c0_i32, %arg1 : i32, i32
  }
  func.func @transform_2(%arg0: i32, %arg1: i32) -> (i32, i32) {
    %c0_i32 = arith.constant 0 : i32
    %c0_i32_0 = arith.constant 0 : i32
    return %c0_i32, %arg1 : i32, i32
  }
  func.func @transform_3(%arg0: i32, %arg1: i32) -> (i32, i32) {
    %c0_i32 = arith.constant 0 : i32
    return %arg0, %arg1 : i32, i32
  }
}

module attributes {stable_mosaic.version = 11 : i64} {
  func.func @_matmul_single_k_kernel(%arg0: i32, %arg1: i32, %arg2: memref<48x128xbf16, #tpu.memory_space<vmem>>, %arg3: memref<128x128xbf16, #tpu.memory_space<vmem>>, %arg4: memref<1x128xf32, #tpu.memory_space<vmem>>, %arg5: memref<48x128xbf16, #tpu.memory_space<vmem>>) attributes {dimension_semantics = [#tpu.dimension_semantics<parallel>, #tpu.dimension_semantics<parallel>], iteration_bounds = array<i64: 1, 1>, scalar_prefetch = 0 : i64, scratch_operands = 0 : i64, tpu.core_type = #tpu.core_type<tc>, window_params = [{transform_indices = @transform_0, window_bounds = array<i64: 48, 128>}, {transform_indices = @transform_1, window_bounds = array<i64: 128, 128>}, {transform_indices = @transform_2, window_bounds = array<i64: 1, 128>}, {transform_indices = @transform_3, window_bounds = array<i64: 48, 128>}]} {
    %c0 = arith.constant 0 : index
    %c0_0 = arith.constant 0 : index
    %0 = vector.load %arg2[%c0, %c0_0] : memref<48x128xbf16, #tpu.memory_space<vmem>>, vector<48x128xbf16>
    %c0_1 = arith.constant 0 : index
    %c0_2 = arith.constant 0 : index
    %1 = vector.load %arg3[%c0_1, %c0_2] : memref<128x128xbf16, #tpu.memory_space<vmem>>, vector<128x128xbf16>
    %cst = arith.constant dense<0.000000e+00> : vector<48x128xf32>
    %2 = tpu.matmul %0, %1, %cst {dimension_numbers = #tpu.dot_dimension_numbers<[1], [0], [0], [1], [0, 0, 1, 1], [], []>} : vector<48x128xbf16>, vector<128x128xbf16>, vector<48x128xf32> -> vector<48x128xf32>
    %c0_3 = arith.constant 0 : index
    %c0_4 = arith.constant 0 : index
    %3 = vector.load %arg4[%c0_3, %c0_4] : memref<1x128xf32, #tpu.memory_space<vmem>>, vector<1x128xf32>
    %4 = vector.broadcast %3 : vector<1x128xf32> to vector<48x128xf32>
    %5 = arith.addf %2, %4 : vector<48x128xf32>
    %cst_5 = arith.constant 0.000000e+00 : f32
    %6 = vector.broadcast %cst_5 : f32 to vector<48x128xf32>
    %7 = arith.maximumf %5, %6 : vector<48x128xf32>
    %8 = arith.truncf %7 : vector<48x128xf32> to vector<48x128xbf16>
    %c0_6 = arith.constant 0 : index
    %c0_7 = arith.constant 0 : index
    %9 = vector.load %arg5[%c0_6, %c0_7] : memref<48x128xbf16, #tpu.memory_space<vmem>>, vector<48x128xbf16>
    tpu.vector_store %arg5[%c0_6, %c0_7], %8 {strides = array<i32>} : memref<48x128xbf16, #tpu.memory_space<vmem>>, vector<48x128xbf16>,
    return
  }
  func.func @transform_0(%arg0: i32, %arg1: i32) -> (i32, i32) {
    %c0_i32 = arith.constant 0 : i32
    %c0_i32_0 = arith.constant 0 : i32
    return %arg0, %c0_i32 : i32, i32
  }
  func.func @transform_1(%arg0: i32, %arg1: i32) -> (i32, i32) {
    %c0_i32 = arith.constant 0 : i32
    %c0_i32_0 = arith.constant 0 : i32
    return %c0_i32, %arg1 : i32, i32
  }
  func.func @transform_2(%arg0: i32, %arg1: i32) -> (i32, i32) {
    %c0_i32 = arith.constant 0 : i32
    %c0_i32_0 = arith.constant 0 : i32
    return %c0_i32, %arg1 : i32, i32
  }
  func.func @transform_3(%arg0: i32, %arg1: i32) -> (i32, i32) {
    %c0_i32 = arith.constant 0 : i32
    return %arg0, %arg1 : i32, i32
  }
}

module attributes {stable_mosaic.version = 11 : i64} {
  func.func @_matmul_single_k_kernel(%arg0: i32, %arg1: i32, %arg2: memref<224x384xbf16, #tpu.memory_space<vmem>>, %arg3: memref<384x256xbf16, #tpu.memory_space<vmem>>, %arg4: memref<1x256xf32, #tpu.memory_space<vmem>>, %arg5: memref<224x256xbf16, #tpu.memory_space<vmem>>) attributes {dimension_semantics = [#tpu.dimension_semantics<parallel>, #tpu.dimension_semantics<parallel>], iteration_bounds = array<i64: 1, 1>, scalar_prefetch = 0 : i64, scratch_operands = 0 : i64, tpu.core_type = #tpu.core_type<tc>, window_params = [{transform_indices = @transform_0, window_bounds = array<i64: 224, 384>}, {transform_indices = @transform_1, window_bounds = array<i64: 384, 256>}, {transform_indices = @transform_2, window_bounds = array<i64: 1, 256>}, {transform_indices = @transform_3, window_bounds = array<i64: 224, 256>}]} {
    %c0 = arith.constant 0 : index
    %c0_0 = arith.constant 0 : index
    %0 = vector.load %arg2[%c0, %c0_0] : memref<224x384xbf16, #tpu.memory_space<vmem>>, vector<224x384xbf16>
    %c0_1 = arith.constant 0 : index
    %c0_2 = arith.constant 0 : index
    %1 = vector.load %arg3[%c0_1, %c0_2] : memref<384x256xbf16, #tpu.memory_space<vmem>>, vector<384x256xbf16>
    %cst = arith.constant dense<0.000000e+00> : vector<224x256xf32>
    %2 = tpu.matmul %0, %1, %cst {dimension_numbers = #tpu.dot_dimension_numbers<[1], [0], [0], [1], [0, 0, 1, 1], [], []>} : vector<224x384xbf16>, vector<384x256xbf16>, vector<224x256xf32> -> vector<224x256xf32>
    %c0_3 = arith.constant 0 : index
    %c0_4 = arith.constant 0 : index
    %3 = vector.load %arg4[%c0_3, %c0_4] : memref<1x256xf32, #tpu.memory_space<vmem>>, vector<1x256xf32>
    %4 = vector.broadcast %3 : vector<1x256xf32> to vector<224x256xf32>
    %5 = arith.addf %2, %4 : vector<224x256xf32>
    %cst_5 = arith.constant 0.000000e+00 : f32
    %6 = vector.broadcast %cst_5 : f32 to vector<224x256xf32>
    %7 = arith.maximumf %5, %6 : vector<224x256xf32>
    %8 = arith.truncf %7 : vector<224x256xf32> to vector<224x256xbf16>
    %c0_6 = arith.constant 0 : index
    %c0_7 = arith.constant 0 : index
    %9 = vector.load %arg5[%c0_6, %c0_7] : memref<224x256xbf16, #tpu.memory_space<vmem>>, vector<224x256xbf16>
    tpu.vector_store %arg5[%c0_6, %c0_7], %8 {strides = array<i32>} : memref<224x256xbf16, #tpu.memory_space<vmem>>, vector<224x256xbf16>,
    return
  }
  func.func @transform_0(%arg0: i32, %arg1: i32) -> (i32, i32) {
    %c0_i32 = arith.constant 0 : i32
    %c0_i32_0 = arith.constant 0 : i32
    return %arg0, %c0_i32 : i32, i32
  }
  func.func @transform_1(%arg0: i32, %arg1: i32) -> (i32, i32) {
    %c0_i32 = arith.constant 0 : i32
    %c0_i32_0 = arith.constant 0 : i32
    return %c0_i32, %arg1 : i32, i32
  }
  func.func @transform_2(%arg0: i32, %arg1: i32) -> (i32, i32) {
    %c0_i32 = arith.constant 0 : i32
    %c0_i32_0 = arith.constant 0 : i32
    return %c0_i32, %arg1 : i32, i32
  }
  func.func @transform_3(%arg0: i32, %arg1: i32) -> (i32, i32) {
    %c0_i32 = arith.constant 0 : i32
    return %arg0, %arg1 : i32, i32
  }
}

module attributes {stable_mosaic.version = 11 : i64} {
  func.func @_matmul_single_k_kernel(%arg0: i32, %arg1: i32, %arg2: memref<528x1024xbf16, #tpu.memory_space<vmem>>, %arg3: memref<1024x128xbf16, #tpu.memory_space<vmem>>, %arg4: memref<1x128xf32, #tpu.memory_space<vmem>>, %arg5: memref<528x128xf32, #tpu.memory_space<vmem>>) attributes {dimension_semantics = [#tpu.dimension_semantics<parallel>, #tpu.dimension_semantics<parallel>], iteration_bounds = array<i64: 2, 1>, scalar_prefetch = 0 : i64, scratch_operands = 0 : i64, tpu.core_type = #tpu.core_type<tc>, window_params = [{transform_indices = @transform_0, window_bounds = array<i64: 528, 1024>}, {transform_indices = @transform_1, window_bounds = array<i64: 1024, 128>}, {transform_indices = @transform_2, window_bounds = array<i64: 1, 128>}, {transform_indices = @transform_3, window_bounds = array<i64: 528, 128>}]} {
    %c0 = arith.constant 0 : index
    %c0_0 = arith.constant 0 : index
    %0 = vector.load %arg2[%c0, %c0_0] : memref<528x1024xbf16, #tpu.memory_space<vmem>>, vector<528x1024xbf16>
    %c0_1 = arith.constant 0 : index
    %c0_2 = arith.constant 0 : index
    %1 = vector.load %arg3[%c0_1, %c0_2] : memref<1024x128xbf16, #tpu.memory_space<vmem>>, vector<1024x128xbf16>
    %cst = arith.constant dense<0.000000e+00> : vector<528x128xf32>
    %2 = tpu.matmul %0, %1, %cst {dimension_numbers = #tpu.dot_dimension_numbers<[1], [0], [0], [1], [0, 0, 1, 1], [], []>} : vector<528x1024xbf16>, vector<1024x128xbf16>, vector<528x128xf32> -> vector<528x128xf32>
    %c0_3 = arith.constant 0 : index
    %c0_4 = arith.constant 0 : index
    %3 = vector.load %arg4[%c0_3, %c0_4] : memref<1x128xf32, #tpu.memory_space<vmem>>, vector<1x128xf32>
    %4 = vector.broadcast %3 : vector<1x128xf32> to vector<528x128xf32>
    %5 = arith.addf %2, %4 : vector<528x128xf32>
    %6 = math.tanh %5 : vector<528x128xf32>
    %cst_5 = arith.constant 1.000000e+00 : f32
    %7 = vector.broadcast %cst_5 : f32 to vector<528x128xf32>
    %8 = arith.addf %6, %7 : vector<528x128xf32>
    %cst_6 = arith.constant 5.000000e-01 : f32
    %9 = vector.broadcast %cst_6 : f32 to vector<528x128xf32>
    %10 = arith.mulf %9, %8 : vector<528x128xf32>
    %cst_7 = arith.constant 0.000000e+00 : f32
    %cst_8 = arith.constant 1.000000e+00 : f32
    %11 = vector.broadcast %cst_7 : f32 to vector<528x128xf32>
    %12 = arith.maximumf %11, %10 : vector<528x128xf32>
    %13 = vector.broadcast %cst_8 : f32 to vector<528x128xf32>
    %14 = arith.minimumf %13, %12 : vector<528x128xf32>
    %cst_9 = arith.constant 2.550000e+02 : f32
    %15 = vector.broadcast %cst_9 : f32 to vector<528x128xf32>
    %16 = arith.mulf %14, %15 : vector<528x128xf32>
    %c0_10 = arith.constant 0 : index
    %c0_11 = arith.constant 0 : index
    %17 = vector.load %arg5[%c0_10, %c0_11] : memref<528x128xf32, #tpu.memory_space<vmem>>, vector<528x128xf32>
    tpu.vector_store %arg5[%c0_10, %c0_11], %16 {strides = array<i32>} : memref<528x128xf32, #tpu.memory_space<vmem>>, vector<528x128xf32>,
    return
  }
  func.func @transform_0(%arg0: i32, %arg1: i32) -> (i32, i32) {
    %c0_i32 = arith.constant 0 : i32
    %c0_i32_0 = arith.constant 0 : i32
    return %arg0, %c0_i32 : i32, i32
  }
  func.func @transform_1(%arg0: i32, %arg1: i32) -> (i32, i32) {
    %c0_i32 = arith.constant 0 : i32
    %c0_i32_0 = arith.constant 0 : i32
    return %c0_i32, %arg1 : i32, i32
  }
  func.func @transform_2(%arg0: i32, %arg1: i32) -> (i32, i32) {
    %c0_i32 = arith.constant 0 : i32
    %c0_i32_0 = arith.constant 0 : i32
    return %c0_i32, %arg1 : i32, i32
  }
  func.func @transform_3(%arg0: i32, %arg1: i32) -> (i32, i32) {
    %c0_i32 = arith.constant 0 : i32
    return %arg0, %arg1 : i32, i32
  }
}

</mosaic_0001>

<llo_original>
// kernel: cnnae_forward.5
$region0: #{cnnae_forward.5}
  #allocation0 [shape = 'u32[]', space=smem, size = 0x4, offset = 0x4, fixed_abs, tag = 'smem constant byte address 0x4 - core index']
  #allocation1 [shape = 'u32[72,128]{1,0:T(1,128)}', space=vmem, size = 0x9000, scoped, tag = 'internal scratch']
  %s0 = inlined_call_operand.vmem [shape: bf16[704,256], index: 0, kind: input, shape index: {}]
  %s1 = inlined_call_operand.vmem [shape: bf16[256,128], index: 1, kind: input, shape index: {}]
  %s2 = inlined_call_operand.vmem [shape: f32[1,128], index: 2, kind: input, shape index: {}]
  %s3 = inlined_call_operand.vmem [shape: bf16[704,128], index: 3, kind: output, shape index: {}]
  %s4 = sld [smem:[#allocation0]]
  $region22: #{cnnae_forward.5} parent=0
    _
  %s6 = ssub.s32 1, %s4
  %s7 = scalar_select 0, %s6, %s4
  // Predicated region
  $region2: #{cnnae_forward.5} parent=0 // pred_check
    _
  $region3: #{cnnae_forward.5} parent=0 // pred_check_branch
    %9 = sbr.rel (0) target = $region5
  $region4: #{cnnae_forward.5} parent=0 // pred_region
    _
  $region5: #{cnnae_forward.5} parent=0 // pred_fallthru
    _
  // Predicated region
  $region6: #{cnnae_forward.5} parent=0 // pred_check
    _
  $region7: #{cnnae_forward.5} parent=0 // pred_check_branch
    %11 = sbr.rel (0) target = $region9
  $region8: #{cnnae_forward.5} parent=0 // pred_region
    _
  $region9: #{cnnae_forward.5} parent=0 // pred_fallthru
    _
  // Predicated region
  $region10: #{cnnae_forward.5} parent=0 // pred_check
    _
  $region11: #{cnnae_forward.5} parent=0 // pred_check_branch
    %13 = sbr.rel (0) target = $region13
  $region12: #{cnnae_forward.5} parent=0 // pred_region
    _
  $region13: #{cnnae_forward.5} parent=0 // pred_fallthru
    _
  %v14 = vld [vmem:[%s0] sm:$0xff]
  %v15 = vld [vmem:[%s0 + $0x8] sm:$0xff]
  %v16 = vld [vmem:[%s0 + $0x10] sm:$0xff]
  %v17 = vld [vmem:[%s0 + $0x18] sm:$0xff]
  %v18 = vld [vmem:[%s0 + $0x20] sm:$0xff]
  %v19 = vld [vmem:[%s0 + $0x28] sm:$0xff]
  %v20 = vld [vmem:[%s0 + $0x30] sm:$0xff]
  %v21 = vld [vmem:[%s0 + $0x38] sm:$0xff]
  %v22 = vld [vmem:[%s0 + $0x40] sm:$0xff]
  %v23 = vld [vmem:[%s0 + $0x48] sm:$0xff]
  %v24 = vld [vmem:[%s0 + $0x50] sm:$0xff]
  %v25 = vld [vmem:[%s0 + $0x58] sm:$0xff]
  %v26 = vld [vmem:[%s0 + $0x60] sm:$0xff]
  %v27 = vld [vmem:[%s0 + $0x68] sm:$0xff]
  %v28 = vld [vmem:[%s0 + $0x70] sm:$0xff]
  %v29 = vld [vmem:[%s0 + $0x78] sm:$0xff]
  %v30 = vld [vmem:[%s0 + $0x80] sm:$0xff]
  %v31 = vld [vmem:[%s0 + $0x88] sm:$0xff]
  %v32 = vld [vmem:[%s0 + $0x90] sm:$0xff]
  %v33 = vld [vmem:[%s0 + $0x98] sm:$0xff]
  %v34 = vld [vmem:[%s0 + $0xa0] sm:$0xff]
  %v35 = vld [vmem:[%s0 + $0xa8] sm:$0xff]
  %v36 = vld [vmem:[%s0 + $0xb0] sm:$0xff]
  %v37 = vld [vmem:[%s0 + $0xb8] sm:$0xff]
  %v38 = vld [vmem:[%s0 + $0xc0] sm:$0xff]
  %v39 = vld [vmem:[%s0 + $0xc8] sm:$0xff]
  %v40 = vld [vmem:[%s0 + $0xd0] sm:$0xff]
  %v41 = vld [vmem:[%s0 + $0xd8] sm:$0xff]
  %v42 = vld [vmem:[%s0 + $0xe0] sm:$0xff]
  %v43 = vld [vmem:[%s0 + $0xe8] sm:$0xff]
  %v44 = vld [vmem:[%s0 + $0xf0] sm:$0xff]
  %v45 = vld [vmem:[%s0 + $0xf8] sm:$0xff]
  %v46 = vld [vmem:[%s0 + $0x100] sm:$0xff]
  %v47 = vld [vmem:[%s0 + $0x108] sm:$0xff]
  %v48 = vld [vmem:[%s0 + $0x110] sm:$0xff]
  %v49 = vld [vmem:[%s0 + $0x118] sm:$0xff]
  %v50 = vld [vmem:[%s0 + $0x120] sm:$0xff]
  %v51 = vld [vmem:[%s0 + $0x128] sm:$0xff]
  %v52 = vld [vmem:[%s0 + $0x130] sm:$0xff]
  %v53 = vld [vmem:[%s0 + $0x138] sm:$0xff]
  %v54 = vld [vmem:[%s0 + $0x140] sm:$0xff]
  %v55 = vld [vmem:[%s0 + $0x148] sm:$0xff]
  %v56 = vld [vmem:[%s0 + $0x150] sm:$0xff]
  %v57 = vld [vmem:[%s0 + $0x158] sm:$0xff]
  %v58 = vld [vmem:[%s0 + $0x160] sm:$0xff]
  %v59 = vld [vmem:[%s0 + $0x168] sm:$0xff]
  %v60 = vld [vmem:[%s0 + $0x170] sm:$0xff]
  %v61 = vld [vmem:[%s0 + $0x178] sm:$0xff]
  %v62 = vld [vmem:[%s0 + $0x180] sm:$0xff]
  %v63 = vld [vmem:[%s0 + $0x188] sm:$0xff]
  %v64 = vld [vmem:[%s0 + $0x190] sm:$0xff]
  %v65 = vld [vmem:[%s0 + $0x198] sm:$0xff]
  %v66 = vld [vmem:[%s0 + $0x1a0] sm:$0xff]
  %v67 = vld [vmem:[%s0 + $0x1a8] sm:$0xff]
  %v68 = vld [vmem:[%s0 + $0x1b0] sm:$0xff]
  %v69 = vld [vmem:[%s0 + $0x1b8] sm:$0xff]
  %v70 = vld [vmem:[%s0 + $0x1c0] sm:$0xff]
  %v71 = vld [vmem:[%s0 + $0x1c8] sm:$0xff]
  %v72 = vld [vmem:[%s0 + $0x1d0] sm:$0xff]
  %v73 = vld [vmem:[%s0 + $0x1d8] sm:$0xff]
  %v74 = vld [vmem:[%s0 + $0x1e0] sm:$0xff]
  %v75 = vld [vmem:[%s0 + $0x1e8] sm:$0xff]
  %v76 = vld [vmem:[%s0 + $0x1f0] sm:$0xff]
  %v77 = vld [vmem:[%s0 + $0x1f8] sm:$0xff]
  %v78 = vld [vmem:[%s0 + $0x200] sm:$0xff]
  %v79 = vld [vmem:[%s0 + $0x208] sm:$0xff]
  %v80 = vld [vmem:[%s0 + $0x210] sm:$0xff]
  %v81 = vld [vmem:[%s0 + $0x218] sm:$0xff]
  %v82 = vld [vmem:[%s0 + $0x220] sm:$0xff]
  %v83 = vld [vmem:[%s0 + $0x228] sm:$0xff]
  %v84 = vld [vmem:[%s0 + $0x230] sm:$0xff]
  %v85 = vld [vmem:[%s0 + $0x238] sm:$0xff]
  %v86 = vld [vmem:[%s0 + $0x240] sm:$0xff]
  %v87 = vld [vmem:[%s0 + $0x248] sm:$0xff]
  %v88 = vld [vmem:[%s0 + $0x250] sm:$0xff]
  %v89 = vld [vmem:[%s0 + $0x258] sm:$0xff]
  %v90 = vld [vmem:[%s0 + $0x260] sm:$0xff]
  %v91 = vld [vmem:[%s0 + $0x268] sm:$0xff]
  %v92 = vld [vmem:[%s0 + $0x270] sm:$0xff]
  %v93 = vld [vmem:[%s0 + $0x278] sm:$0xff]
  %v94 = vld [vmem:[%s0 + $0x280] sm:$0xff]
  %v95 = vld [vmem:[%s0 + $0x288] sm:$0xff]
  %v96 = vld [vmem:[%s0 + $0x290] sm:$0xff]
  %v97 = vld [vmem:[%s0 + $0x298] sm:$0xff]
  %v98 = vld [vmem:[%s0 + $0x2a0] sm:$0xff]
  %v99 = vld [vmem:[%s0 + $0x2a8] sm:$0xff]
  %v100 = vld [vmem:[%s0 + $0x2b0] sm:$0xff]
  %v101 = vld [vmem:[%s0 + $0x2b8] sm:$0xff]
  %v102 = vld [vmem:[%s1] sm:$0xf]
  %v103 = vld [vmem:[%s1 + $0x4] sm:$0xf]
  %v104 = vld [vmem:[%s1 + $0x8] sm:$0xf]
  %v105 = vld [vmem:[%s1 + $0xc] sm:$0xf]
  %v106 = vld [vmem:[%s1 + $0x10] sm:$0xf]
  %v107 = vld [vmem:[%s1 + $0x14] sm:$0xf]
  %v108 = vld [vmem:[%s1 + $0x18] sm:$0xf]
  %v109 = vld [vmem:[%s1 + $0x1c] sm:$0xf]
  %v110 = vld [vmem:[%s1 + $0x20] sm:$0xf]
  %v111 = vld [vmem:[%s1 + $0x24] sm:$0xf]
  %v112 = vld [vmem:[%s1 + $0x28] sm:$0xf]
  %v113 = vld [vmem:[%s1 + $0x2c] sm:$0xf]
  %v114 = vld [vmem:[%s1 + $0x30] sm:$0xf]
  %v115 = vld [vmem:[%s1 + $0x34] sm:$0xf]
  %v116 = vld [vmem:[%s1 + $0x38] sm:$0xf]
  %v117 = vld [vmem:[%s1 + $0x3c] sm:$0xf]
  %v118 = vld [vmem:[%s1 + $0x40] sm:$0xf]
  %v119 = vld [vmem:[%s1 + $0x44] sm:$0xf]
  %v120 = vld [vmem:[%s1 + $0x48] sm:$0xf]
  %v121 = vld [vmem:[%s1 + $0x4c] sm:$0xf]
  %v122 = vld [vmem:[%s1 + $0x50] sm:$0xf]
  %v123 = vld [vmem:[%s1 + $0x54] sm:$0xf]
  %v124 = vld [vmem:[%s1 + $0x58] sm:$0xf]
  %v125 = vld [vmem:[%s1 + $0x5c] sm:$0xf]
  %v126 = vld [vmem:[%s1 + $0x60] sm:$0xf]
  %v127 = vld [vmem:[%s1 + $0x64] sm:$0xf]
  %v128 = vld [vmem:[%s1 + $0x68] sm:$0xf]
  %v129 = vld [vmem:[%s1 + $0x6c] sm:$0xf]
  %v130 = vld [vmem:[%s1 + $0x70] sm:$0xf]
  %v131 = vld [vmem:[%s1 + $0x74] sm:$0xf]
  %v132 = vld [vmem:[%s1 + $0x78] sm:$0xf]
  %v133 = vld [vmem:[%s1 + $0x7c] sm:$0xf]
  %v134 = vld [vmem:[%s2] sm:$0x1]
  %v136 = vperm.slane %v134, 0
  %v226 = vunpack.c.l.b16 %v14
  %v227 = vunpack.c.h.b16 %v14
  %v228 = vunpack.c.l.b16 %v15
  %v229 = vunpack.c.h.b16 %v15
  %v230 = vunpack.c.l.b16 %v16
  %v231 = vunpack.c.h.b16 %v16
  %v232 = vunpack.c.l.b16 %v17
  %v233 = vunpack.c.h.b16 %v17
  %v234 = vunpack.c.l.b16 %v18
  %v235 = vunpack.c.h.b16 %v18
  %v236 = vunpack.c.l.b16 %v19
  %v237 = vunpack.c.h.b16 %v19
  %v238 = vunpack.c.l.b16 %v20
  %v239 = vunpack.c.h.b16 %v20
  %v240 = vunpack.c.l.b16 %v21
  %v241 = vunpack.c.h.b16 %v21
  %v242 = vunpack.c.l.b16 %v22
  %v243 = vunpack.c.h.b16 %v22
  %v244 = vunpack.c.l.b16 %v23
  %v245 = vunpack.c.h.b16 %v23
  %v246 = vunpack.c.l.b16 %v24
  %v247 = vunpack.c.h.b16 %v24
  %v248 = vunpack.c.l.b16 %v25
  %v249 = vunpack.c.h.b16 %v25
  %v250 = vunpack.c.l.b16 %v26
  %v251 = vunpack.c.h.b16 %v26
  %v252 = vunpack.c.l.b16 %v27
  %v253 = vunpack.c.h.b16 %v27
  %v254 = vunpack.c.l.b16 %v28
  %v255 = vunpack.c.h.b16 %v28
  %v256 = vunpack.c.l.b16 %v29
  %v257 = vunpack.c.h.b16 %v29
  %v258 = vunpack.c.l.b16 %v30
  %v259 = vunpack.c.h.b16 %v30
  %v260 = vunpack.c.l.b16 %v31
  %v261 = vunpack.c.h.b16 %v31
  %v262 = vunpack.c.l.b16 %v32
  %v263 = vunpack.c.h.b16 %v32
  %v264 = vunpack.c.l.b16 %v33
  %v265 = vunpack.c.h.b16 %v33
  %v266 = vunpack.c.l.b16 %v34
  %v267 = vunpack.c.h.b16 %v34
  %v268 = vunpack.c.l.b16 %v35
  %v269 = vunpack.c.h.b16 %v35
  %v270 = vunpack.c.l.b16 %v36
  %v271 = vunpack.c.h.b16 %v36
  %v272 = vunpack.c.l.b16 %v37
  %v273 = vunpack.c.h.b16 %v37
  %v274 = vunpack.c.l.b16 %v38
  %v275 = vunpack.c.h.b16 %v38
  %v276 = vunpack.c.l.b16 %v39
  %v277 = vunpack.c.h.b16 %v39
  %v278 = vunpack.c.l.b16 %v40
  %v279 = vunpack.c.h.b16 %v40
  %v280 = vunpack.c.l.b16 %v41
  %v281 = vunpack.c.h.b16 %v41
  %v282 = vunpack.c.l.b16 %v42
  %v283 = vunpack.c.h.b16 %v42
  %v284 = vunpack.c.l.b16 %v43
  %v285 = vunpack.c.h.b16 %v43
  %v286 = vunpack.c.l.b16 %v44
  %v287 = vunpack.c.h.b16 %v44
  %v288 = vunpack.c.l.b16 %v45
  %v289 = vunpack.c.h.b16 %v45
  %v290 = vunpack.c.l.b16 %v46
  %v291 = vunpack.c.h.b16 %v46
  %v292 = vunpack.c.l.b16 %v47
  %v293 = vunpack.c.h.b16 %v47
  %v294 = vunpack.c.l.b16 %v48
  %v295 = vunpack.c.h.b16 %v48
  %v296 = vunpack.c.l.b16 %v49
  %v297 = vunpack.c.h.b16 %v49
  %v298 = vunpack.c.l.b16 %v50
  %v299 = vunpack.c.h.b16 %v50
  %v300 = vunpack.c.l.b16 %v51
  %v301 = vunpack.c.h.b16 %v51
  %v302 = vunpack.c.l.b16 %v52
  %v303 = vunpack.c.h.b16 %v52
  %v304 = vunpack.c.l.b16 %v53
  %v305 = vunpack.c.h.b16 %v53
  %v306 = vunpack.c.l.b16 %v54
  %v307 = vunpack.c.h.b16 %v54
  %v308 = vunpack.c.l.b16 %v55
  %v309 = vunpack.c.h.b16 %v55
  %v310 = vunpack.c.l.b16 %v56
  %v311 = vunpack.c.h.b16 %v56
  %v312 = vunpack.c.l.b16 %v57
  %v313 = vunpack.c.h.b16 %v57
  %v314 = vunpack.c.l.b16 %v58
  %v315 = vunpack.c.h.b16 %v58
  %v316 = vunpack.c.l.b16 %v59
  %v317 = vunpack.c.h.b16 %v59
  %v318 = vunpack.c.l.b16 %v60
  %v319 = vunpack.c.h.b16 %v60
  %v320 = vunpack.c.l.b16 %v61
  %v321 = vunpack.c.h.b16 %v61
  %v322 = vunpack.c.l.b16 %v62
  %v323 = vunpack.c.h.b16 %v62
  %v324 = vunpack.c.l.b16 %v63
  %v325 = vunpack.c.h.b16 %v63
  %v326 = vunpack.c.l.b16 %v64
  %v327 = vunpack.c.h.b16 %v64
  %v328 = vunpack.c.l.b16 %v65
  %v329 = vunpack.c.h.b16 %v65
  %v330 = vunpack.c.l.b16 %v66
  %v331 = vunpack.c.h.b16 %v66
  %v332 = vunpack.c.l.b16 %v67
  %v333 = vunpack.c.h.b16 %v67
  %v334 = vunpack.c.l.b16 %v68
  %v335 = vunpack.c.h.b16 %v68
  %v336 = vunpack.c.l.b16 %v69
  %v337 = vunpack.c.h.b16 %v69
  %v338 = vunpack.c.l.b16 %v70
  %v339 = vunpack.c.h.b16 %v70
  %v340 = vunpack.c.l.b16 %v71
  %v341 = vunpack.c.h.b16 %v71
  %v342 = vunpack.c.l.b16 %v72
  %v343 = vunpack.c.h.b16 %v72
  %v344 = vunpack.c.l.b16 %v73
  %v345 = vunpack.c.h.b16 %v73
  %v346 = vunpack.c.l.b16 %v74
  %v347 = vunpack.c.h.b16 %v74
  %v348 = vunpack.c.l.b16 %v75
  %v349 = vunpack.c.h.b16 %v75
  %v350 = vunpack.c.l.b16 %v76
  %v351 = vunpack.c.h.b16 %v76
  %v352 = vunpack.c.l.b16 %v77
  %v353 = vunpack.c.h.b16 %v77
  %v354 = vunpack.c.l.b16 %v78
  %v355 = vunpack.c.h.b16 %v78
  %v356 = vunpack.c.l.b16 %v79
  %v357 = vunpack.c.h.b16 %v79
  %v358 = vunpack.c.l.b16 %v80
  %v359 = vunpack.c.h.b16 %v80
  %v360 = vunpack.c.l.b16 %v81
  %v361 = vunpack.c.h.b16 %v81
  %v362 = vunpack.c.l.b16 %v82
  %v363 = vunpack.c.h.b16 %v82
  %v364 = vunpack.c.l.b16 %v83
  %v365 = vunpack.c.h.b16 %v83
  %v366 = vunpack.c.l.b16 %v84
  %v367 = vunpack.c.h.b16 %v84
  %v368 = vunpack.c.l.b16 %v85
  %v369 = vunpack.c.h.b16 %v85
  %v370 = vunpack.c.l.b16 %v86
  %v371 = vunpack.c.h.b16 %v86
  %v372 = vunpack.c.l.b16 %v87
  %v373 = vunpack.c.h.b16 %v87
  %v374 = vunpack.c.l.b16 %v88
  %v375 = vunpack.c.h.b16 %v88
  %v376 = vunpack.c.l.b16 %v89
  %v377 = vunpack.c.h.b16 %v89
  %v378 = vunpack.c.l.b16 %v90
  %v379 = vunpack.c.h.b16 %v90
  %v380 = vunpack.c.l.b16 %v91
  %v381 = vunpack.c.h.b16 %v91
  %v382 = vunpack.c.l.b16 %v92
  %v383 = vunpack.c.h.b16 %v92
  %v384 = vunpack.c.l.b16 %v93
  %v385 = vunpack.c.h.b16 %v93
  %v386 = vunpack.c.l.b16 %v94
  %v387 = vunpack.c.h.b16 %v94
  %v388 = vunpack.c.l.b16 %v95
  %v389 = vunpack.c.h.b16 %v95
  %v390 = vunpack.c.l.b16 %v96
  %v391 = vunpack.c.h.b16 %v96
  %v392 = vunpack.c.l.b16 %v97
  %v393 = vunpack.c.h.b16 %v97
  %v394 = vunpack.c.l.b16 %v98
  %v395 = vunpack.c.h.b16 %v98
  %v396 = vunpack.c.l.b16 %v99
  %v397 = vunpack.c.h.b16 %v99
  %v398 = vunpack.c.l.b16 %v100
  %v399 = vunpack.c.h.b16 %v100
  %v400 = vunpack.c.l.b16 %v101
  %v401 = vunpack.c.h.b16 %v101
  %v402 = vpack.c.b16 %v228, %v226
  %v403 = vpack.c.b16 %v229, %v227
  %v404 = vpack.c.b16 %v232, %v230
  %v405 = vpack.c.b16 %v233, %v231
  %v406 = vpack.c.b16 %v236, %v234
  %v407 = vpack.c.b16 %v237, %v235
  %v408 = vpack.c.b16 %v240, %v238
  %v409 = vpack.c.b16 %v241, %v239
  %v410 = vpack.c.b16 %v244, %v242
  %v411 = vpack.c.b16 %v245, %v243
  %v412 = vpack.c.b16 %v248, %v246
  %v413 = vpack.c.b16 %v249, %v247
  %v414 = vpack.c.b16 %v252, %v250
  %v415 = vpack.c.b16 %v253, %v251
  %v416 = vpack.c.b16 %v256, %v254
  %v417 = vpack.c.b16 %v257, %v255
  %v418 = vpack.c.b16 %v260, %v258
  %v419 = vpack.c.b16 %v261, %v259
  %v420 = vpack.c.b16 %v264, %v262
  %v421 = vpack.c.b16 %v265, %v263
  %v422 = vpack.c.b16 %v268, %v266
  %v423 = vpack.c.b16 %v269, %v267
  %v424 = vpack.c.b16 %v272, %v270
  %v425 = vpack.c.b16 %v273, %v271
  %v426 = vpack.c.b16 %v276, %v274
  %v427 = vpack.c.b16 %v277, %v275
  %v428 = vpack.c.b16 %v280, %v278
  %v429 = vpack.c.b16 %v281, %v279
  %v430 = vpack.c.b16 %v284, %v282
  %v431 = vpack.c.b16 %v285, %v283
  %v432 = vpack.c.b16 %v288, %v286
  %v433 = vpack.c.b16 %v289, %v287
  %v434 = vpack.c.b16 %v292, %v290
  %v435 = vpack.c.b16 %v293, %v291
  %v436 = vpack.c.b16 %v296, %v294
  %v437 = vpack.c.b16 %v297, %v295
  %v438 = vpack.c.b16 %v300, %v298
  %v439 = vpack.c.b16 %v301, %v299
  %v440 = vpack.c.b16 %v304, %v302
  %v441 = vpack.c.b16 %v305, %v303
  %v442 = vpack.c.b16 %v308, %v306
  %v443 = vpack.c.b16 %v309, %v307
  %v444 = vpack.c.b16 %v312, %v310
  %v445 = vpack.c.b16 %v313, %v311
  %v446 = vpack.c.b16 %v316, %v314
  %v447 = vpack.c.b16 %v317, %v315
  %v448 = vpack.c.b16 %v320, %v318
  %v449 = vpack.c.b16 %v321, %v319
  %v450 = vpack.c.b16 %v324, %v322
  %v451 = vpack.c.b16 %v325, %v323
  %v452 = vpack.c.b16 %v328, %v326
  %v453 = vpack.c.b16 %v329, %v327
  %v454 = vpack.c.b16 %v332, %v330
  %v455 = vpack.c.b16 %v333, %v331
  %v456 = vpack.c.b16 %v336, %v334
  %v457 = vpack.c.b16 %v337, %v335
  %v458 = vpack.c.b16 %v340, %v338
  %v459 = vpack.c.b16 %v341, %v339
  %v460 = vpack.c.b16 %v344, %v342
  %v461 = vpack.c.b16 %v345, %v343
  %v462 = vpack.c.b16 %v348, %v346
  %v463 = vpack.c.b16 %v349, %v347
  %v464 = vpack.c.b16 %v352, %v350
  %v465 = vpack.c.b16 %v353, %v351
  %v466 = vpack.c.b16 %v356, %v354
  %v467 = vpack.c.b16 %v357, %v355
  %v468 = vpack.c.b16 %v360, %v358
  %v469 = vpack.c.b16 %v361, %v359
  %v470 = vpack.c.b16 %v364, %v362
  %v471 = vpack.c.b16 %v365, %v363
  %v472 = vpack.c.b16 %v368, %v366
  %v473 = vpack.c.b16 %v369, %v367
  %v474 = vpack.c.b16 %v372, %v370
  %v475 = vpack.c.b16 %v373, %v371
  %v476 = vpack.c.b16 %v376, %v374
  %v477 = vpack.c.b16 %v377, %v375
  %v478 = vpack.c.b16 %v380, %v378
  %v479 = vpack.c.b16 %v381, %v379
  %v480 = vpack.c.b16 %v384, %v382
  %v481 = vpack.c.b16 %v385, %v383
  %v482 = vpack.c.b16 %v388, %v386
  %v483 = vpack.c.b16 %v389, %v387
  %v484 = vpack.c.b16 %v392, %v390
  %v485 = vpack.c.b16 %v393, %v391
  %v486 = vpack.c.b16 %v396, %v394
  %v487 = vpack.c.b16 %v397, %v395
  %v488 = vpack.c.b16 %v400, %v398
  %v489 = vpack.c.b16 %v401, %v399
  %v610 = vunpack.c.l.b16 %v102
  %v611 = vunpack.c.l.b16 %v103
  %v612 = vunpack.c.l.b16 %v104
  %v613 = vunpack.c.l.b16 %v105
  %v614 = vunpack.c.l.b16 %v106
  %v615 = vunpack.c.l.b16 %v107
  %v616 = vunpack.c.l.b16 %v108
  %v617 = vunpack.c.l.b16 %v109
  %v618 = vunpack.c.l.b16 %v110
  %v619 = vunpack.c.l.b16 %v111
  %v620 = vunpack.c.l.b16 %v112
  %v621 = vunpack.c.l.b16 %v113
  %v622 = vunpack.c.l.b16 %v114
  %v623 = vunpack.c.l.b16 %v115
  %v624 = vunpack.c.l.b16 %v116
  %v625 = vunpack.c.l.b16 %v117
  %v626 = vunpack.c.l.b16 %v118
  %v627 = vunpack.c.l.b16 %v119
  %v628 = vunpack.c.l.b16 %v120
  %v629 = vunpack.c.l.b16 %v121
  %v630 = vunpack.c.l.b16 %v122
  %v631 = vunpack.c.l.b16 %v123
  %v632 = vunpack.c.l.b16 %v124
  %v633 = vunpack.c.l.b16 %v125
  %v634 = vunpack.c.l.b16 %v126
  %v635 = vunpack.c.l.b16 %v127
  %v636 = vunpack.c.l.b16 %v128
  %v637 = vunpack.c.l.b16 %v129
  %v638 = vunpack.c.l.b16 %v130
  %v639 = vunpack.c.l.b16 %v131
  %v640 = vunpack.c.l.b16 %v132
  %v641 = vunpack.c.l.b16 %v133
  %v642 = vpack.c.b16 %v611, %v610
  %v643 = vpack.c.b16 %v613, %v612
  %v644 = vpack.c.b16 %v615, %v614
  %v645 = vpack.c.b16 %v617, %v616
  %v646 = vpack.c.b16 %v619, %v618
  %v647 = vpack.c.b16 %v621, %v620
  %v648 = vpack.c.b16 %v623, %v622
  %v649 = vpack.c.b16 %v625, %v624
  %v650 = vpack.c.b16 %v627, %v626
  %v651 = vpack.c.b16 %v629, %v628
  %v652 = vpack.c.b16 %v631, %v630
  %v653 = vpack.c.b16 %v633, %v632
  %v654 = vpack.c.b16 %v635, %v634
  %v655 = vpack.c.b16 %v637, %v636
  %v656 = vpack.c.b16 %v639, %v638
  %v657 = vpack.c.b16 %v641, %v640
  %674 = vmatpush.bf16.msra.mxu0 %v649
  %675 = vmatpush.bf16.msra.mxu0 %v648
  %676 = vmatpush.bf16.msra.mxu0 %v647
  %677 = vmatpush.bf16.msra.mxu0 %v646
  %678 = vmatpush.bf16.msra.mxu0 %v645
  %679 = vmatpush.bf16.msra.mxu0 %v644
  %680 = vmatpush.bf16.msra.mxu0 %v643
  %681 = vmatpush.bf16.msra.mxu0 %v642
  %682 = vmatmul.bf16.gmra.mxu0 %v402
  %v683 = vpop.f32.mrf.mxu0
  %v684 = vadd.f32 %v136, %v683
  %v685 = vpop.f32.mrf.mxu0
  %v686 = vadd.f32 %v136, %v685
  %687 = vmatmul.bf16.gmra.mxu0 %v404
  %v688 = vpop.f32.mrf.mxu0
  %v689 = vadd.f32 %v136, %v688
  %v690 = vpop.f32.mrf.mxu0
  %v691 = vadd.f32 %v136, %v690
  %692 = vmatmul.bf16.gmra.mxu0 %v406
  %v693 = vpop.f32.mrf.mxu0
  %v694 = vadd.f32 %v136, %v693
  %v695 = vpop.f32.mrf.mxu0
  %v696 = vadd.f32 %v136, %v695
  %697 = vmatmul.bf16.gmra.mxu0 %v408
  %v698 = vpop.f32.mrf.mxu0
  %v699 = vadd.f32 %v136, %v698
  %v700 = vpop.f32.mrf.mxu0
  %v701 = vadd.f32 %v136, %v700
  %702 = vmatmul.bf16.gmra.mxu0 %v410
  %v703 = vpop.f32.mrf.mxu0
  %v704 = vadd.f32 %v136, %v703
  %v705 = vpop.f32.mrf.mxu0
  %v706 = vadd.f32 %v136, %v705
  %707 = vmatmul.bf16.gmra.mxu0 %v412
  %v708 = vpop.f32.mrf.mxu0
  %v709 = vadd.f32 %v136, %v708
  %v710 = vpop.f32.mrf.mxu0
  %v711 = vadd.f32 %v136, %v710
  %712 = vmatmul.bf16.gmra.mxu0 %v414
  %v713 = vpop.f32.mrf.mxu0
  %v714 = vadd.f32 %v136, %v713
  %v715 = vpop.f32.mrf.mxu0
  %v716 = vadd.f32 %v136, %v715
  %717 = vmatmul.bf16.gmra.mxu0 %v416
  %v718 = vpop.f32.mrf.mxu0
  %v719 = vadd.f32 %v136, %v718
  %v720 = vpop.f32.mrf.mxu0
  %v721 = vadd.f32 %v136, %v720
  %722 = vmatmul.bf16.gmra.mxu0 %v418
  %v723 = vpop.f32.mrf.mxu0
  %v724 = vadd.f32 %v136, %v723
  %v725 = vpop.f32.mrf.mxu0
  %v726 = vadd.f32 %v136, %v725
  %727 = vmatmul.bf16.gmra.mxu0 %v420
  %v728 = vpop.f32.mrf.mxu0
  %v729 = vadd.f32 %v136, %v728
  %v730 = vpop.f32.mrf.mxu0
  %v731 = vadd.f32 %v136, %v730
  %732 = vmatmul.bf16.gmra.mxu0 %v422
  %v733 = vpop.f32.mrf.mxu0
  %v734 = vadd.f32 %v136, %v733
  %v735 = vpop.f32.mrf.mxu0
  %v736 = vadd.f32 %v136, %v735
  %737 = vmatmul.bf16.gmra.mxu0 %v424
  %v738 = vpop.f32.mrf.mxu0
  %v739 = vadd.f32 %v136, %v738
  %v740 = vpop.f32.mrf.mxu0
  %v741 = vadd.f32 %v136, %v740
  %742 = vmatmul.bf16.gmra.mxu0 %v426
  %v743 = vpop.f32.mrf.mxu0
  %v744 = vadd.f32 %v136, %v743
  %v745 = vpop.f32.mrf.mxu0
  %v746 = vadd.f32 %v136, %v745
  %747 = vmatmul.bf16.gmra.mxu0 %v428
  %v748 = vpop.f32.mrf.mxu0
  %v749 = vadd.f32 %v136, %v748
  %v750 = vpop.f32.mrf.mxu0
  %v751 = vadd.f32 %v136, %v750
  %752 = vmatmul.bf16.gmra.mxu0 %v430
  %v753 = vpop.f32.mrf.mxu0
  %v754 = vadd.f32 %v136, %v753
  %v755 = vpop.f32.mrf.mxu0
  %v756 = vadd.f32 %v136, %v755
  %757 = vmatmul.bf16.gmra.mxu0 %v432
  %v758 = vpop.f32.mrf.mxu0
  %v759 = vadd.f32 %v136, %v758
  %v760 = vpop.f32.mrf.mxu0
  %v761 = vadd.f32 %v136, %v760
  %762 = vmatmul.bf16.gmra.mxu0 %v434
  %v763 = vpop.f32.mrf.mxu0
  %v764 = vadd.f32 %v136, %v763
  %v765 = vpop.f32.mrf.mxu0
  %v766 = vadd.f32 %v136, %v765
  %767 = vmatmul.bf16.gmra.mxu0 %v436
  %v768 = vpop.f32.mrf.mxu0
  %v769 = vadd.f32 %v136, %v768
  %v770 = vpop.f32.mrf.mxu0
  %v771 = vadd.f32 %v136, %v770
  %772 = vmatmul.bf16.gmra.mxu0 %v438
  %v773 = vpop.f32.mrf.mxu0
  %v774 = vadd.f32 %v136, %v773
  %v775 = vpop.f32.mrf.mxu0
  %v776 = vadd.f32 %v136, %v775
  %777 = vmatmul.bf16.gmra.mxu0 %v440
  %v778 = vpop.f32.mrf.mxu0
  %v779 = vadd.f32 %v136, %v778
  %v780 = vpop.f32.mrf.mxu0
  %v781 = vadd.f32 %v136, %v780
  %782 = vmatmul.bf16.gmra.mxu0 %v442
  %v783 = vpop.f32.mrf.mxu0
  %v784 = vadd.f32 %v136, %v783
  %v785 = vpop.f32.mrf.mxu0
  %v786 = vadd.f32 %v136, %v785
  %787 = vmatmul.bf16.gmra.mxu0 %v444
  %v788 = vpop.f32.mrf.mxu0
  %v789 = vadd.f32 %v136, %v788
  %v790 = vpop.f32.mrf.mxu0
  %v791 = vadd.f32 %v136, %v790
  %792 = vmatmul.bf16.gmra.mxu0 %v446
  %v793 = vpop.f32.mrf.mxu0
  %v794 = vadd.f32 %v136, %v793
  %v795 = vpop.f32.mrf.mxu0
  %v796 = vadd.f32 %v136, %v795
  %797 = vmatmul.bf16.gmra.mxu0 %v448
  %v798 = vpop.f32.mrf.mxu0
  %v799 = vadd.f32 %v136, %v798
  %v800 = vpop.f32.mrf.mxu0
  %v801 = vadd.f32 %v136, %v800
  %802 = vmatmul.bf16.gmra.mxu0 %v450
  %v803 = vpop.f32.mrf.mxu0
  %v804 = vadd.f32 %v136, %v803
  %v805 = vpop.f32.mrf.mxu0
  %v806 = vadd.f32 %v136, %v805
  %807 = vmatmul.bf16.gmra.mxu0 %v452
  %v808 = vpop.f32.mrf.mxu0
  %v809 = vadd.f32 %v136, %v808
  %v810 = vpop.f32.mrf.mxu0
  %v811 = vadd.f32 %v136, %v810
  %812 = vmatmul.bf16.gmra.mxu0 %v454
  %v813 = vpop.f32.mrf.mxu0
  %v814 = vadd.f32 %v136, %v813
  %v815 = vpop.f32.mrf.mxu0
  %v816 = vadd.f32 %v136, %v815
  %817 = vmatmul.bf16.gmra.mxu0 %v456
  %v818 = vpop.f32.mrf.mxu0
  %v819 = vadd.f32 %v136, %v818
  %v820 = vpop.f32.mrf.mxu0
  %v821 = vadd.f32 %v136, %v820
  %822 = vmatmul.bf16.gmra.mxu0 %v458
  %v823 = vpop.f32.mrf.mxu0
  %v824 = vadd.f32 %v136, %v823
  %v825 = vpop.f32.mrf.mxu0
  %v826 = vadd.f32 %v136, %v825
  %827 = vmatmul.bf16.gmra.mxu0 %v460
  %v828 = vpop.f32.mrf.mxu0
  %v829 = vadd.f32 %v136, %v828
  %v830 = vpop.f32.mrf.mxu0
  %v831 = vadd.f32 %v136, %v830
  %832 = vmatmul.bf16.gmra.mxu0 %v462
  %v833 = vpop.f32.mrf.mxu0
  %v834 = vadd.f32 %v136, %v833
  %v835 = vpop.f32.mrf.mxu0
  %v836 = vadd.f32 %v136, %v835
  %837 = vmatmul.bf16.gmra.mxu0 %v464
  %v838 = vpop.f32.mrf.mxu0
  %v839 = vadd.f32 %v136, %v838
  %v840 = vpop.f32.mrf.mxu0
  %v841 = vadd.f32 %v136, %v840
  %842 = vmatmul.bf16.gmra.mxu0 %v466
  %v843 = vpop.f32.mrf.mxu0
  %v844 = vadd.f32 %v136, %v843
  %v845 = vpop.f32.mrf.mxu0
  %v846 = vadd.f32 %v136, %v845
  %847 = vmatmul.bf16.gmra.mxu0 %v468
  %v848 = vpop.f32.mrf.mxu0
  %v849 = vadd.f32 %v136, %v848
  %v850 = vpop.f32.mrf.mxu0
  %v851 = vadd.f32 %v136, %v850
  %852 = vmatmul.bf16.gmra.mxu0 %v470
  %v853 = vpop.f32.mrf.mxu0
  %v854 = vadd.f32 %v136, %v853
  %v855 = vpop.f32.mrf.mxu0
  %v856 = vadd.f32 %v136, %v855
  %857 = vmatmul.bf16.gmra.mxu0 %v472
  %v858 = vpop.f32.mrf.mxu0
  %v859 = vadd.f32 %v136, %v858
  %v860 = vpop.f32.mrf.mxu0
  %v861 = vadd.f32 %v136, %v860
  %862 = vmatmul.bf16.gmra.mxu0 %v474
  %v863 = vpop.f32.mrf.mxu0
  %v864 = vadd.f32 %v136, %v863
  %v865 = vpop.f32.mrf.mxu0
  %v866 = vadd.f32 %v136, %v865
  %867 = vmatmul.bf16.gmra.mxu0 %v476
  %v868 = vpop.f32.mrf.mxu0
  %v869 = vadd.f32 %v136, %v868
  %v870 = vpop.f32.mrf.mxu0
  %v871 = vadd.f32 %v136, %v870
  %872 = vmatmul.bf16.gmra.mxu0 %v478
  %v873 = vpop.f32.mrf.mxu0
  %v874 = vadd.f32 %v136, %v873
  %v875 = vpop.f32.mrf.mxu0
  %v876 = vadd.f32 %v136, %v875
  %877 = vmatmul.bf16.gmra.mxu0 %v480
  %v878 = vpop.f32.mrf.mxu0
  %v879 = vadd.f32 %v136, %v878
  %v880 = vpop.f32.mrf.mxu0
  %v881 = vadd.f32 %v136, %v880
  %882 = vmatmul.bf16.gmra.mxu0 %v482
  %v883 = vpop.f32.mrf.mxu0
  %v884 = vadd.f32 %v136, %v883
  %v885 = vpop.f32.mrf.mxu0
  %v886 = vadd.f32 %v136, %v885
  %887 = vmatmul.bf16.gmra.mxu0 %v484
  %v888 = vpop.f32.mrf.mxu0
  %v889 = vadd.f32 %v136, %v888
  %v890 = vpop.f32.mrf.mxu0
  %v891 = vadd.f32 %v136, %v890
  %892 = vmatmul.bf16.gmra.mxu0 %v486
  %v893 = vpop.f32.mrf.mxu0
  %v894 = vadd.f32 %v136, %v893
  %v895 = vpop.f32.mrf.mxu0
  %v896 = vadd.f32 %v136, %v895
  %897 = vmatmul.bf16.gmra.mxu0 %v488
  %v898 = vpop.f32.mrf.mxu0
  %v899 = vadd.f32 %v136, %v898
  %v900 = vpop.f32.mrf.mxu0
  %v901 = vadd.f32 %v136, %v900
  %902 = vdwg.mxu0
  %903 = vmatpush.bf16.msra.mxu0 %v657
  %904 = vmatpush.bf16.msra.mxu0 %v656
  %905 = vmatpush.bf16.msra.mxu0 %v655
  %906 = vmatpush.bf16.msra.mxu0 %v654
  %907 = vmatpush.bf16.msra.mxu0 %v653
  %908 = vmatpush.bf16.msra.mxu0 %v652
  %909 = vmatpush.bf16.msra.mxu0 %v651
  %910 = vmatpush.bf16.msra.mxu0 %v650
  %911 = vmatmul.bf16.gmra.mxu0 %v403
  %v912 = vpop.f32.mrf.mxu0
  %v913 = vadd.f32 %v684, %v912
  %v914 = vpop.f32.mrf.mxu0
  %v915 = vadd.f32 %v686, %v914
  %916 = vmatmul.bf16.gmra.mxu0 %v405
  %v917 = vpop.f32.mrf.mxu0
  %v918 = vadd.f32 %v689, %v917
  %v919 = vpop.f32.mrf.mxu0
  %v920 = vadd.f32 %v691, %v919
  %921 = vmatmul.bf16.gmra.mxu0 %v407
  %v922 = vpop.f32.mrf.mxu0
  %v923 = vadd.f32 %v694, %v922
  %v924 = vpop.f32.mrf.mxu0
  %v925 = vadd.f32 %v696, %v924
  %926 = vmatmul.bf16.gmra.mxu0 %v409
  %v927 = vpop.f32.mrf.mxu0
  %v928 = vadd.f32 %v699, %v927
  %v929 = vpop.f32.mrf.mxu0
  %v930 = vadd.f32 %v701, %v929
  %931 = vmatmul.bf16.gmra.mxu0 %v411
  %v932 = vpop.f32.mrf.mxu0
  %v933 = vadd.f32 %v704, %v932
  %v934 = vpop.f32.mrf.mxu0
  %v935 = vadd.f32 %v706, %v934
  %936 = vmatmul.bf16.gmra.mxu0 %v413
  %v937 = vpop.f32.mrf.mxu0
  %v938 = vadd.f32 %v709, %v937
  %v939 = vpop.f32.mrf.mxu0
  %v940 = vadd.f32 %v711, %v939
  %941 = vmatmul.bf16.gmra.mxu0 %v415
  %v942 = vpop.f32.mrf.mxu0
  %v943 = vadd.f32 %v714, %v942
  %v944 = vpop.f32.mrf.mxu0
  %v945 = vadd.f32 %v716, %v944
  %946 = vmatmul.bf16.gmra.mxu0 %v417
  %v947 = vpop.f32.mrf.mxu0
  %v948 = vadd.f32 %v719, %v947
  %v949 = vpop.f32.mrf.mxu0
  %v950 = vadd.f32 %v721, %v949
  %951 = vmatmul.bf16.gmra.mxu0 %v419
  %v952 = vpop.f32.mrf.mxu0
  %v953 = vadd.f32 %v724, %v952
  %v954 = vpop.f32.mrf.mxu0
  %v955 = vadd.f32 %v726, %v954
  %956 = vmatmul.bf16.gmra.mxu0 %v421
  %v957 = vpop.f32.mrf.mxu0
  %v958 = vadd.f32 %v729, %v957
  %v959 = vpop.f32.mrf.mxu0
  %v960 = vadd.f32 %v731, %v959
  %961 = vmatmul.bf16.gmra.mxu0 %v423
  %v962 = vpop.f32.mrf.mxu0
  %v963 = vadd.f32 %v734, %v962
  %v964 = vpop.f32.mrf.mxu0
  %v965 = vadd.f32 %v736, %v964
  %966 = vmatmul.bf16.gmra.mxu0 %v425
  %v967 = vpop.f32.mrf.mxu0
  %v968 = vadd.f32 %v739, %v967
  %v969 = vpop.f32.mrf.mxu0
  %v970 = vadd.f32 %v741, %v969
  %971 = vmatmul.bf16.gmra.mxu0 %v427
  %v972 = vpop.f32.mrf.mxu0
  %v973 = vadd.f32 %v744, %v972
  %v974 = vpop.f32.mrf.mxu0
  %v975 = vadd.f32 %v746, %v974
  %976 = vmatmul.bf16.gmra.mxu0 %v429
  %v977 = vpop.f32.mrf.mxu0
  %v978 = vadd.f32 %v749, %v977
  %v979 = vpop.f32.mrf.mxu0
  %v980 = vadd.f32 %v751, %v979
  %981 = vmatmul.bf16.gmra.mxu0 %v431
  %v982 = vpop.f32.mrf.mxu0
  %v983 = vadd.f32 %v754, %v982
  %v984 = vpop.f32.mrf.mxu0
  %v985 = vadd.f32 %v756, %v984
  %986 = vmatmul.bf16.gmra.mxu0 %v433
  %v987 = vpop.f32.mrf.mxu0
  %v988 = vadd.f32 %v759, %v987
  %v989 = vpop.f32.mrf.mxu0
  %v990 = vadd.f32 %v761, %v989
  %991 = vmatmul.bf16.gmra.mxu0 %v435
  %v992 = vpop.f32.mrf.mxu0
  %v993 = vadd.f32 %v764, %v992
  %v994 = vpop.f32.mrf.mxu0
  %v995 = vadd.f32 %v766, %v994
  %996 = vmatmul.bf16.gmra.mxu0 %v437
  %v997 = vpop.f32.mrf.mxu0
  %v998 = vadd.f32 %v769, %v997
  %v999 = vpop.f32.mrf.mxu0
  %v1000 = vadd.f32 %v771, %v999
  %1001 = vmatmul.bf16.gmra.mxu0 %v439
  %v1002 = vpop.f32.mrf.mxu0
  %v1003 = vadd.f32 %v774, %v1002
  %v1004 = vpop.f32.mrf.mxu0
  %v1005 = vadd.f32 %v776, %v1004
  %1006 = vmatmul.bf16.gmra.mxu0 %v441
  %v1007 = vpop.f32.mrf.mxu0
  %v1008 = vadd.f32 %v779, %v1007
  %v1009 = vpop.f32.mrf.mxu0
  %v1010 = vadd.f32 %v781, %v1009
  %1011 = vmatmul.bf16.gmra.mxu0 %v443
  %v1012 = vpop.f32.mrf.mxu0
  %v1013 = vadd.f32 %v784, %v1012
  %v1014 = vpop.f32.mrf.mxu0
  %v1015 = vadd.f32 %v786, %v1014
  %1016 = vmatmul.bf16.gmra.mxu0 %v445
  %v1017 = vpop.f32.mrf.mxu0
  %v1018 = vadd.f32 %v789, %v1017
  %v1019 = vpop.f32.mrf.mxu0
  %v1020 = vadd.f32 %v791, %v1019
  %1021 = vmatmul.bf16.gmra.mxu0 %v447
  %v1022 = vpop.f32.mrf.mxu0
  %v1023 = vadd.f32 %v794, %v1022
  %v1024 = vpop.f32.mrf.mxu0
  %v1025 = vadd.f32 %v796, %v1024
  %1026 = vmatmul.bf16.gmra.mxu0 %v449
  %v1027 = vpop.f32.mrf.mxu0
  %v1028 = vadd.f32 %v799, %v1027
  %v1029 = vpop.f32.mrf.mxu0
  %v1030 = vadd.f32 %v801, %v1029
  %1031 = vmatmul.bf16.gmra.mxu0 %v451
  %v1032 = vpop.f32.mrf.mxu0
  %v1033 = vadd.f32 %v804, %v1032
  %v1034 = vpop.f32.mrf.mxu0
  %v1035 = vadd.f32 %v806, %v1034
  %1036 = vmatmul.bf16.gmra.mxu0 %v453
  %v1037 = vpop.f32.mrf.mxu0
  %v1038 = vadd.f32 %v809, %v1037
  %v1039 = vpop.f32.mrf.mxu0
  %v1040 = vadd.f32 %v811, %v1039
  %1041 = vmatmul.bf16.gmra.mxu0 %v455
  %v1042 = vpop.f32.mrf.mxu0
  %v1043 = vadd.f32 %v814, %v1042
  %v1044 = vpop.f32.mrf.mxu0
  %v1045 = vadd.f32 %v816, %v1044
  %1046 = vmatmul.bf16.gmra.mxu0 %v457
  %v1047 = vpop.f32.mrf.mxu0
  %v1048 = vadd.f32 %v819, %v1047
  %v1049 = vpop.f32.mrf.mxu0
  %v1050 = vadd.f32 %v821, %v1049
  %1051 = vmatmul.bf16.gmra.mxu0 %v459
  %v1052 = vpop.f32.mrf.mxu0
  %v1053 = vadd.f32 %v824, %v1052
  %v1054 = vpop.f32.mrf.mxu0
  %v1055 = vadd.f32 %v826, %v1054
  %1056 = vmatmul.bf16.gmra.mxu0 %v461
  %v1057 = vpop.f32.mrf.mxu0
  %v1058 = vadd.f32 %v829, %v1057
  %v1059 = vpop.f32.mrf.mxu0
  %v1060 = vadd.f32 %v831, %v1059
  %1061 = vmatmul.bf16.gmra.mxu0 %v463
  %v1062 = vpop.f32.mrf.mxu0
  %v1063 = vadd.f32 %v834, %v1062
  %v1064 = vpop.f32.mrf.mxu0
  %v1065 = vadd.f32 %v836, %v1064
  %1066 = vmatmul.bf16.gmra.mxu0 %v465
  %v1067 = vpop.f32.mrf.mxu0
  %v1068 = vadd.f32 %v839, %v1067
  %v1069 = vpop.f32.mrf.mxu0
  %v1070 = vadd.f32 %v841, %v1069
  %1071 = vmatmul.bf16.gmra.mxu0 %v467
  %v1072 = vpop.f32.mrf.mxu0
  %v1073 = vadd.f32 %v844, %v1072
  %v1074 = vpop.f32.mrf.mxu0
  %v1075 = vadd.f32 %v846, %v1074
  %1076 = vmatmul.bf16.gmra.mxu0 %v469
  %v1077 = vpop.f32.mrf.mxu0
  %v1078 = vadd.f32 %v849, %v1077
  %v1079 = vpop.f32.mrf.mxu0
  %v1080 = vadd.f32 %v851, %v1079
  %1081 = vmatmul.bf16.gmra.mxu0 %v471
  %v1082 = vpop.f32.mrf.mxu0
  %v1083 = vadd.f32 %v854, %v1082
  %v1084 = vpop.f32.mrf.mxu0
  %v1085 = vadd.f32 %v856, %v1084
  %1086 = vmatmul.bf16.gmra.mxu0 %v473
  %v1087 = vpop.f32.mrf.mxu0
  %v1088 = vadd.f32 %v859, %v1087
  %v1089 = vpop.f32.mrf.mxu0
  %v1090 = vadd.f32 %v861, %v1089
  %1091 = vmatmul.bf16.gmra.mxu0 %v475
  %v1092 = vpop.f32.mrf.mxu0
  %v1093 = vadd.f32 %v864, %v1092
  %v1094 = vpop.f32.mrf.mxu0
  %v1095 = vadd.f32 %v866, %v1094
  %1096 = vmatmul.bf16.gmra.mxu0 %v477
  %v1097 = vpop.f32.mrf.mxu0
  %v1098 = vadd.f32 %v869, %v1097
  %v1099 = vpop.f32.mrf.mxu0
  %v1100 = vadd.f32 %v871, %v1099
  %1101 = vmatmul.bf16.gmra.mxu0 %v479
  %v1102 = vpop.f32.mrf.mxu0
  %v1103 = vadd.f32 %v874, %v1102
  %v1104 = vpop.f32.mrf.mxu0
  %v1105 = vadd.f32 %v876, %v1104
  %1106 = vmatmul.bf16.gmra.mxu0 %v481
  %v1107 = vpop.f32.mrf.mxu0
  %v1108 = vadd.f32 %v879, %v1107
  %v1109 = vpop.f32.mrf.mxu0
  %v1110 = vadd.f32 %v881, %v1109
  %1111 = vmatmul.bf16.gmra.mxu0 %v483
  %v1112 = vpop.f32.mrf.mxu0
  %v1113 = vadd.f32 %v884, %v1112
  %v1114 = vpop.f32.mrf.mxu0
  %v1115 = vadd.f32 %v886, %v1114
  %1116 = vmatmul.bf16.gmra.mxu0 %v485
  %v1117 = vpop.f32.mrf.mxu0
  %v1118 = vadd.f32 %v889, %v1117
  %v1119 = vpop.f32.mrf.mxu0
  %v1120 = vadd.f32 %v891, %v1119
  %1121 = vmatmul.bf16.gmra.mxu0 %v487
  %v1122 = vpop.f32.mrf.mxu0
  %v1123 = vadd.f32 %v894, %v1122
  %v1124 = vpop.f32.mrf.mxu0
  %v1125 = vadd.f32 %v896, %v1124
  %1126 = vmatmul.bf16.gmra.mxu0 %v489
  %v1127 = vpop.f32.mrf.mxu0
  %v1128 = vadd.f32 %v899, %v1127
  %v1129 = vpop.f32.mrf.mxu0
  %v1130 = vadd.f32 %v901, %v1129
  %1131 = vdwg.mxu0
  %v1132 = vmax.f32 %v913, 0.0
  %v1133 = vmax.f32 %v915, 0.0
  %v1134 = vmax.f32 %v918, 0.0
  %v1135 = vmax.f32 %v920, 0.0
  %v1136 = vmax.f32 %v923, 0.0
  %v1137 = vmax.f32 %v925, 0.0
  %v1138 = vmax.f32 %v928, 0.0
  %v1139 = vmax.f32 %v930, 0.0
  %v1140 = vmax.f32 %v933, 0.0
  %v1141 = vmax.f32 %v935, 0.0
  %v1142 = vmax.f32 %v938, 0.0
  %v1143 = vmax.f32 %v940, 0.0
  %v1144 = vmax.f32 %v943, 0.0
  %v1145 = vmax.f32 %v945, 0.0
  %v1146 = vmax.f32 %v948, 0.0
  %v1147 = vmax.f32 %v950, 0.0
  %v1148 = vmax.f32 %v953, 0.0
  %v1149 = vmax.f32 %v955, 0.0
  %v1150 = vmax.f32 %v958, 0.0
  %v1151 = vmax.f32 %v960, 0.0
  %v1152 = vmax.f32 %v963, 0.0
  %v1153 = vmax.f32 %v965, 0.0
  %v1154 = vmax.f32 %v968, 0.0
  %v1155 = vmax.f32 %v970, 0.0
  %v1156 = vmax.f32 %v973, 0.0
  %v1157 = vmax.f32 %v975, 0.0
  %v1158 = vmax.f32 %v978, 0.0
  %v1159 = vmax.f32 %v980, 0.0
  %v1160 = vmax.f32 %v983, 0.0
  %v1161 = vmax.f32 %v985, 0.0
  %v1162 = vmax.f32 %v988, 0.0
  %v1163 = vmax.f32 %v990, 0.0
  %v1164 = vmax.f32 %v993, 0.0
  %v1165 = vmax.f32 %v995, 0.0
  %v1166 = vmax.f32 %v998, 0.0
  %v1167 = vmax.f32 %v1000, 0.0
  %v1168 = vmax.f32 %v1003, 0.0
  %v1169 = vmax.f32 %v1005, 0.0
  %v1170 = vmax.f32 %v1008, 0.0
  %v1171 = vmax.f32 %v1010, 0.0
  %v1172 = vmax.f32 %v1013, 0.0
  %v1173 = vmax.f32 %v1015, 0.0
  %v1174 = vmax.f32 %v1018, 0.0
  %v1175 = vmax.f32 %v1020, 0.0
  %v1176 = vmax.f32 %v1023, 0.0
  %v1177 = vmax.f32 %v1025, 0.0
  %v1178 = vmax.f32 %v1028, 0.0
  %v1179 = vmax.f32 %v1030, 0.0
  %v1180 = vmax.f32 %v1033, 0.0
  %v1181 = vmax.f32 %v1035, 0.0
  %v1182 = vmax.f32 %v1038, 0.0
  %v1183 = vmax.f32 %v1040, 0.0
  %v1184 = vmax.f32 %v1043, 0.0
  %v1185 = vmax.f32 %v1045, 0.0
  %v1186 = vmax.f32 %v1048, 0.0
  %v1187 = vmax.f32 %v1050, 0.0
  %v1188 = vmax.f32 %v1053, 0.0
  %v1189 = vmax.f32 %v1055, 0.0
  %v1190 = vmax.f32 %v1058, 0.0
  %v1191 = vmax.f32 %v1060, 0.0
  %v1192 = vmax.f32 %v1063, 0.0
  %v1193 = vmax.f32 %v1065, 0.0
  %v1194 = vmax.f32 %v1068, 0.0
  %v1195 = vmax.f32 %v1070, 0.0
  %v1196 = vmax.f32 %v1073, 0.0
  %v1197 = vmax.f32 %v1075, 0.0
  %v1198 = vmax.f32 %v1078, 0.0
  %v1199 = vmax.f32 %v1080, 0.0
  %v1200 = vmax.f32 %v1083, 0.0
  %v1201 = vmax.f32 %v1085, 0.0
  %v1202 = vmax.f32 %v1088, 0.0
  %v1203 = vmax.f32 %v1090, 0.0
  %v1204 = vmax.f32 %v1093, 0.0
  %v1205 = vmax.f32 %v1095, 0.0
  %v1206 = vmax.f32 %v1098, 0.0
  %v1207 = vmax.f32 %v1100, 0.0
  %v1208 = vmax.f32 %v1103, 0.0
  %v1209 = vmax.f32 %v1105, 0.0
  %v1210 = vmax.f32 %v1108, 0.0
  %v1211 = vmax.f32 %v1110, 0.0
  %v1212 = vmax.f32 %v1113, 0.0
  %v1213 = vmax.f32 %v1115, 0.0
  %v1214 = vmax.f32 %v1118, 0.0
  %v1215 = vmax.f32 %v1120, 0.0
  %v1216 = vmax.f32 %v1123, 0.0
  %v1217 = vmax.f32 %v1125, 0.0
  %v1218 = vmax.f32 %v1128, 0.0
  %v1219 = vmax.f32 %v1130, 0.0
  %v1220 = vpack.c.bf16 %v1132, %v1132
  %v1221 = vpack.c.bf16 %v1133, %v1133
  %v1222 = vpack.c.bf16 %v1134, %v1134
  %v1223 = vpack.c.bf16 %v1135, %v1135
  %v1224 = vpack.c.bf16 %v1136, %v1136
  %v1225 = vpack.c.bf16 %v1137, %v1137
  %v1226 = vpack.c.bf16 %v1138, %v1138
  %v1227 = vpack.c.bf16 %v1139, %v1139
  %v1228 = vpack.c.bf16 %v1140, %v1140
  %v1229 = vpack.c.bf16 %v1141, %v1141
  %v1230 = vpack.c.bf16 %v1142, %v1142
  %v1231 = vpack.c.bf16 %v1143, %v1143
  %v1232 = vpack.c.bf16 %v1144, %v1144
  %v1233 = vpack.c.bf16 %v1145, %v1145
  %v1234 = vpack.c.bf16 %v1146, %v1146
  %v1235 = vpack.c.bf16 %v1147, %v1147
  %v1236 = vpack.c.bf16 %v1148, %v1148
  %v1237 = vpack.c.bf16 %v1149, %v1149
  %v1238 = vpack.c.bf16 %v1150, %v1150
  %v1239 = vpack.c.bf16 %v1151, %v1151
  %v1240 = vpack.c.bf16 %v1152, %v1152
  %v1241 = vpack.c.bf16 %v1153, %v1153
  %v1242 = vpack.c.bf16 %v1154, %v1154
  %v1243 = vpack.c.bf16 %v1155, %v1155
  %v1244 = vpack.c.bf16 %v1156, %v1156
  %v1245 = vpack.c.bf16 %v1157, %v1157
  %v1246 = vpack.c.bf16 %v1158, %v1158
  %v1247 = vpack.c.bf16 %v1159, %v1159
  %v1248 = vpack.c.bf16 %v1160, %v1160
  %v1249 = vpack.c.bf16 %v1161, %v1161
  %v1250 = vpack.c.bf16 %v1162, %v1162
  %v1251 = vpack.c.bf16 %v1163, %v1163
  %v1252 = vpack.c.bf16 %v1164, %v1164
  %v1253 = vpack.c.bf16 %v1165, %v1165
  %v1254 = vpack.c.bf16 %v1166, %v1166
  %v1255 = vpack.c.bf16 %v1167, %v1167
  %v1256 = vpack.c.bf16 %v1168, %v1168
  %v1257 = vpack.c.bf16 %v1169, %v1169
  %v1258 = vpack.c.bf16 %v1170, %v1170
  %v1259 = vpack.c.bf16 %v1171, %v1171
  %v1260 = vpack.c.bf16 %v1172, %v1172
  %v1261 = vpack.c.bf16 %v1173, %v1173
  %v1262 = vpack.c.bf16 %v1174, %v1174
  %v1263 = vpack.c.bf16 %v1175, %v1175
  %v1264 = vpack.c.bf16 %v1176, %v1176
  %v1265 = vpack.c.bf16 %v1177, %v1177
  %v1266 = vpack.c.bf16 %v1178, %v1178
  %v1267 = vpack.c.bf16 %v1179, %v1179
  %v1268 = vpack.c.bf16 %v1180, %v1180
  %v1269 = vpack.c.bf16 %v1181, %v1181
  %v1270 = vpack.c.bf16 %v1182, %v1182
  %v1271 = vpack.c.bf16 %v1183, %v1183
  %v1272 = vpack.c.bf16 %v1184, %v1184
  %v1273 = vpack.c.bf16 %v1185, %v1185
  %v1274 = vpack.c.bf16 %v1186, %v1186
  %v1275 = vpack.c.bf16 %v1187, %v1187
  %v1276 = vpack.c.bf16 %v1188, %v1188
  %v1277 = vpack.c.bf16 %v1189, %v1189
  %v1278 = vpack.c.bf16 %v1190, %v1190
  %v1279 = vpack.c.bf16 %v1191, %v1191
  %v1280 = vpack.c.bf16 %v1192, %v1192
  %v1281 = vpack.c.bf16 %v1193, %v1193
  %v1282 = vpack.c.bf16 %v1194, %v1194
  %v1283 = vpack.c.bf16 %v1195, %v1195
  %v1284 = vpack.c.bf16 %v1196, %v1196
  %v1285 = vpack.c.bf16 %v1197, %v1197
  %v1286 = vpack.c.bf16 %v1198, %v1198
  %v1287 = vpack.c.bf16 %v1199, %v1199
  %v1288 = vpack.c.bf16 %v1200, %v1200
  %v1289 = vpack.c.bf16 %v1201, %v1201
  %v1290 = vpack.c.bf16 %v1202, %v1202
  %v1291 = vpack.c.bf16 %v1203, %v1203
  %v1292 = vpack.c.bf16 %v1204, %v1204
  %v1293 = vpack.c.bf16 %v1205, %v1205
  %v1294 = vpack.c.bf16 %v1206, %v1206
  %v1295 = vpack.c.bf16 %v1207, %v1207
  %v1296 = vpack.c.bf16 %v1208, %v1208
  %v1297 = vpack.c.bf16 %v1209, %v1209
  %v1298 = vpack.c.bf16 %v1210, %v1210
  %v1299 = vpack.c.bf16 %v1211, %v1211
  %v1300 = vpack.c.bf16 %v1212, %v1212
  %v1301 = vpack.c.bf16 %v1213, %v1213
  %v1302 = vpack.c.bf16 %v1214, %v1214
  %v1303 = vpack.c.bf16 %v1215, %v1215
  %v1304 = vpack.c.bf16 %v1216, %v1216
  %v1305 = vpack.c.bf16 %v1217, %v1217
  %v1306 = vpack.c.bf16 %v1218, %v1218
  %v1307 = vpack.c.bf16 %v1219, %v1219
  %1308 = vst [vmem:[%s3] sm:$0xf] %v1220
  %1309 = vst [vmem:[%s3 + $0x4] sm:$0xf] %v1221
  %1310 = vst [vmem:[%s3 + $0x8] sm:$0xf] %v1222
  %1311 = vst [vmem:[%s3 + $0xc] sm:$0xf] %v1223
  %1312 = vst [vmem:[%s3 + $0x10] sm:$0xf] %v1224
  %1313 = vst [vmem:[%s3 + $0x14] sm:$0xf] %v1225
  %1314 = vst [vmem:[%s3 + $0x18] sm:$0xf] %v1226
  %1315 = vst [vmem:[%s3 + $0x1c] sm:$0xf] %v1227
  %1316 = vst [vmem:[%s3 + $0x20] sm:$0xf] %v1228
  %1317 = vst [vmem:[%s3 + $0x24] sm:$0xf] %v1229
  %1318 = vst [vmem:[%s3 + $0x28] sm:$0xf] %v1230
  %1319 = vst [vmem:[%s3 + $0x2c] sm:$0xf] %v1231
  %1320 = vst [vmem:[%s3 + $0x30] sm:$0xf] %v1232
  %1321 = vst [vmem:[%s3 + $0x34] sm:$0xf] %v1233
  %1322 = vst [vmem:[%s3 + $0x38] sm:$0xf] %v1234
  %1323 = vst [vmem:[%s3 + $0x3c] sm:$0xf] %v1235
  %1324 = vst [vmem:[%s3 + $0x40] sm:$0xf] %v1236
  %1325 = vst [vmem:[%s3 + $0x44] sm:$0xf] %v1237
  %1326 = vst [vmem:[%s3 + $0x48] sm:$0xf] %v1238
  %1327 = vst [vmem:[%s3 + $0x4c] sm:$0xf] %v1239
  %1328 = vst [vmem:[%s3 + $0x50] sm:$0xf] %v1240
  %1329 = vst [vmem:[%s3 + $0x54] sm:$0xf] %v1241
  %1330 = vst [vmem:[%s3 + $0x58] sm:$0xf] %v1242
  %1331 = vst [vmem:[%s3 + $0x5c] sm:$0xf] %v1243
  %1332 = vst [vmem:[%s3 + $0x60] sm:$0xf] %v1244
  %1333 = vst [vmem:[%s3 + $0x64] sm:$0xf] %v1245
  %1334 = vst [vmem:[%s3 + $0x68] sm:$0xf] %v1246
  %1335 = vst [vmem:[%s3 + $0x6c] sm:$0xf] %v1247
  %1336 = vst [vmem:[%s3 + $0x70] sm:$0xf] %v1248
  %1337 = vst [vmem:[%s3 + $0x74] sm:$0xf] %v1249
  %1338 = vst [vmem:[%s3 + $0x78] sm:$0xf] %v1250
  %1339 = vst [vmem:[%s3 + $0x7c] sm:$0xf] %v1251
  %1340 = vst [vmem:[%s3 + $0x80] sm:$0xf] %v1252
  %1341 = vst [vmem:[%s3 + $0x84] sm:$0xf] %v1253
  %1342 = vst [vmem:[%s3 + $0x88] sm:$0xf] %v1254
  %1343 = vst [vmem:[%s3 + $0x8c] sm:$0xf] %v1255
  %1344 = vst [vmem:[%s3 + $0x90] sm:$0xf] %v1256
  %1345 = vst [vmem:[%s3 + $0x94] sm:$0xf] %v1257
  %1346 = vst [vmem:[%s3 + $0x98] sm:$0xf] %v1258
  %1347 = vst [vmem:[%s3 + $0x9c] sm:$0xf] %v1259
  %1348 = vst [vmem:[%s3 + $0xa0] sm:$0xf] %v1260
  %1349 = vst [vmem:[%s3 + $0xa4] sm:$0xf] %v1261
  %1350 = vst [vmem:[%s3 + $0xa8] sm:$0xf] %v1262
  %1351 = vst [vmem:[%s3 + $0xac] sm:$0xf] %v1263
  %1352 = vst [vmem:[%s3 + $0xb0] sm:$0xf] %v1264
  %1353 = vst [vmem:[%s3 + $0xb4] sm:$0xf] %v1265
  %1354 = vst [vmem:[%s3 + $0xb8] sm:$0xf] %v1266
  %1355 = vst [vmem:[%s3 + $0xbc] sm:$0xf] %v1267
  %1356 = vst [vmem:[%s3 + $0xc0] sm:$0xf] %v1268
  %1357 = vst [vmem:[%s3 + $0xc4] sm:$0xf] %v1269
  %1358 = vst [vmem:[%s3 + $0xc8] sm:$0xf] %v1270
  %1359 = vst [vmem:[%s3 + $0xcc] sm:$0xf] %v1271
  %1360 = vst [vmem:[%s3 + $0xd0] sm:$0xf] %v1272
  %1361 = vst [vmem:[%s3 + $0xd4] sm:$0xf] %v1273
  %1362 = vst [vmem:[%s3 + $0xd8] sm:$0xf] %v1274
  %1363 = vst [vmem:[%s3 + $0xdc] sm:$0xf] %v1275
  %1364 = vst [vmem:[%s3 + $0xe0] sm:$0xf] %v1276
  %1365 = vst [vmem:[%s3 + $0xe4] sm:$0xf] %v1277
  %1366 = vst [vmem:[%s3 + $0xe8] sm:$0xf] %v1278
  %1367 = vst [vmem:[%s3 + $0xec] sm:$0xf] %v1279
  %1368 = vst [vmem:[%s3 + $0xf0] sm:$0xf] %v1280
  %1369 = vst [vmem:[%s3 + $0xf4] sm:$0xf] %v1281
  %1370 = vst [vmem:[%s3 + $0xf8] sm:$0xf] %v1282
  %1371 = vst [vmem:[%s3 + $0xfc] sm:$0xf] %v1283
  %1372 = vst [vmem:[%s3 + $0x100] sm:$0xf] %v1284
  %1373 = vst [vmem:[%s3 + $0x104] sm:$0xf] %v1285
  %1374 = vst [vmem:[%s3 + $0x108] sm:$0xf] %v1286
  %1375 = vst [vmem:[%s3 + $0x10c] sm:$0xf] %v1287
  %1376 = vst [vmem:[%s3 + $0x110] sm:$0xf] %v1288
  %1377 = vst [vmem:[%s3 + $0x114] sm:$0xf] %v1289
  %1378 = vst [vmem:[%s3 + $0x118] sm:$0xf] %v1290
  %1379 = vst [vmem:[%s3 + $0x11c] sm:$0xf] %v1291
  %1380 = vst [vmem:[%s3 + $0x120] sm:$0xf] %v1292
  %1381 = vst [vmem:[%s3 + $0x124] sm:$0xf] %v1293
  %1382 = vst [vmem:[%s3 + $0x128] sm:$0xf] %v1294
  %1383 = vst [vmem:[%s3 + $0x12c] sm:$0xf] %v1295
  %1384 = vst [vmem:[%s3 + $0x130] sm:$0xf] %v1296
  %1385 = vst [vmem:[%s3 + $0x134] sm:$0xf] %v1297
  %1386 = vst [vmem:[%s3 + $0x138] sm:$0xf] %v1298
  %1387 = vst [vmem:[%s3 + $0x13c] sm:$0xf] %v1299
  %1388 = vst [vmem:[%s3 + $0x140] sm:$0xf] %v1300
  %1389 = vst [vmem:[%s3 + $0x144] sm:$0xf] %v1301
  %1390 = vst [vmem:[%s3 + $0x148] sm:$0xf] %v1302
  %1391 = vst [vmem:[%s3 + $0x14c] sm:$0xf] %v1303
  %1392 = vst [vmem:[%s3 + $0x150] sm:$0xf] %v1304
  %1393 = vst [vmem:[%s3 + $0x154] sm:$0xf] %v1305
  %1394 = vst [vmem:[%s3 + $0x158] sm:$0xf] %v1306
  %1395 = vst [vmem:[%s3 + $0x15c] sm:$0xf] %v1307
  // Predicated region
  $region14: #{cnnae_forward.5} parent=0 // pred_check
    _
  $region15: #{cnnae_forward.5} parent=0 // pred_check_branch
    %1397 = sbr.rel (0) target = $region17
  $region16: #{cnnae_forward.5} parent=0 // pred_region
    _
  $region17: #{cnnae_forward.5} parent=0 // pred_fallthru
    _
  // Predicated region
  $region18: #{cnnae_forward.5} parent=0 // pred_check
    _
  $region19: #{cnnae_forward.5} parent=0 // pred_check_branch
    %1399 = sbr.rel (0) target = $region21
  $region20: #{cnnae_forward.5} parent=0 // pred_region
    _
  $region21: #{cnnae_forward.5} parent=0 // pred_fallthru
    _

// kernel: cnnae_forward.6
$region0: #{cnnae_forward.6}
  #allocation0 [shape = 'u32[]', space=smem, size = 0x4, offset = 0x4, fixed_abs, tag = 'smem constant byte address 0x4 - core index']
  #allocation1 [shape = 'u32[72,128]{1,0:T(1,128)}', space=vmem, size = 0x9000, scoped, tag = 'internal scratch']
  %s0 = inlined_call_operand.vmem [shape: bf16[112,640], index: 0, kind: input, shape index: {}]
  %s1 = inlined_call_operand.vmem [shape: bf16[640,128], index: 1, kind: input, shape index: {}]
  %s2 = inlined_call_operand.vmem [shape: f32[1,128], index: 2, kind: input, shape index: {}]
  %s3 = inlined_call_operand.vmem [shape: bf16[112,128], index: 3, kind: output, shape index: {}]
  %s4 = sld [smem:[#allocation0]]
  $region22: #{cnnae_forward.6} parent=0
    _
  %s6 = ssub.s32 1, %s4
  %s7 = scalar_select 0, %s6, %s4
  // Predicated region
  $region2: #{cnnae_forward.6} parent=0 // pred_check
    _
  $region3: #{cnnae_forward.6} parent=0 // pred_check_branch
    %9 = sbr.rel (0) target = $region5
  $region4: #{cnnae_forward.6} parent=0 // pred_region
    _
  $region5: #{cnnae_forward.6} parent=0 // pred_fallthru
    _
  // Predicated region
  $region6: #{cnnae_forward.6} parent=0 // pred_check
    _
  $region7: #{cnnae_forward.6} parent=0 // pred_check_branch
    %11 = sbr.rel (0) target = $region9
  $region8: #{cnnae_forward.6} parent=0 // pred_region
    _
  $region9: #{cnnae_forward.6} parent=0 // pred_fallthru
    _
  // Predicated region
  $region10: #{cnnae_forward.6} parent=0 // pred_check
    _
  $region11: #{cnnae_forward.6} parent=0 // pred_check_branch
    %13 = sbr.rel (0) target = $region13
  $region12: #{cnnae_forward.6} parent=0 // pred_region
    _
  $region13: #{cnnae_forward.6} parent=0 // pred_fallthru
    _
  %v14 = vld [vmem:[%s0] sm:$0xff]
  %v15 = vld [vmem:[%s0 + $0x8] sm:$0xff]
  %v16 = vld [vmem:[%s0 + $0x10] sm:$0xf]
  %v17 = vld [vmem:[%s0 + $0x14] sm:$0xff]
  %v18 = vld [vmem:[%s0 + $0x1c] sm:$0xff]
  %v19 = vld [vmem:[%s0 + $0x24] sm:$0xf]
  %v20 = vld [vmem:[%s0 + $0x28] sm:$0xff]
  %v21 = vld [vmem:[%s0 + $0x30] sm:$0xff]
  %v22 = vld [vmem:[%s0 + $0x38] sm:$0xf]
  %v23 = vld [vmem:[%s0 + $0x3c] sm:$0xff]
  %v24 = vld [vmem:[%s0 + $0x44] sm:$0xff]
  %v25 = vld [vmem:[%s0 + $0x4c] sm:$0xf]
  %v26 = vld [vmem:[%s0 + $0x50] sm:$0xff]
  %v27 = vld [vmem:[%s0 + $0x58] sm:$0xff]
  %v28 = vld [vmem:[%s0 + $0x60] sm:$0xf]
  %v29 = vld [vmem:[%s0 + $0x64] sm:$0xff]
  %v30 = vld [vmem:[%s0 + $0x6c] sm:$0xff]
  %v31 = vld [vmem:[%s0 + $0x74] sm:$0xf]
  %v32 = vld [vmem:[%s0 + $0x78] sm:$0xff]
  %v33 = vld [vmem:[%s0 + $0x80] sm:$0xff]
  %v34 = vld [vmem:[%s0 + $0x88] sm:$0xf]
  %v35 = vld [vmem:[%s0 + $0x8c] sm:$0xff]
  %v36 = vld [vmem:[%s0 + $0x94] sm:$0xff]
  %v37 = vld [vmem:[%s0 + $0x9c] sm:$0xf]
  %v38 = vld [vmem:[%s0 + $0xa0] sm:$0xff]
  %v39 = vld [vmem:[%s0 + $0xa8] sm:$0xff]
  %v40 = vld [vmem:[%s0 + $0xb0] sm:$0xf]
  %v41 = vld [vmem:[%s0 + $0xb4] sm:$0xff]
  %v42 = vld [vmem:[%s0 + $0xbc] sm:$0xff]
  %v43 = vld [vmem:[%s0 + $0xc4] sm:$0xf]
  %v44 = vld [vmem:[%s0 + $0xc8] sm:$0xff]
  %v45 = vld [vmem:[%s0 + $0xd0] sm:$0xff]
  %v46 = vld [vmem:[%s0 + $0xd8] sm:$0xf]
  %v47 = vld [vmem:[%s0 + $0xdc] sm:$0xff]
  %v48 = vld [vmem:[%s0 + $0xe4] sm:$0xff]
  %v49 = vld [vmem:[%s0 + $0xec] sm:$0xf]
  %v50 = vld [vmem:[%s0 + $0xf0] sm:$0xff]
  %v51 = vld [vmem:[%s0 + $0xf8] sm:$0xff]
  %v52 = vld [vmem:[%s0 + $0x100] sm:$0xf]
  %v53 = vld [vmem:[%s0 + $0x104] sm:$0xff]
  %v54 = vld [vmem:[%s0 + $0x10c] sm:$0xff]
  %v55 = vld [vmem:[%s0 + $0x114] sm:$0xf]
  %v56 = vld [vmem:[%s1] sm:$0xf]
  %v57 = vld [vmem:[%s1 + $0x4] sm:$0xf]
  %v58 = vld [vmem:[%s1 + $0x8] sm:$0xf]
  %v59 = vld [vmem:[%s1 + $0xc] sm:$0xf]
  %v60 = vld [vmem:[%s1 + $0x10] sm:$0xf]
  %v61 = vld [vmem:[%s1 + $0x14] sm:$0xf]
  %v62 = vld [vmem:[%s1 + $0x18] sm:$0xf]
  %v63 = vld [vmem:[%s1 + $0x1c] sm:$0xf]
  %v64 = vld [vmem:[%s1 + $0x20] sm:$0xf]
  %v65 = vld [vmem:[%s1 + $0x24] sm:$0xf]
  %v66 = vld [vmem:[%s1 + $0x28] sm:$0xf]
  %v67 = vld [vmem:[%s1 + $0x2c] sm:$0xf]
  %v68 = vld [vmem:[%s1 + $0x30] sm:$0xf]
  %v69 = vld [vmem:[%s1 + $0x34] sm:$0xf]
  %v70 = vld [vmem:[%s1 + $0x38] sm:$0xf]
  %v71 = vld [vmem:[%s1 + $0x3c] sm:$0xf]
  %v72 = vld [vmem:[%s1 + $0x40] sm:$0xf]
  %v73 = vld [vmem:[%s1 + $0x44] sm:$0xf]
  %v74 = vld [vmem:[%s1 + $0x48] sm:$0xf]
  %v75 = vld [vmem:[%s1 + $0x4c] sm:$0xf]
  %v76 = vld [vmem:[%s1 + $0x50] sm:$0xf]
  %v77 = vld [vmem:[%s1 + $0x54] sm:$0xf]
  %v78 = vld [vmem:[%s1 + $0x58] sm:$0xf]
  %v79 = vld [vmem:[%s1 + $0x5c] sm:$0xf]
  %v80 = vld [vmem:[%s1 + $0x60] sm:$0xf]
  %v81 = vld [vmem:[%s1 + $0x64] sm:$0xf]
  %v82 = vld [vmem:[%s1 + $0x68] sm:$0xf]
  %v83 = vld [vmem:[%s1 + $0x6c] sm:$0xf]
  %v84 = vld [vmem:[%s1 + $0x70] sm:$0xf]
  %v85 = vld [vmem:[%s1 + $0x74] sm:$0xf]
  %v86 = vld [vmem:[%s1 + $0x78] sm:$0xf]
  %v87 = vld [vmem:[%s1 + $0x7c] sm:$0xf]
  %v88 = vld [vmem:[%s1 + $0x80] sm:$0xf]
  %v89 = vld [vmem:[%s1 + $0x84] sm:$0xf]
  %v90 = vld [vmem:[%s1 + $0x88] sm:$0xf]
  %v91 = vld [vmem:[%s1 + $0x8c] sm:$0xf]
  %v92 = vld [vmem:[%s1 + $0x90] sm:$0xf]
  %v93 = vld [vmem:[%s1 + $0x94] sm:$0xf]
  %v94 = vld [vmem:[%s1 + $0x98] sm:$0xf]
  %v95 = vld [vmem:[%s1 + $0x9c] sm:$0xf]
  %v96 = vld [vmem:[%s1 + $0xa0] sm:$0xf]
  %v97 = vld [vmem:[%s1 + $0xa4] sm:$0xf]
  %v98 = vld [vmem:[%s1 + $0xa8] sm:$0xf]
  %v99 = vld [vmem:[%s1 + $0xac] sm:$0xf]
  %v100 = vld [vmem:[%s1 + $0xb0] sm:$0xf]
  %v101 = vld [vmem:[%s1 + $0xb4] sm:$0xf]
  %v102 = vld [vmem:[%s1 + $0xb8] sm:$0xf]
  %v103 = vld [vmem:[%s1 + $0xbc] sm:$0xf]
  %v104 = vld [vmem:[%s1 + $0xc0] sm:$0xf]
  %v105 = vld [vmem:[%s1 + $0xc4] sm:$0xf]
  %v106 = vld [vmem:[%s1 + $0xc8] sm:$0xf]
  %v107 = vld [vmem:[%s1 + $0xcc] sm:$0xf]
  %v108 = vld [vmem:[%s1 + $0xd0] sm:$0xf]
  %v109 = vld [vmem:[%s1 + $0xd4] sm:$0xf]
  %v110 = vld [vmem:[%s1 + $0xd8] sm:$0xf]
  %v111 = vld [vmem:[%s1 + $0xdc] sm:$0xf]
  %v112 = vld [vmem:[%s1 + $0xe0] sm:$0xf]
  %v113 = vld [vmem:[%s1 + $0xe4] sm:$0xf]
  %v114 = vld [vmem:[%s1 + $0xe8] sm:$0xf]
  %v115 = vld [vmem:[%s1 + $0xec] sm:$0xf]
  %v116 = vld [vmem:[%s1 + $0xf0] sm:$0xf]
  %v117 = vld [vmem:[%s1 + $0xf4] sm:$0xf]
  %v118 = vld [vmem:[%s1 + $0xf8] sm:$0xf]
  %v119 = vld [vmem:[%s1 + $0xfc] sm:$0xf]
  %v120 = vld [vmem:[%s1 + $0x100] sm:$0xf]
  %v121 = vld [vmem:[%s1 + $0x104] sm:$0xf]
  %v122 = vld [vmem:[%s1 + $0x108] sm:$0xf]
  %v123 = vld [vmem:[%s1 + $0x10c] sm:$0xf]
  %v124 = vld [vmem:[%s1 + $0x110] sm:$0xf]
  %v125 = vld [vmem:[%s1 + $0x114] sm:$0xf]
  %v126 = vld [vmem:[%s1 + $0x118] sm:$0xf]
  %v127 = vld [vmem:[%s1 + $0x11c] sm:$0xf]
  %v128 = vld [vmem:[%s1 + $0x120] sm:$0xf]
  %v129 = vld [vmem:[%s1 + $0x124] sm:$0xf]
  %v130 = vld [vmem:[%s1 + $0x128] sm:$0xf]
  %v131 = vld [vmem:[%s1 + $0x12c] sm:$0xf]
  %v132 = vld [vmem:[%s1 + $0x130] sm:$0xf]
  %v133 = vld [vmem:[%s1 + $0x134] sm:$0xf]
  %v134 = vld [vmem:[%s1 + $0x138] sm:$0xf]
  %v135 = vld [vmem:[%s1 + $0x13c] sm:$0xf]
  %v136 = vld [vmem:[%s2] sm:$0x1]
  %v138 = vperm.slane %v136, 0
  %v182 = vunpack.c.l.b16 %v14
  %v183 = vunpack.c.h.b16 %v14
  %v184 = vunpack.c.l.b16 %v15
  %v185 = vunpack.c.h.b16 %v15
  %v186 = vunpack.c.l.b16 %v16
  %v187 = vunpack.c.l.b16 %v17
  %v188 = vunpack.c.h.b16 %v17
  %v189 = vunpack.c.l.b16 %v18
  %v190 = vunpack.c.h.b16 %v18
  %v191 = vunpack.c.l.b16 %v19
  %v192 = vunpack.c.l.b16 %v20
  %v193 = vunpack.c.h.b16 %v20
  %v194 = vunpack.c.l.b16 %v21
  %v195 = vunpack.c.h.b16 %v21
  %v196 = vunpack.c.l.b16 %v22
  %v197 = vunpack.c.l.b16 %v23
  %v198 = vunpack.c.h.b16 %v23
  %v199 = vunpack.c.l.b16 %v24
  %v200 = vunpack.c.h.b16 %v24
  %v201 = vunpack.c.l.b16 %v25
  %v202 = vunpack.c.l.b16 %v26
  %v203 = vunpack.c.h.b16 %v26
  %v204 = vunpack.c.l.b16 %v27
  %v205 = vunpack.c.h.b16 %v27
  %v206 = vunpack.c.l.b16 %v28
  %v207 = vunpack.c.l.b16 %v29
  %v208 = vunpack.c.h.b16 %v29
  %v209 = vunpack.c.l.b16 %v30
  %v210 = vunpack.c.h.b16 %v30
  %v211 = vunpack.c.l.b16 %v31
  %v212 = vunpack.c.l.b16 %v32
  %v213 = vunpack.c.h.b16 %v32
  %v214 = vunpack.c.l.b16 %v33
  %v215 = vunpack.c.h.b16 %v33
  %v216 = vunpack.c.l.b16 %v34
  %v217 = vunpack.c.l.b16 %v35
  %v218 = vunpack.c.h.b16 %v35
  %v219 = vunpack.c.l.b16 %v36
  %v220 = vunpack.c.h.b16 %v36
  %v221 = vunpack.c.l.b16 %v37
  %v222 = vunpack.c.l.b16 %v38
  %v223 = vunpack.c.h.b16 %v38
  %v224 = vunpack.c.l.b16 %v39
  %v225 = vunpack.c.h.b16 %v39
  %v226 = vunpack.c.l.b16 %v40
  %v227 = vunpack.c.l.b16 %v41
  %v228 = vunpack.c.h.b16 %v41
  %v229 = vunpack.c.l.b16 %v42
  %v230 = vunpack.c.h.b16 %v42
  %v231 = vunpack.c.l.b16 %v43
  %v232 = vunpack.c.l.b16 %v44
  %v233 = vunpack.c.h.b16 %v44
  %v234 = vunpack.c.l.b16 %v45
  %v235 = vunpack.c.h.b16 %v45
  %v236 = vunpack.c.l.b16 %v46
  %v237 = vunpack.c.l.b16 %v47
  %v238 = vunpack.c.h.b16 %v47
  %v239 = vunpack.c.l.b16 %v48
  %v240 = vunpack.c.h.b16 %v48
  %v241 = vunpack.c.l.b16 %v49
  %v242 = vunpack.c.l.b16 %v50
  %v243 = vunpack.c.h.b16 %v50
  %v244 = vunpack.c.l.b16 %v51
  %v245 = vunpack.c.h.b16 %v51
  %v246 = vunpack.c.l.b16 %v52
  %v247 = vunpack.c.l.b16 %v53
  %v248 = vunpack.c.h.b16 %v53
  %v249 = vunpack.c.l.b16 %v54
  %v250 = vunpack.c.h.b16 %v54
  %v251 = vunpack.c.l.b16 %v55
  %v252 = vpack.c.b16 %v187, %v182
  %v253 = vpack.c.b16 %v188, %v183
  %v254 = vpack.c.b16 %v189, %v184
  %v255 = vpack.c.b16 %v190, %v185
  %v256 = vpack.c.b16 %v191, %v186
  %v257 = vpack.c.b16 %v197, %v192
  %v258 = vpack.c.b16 %v198, %v193
  %v259 = vpack.c.b16 %v199, %v194
  %v260 = vpack.c.b16 %v200, %v195
  %v261 = vpack.c.b16 %v201, %v196
  %v262 = vpack.c.b16 %v207, %v202
  %v263 = vpack.c.b16 %v208, %v203
  %v264 = vpack.c.b16 %v209, %v204
  %v265 = vpack.c.b16 %v210, %v205
  %v266 = vpack.c.b16 %v211, %v206
  %v267 = vpack.c.b16 %v217, %v212
  %v268 = vpack.c.b16 %v218, %v213
  %v269 = vpack.c.b16 %v219, %v214
  %v270 = vpack.c.b16 %v220, %v215
  %v271 = vpack.c.b16 %v221, %v216
  %v272 = vpack.c.b16 %v227, %v222
  %v273 = vpack.c.b16 %v228, %v223
  %v274 = vpack.c.b16 %v229, %v224
  %v275 = vpack.c.b16 %v230, %v225
  %v276 = vpack.c.b16 %v231, %v226
  %v277 = vpack.c.b16 %v237, %v232
  %v278 = vpack.c.b16 %v238, %v233
  %v279 = vpack.c.b16 %v239, %v234
  %v280 = vpack.c.b16 %v240, %v235
  %v281 = vpack.c.b16 %v241, %v236
  %v282 = vpack.c.b16 %v247, %v242
  %v283 = vpack.c.b16 %v248, %v243
  %v284 = vpack.c.b16 %v249, %v244
  %v285 = vpack.c.b16 %v250, %v245
  %v286 = vpack.c.b16 %v251, %v246
  %v402 = vunpack.c.l.b16 %v56
  %v403 = vunpack.c.l.b16 %v57
  %v404 = vunpack.c.l.b16 %v58
  %v405 = vunpack.c.l.b16 %v59
  %v406 = vunpack.c.l.b16 %v60
  %v407 = vunpack.c.l.b16 %v61
  %v408 = vunpack.c.l.b16 %v62
  %v409 = vunpack.c.l.b16 %v63
  %v410 = vunpack.c.l.b16 %v64
  %v411 = vunpack.c.l.b16 %v65
  %v412 = vunpack.c.l.b16 %v66
  %v413 = vunpack.c.l.b16 %v67
  %v414 = vunpack.c.l.b16 %v68
  %v415 = vunpack.c.l.b16 %v69
  %v416 = vunpack.c.l.b16 %v70
  %v417 = vunpack.c.l.b16 %v71
  %v418 = vunpack.c.l.b16 %v72
  %v419 = vunpack.c.l.b16 %v73
  %v420 = vunpack.c.l.b16 %v74
  %v421 = vunpack.c.l.b16 %v75
  %v422 = vunpack.c.l.b16 %v76
  %v423 = vunpack.c.l.b16 %v77
  %v424 = vunpack.c.l.b16 %v78
  %v425 = vunpack.c.l.b16 %v79
  %v426 = vunpack.c.l.b16 %v80
  %v427 = vunpack.c.l.b16 %v81
  %v428 = vunpack.c.l.b16 %v82
  %v429 = vunpack.c.l.b16 %v83
  %v430 = vunpack.c.l.b16 %v84
  %v431 = vunpack.c.l.b16 %v85
  %v432 = vunpack.c.l.b16 %v86
  %v433 = vunpack.c.l.b16 %v87
  %v434 = vunpack.c.l.b16 %v88
  %v435 = vunpack.c.l.b16 %v89
  %v436 = vunpack.c.l.b16 %v90
  %v437 = vunpack.c.l.b16 %v91
  %v438 = vunpack.c.l.b16 %v92
  %v439 = vunpack.c.l.b16 %v93
  %v440 = vunpack.c.l.b16 %v94
  %v441 = vunpack.c.l.b16 %v95
  %v442 = vunpack.c.l.b16 %v96
  %v443 = vunpack.c.l.b16 %v97
  %v444 = vunpack.c.l.b16 %v98
  %v445 = vunpack.c.l.b16 %v99
  %v446 = vunpack.c.l.b16 %v100
  %v447 = vunpack.c.l.b16 %v101
  %v448 = vunpack.c.l.b16 %v102
  %v449 = vunpack.c.l.b16 %v103
  %v450 = vunpack.c.l.b16 %v104
  %v451 = vunpack.c.l.b16 %v105
  %v452 = vunpack.c.l.b16 %v106
  %v453 = vunpack.c.l.b16 %v107
  %v454 = vunpack.c.l.b16 %v108
  %v455 = vunpack.c.l.b16 %v109
  %v456 = vunpack.c.l.b16 %v110
  %v457 = vunpack.c.l.b16 %v111
  %v458 = vunpack.c.l.b16 %v112
  %v459 = vunpack.c.l.b16 %v113
  %v460 = vunpack.c.l.b16 %v114
  %v461 = vunpack.c.l.b16 %v115
  %v462 = vunpack.c.l.b16 %v116
  %v463 = vunpack.c.l.b16 %v117
  %v464 = vunpack.c.l.b16 %v118
  %v465 = vunpack.c.l.b16 %v119
  %v466 = vunpack.c.l.b16 %v120
  %v467 = vunpack.c.l.b16 %v121
  %v468 = vunpack.c.l.b16 %v122
  %v469 = vunpack.c.l.b16 %v123
  %v470 = vunpack.c.l.b16 %v124
  %v471 = vunpack.c.l.b16 %v125
  %v472 = vunpack.c.l.b16 %v126
  %v473 = vunpack.c.l.b16 %v127
  %v474 = vunpack.c.l.b16 %v128
  %v475 = vunpack.c.l.b16 %v129
  %v476 = vunpack.c.l.b16 %v130
  %v477 = vunpack.c.l.b16 %v131
  %v478 = vunpack.c.l.b16 %v132
  %v479 = vunpack.c.l.b16 %v133
  %v480 = vunpack.c.l.b16 %v134
  %v481 = vunpack.c.l.b16 %v135
  %v482 = vpack.c.b16 %v403, %v402
  %v483 = vpack.c.b16 %v405, %v404
  %v484 = vpack.c.b16 %v407, %v406
  %v485 = vpack.c.b16 %v409, %v408
  %v486 = vpack.c.b16 %v411, %v410
  %v487 = vpack.c.b16 %v413, %v412
  %v488 = vpack.c.b16 %v415, %v414
  %v489 = vpack.c.b16 %v417, %v416
  %v490 = vpack.c.b16 %v419, %v418
  %v491 = vpack.c.b16 %v421, %v420
  %v492 = vpack.c.b16 %v423, %v422
  %v493 = vpack.c.b16 %v425, %v424
  %v494 = vpack.c.b16 %v427, %v426
  %v495 = vpack.c.b16 %v429, %v428
  %v496 = vpack.c.b16 %v431, %v430
  %v497 = vpack.c.b16 %v433, %v432
  %v498 = vpack.c.b16 %v435, %v434
  %v499 = vpack.c.b16 %v437, %v436
  %v500 = vpack.c.b16 %v439, %v438
  %v501 = vpack.c.b16 %v441, %v440
  %v502 = vpack.c.b16 %v443, %v442
  %v503 = vpack.c.b16 %v445, %v444
  %v504 = vpack.c.b16 %v447, %v446
  %v505 = vpack.c.b16 %v449, %v448
  %v506 = vpack.c.b16 %v451, %v450
  %v507 = vpack.c.b16 %v453, %v452
  %v508 = vpack.c.b16 %v455, %v454
  %v509 = vpack.c.b16 %v457, %v456
  %v510 = vpack.c.b16 %v459, %v458
  %v511 = vpack.c.b16 %v461, %v460
  %v512 = vpack.c.b16 %v463, %v462
  %v513 = vpack.c.b16 %v465, %v464
  %v514 = vpack.c.b16 %v467, %v466
  %v515 = vpack.c.b16 %v469, %v468
  %v516 = vpack.c.b16 %v471, %v470
  %v517 = vpack.c.b16 %v473, %v472
  %v518 = vpack.c.b16 %v475, %v474
  %v519 = vpack.c.b16 %v477, %v476
  %v520 = vpack.c.b16 %v479, %v478
  %v521 = vpack.c.b16 %v481, %v480
  %562 = vmatpush.bf16.msra.mxu0 %v489
  %563 = vmatpush.bf16.msra.mxu0 %v488
  %564 = vmatpush.bf16.msra.mxu0 %v487
  %565 = vmatpush.bf16.msra.mxu0 %v486
  %566 = vmatpush.bf16.msra.mxu0 %v485
  %567 = vmatpush.bf16.msra.mxu0 %v484
  %568 = vmatpush.bf16.msra.mxu0 %v483
  %569 = vmatpush.bf16.msra.mxu0 %v482
  %570 = vmatmul.bf16.gmra.mxu0 %v252
  %v571 = vpop.f32.mrf.mxu0
  %v572 = vadd.f32 %v138, %v571
  %v573 = vpop.f32.mrf.mxu0
  %v574 = vadd.f32 %v138, %v573
  %575 = vmatmul.bf16.gmra.mxu0 %v257
  %v576 = vpop.f32.mrf.mxu0
  %v577 = vadd.f32 %v138, %v576
  %v578 = vpop.f32.mrf.mxu0
  %v579 = vadd.f32 %v138, %v578
  %580 = vmatmul.bf16.gmra.mxu0 %v262
  %v581 = vpop.f32.mrf.mxu0
  %v582 = vadd.f32 %v138, %v581
  %v583 = vpop.f32.mrf.mxu0
  %v584 = vadd.f32 %v138, %v583
  %585 = vmatmul.bf16.gmra.mxu0 %v267
  %v586 = vpop.f32.mrf.mxu0
  %v587 = vadd.f32 %v138, %v586
  %v588 = vpop.f32.mrf.mxu0
  %v589 = vadd.f32 %v138, %v588
  %590 = vmatmul.bf16.gmra.mxu0 %v272
  %v591 = vpop.f32.mrf.mxu0
  %v592 = vadd.f32 %v138, %v591
  %v593 = vpop.f32.mrf.mxu0
  %v594 = vadd.f32 %v138, %v593
  %595 = vmatmul.bf16.gmra.mxu0 %v277
  %v596 = vpop.f32.mrf.mxu0
  %v597 = vadd.f32 %v138, %v596
  %v598 = vpop.f32.mrf.mxu0
  %v599 = vadd.f32 %v138, %v598
  %600 = vmatmul.bf16.gmra.mxu0 %v282
  %v601 = vpop.f32.mrf.mxu0
  %v602 = vadd.f32 %v138, %v601
  %v603 = vpop.f32.mrf.mxu0
  %v604 = vadd.f32 %v138, %v603
  %605 = vdwg.mxu0
  %606 = vmatpush.bf16.msra.mxu0 %v497
  %607 = vmatpush.bf16.msra.mxu0 %v496
  %608 = vmatpush.bf16.msra.mxu0 %v495
  %609 = vmatpush.bf16.msra.mxu0 %v494
  %610 = vmatpush.bf16.msra.mxu0 %v493
  %611 = vmatpush.bf16.msra.mxu0 %v492
  %612 = vmatpush.bf16.msra.mxu0 %v491
  %613 = vmatpush.bf16.msra.mxu0 %v490
  %614 = vmatmul.bf16.gmra.mxu0 %v253
  %v615 = vpop.f32.mrf.mxu0
  %v616 = vadd.f32 %v572, %v615
  %v617 = vpop.f32.mrf.mxu0
  %v618 = vadd.f32 %v574, %v617
  %619 = vmatmul.bf16.gmra.mxu0 %v258
  %v620 = vpop.f32.mrf.mxu0
  %v621 = vadd.f32 %v577, %v620
  %v622 = vpop.f32.mrf.mxu0
  %v623 = vadd.f32 %v579, %v622
  %624 = vmatmul.bf16.gmra.mxu0 %v263
  %v625 = vpop.f32.mrf.mxu0
  %v626 = vadd.f32 %v582, %v625
  %v627 = vpop.f32.mrf.mxu0
  %v628 = vadd.f32 %v584, %v627
  %629 = vmatmul.bf16.gmra.mxu0 %v268
  %v630 = vpop.f32.mrf.mxu0
  %v631 = vadd.f32 %v587, %v630
  %v632 = vpop.f32.mrf.mxu0
  %v633 = vadd.f32 %v589, %v632
  %634 = vmatmul.bf16.gmra.mxu0 %v273
  %v635 = vpop.f32.mrf.mxu0
  %v636 = vadd.f32 %v592, %v635
  %v637 = vpop.f32.mrf.mxu0
  %v638 = vadd.f32 %v594, %v637
  %639 = vmatmul.bf16.gmra.mxu0 %v278
  %v640 = vpop.f32.mrf.mxu0
  %v641 = vadd.f32 %v597, %v640
  %v642 = vpop.f32.mrf.mxu0
  %v643 = vadd.f32 %v599, %v642
  %644 = vmatmul.bf16.gmra.mxu0 %v283
  %v645 = vpop.f32.mrf.mxu0
  %v646 = vadd.f32 %v602, %v645
  %v647 = vpop.f32.mrf.mxu0
  %v648 = vadd.f32 %v604, %v647
  %649 = vdwg.mxu0
  %650 = vmatpush.bf16.msra.mxu0 %v505
  %651 = vmatpush.bf16.msra.mxu0 %v504
  %652 = vmatpush.bf16.msra.mxu0 %v503
  %653 = vmatpush.bf16.msra.mxu0 %v502
  %654 = vmatpush.bf16.msra.mxu0 %v501
  %655 = vmatpush.bf16.msra.mxu0 %v500
  %656 = vmatpush.bf16.msra.mxu0 %v499
  %657 = vmatpush.bf16.msra.mxu0 %v498
  %658 = vmatmul.bf16.gmra.mxu0 %v254
  %v659 = vpop.f32.mrf.mxu0
  %v660 = vadd.f32 %v616, %v659
  %v661 = vpop.f32.mrf.mxu0
  %v662 = vadd.f32 %v618, %v661
  %663 = vmatmul.bf16.gmra.mxu0 %v259
  %v664 = vpop.f32.mrf.mxu0
  %v665 = vadd.f32 %v621, %v664
  %v666 = vpop.f32.mrf.mxu0
  %v667 = vadd.f32 %v623, %v666
  %668 = vmatmul.bf16.gmra.mxu0 %v264
  %v669 = vpop.f32.mrf.mxu0
  %v670 = vadd.f32 %v626, %v669
  %v671 = vpop.f32.mrf.mxu0
  %v672 = vadd.f32 %v628, %v671
  %673 = vmatmul.bf16.gmra.mxu0 %v269
  %v674 = vpop.f32.mrf.mxu0
  %v675 = vadd.f32 %v631, %v674
  %v676 = vpop.f32.mrf.mxu0
  %v677 = vadd.f32 %v633, %v676
  %678 = vmatmul.bf16.gmra.mxu0 %v274
  %v679 = vpop.f32.mrf.mxu0
  %v680 = vadd.f32 %v636, %v679
  %v681 = vpop.f32.mrf.mxu0
  %v682 = vadd.f32 %v638, %v681
  %683 = vmatmul.bf16.gmra.mxu0 %v279
  %v684 = vpop.f32.mrf.mxu0
  %v685 = vadd.f32 %v641, %v684
  %v686 = vpop.f32.mrf.mxu0
  %v687 = vadd.f32 %v643, %v686
  %688 = vmatmul.bf16.gmra.mxu0 %v284
  %v689 = vpop.f32.mrf.mxu0
  %v690 = vadd.f32 %v646, %v689
  %v691 = vpop.f32.mrf.mxu0
  %v692 = vadd.f32 %v648, %v691
  %693 = vdwg.mxu0
  %694 = vmatpush.bf16.msra.mxu0 %v513
  %695 = vmatpush.bf16.msra.mxu0 %v512
  %696 = vmatpush.bf16.msra.mxu0 %v511
  %697 = vmatpush.bf16.msra.mxu0 %v510
  %698 = vmatpush.bf16.msra.mxu0 %v509
  %699 = vmatpush.bf16.msra.mxu0 %v508
  %700 = vmatpush.bf16.msra.mxu0 %v507
  %701 = vmatpush.bf16.msra.mxu0 %v506
  %702 = vmatmul.bf16.gmra.mxu0 %v255
  %v703 = vpop.f32.mrf.mxu0
  %v704 = vadd.f32 %v660, %v703
  %v705 = vpop.f32.mrf.mxu0
  %v706 = vadd.f32 %v662, %v705
  %707 = vmatmul.bf16.gmra.mxu0 %v260
  %v708 = vpop.f32.mrf.mxu0
  %v709 = vadd.f32 %v665, %v708
  %v710 = vpop.f32.mrf.mxu0
  %v711 = vadd.f32 %v667, %v710
  %712 = vmatmul.bf16.gmra.mxu0 %v265
  %v713 = vpop.f32.mrf.mxu0
  %v714 = vadd.f32 %v670, %v713
  %v715 = vpop.f32.mrf.mxu0
  %v716 = vadd.f32 %v672, %v715
  %717 = vmatmul.bf16.gmra.mxu0 %v270
  %v718 = vpop.f32.mrf.mxu0
  %v719 = vadd.f32 %v675, %v718
  %v720 = vpop.f32.mrf.mxu0
  %v721 = vadd.f32 %v677, %v720
  %722 = vmatmul.bf16.gmra.mxu0 %v275
  %v723 = vpop.f32.mrf.mxu0
  %v724 = vadd.f32 %v680, %v723
  %v725 = vpop.f32.mrf.mxu0
  %v726 = vadd.f32 %v682, %v725
  %727 = vmatmul.bf16.gmra.mxu0 %v280
  %v728 = vpop.f32.mrf.mxu0
  %v729 = vadd.f32 %v685, %v728
  %v730 = vpop.f32.mrf.mxu0
  %v731 = vadd.f32 %v687, %v730
  %732 = vmatmul.bf16.gmra.mxu0 %v285
  %v733 = vpop.f32.mrf.mxu0
  %v734 = vadd.f32 %v690, %v733
  %v735 = vpop.f32.mrf.mxu0
  %v736 = vadd.f32 %v692, %v735
  %737 = vdwg.mxu0
  %738 = vmatpush.bf16.msra.mxu0 %v521
  %739 = vmatpush.bf16.msra.mxu0 %v520
  %740 = vmatpush.bf16.msra.mxu0 %v519
  %741 = vmatpush.bf16.msra.mxu0 %v518
  %742 = vmatpush.bf16.msra.mxu0 %v517
  %743 = vmatpush.bf16.msra.mxu0 %v516
  %744 = vmatpush.bf16.msra.mxu0 %v515
  %745 = vmatpush.bf16.msra.mxu0 %v514
  %746 = vmatmul.bf16.gmra.mxu0 %v256
  %v747 = vpop.f32.mrf.mxu0
  %v748 = vadd.f32 %v704, %v747
  %v749 = vpop.f32.mrf.mxu0
  %v750 = vadd.f32 %v706, %v749
  %751 = vmatmul.bf16.gmra.mxu0 %v261
  %v752 = vpop.f32.mrf.mxu0
  %v753 = vadd.f32 %v709, %v752
  %v754 = vpop.f32.mrf.mxu0
  %v755 = vadd.f32 %v711, %v754
  %756 = vmatmul.bf16.gmra.mxu0 %v266
  %v757 = vpop.f32.mrf.mxu0
  %v758 = vadd.f32 %v714, %v757
  %v759 = vpop.f32.mrf.mxu0
  %v760 = vadd.f32 %v716, %v759
  %761 = vmatmul.bf16.gmra.mxu0 %v271
  %v762 = vpop.f32.mrf.mxu0
  %v763 = vadd.f32 %v719, %v762
  %v764 = vpop.f32.mrf.mxu0
  %v765 = vadd.f32 %v721, %v764
  %766 = vmatmul.bf16.gmra.mxu0 %v276
  %v767 = vpop.f32.mrf.mxu0
  %v768 = vadd.f32 %v724, %v767
  %v769 = vpop.f32.mrf.mxu0
  %v770 = vadd.f32 %v726, %v769
  %771 = vmatmul.bf16.gmra.mxu0 %v281
  %v772 = vpop.f32.mrf.mxu0
  %v773 = vadd.f32 %v729, %v772
  %v774 = vpop.f32.mrf.mxu0
  %v775 = vadd.f32 %v731, %v774
  %776 = vmatmul.bf16.gmra.mxu0 %v286
  %v777 = vpop.f32.mrf.mxu0
  %v778 = vadd.f32 %v734, %v777
  %v779 = vpop.f32.mrf.mxu0
  %v780 = vadd.f32 %v736, %v779
  %781 = vdwg.mxu0
  %v782 = vmax.f32 %v748, 0.0
  %v783 = vmax.f32 %v750, 0.0
  %v784 = vmax.f32 %v753, 0.0
  %v785 = vmax.f32 %v755, 0.0
  %v786 = vmax.f32 %v758, 0.0
  %v787 = vmax.f32 %v760, 0.0
  %v788 = vmax.f32 %v763, 0.0
  %v789 = vmax.f32 %v765, 0.0
  %v790 = vmax.f32 %v768, 0.0
  %v791 = vmax.f32 %v770, 0.0
  %v792 = vmax.f32 %v773, 0.0
  %v793 = vmax.f32 %v775, 0.0
  %v794 = vmax.f32 %v778, 0.0
  %v795 = vmax.f32 %v780, 0.0
  %v796 = vpack.c.bf16 %v782, %v782
  %v797 = vpack.c.bf16 %v783, %v783
  %v798 = vpack.c.bf16 %v784, %v784
  %v799 = vpack.c.bf16 %v785, %v785
  %v800 = vpack.c.bf16 %v786, %v786
  %v801 = vpack.c.bf16 %v787, %v787
  %v802 = vpack.c.bf16 %v788, %v788
  %v803 = vpack.c.bf16 %v789, %v789
  %v804 = vpack.c.bf16 %v790, %v790
  %v805 = vpack.c.bf16 %v791, %v791
  %v806 = vpack.c.bf16 %v792, %v792
  %v807 = vpack.c.bf16 %v793, %v793
  %v808 = vpack.c.bf16 %v794, %v794
  %v809 = vpack.c.bf16 %v795, %v795
  %810 = vst [vmem:[%s3] sm:$0xf] %v796
  %811 = vst [vmem:[%s3 + $0x4] sm:$0xf] %v797
  %812 = vst [vmem:[%s3 + $0x8] sm:$0xf] %v798
  %813 = vst [vmem:[%s3 + $0xc] sm:$0xf] %v799
  %814 = vst [vmem:[%s3 + $0x10] sm:$0xf] %v800
  %815 = vst [vmem:[%s3 + $0x14] sm:$0xf] %v801
  %816 = vst [vmem:[%s3 + $0x18] sm:$0xf] %v802
  %817 = vst [vmem:[%s3 + $0x1c] sm:$0xf] %v803
  %818 = vst [vmem:[%s3 + $0x20] sm:$0xf] %v804
  %819 = vst [vmem:[%s3 + $0x24] sm:$0xf] %v805
  %820 = vst [vmem:[%s3 + $0x28] sm:$0xf] %v806
  %821 = vst [vmem:[%s3 + $0x2c] sm:$0xf] %v807
  %822 = vst [vmem:[%s3 + $0x30] sm:$0xf] %v808
  %823 = vst [vmem:[%s3 + $0x34] sm:$0xf] %v809
  // Predicated region
  $region14: #{cnnae_forward.6} parent=0 // pred_check
    _
  $region15: #{cnnae_forward.6} parent=0 // pred_check_branch
    %825 = sbr.rel (0) target = $region17
  $region16: #{cnnae_forward.6} parent=0 // pred_region
    _
  $region17: #{cnnae_forward.6} parent=0 // pred_fallthru
    _
  // Predicated region
  $region18: #{cnnae_forward.6} parent=0 // pred_check
    _
  $region19: #{cnnae_forward.6} parent=0 // pred_check_branch
    %827 = sbr.rel (0) target = $region21
  $region20: #{cnnae_forward.6} parent=0 // pred_region
    _
  $region21: #{cnnae_forward.6} parent=0 // pred_fallthru
    _

// kernel: tile.18
$region0: #{tile.18}
  #allocation0 [shape = 's32[1]{0}', space=sflag, size = 0x4, scoped, tag = 'scoped memory for tile.18']
  %s0 = inlined_call_operand.vmem [shape: f32[32], index: 0, kind: input, shape index: {}]
  %s1 = inlined_call_operand.vmem [shape: f32[4,32], index: 1, kind: output, shape index: {}]
  // Predicated region
  $region2: #{tile.18} parent=0 // pred_check
    _
  $region3: #{tile.18} parent=0 // pred_check_branch
    %3 = sbr.rel (0) target = $region5
  $region4: #{tile.18} parent=0 // pred_region
    _
  $region5: #{tile.18} parent=0 // pred_fallthru
    _
  %v4 = vld [vmem:[%s0] ss:$0 sm:$0xff]
  %5 = vst [vmem:[%s1] sm:$0xf] %v4

// kernel: tile.19
$region0: #{tile.19}
  %s0 = inlined_call_operand.vmem [shape: f32[4,32], index: 0, kind: input, shape index: {}]
  %s1 = inlined_call_operand.vmem [shape: f32[1,128], index: 1, kind: output, shape index: {}]
  $region1: #{tile.19} parent=0
    #allocation0 [shape = 'u8[4096]{0}', space=vmem, size = 0x1000, scoped, tag = 'scoped mem for output reshape']
    #allocation1 [shape = 'u8[4096]{0}', space=vmem, size = 0x1000, scoped, tag = 'scoped mem for input reshape']
    %s3 = ssub.s32 16, 1
    %v4 = vld [vmem:[%s0] sm:%s3]
    %5 = vst [vmem:[#allocation1] sm:%s3] %v4
    %v6 = vld [vmem:[#allocation1] sm:$0x1]
    %vm7 = vcmask 261120
    %8 = vst.msk [vmem:[#allocation0] sm:$0x1] %vm7, %v6
    %s9 = scalar_lea.vmem [#allocation1], 3
    %v10 = vld [vmem:[%s9] sm:$0x1]
    %11 = vrot.lane.b32.xlu0 %v10, 96
    %v12 = vpop.permute.xlu0 %11
    %vm13 = vcmask 1048320
    %14 = vst.msk [vmem:[#allocation0] sm:$0x1] %vm13, %v12
    %s15 = scalar_lea.vmem [#allocation1], 2
    %v16 = vld [vmem:[%s15] sm:$0x1]
    %17 = vrot.lane.b32.xlu0 %v16, 64
    %v18 = vpop.permute.xlu0 %17
    %vm19 = vcmask 785920
    %20 = vst.msk [vmem:[#allocation0] sm:$0x1] %vm19, %v18
    %s21 = scalar_lea.vmem [#allocation1], 1
    %v22 = vld [vmem:[%s21] sm:$0x1]
    %23 = vrot.lane.b32.xlu0 %v22, 32
    %v24 = vpop.permute.xlu0 %23
    %vm25 = vcmask 523520
    %26 = vst.msk [vmem:[#allocation0] sm:$0x1] %vm25, %v24
    %s28 = ssub.s32 2, 1
    %v29 = vld [vmem:[#allocation0] sm:%s28]
    %s31 = ssub.s32 2, 1
    %32 = vst [vmem:[%s1] sm:%s31] %v29

// kernel: cnnae_forward.7
$region0: #{cnnae_forward.7}
  #allocation0 [shape = 'u32[]', space=smem, size = 0x4, offset = 0x4, fixed_abs, tag = 'smem constant byte address 0x4 - core index']
  #allocation1 [shape = 'u32[72,128]{1,0:T(1,128)}', space=vmem, size = 0x9000, scoped, tag = 'internal scratch']
  %s0 = inlined_call_operand.vmem [shape: bf16[48,128], index: 0, kind: input, shape index: {}]
  %s1 = inlined_call_operand.vmem [shape: bf16[128,128], index: 1, kind: input, shape index: {}]
  %s2 = inlined_call_operand.vmem [shape: f32[1,128], index: 2, kind: input, shape index: {}]
  %s3 = inlined_call_operand.vmem [shape: bf16[48,128], index: 3, kind: output, shape index: {}]
  %s4 = sld [smem:[#allocation0]]
  $region22: #{cnnae_forward.7} parent=0
    _
  %s6 = ssub.s32 1, %s4
  %s7 = scalar_select 0, %s6, %s4
  // Predicated region
  $region2: #{cnnae_forward.7} parent=0 // pred_check
    _
  $region3: #{cnnae_forward.7} parent=0 // pred_check_branch
    %9 = sbr.rel (0) target = $region5
  $region4: #{cnnae_forward.7} parent=0 // pred_region
    _
  $region5: #{cnnae_forward.7} parent=0 // pred_fallthru
    _
  // Predicated region
  $region6: #{cnnae_forward.7} parent=0 // pred_check
    _
  $region7: #{cnnae_forward.7} parent=0 // pred_check_branch
    %11 = sbr.rel (0) target = $region9
  $region8: #{cnnae_forward.7} parent=0 // pred_region
    _
  $region9: #{cnnae_forward.7} parent=0 // pred_fallthru
    _
  // Predicated region
  $region10: #{cnnae_forward.7} parent=0 // pred_check
    _
  $region11: #{cnnae_forward.7} parent=0 // pred_check_branch
    %13 = sbr.rel (0) target = $region13
  $region12: #{cnnae_forward.7} parent=0 // pred_region
    _
  $region13: #{cnnae_forward.7} parent=0 // pred_fallthru
    _
  %v14 = vld [vmem:[%s0] sm:$0xf]
  %v15 = vld [vmem:[%s0 + $0x4] sm:$0xf]
  %v16 = vld [vmem:[%s0 + $0x8] sm:$0xf]
  %v17 = vld [vmem:[%s0 + $0xc] sm:$0xf]
  %v18 = vld [vmem:[%s0 + $0x10] sm:$0xf]
  %v19 = vld [vmem:[%s0 + $0x14] sm:$0xf]
  %v20 = vld [vmem:[%s1] sm:$0xf]
  %v21 = vld [vmem:[%s1 + $0x4] sm:$0xf]
  %v22 = vld [vmem:[%s1 + $0x8] sm:$0xf]
  %v23 = vld [vmem:[%s1 + $0xc] sm:$0xf]
  %v24 = vld [vmem:[%s1 + $0x10] sm:$0xf]
  %v25 = vld [vmem:[%s1 + $0x14] sm:$0xf]
  %v26 = vld [vmem:[%s1 + $0x18] sm:$0xf]
  %v27 = vld [vmem:[%s1 + $0x1c] sm:$0xf]
  %v28 = vld [vmem:[%s1 + $0x20] sm:$0xf]
  %v29 = vld [vmem:[%s1 + $0x24] sm:$0xf]
  %v30 = vld [vmem:[%s1 + $0x28] sm:$0xf]
  %v31 = vld [vmem:[%s1 + $0x2c] sm:$0xf]
  %v32 = vld [vmem:[%s1 + $0x30] sm:$0xf]
  %v33 = vld [vmem:[%s1 + $0x34] sm:$0xf]
  %v34 = vld [vmem:[%s1 + $0x38] sm:$0xf]
  %v35 = vld [vmem:[%s1 + $0x3c] sm:$0xf]
  %v36 = vld [vmem:[%s2] sm:$0x1]
  %v38 = vperm.slane %v36, 0
  %v46 = vunpack.c.l.b16 %v14
  %v47 = vunpack.c.l.b16 %v15
  %v48 = vunpack.c.l.b16 %v16
  %v49 = vunpack.c.l.b16 %v17
  %v50 = vunpack.c.l.b16 %v18
  %v51 = vunpack.c.l.b16 %v19
  %v52 = vpack.c.b16 %v47, %v46
  %v53 = vpack.c.b16 %v49, %v48
  %v54 = vpack.c.b16 %v51, %v50
  %v74 = vunpack.c.l.b16 %v20
  %v75 = vunpack.c.l.b16 %v21
  %v76 = vunpack.c.l.b16 %v22
  %v77 = vunpack.c.l.b16 %v23
  %v78 = vunpack.c.l.b16 %v24
  %v79 = vunpack.c.l.b16 %v25
  %v80 = vunpack.c.l.b16 %v26
  %v81 = vunpack.c.l.b16 %v27
  %v82 = vunpack.c.l.b16 %v28
  %v83 = vunpack.c.l.b16 %v29
  %v84 = vunpack.c.l.b16 %v30
  %v85 = vunpack.c.l.b16 %v31
  %v86 = vunpack.c.l.b16 %v32
  %v87 = vunpack.c.l.b16 %v33
  %v88 = vunpack.c.l.b16 %v34
  %v89 = vunpack.c.l.b16 %v35
  %v90 = vpack.c.b16 %v75, %v74
  %v91 = vpack.c.b16 %v77, %v76
  %v92 = vpack.c.b16 %v79, %v78
  %v93 = vpack.c.b16 %v81, %v80
  %v94 = vpack.c.b16 %v83, %v82
  %v95 = vpack.c.b16 %v85, %v84
  %v96 = vpack.c.b16 %v87, %v86
  %v97 = vpack.c.b16 %v89, %v88
  %106 = vmatpush.bf16.msra.mxu0 %v97
  %107 = vmatpush.bf16.msra.mxu0 %v96
  %108 = vmatpush.bf16.msra.mxu0 %v95
  %109 = vmatpush.bf16.msra.mxu0 %v94
  %110 = vmatpush.bf16.msra.mxu0 %v93
  %111 = vmatpush.bf16.msra.mxu0 %v92
  %112 = vmatpush.bf16.msra.mxu0 %v91
  %113 = vmatpush.bf16.msra.mxu0 %v90
  %114 = vmatmul.bf16.gmra.mxu0 %v52
  %v115 = vpop.f32.mrf.mxu0
  %v116 = vadd.f32 %v38, %v115
  %v117 = vpop.f32.mrf.mxu0
  %v118 = vadd.f32 %v38, %v117
  %119 = vmatmul.bf16.gmra.mxu0 %v53
  %v120 = vpop.f32.mrf.mxu0
  %v121 = vadd.f32 %v38, %v120
  %v122 = vpop.f32.mrf.mxu0
  %v123 = vadd.f32 %v38, %v122
  %124 = vmatmul.bf16.gmra.mxu0 %v54
  %v125 = vpop.f32.mrf.mxu0
  %v126 = vadd.f32 %v38, %v125
  %v127 = vpop.f32.mrf.mxu0
  %v128 = vadd.f32 %v38, %v127
  %129 = vdwg.mxu0
  %v130 = vmax.f32 %v116, 0.0
  %v131 = vmax.f32 %v118, 0.0
  %v132 = vmax.f32 %v121, 0.0
  %v133 = vmax.f32 %v123, 0.0
  %v134 = vmax.f32 %v126, 0.0
  %v135 = vmax.f32 %v128, 0.0
  %v136 = vpack.c.bf16 %v130, %v130
  %v137 = vpack.c.bf16 %v131, %v131
  %v138 = vpack.c.bf16 %v132, %v132
  %v139 = vpack.c.bf16 %v133, %v133
  %v140 = vpack.c.bf16 %v134, %v134
  %v141 = vpack.c.bf16 %v135, %v135
  %142 = vst [vmem:[%s3] sm:$0xf] %v136
  %143 = vst [vmem:[%s3 + $0x4] sm:$0xf] %v137
  %144 = vst [vmem:[%s3 + $0x8] sm:$0xf] %v138
  %145 = vst [vmem:[%s3 + $0xc] sm:$0xf] %v139
  %146 = vst [vmem:[%s3 + $0x10] sm:$0xf] %v140
  %147 = vst [vmem:[%s3 + $0x14] sm:$0xf] %v141
  // Predicated region
  $region14: #{cnnae_forward.7} parent=0 // pred_check
    _
  $region15: #{cnnae_forward.7} parent=0 // pred_check_branch
    %149 = sbr.rel (0) target = $region17
  $region16: #{cnnae_forward.7} parent=0 // pred_region
    _
  $region17: #{cnnae_forward.7} parent=0 // pred_fallthru
    _
  // Predicated region
  $region18: #{cnnae_forward.7} parent=0 // pred_check
    _
  $region19: #{cnnae_forward.7} parent=0 // pred_check_branch
    %151 = sbr.rel (0) target = $region21
  $region20: #{cnnae_forward.7} parent=0 // pred_region
    _
  $region21: #{cnnae_forward.7} parent=0 // pred_fallthru
    _

// kernel: tile.23
$region0: #{tile.23}
  #allocation0 [shape = 's32[1]{0}', space=sflag, size = 0x4, scoped, tag = 'scoped memory for tile.23']
  %s0 = inlined_call_operand.vmem [shape: f32[64], index: 0, kind: input, shape index: {}]
  %s1 = inlined_call_operand.vmem [shape: f32[4,64], index: 1, kind: output, shape index: {}]
  // Predicated region
  $region2: #{tile.23} parent=0 // pred_check
    _
  $region3: #{tile.23} parent=0 // pred_check_branch
    %3 = sbr.rel (0) target = $region5
  $region4: #{tile.23} parent=0 // pred_region
    _
  $region5: #{tile.23} parent=0 // pred_fallthru
    _
  %v4 = vld [vmem:[%s0] ss:$0 sm:$0xff]
  %5 = vst [vmem:[%s1] sm:$0xf] %v4

// kernel: tile.24
$region0: #{tile.24}
  %s0 = inlined_call_operand.vmem [shape: f32[4,64], index: 0, kind: input, shape index: {}]
  %s1 = inlined_call_operand.vmem [shape: f32[1,256], index: 1, kind: output, shape index: {}]
  $region1: #{tile.24} parent=0
    #allocation0 [shape = 'u8[8192]{0}', space=vmem, size = 0x2000, scoped, tag = 'scoped mem for output reshape']
    #allocation1 [shape = 'u8[4096]{0}', space=vmem, size = 0x1000, scoped, tag = 'scoped mem for input reshape']
    %s3 = ssub.s32 16, 1
    %v4 = vld [vmem:[%s0] sm:%s3]
    %5 = vst [vmem:[#allocation1] sm:%s3] %v4
    %s6 = smov 3
    %v7 = vld [vmem:[#allocation1] ss:$2 sm:%s6]
    %vm8 = vcmask 523264
    %9 = vst.msk [vmem:[#allocation0] ss:$8 sm:$0x3] %vm8, %v7
    %s10 = scalar_lea.vmem [#allocation1], 1
    %s11 = smov 3
    %v12 = vld [vmem:[%s10] ss:$2 sm:%s11]
    %13 = vrot.lane.b32.xlu0 %v12, 64
    %v14 = vpop.permute.xlu0 %13
    %vm15 = vcmask 1048064
    %16 = vst.msk [vmem:[#allocation0] ss:$8 sm:$0x3] %vm15, %v14
    %s18 = ssub.s32 2, 1
    %v19 = vld [vmem:[#allocation0] sm:%s18]
    %s21 = ssub.s32 2, 1
    %22 = vst [vmem:[%s1] sm:%s21] %v19
    %s23 = scalar_lea.vmem [#allocation0], 8
    %v24 = vld [vmem:[%s23] sm:%s18]
    %s26 = ssub.s32 2, 1
    %s27 = scalar_lea.vmem %s1, 1
    %28 = vst [vmem:[%s27] sm:%s26] %v24

// kernel: cnnae_forward.8
$region0: #{cnnae_forward.8}
  #allocation0 [shape = 'u32[]', space=smem, size = 0x4, offset = 0x4, fixed_abs, tag = 'smem constant byte address 0x4 - core index']
  #allocation1 [shape = 'u32[72,128]{1,0:T(1,128)}', space=vmem, size = 0x9000, scoped, tag = 'internal scratch']
  %s0 = inlined_call_operand.vmem [shape: bf16[224,384], index: 0, kind: input, shape index: {}]
  %s1 = inlined_call_operand.vmem [shape: bf16[384,256], index: 1, kind: input, shape index: {}]
  %s2 = inlined_call_operand.vmem [shape: f32[1,256], index: 2, kind: input, shape index: {}]
  %s3 = inlined_call_operand.vmem [shape: bf16[224,256], index: 3, kind: output, shape index: {}]
  %s4 = sld [smem:[#allocation0]]
  $region22: #{cnnae_forward.8} parent=0
    _
  %s6 = ssub.s32 1, %s4
  %s7 = scalar_select 0, %s6, %s4
  // Predicated region
  $region2: #{cnnae_forward.8} parent=0 // pred_check
    _
  $region3: #{cnnae_forward.8} parent=0 // pred_check_branch
    %9 = sbr.rel (0) target = $region5
  $region4: #{cnnae_forward.8} parent=0 // pred_region
    _
  $region5: #{cnnae_forward.8} parent=0 // pred_fallthru
    _
  // Predicated region
  $region6: #{cnnae_forward.8} parent=0 // pred_check
    _
  $region7: #{cnnae_forward.8} parent=0 // pred_check_branch
    %11 = sbr.rel (0) target = $region9
  $region8: #{cnnae_forward.8} parent=0 // pred_region
    _
  $region9: #{cnnae_forward.8} parent=0 // pred_fallthru
    _
  // Predicated region
  $region10: #{cnnae_forward.8} parent=0 // pred_check
    _
  $region11: #{cnnae_forward.8} parent=0 // pred_check_branch
    %13 = sbr.rel (0) target = $region13
  $region12: #{cnnae_forward.8} parent=0 // pred_region
    _
  $region13: #{cnnae_forward.8} parent=0 // pred_fallthru
    _
  %v14 = vld [vmem:[%s0] sm:$0xff]
  %v15 = vld [vmem:[%s0 + $0x8] sm:$0xf]
  %v16 = vld [vmem:[%s0 + $0xc] sm:$0xff]
  %v17 = vld [vmem:[%s0 + $0x14] sm:$0xf]
  %v18 = vld [vmem:[%s0 + $0x18] sm:$0xff]
  %v19 = vld [vmem:[%s0 + $0x20] sm:$0xf]
  %v20 = vld [vmem:[%s0 + $0x24] sm:$0xff]
  %v21 = vld [vmem:[%s0 + $0x2c] sm:$0xf]
  %v22 = vld [vmem:[%s0 + $0x30] sm:$0xff]
  %v23 = vld [vmem:[%s0 + $0x38] sm:$0xf]
  %v24 = vld [vmem:[%s0 + $0x3c] sm:$0xff]
  %v25 = vld [vmem:[%s0 + $0x44] sm:$0xf]
  %v26 = vld [vmem:[%s0 + $0x48] sm:$0xff]
  %v27 = vld [vmem:[%s0 + $0x50] sm:$0xf]
  %v28 = vld [vmem:[%s0 + $0x54] sm:$0xff]
  %v29 = vld [vmem:[%s0 + $0x5c] sm:$0xf]
  %v30 = vld [vmem:[%s0 + $0x60] sm:$0xff]
  %v31 = vld [vmem:[%s0 + $0x68] sm:$0xf]
  %v32 = vld [vmem:[%s0 + $0x6c] sm:$0xff]
  %v33 = vld [vmem:[%s0 + $0x74] sm:$0xf]
  %v34 = vld [vmem:[%s0 + $0x78] sm:$0xff]
  %v35 = vld [vmem:[%s0 + $0x80] sm:$0xf]
  %v36 = vld [vmem:[%s0 + $0x84] sm:$0xff]
  %v37 = vld [vmem:[%s0 + $0x8c] sm:$0xf]
  %v38 = vld [vmem:[%s0 + $0x90] sm:$0xff]
  %v39 = vld [vmem:[%s0 + $0x98] sm:$0xf]
  %v40 = vld [vmem:[%s0 + $0x9c] sm:$0xff]
  %v41 = vld [vmem:[%s0 + $0xa4] sm:$0xf]
  %v42 = vld [vmem:[%s0 + $0xa8] sm:$0xff]
  %v43 = vld [vmem:[%s0 + $0xb0] sm:$0xf]
  %v44 = vld [vmem:[%s0 + $0xb4] sm:$0xff]
  %v45 = vld [vmem:[%s0 + $0xbc] sm:$0xf]
  %v46 = vld [vmem:[%s0 + $0xc0] sm:$0xff]
  %v47 = vld [vmem:[%s0 + $0xc8] sm:$0xf]
  %v48 = vld [vmem:[%s0 + $0xcc] sm:$0xff]
  %v49 = vld [vmem:[%s0 + $0xd4] sm:$0xf]
  %v50 = vld [vmem:[%s0 + $0xd8] sm:$0xff]
  %v51 = vld [vmem:[%s0 + $0xe0] sm:$0xf]
  %v52 = vld [vmem:[%s0 + $0xe4] sm:$0xff]
  %v53 = vld [vmem:[%s0 + $0xec] sm:$0xf]
  %v54 = vld [vmem:[%s0 + $0xf0] sm:$0xff]
  %v55 = vld [vmem:[%s0 + $0xf8] sm:$0xf]
  %v56 = vld [vmem:[%s0 + $0xfc] sm:$0xff]
  %v57 = vld [vmem:[%s0 + $0x104] sm:$0xf]
  %v58 = vld [vmem:[%s0 + $0x108] sm:$0xff]
  %v59 = vld [vmem:[%s0 + $0x110] sm:$0xf]
  %v60 = vld [vmem:[%s0 + $0x114] sm:$0xff]
  %v61 = vld [vmem:[%s0 + $0x11c] sm:$0xf]
  %v62 = vld [vmem:[%s0 + $0x120] sm:$0xff]
  %v63 = vld [vmem:[%s0 + $0x128] sm:$0xf]
  %v64 = vld [vmem:[%s0 + $0x12c] sm:$0xff]
  %v65 = vld [vmem:[%s0 + $0x134] sm:$0xf]
  %v66 = vld [vmem:[%s0 + $0x138] sm:$0xff]
  %v67 = vld [vmem:[%s0 + $0x140] sm:$0xf]
  %v68 = vld [vmem:[%s0 + $0x144] sm:$0xff]
  %v69 = vld [vmem:[%s0 + $0x14c] sm:$0xf]
  %v70 = vld [vmem:[%s1] sm:$0xff]
  %v71 = vld [vmem:[%s1 + $0x8] sm:$0xff]
  %v72 = vld [vmem:[%s1 + $0x10] sm:$0xff]
  %v73 = vld [vmem:[%s1 + $0x18] sm:$0xff]
  %v74 = vld [vmem:[%s1 + $0x20] sm:$0xff]
  %v75 = vld [vmem:[%s1 + $0x28] sm:$0xff]
  %v76 = vld [vmem:[%s1 + $0x30] sm:$0xff]
  %v77 = vld [vmem:[%s1 + $0x38] sm:$0xff]
  %v78 = vld [vmem:[%s1 + $0x40] sm:$0xff]
  %v79 = vld [vmem:[%s1 + $0x48] sm:$0xff]
  %v80 = vld [vmem:[%s1 + $0x50] sm:$0xff]
  %v81 = vld [vmem:[%s1 + $0x58] sm:$0xff]
  %v82 = vld [vmem:[%s1 + $0x60] sm:$0xff]
  %v83 = vld [vmem:[%s1 + $0x68] sm:$0xff]
  %v84 = vld [vmem:[%s1 + $0x70] sm:$0xff]
  %v85 = vld [vmem:[%s1 + $0x78] sm:$0xff]
  %v86 = vld [vmem:[%s1 + $0x80] sm:$0xff]
  %v87 = vld [vmem:[%s1 + $0x88] sm:$0xff]
  %v88 = vld [vmem:[%s1 + $0x90] sm:$0xff]
  %v89 = vld [vmem:[%s1 + $0x98] sm:$0xff]
  %v90 = vld [vmem:[%s1 + $0xa0] sm:$0xff]
  %v91 = vld [vmem:[%s1 + $0xa8] sm:$0xff]
  %v92 = vld [vmem:[%s1 + $0xb0] sm:$0xff]
  %v93 = vld [vmem:[%s1 + $0xb8] sm:$0xff]
  %v94 = vld [vmem:[%s1 + $0xc0] sm:$0xff]
  %v95 = vld [vmem:[%s1 + $0xc8] sm:$0xff]
  %v96 = vld [vmem:[%s1 + $0xd0] sm:$0xff]
  %v97 = vld [vmem:[%s1 + $0xd8] sm:$0xff]
  %v98 = vld [vmem:[%s1 + $0xe0] sm:$0xff]
  %v99 = vld [vmem:[%s1 + $0xe8] sm:$0xff]
  %v100 = vld [vmem:[%s1 + $0xf0] sm:$0xff]
  %v101 = vld [vmem:[%s1 + $0xf8] sm:$0xff]
  %v102 = vld [vmem:[%s1 + $0x100] sm:$0xff]
  %v103 = vld [vmem:[%s1 + $0x108] sm:$0xff]
  %v104 = vld [vmem:[%s1 + $0x110] sm:$0xff]
  %v105 = vld [vmem:[%s1 + $0x118] sm:$0xff]
  %v106 = vld [vmem:[%s1 + $0x120] sm:$0xff]
  %v107 = vld [vmem:[%s1 + $0x128] sm:$0xff]
  %v108 = vld [vmem:[%s1 + $0x130] sm:$0xff]
  %v109 = vld [vmem:[%s1 + $0x138] sm:$0xff]
  %v110 = vld [vmem:[%s1 + $0x140] sm:$0xff]
  %v111 = vld [vmem:[%s1 + $0x148] sm:$0xff]
  %v112 = vld [vmem:[%s1 + $0x150] sm:$0xff]
  %v113 = vld [vmem:[%s1 + $0x158] sm:$0xff]
  %v114 = vld [vmem:[%s1 + $0x160] sm:$0xff]
  %v115 = vld [vmem:[%s1 + $0x168] sm:$0xff]
  %v116 = vld [vmem:[%s1 + $0x170] sm:$0xff]
  %v117 = vld [vmem:[%s1 + $0x178] sm:$0xff]
  %v118 = vld [vmem:[%s2] sm:$0x3]
  %v120 = vperm.slane %v118, 0
  %v121 = vperm.slane %v118, 1
  %v180 = vunpack.c.l.b16 %v14
  %v181 = vunpack.c.h.b16 %v14
  %v182 = vunpack.c.l.b16 %v15
  %v183 = vunpack.c.l.b16 %v16
  %v184 = vunpack.c.h.b16 %v16
  %v185 = vunpack.c.l.b16 %v17
  %v186 = vunpack.c.l.b16 %v18
  %v187 = vunpack.c.h.b16 %v18
  %v188 = vunpack.c.l.b16 %v19
  %v189 = vunpack.c.l.b16 %v20
  %v190 = vunpack.c.h.b16 %v20
  %v191 = vunpack.c.l.b16 %v21
  %v192 = vunpack.c.l.b16 %v22
  %v193 = vunpack.c.h.b16 %v22
  %v194 = vunpack.c.l.b16 %v23
  %v195 = vunpack.c.l.b16 %v24
  %v196 = vunpack.c.h.b16 %v24
  %v197 = vunpack.c.l.b16 %v25
  %v198 = vunpack.c.l.b16 %v26
  %v199 = vunpack.c.h.b16 %v26
  %v200 = vunpack.c.l.b16 %v27
  %v201 = vunpack.c.l.b16 %v28
  %v202 = vunpack.c.h.b16 %v28
  %v203 = vunpack.c.l.b16 %v29
  %v204 = vunpack.c.l.b16 %v30
  %v205 = vunpack.c.h.b16 %v30
  %v206 = vunpack.c.l.b16 %v31
  %v207 = vunpack.c.l.b16 %v32
  %v208 = vunpack.c.h.b16 %v32
  %v209 = vunpack.c.l.b16 %v33
  %v210 = vunpack.c.l.b16 %v34
  %v211 = vunpack.c.h.b16 %v34
  %v212 = vunpack.c.l.b16 %v35
  %v213 = vunpack.c.l.b16 %v36
  %v214 = vunpack.c.h.b16 %v36
  %v215 = vunpack.c.l.b16 %v37
  %v216 = vunpack.c.l.b16 %v38
  %v217 = vunpack.c.h.b16 %v38
  %v218 = vunpack.c.l.b16 %v39
  %v219 = vunpack.c.l.b16 %v40
  %v220 = vunpack.c.h.b16 %v40
  %v221 = vunpack.c.l.b16 %v41
  %v222 = vunpack.c.l.b16 %v42
  %v223 = vunpack.c.h.b16 %v42
  %v224 = vunpack.c.l.b16 %v43
  %v225 = vunpack.c.l.b16 %v44
  %v226 = vunpack.c.h.b16 %v44
  %v227 = vunpack.c.l.b16 %v45
  %v228 = vunpack.c.l.b16 %v46
  %v229 = vunpack.c.h.b16 %v46
  %v230 = vunpack.c.l.b16 %v47
  %v231 = vunpack.c.l.b16 %v48
  %v232 = vunpack.c.h.b16 %v48
  %v233 = vunpack.c.l.b16 %v49
  %v234 = vunpack.c.l.b16 %v50
  %v235 = vunpack.c.h.b16 %v50
  %v236 = vunpack.c.l.b16 %v51
  %v237 = vunpack.c.l.b16 %v52
  %v238 = vunpack.c.h.b16 %v52
  %v239 = vunpack.c.l.b16 %v53
  %v240 = vunpack.c.l.b16 %v54
  %v241 = vunpack.c.h.b16 %v54
  %v242 = vunpack.c.l.b16 %v55
  %v243 = vunpack.c.l.b16 %v56
  %v244 = vunpack.c.h.b16 %v56
  %v245 = vunpack.c.l.b16 %v57
  %v246 = vunpack.c.l.b16 %v58
  %v247 = vunpack.c.h.b16 %v58
  %v248 = vunpack.c.l.b16 %v59
  %v249 = vunpack.c.l.b16 %v60
  %v250 = vunpack.c.h.b16 %v60
  %v251 = vunpack.c.l.b16 %v61
  %v252 = vunpack.c.l.b16 %v62
  %v253 = vunpack.c.h.b16 %v62
  %v254 = vunpack.c.l.b16 %v63
  %v255 = vunpack.c.l.b16 %v64
  %v256 = vunpack.c.h.b16 %v64
  %v257 = vunpack.c.l.b16 %v65
  %v258 = vunpack.c.l.b16 %v66
  %v259 = vunpack.c.h.b16 %v66
  %v260 = vunpack.c.l.b16 %v67
  %v261 = vunpack.c.l.b16 %v68
  %v262 = vunpack.c.h.b16 %v68
  %v263 = vunpack.c.l.b16 %v69
  %v264 = vpack.c.b16 %v183, %v180
  %v265 = vpack.c.b16 %v184, %v181
  %v266 = vpack.c.b16 %v185, %v182
  %v267 = vpack.c.b16 %v189, %v186
  %v268 = vpack.c.b16 %v190, %v187
  %v269 = vpack.c.b16 %v191, %v188
  %v270 = vpack.c.b16 %v195, %v192
  %v271 = vpack.c.b16 %v196, %v193
  %v272 = vpack.c.b16 %v197, %v194
  %v273 = vpack.c.b16 %v201, %v198
  %v274 = vpack.c.b16 %v202, %v199
  %v275 = vpack.c.b16 %v203, %v200
  %v276 = vpack.c.b16 %v207, %v204
  %v277 = vpack.c.b16 %v208, %v205
  %v278 = vpack.c.b16 %v209, %v206
  %v279 = vpack.c.b16 %v213, %v210
  %v280 = vpack.c.b16 %v214, %v211
  %v281 = vpack.c.b16 %v215, %v212
  %v282 = vpack.c.b16 %v219, %v216
  %v283 = vpack.c.b16 %v220, %v217
  %v284 = vpack.c.b16 %v221, %v218
  %v285 = vpack.c.b16 %v225, %v222
  %v286 = vpack.c.b16 %v226, %v223
  %v287 = vpack.c.b16 %v227, %v224
  %v288 = vpack.c.b16 %v231, %v228
  %v289 = vpack.c.b16 %v232, %v229
  %v290 = vpack.c.b16 %v233, %v230
  %v291 = vpack.c.b16 %v237, %v234
  %v292 = vpack.c.b16 %v238, %v235
  %v293 = vpack.c.b16 %v239, %v236
  %v294 = vpack.c.b16 %v243, %v240
  %v295 = vpack.c.b16 %v244, %v241
  %v296 = vpack.c.b16 %v245, %v242
  %v297 = vpack.c.b16 %v249, %v246
  %v298 = vpack.c.b16 %v250, %v247
  %v299 = vpack.c.b16 %v251, %v248
  %v300 = vpack.c.b16 %v255, %v252
  %v301 = vpack.c.b16 %v256, %v253
  %v302 = vpack.c.b16 %v257, %v254
  %v303 = vpack.c.b16 %v261, %v258
  %v304 = vpack.c.b16 %v262, %v259
  %v305 = vpack.c.b16 %v263, %v260
  %v396 = vunpack.c.l.b16 %v70
  %v397 = vunpack.c.h.b16 %v70
  %v398 = vunpack.c.l.b16 %v71
  %v399 = vunpack.c.h.b16 %v71
  %v400 = vunpack.c.l.b16 %v72
  %v401 = vunpack.c.h.b16 %v72
  %v402 = vunpack.c.l.b16 %v73
  %v403 = vunpack.c.h.b16 %v73
  %v404 = vunpack.c.l.b16 %v74
  %v405 = vunpack.c.h.b16 %v74
  %v406 = vunpack.c.l.b16 %v75
  %v407 = vunpack.c.h.b16 %v75
  %v408 = vunpack.c.l.b16 %v76
  %v409 = vunpack.c.h.b16 %v76
  %v410 = vunpack.c.l.b16 %v77
  %v411 = vunpack.c.h.b16 %v77
  %v412 = vunpack.c.l.b16 %v78
  %v413 = vunpack.c.h.b16 %v78
  %v414 = vunpack.c.l.b16 %v79
  %v415 = vunpack.c.h.b16 %v79
  %v416 = vunpack.c.l.b16 %v80
  %v417 = vunpack.c.h.b16 %v80
  %v418 = vunpack.c.l.b16 %v81
  %v419 = vunpack.c.h.b16 %v81
  %v420 = vunpack.c.l.b16 %v82
  %v421 = vunpack.c.h.b16 %v82
  %v422 = vunpack.c.l.b16 %v83
  %v423 = vunpack.c.h.b16 %v83
  %v424 = vunpack.c.l.b16 %v84
  %v425 = vunpack.c.h.b16 %v84
  %v426 = vunpack.c.l.b16 %v85
  %v427 = vunpack.c.h.b16 %v85
  %v428 = vunpack.c.l.b16 %v86
  %v429 = vunpack.c.h.b16 %v86
  %v430 = vunpack.c.l.b16 %v87
  %v431 = vunpack.c.h.b16 %v87
  %v432 = vunpack.c.l.b16 %v88
  %v433 = vunpack.c.h.b16 %v88
  %v434 = vunpack.c.l.b16 %v89
  %v435 = vunpack.c.h.b16 %v89
  %v436 = vunpack.c.l.b16 %v90
  %v437 = vunpack.c.h.b16 %v90
  %v438 = vunpack.c.l.b16 %v91
  %v439 = vunpack.c.h.b16 %v91
  %v440 = vunpack.c.l.b16 %v92
  %v441 = vunpack.c.h.b16 %v92
  %v442 = vunpack.c.l.b16 %v93
  %v443 = vunpack.c.h.b16 %v93
  %v444 = vunpack.c.l.b16 %v94
  %v445 = vunpack.c.h.b16 %v94
  %v446 = vunpack.c.l.b16 %v95
  %v447 = vunpack.c.h.b16 %v95
  %v448 = vunpack.c.l.b16 %v96
  %v449 = vunpack.c.h.b16 %v96
  %v450 = vunpack.c.l.b16 %v97
  %v451 = vunpack.c.h.b16 %v97
  %v452 = vunpack.c.l.b16 %v98
  %v453 = vunpack.c.h.b16 %v98
  %v454 = vunpack.c.l.b16 %v99
  %v455 = vunpack.c.h.b16 %v99
  %v456 = vunpack.c.l.b16 %v100
  %v457 = vunpack.c.h.b16 %v100
  %v458 = vunpack.c.l.b16 %v101
  %v459 = vunpack.c.h.b16 %v101
  %v460 = vunpack.c.l.b16 %v102
  %v461 = vunpack.c.h.b16 %v102
  %v462 = vunpack.c.l.b16 %v103
  %v463 = vunpack.c.h.b16 %v103
  %v464 = vunpack.c.l.b16 %v104
  %v465 = vunpack.c.h.b16 %v104
  %v466 = vunpack.c.l.b16 %v105
  %v467 = vunpack.c.h.b16 %v105
  %v468 = vunpack.c.l.b16 %v106
  %v469 = vunpack.c.h.b16 %v106
  %v470 = vunpack.c.l.b16 %v107
  %v471 = vunpack.c.h.b16 %v107
  %v472 = vunpack.c.l.b16 %v108
  %v473 = vunpack.c.h.b16 %v108
  %v474 = vunpack.c.l.b16 %v109
  %v475 = vunpack.c.h.b16 %v109
  %v476 = vunpack.c.l.b16 %v110
  %v477 = vunpack.c.h.b16 %v110
  %v478 = vunpack.c.l.b16 %v111
  %v479 = vunpack.c.h.b16 %v111
  %v480 = vunpack.c.l.b16 %v112
  %v481 = vunpack.c.h.b16 %v112
  %v482 = vunpack.c.l.b16 %v113
  %v483 = vunpack.c.h.b16 %v113
  %v484 = vunpack.c.l.b16 %v114
  %v485 = vunpack.c.h.b16 %v114
  %v486 = vunpack.c.l.b16 %v115
  %v487 = vunpack.c.h.b16 %v115
  %v488 = vunpack.c.l.b16 %v116
  %v489 = vunpack.c.h.b16 %v116
  %v490 = vunpack.c.l.b16 %v117
  %v491 = vunpack.c.h.b16 %v117
  %v492 = vpack.c.b16 %v398, %v396
  %v493 = vpack.c.b16 %v399, %v397
  %v494 = vpack.c.b16 %v402, %v400
  %v495 = vpack.c.b16 %v403, %v401
  %v496 = vpack.c.b16 %v406, %v404
  %v497 = vpack.c.b16 %v407, %v405
  %v498 = vpack.c.b16 %v410, %v408
  %v499 = vpack.c.b16 %v411, %v409
  %v500 = vpack.c.b16 %v414, %v412
  %v501 = vpack.c.b16 %v415, %v413
  %v502 = vpack.c.b16 %v418, %v416
  %v503 = vpack.c.b16 %v419, %v417
  %v504 = vpack.c.b16 %v422, %v420
  %v505 = vpack.c.b16 %v423, %v421
  %v506 = vpack.c.b16 %v426, %v424
  %v507 = vpack.c.b16 %v427, %v425
  %v508 = vpack.c.b16 %v430, %v428
  %v509 = vpack.c.b16 %v431, %v429
  %v510 = vpack.c.b16 %v434, %v432
  %v511 = vpack.c.b16 %v435, %v433
  %v512 = vpack.c.b16 %v438, %v436
  %v513 = vpack.c.b16 %v439, %v437
  %v514 = vpack.c.b16 %v442, %v440
  %v515 = vpack.c.b16 %v443, %v441
  %v516 = vpack.c.b16 %v446, %v444
  %v517 = vpack.c.b16 %v447, %v445
  %v518 = vpack.c.b16 %v450, %v448
  %v519 = vpack.c.b16 %v451, %v449
  %v520 = vpack.c.b16 %v454, %v452
  %v521 = vpack.c.b16 %v455, %v453
  %v522 = vpack.c.b16 %v458, %v456
  %v523 = vpack.c.b16 %v459, %v457
  %v524 = vpack.c.b16 %v462, %v460
  %v525 = vpack.c.b16 %v463, %v461
  %v526 = vpack.c.b16 %v466, %v464
  %v527 = vpack.c.b16 %v467, %v465
  %v528 = vpack.c.b16 %v470, %v468
  %v529 = vpack.c.b16 %v471, %v469
  %v530 = vpack.c.b16 %v474, %v472
  %v531 = vpack.c.b16 %v475, %v473
  %v532 = vpack.c.b16 %v478, %v476
  %v533 = vpack.c.b16 %v479, %v477
  %v534 = vpack.c.b16 %v482, %v480
  %v535 = vpack.c.b16 %v483, %v481
  %v536 = vpack.c.b16 %v486, %v484
  %v537 = vpack.c.b16 %v487, %v485
  %v538 = vpack.c.b16 %v490, %v488
  %v539 = vpack.c.b16 %v491, %v489
  %588 = vmatpush.bf16.msra.mxu0 %v506
  %589 = vmatpush.bf16.msra.mxu0 %v504
  %590 = vmatpush.bf16.msra.mxu0 %v502
  %591 = vmatpush.bf16.msra.mxu0 %v500
  %592 = vmatpush.bf16.msra.mxu0 %v498
  %593 = vmatpush.bf16.msra.mxu0 %v496
  %594 = vmatpush.bf16.msra.mxu0 %v494
  %595 = vmatpush.bf16.msra.mxu0 %v492
  %596 = vmatmul.bf16.gmra.mxu0 %v264
  %v597 = vpop.f32.mrf.mxu0
  %v598 = vadd.f32 %v120, %v597
  %v599 = vpop.f32.mrf.mxu0
  %v600 = vadd.f32 %v120, %v599
  %601 = vmatmul.bf16.gmra.mxu0 %v267
  %v602 = vpop.f32.mrf.mxu0
  %v603 = vadd.f32 %v120, %v602
  %v604 = vpop.f32.mrf.mxu0
  %v605 = vadd.f32 %v120, %v604
  %606 = vmatmul.bf16.gmra.mxu0 %v270
  %v607 = vpop.f32.mrf.mxu0
  %v608 = vadd.f32 %v120, %v607
  %v609 = vpop.f32.mrf.mxu0
  %v610 = vadd.f32 %v120, %v609
  %611 = vmatmul.bf16.gmra.mxu0 %v273
  %v612 = vpop.f32.mrf.mxu0
  %v613 = vadd.f32 %v120, %v612
  %v614 = vpop.f32.mrf.mxu0
  %v615 = vadd.f32 %v120, %v614
  %616 = vmatmul.bf16.gmra.mxu0 %v276
  %v617 = vpop.f32.mrf.mxu0
  %v618 = vadd.f32 %v120, %v617
  %v619 = vpop.f32.mrf.mxu0
  %v620 = vadd.f32 %v120, %v619
  %621 = vmatmul.bf16.gmra.mxu0 %v279
  %v622 = vpop.f32.mrf.mxu0
  %v623 = vadd.f32 %v120, %v622
  %v624 = vpop.f32.mrf.mxu0
  %v625 = vadd.f32 %v120, %v624
  %626 = vmatmul.bf16.gmra.mxu0 %v282
  %v627 = vpop.f32.mrf.mxu0
  %v628 = vadd.f32 %v120, %v627
  %v629 = vpop.f32.mrf.mxu0
  %v630 = vadd.f32 %v120, %v629
  %631 = vmatmul.bf16.gmra.mxu0 %v285
  %v632 = vpop.f32.mrf.mxu0
  %v633 = vadd.f32 %v120, %v632
  %v634 = vpop.f32.mrf.mxu0
  %v635 = vadd.f32 %v120, %v634
  %636 = vmatmul.bf16.gmra.mxu0 %v288
  %v637 = vpop.f32.mrf.mxu0
  %v638 = vadd.f32 %v120, %v637
  %v639 = vpop.f32.mrf.mxu0
  %v640 = vadd.f32 %v120, %v639
  %641 = vmatmul.bf16.gmra.mxu0 %v291
  %v642 = vpop.f32.mrf.mxu0
  %v643 = vadd.f32 %v120, %v642
  %v644 = vpop.f32.mrf.mxu0
  %v645 = vadd.f32 %v120, %v644
  %646 = vmatmul.bf16.gmra.mxu0 %v294
  %v647 = vpop.f32.mrf.mxu0
  %v648 = vadd.f32 %v120, %v647
  %v649 = vpop.f32.mrf.mxu0
  %v650 = vadd.f32 %v120, %v649
  %651 = vmatmul.bf16.gmra.mxu0 %v297
  %v652 = vpop.f32.mrf.mxu0
  %v653 = vadd.f32 %v120, %v652
  %v654 = vpop.f32.mrf.mxu0
  %v655 = vadd.f32 %v120, %v654
  %656 = vmatmul.bf16.gmra.mxu0 %v300
  %v657 = vpop.f32.mrf.mxu0
  %v658 = vadd.f32 %v120, %v657
  %v659 = vpop.f32.mrf.mxu0
  %v660 = vadd.f32 %v120, %v659
  %661 = vmatmul.bf16.gmra.mxu0 %v303
  %v662 = vpop.f32.mrf.mxu0
  %v663 = vadd.f32 %v120, %v662
  %v664 = vpop.f32.mrf.mxu0
  %v665 = vadd.f32 %v120, %v664
  %666 = vdwg.mxu0
  %667 = vmatpush.bf16.msra.mxu0 %v522
  %668 = vmatpush.bf16.msra.mxu0 %v520
  %669 = vmatpush.bf16.msra.mxu0 %v518
  %670 = vmatpush.bf16.msra.mxu0 %v516
  %671 = vmatpush.bf16.msra.mxu0 %v514
  %672 = vmatpush.bf16.msra.mxu0 %v512
  %673 = vmatpush.bf16.msra.mxu0 %v510
  %674 = vmatpush.bf16.msra.mxu0 %v508
  %675 = vmatmul.bf16.gmra.mxu0 %v265
  %v676 = vpop.f32.mrf.mxu0
  %v677 = vadd.f32 %v598, %v676
  %v678 = vpop.f32.mrf.mxu0
  %v679 = vadd.f32 %v600, %v678
  %680 = vmatmul.bf16.gmra.mxu0 %v268
  %v681 = vpop.f32.mrf.mxu0
  %v682 = vadd.f32 %v603, %v681
  %v683 = vpop.f32.mrf.mxu0
  %v684 = vadd.f32 %v605, %v683
  %685 = vmatmul.bf16.gmra.mxu0 %v271
  %v686 = vpop.f32.mrf.mxu0
  %v687 = vadd.f32 %v608, %v686
  %v688 = vpop.f32.mrf.mxu0
  %v689 = vadd.f32 %v610, %v688
  %690 = vmatmul.bf16.gmra.mxu0 %v274
  %v691 = vpop.f32.mrf.mxu0
  %v692 = vadd.f32 %v613, %v691
  %v693 = vpop.f32.mrf.mxu0
  %v694 = vadd.f32 %v615, %v693
  %695 = vmatmul.bf16.gmra.mxu0 %v277
  %v696 = vpop.f32.mrf.mxu0
  %v697 = vadd.f32 %v618, %v696
  %v698 = vpop.f32.mrf.mxu0
  %v699 = vadd.f32 %v620, %v698
  %700 = vmatmul.bf16.gmra.mxu0 %v280
  %v701 = vpop.f32.mrf.mxu0
  %v702 = vadd.f32 %v623, %v701
  %v703 = vpop.f32.mrf.mxu0
  %v704 = vadd.f32 %v625, %v703
  %705 = vmatmul.bf16.gmra.mxu0 %v283
  %v706 = vpop.f32.mrf.mxu0
  %v707 = vadd.f32 %v628, %v706
  %v708 = vpop.f32.mrf.mxu0
  %v709 = vadd.f32 %v630, %v708
  %710 = vmatmul.bf16.gmra.mxu0 %v286
  %v711 = vpop.f32.mrf.mxu0
  %v712 = vadd.f32 %v633, %v711
  %v713 = vpop.f32.mrf.mxu0
  %v714 = vadd.f32 %v635, %v713
  %715 = vmatmul.bf16.gmra.mxu0 %v289
  %v716 = vpop.f32.mrf.mxu0
  %v717 = vadd.f32 %v638, %v716
  %v718 = vpop.f32.mrf.mxu0
  %v719 = vadd.f32 %v640, %v718
  %720 = vmatmul.bf16.gmra.mxu0 %v292
  %v721 = vpop.f32.mrf.mxu0
  %v722 = vadd.f32 %v643, %v721
  %v723 = vpop.f32.mrf.mxu0
  %v724 = vadd.f32 %v645, %v723
  %725 = vmatmul.bf16.gmra.mxu0 %v295
  %v726 = vpop.f32.mrf.mxu0
  %v727 = vadd.f32 %v648, %v726
  %v728 = vpop.f32.mrf.mxu0
  %v729 = vadd.f32 %v650, %v728
  %730 = vmatmul.bf16.gmra.mxu0 %v298
  %v731 = vpop.f32.mrf.mxu0
  %v732 = vadd.f32 %v653, %v731
  %v733 = vpop.f32.mrf.mxu0
  %v734 = vadd.f32 %v655, %v733
  %735 = vmatmul.bf16.gmra.mxu0 %v301
  %v736 = vpop.f32.mrf.mxu0
  %v737 = vadd.f32 %v658, %v736
  %v738 = vpop.f32.mrf.mxu0
  %v739 = vadd.f32 %v660, %v738
  %740 = vmatmul.bf16.gmra.mxu0 %v304
  %v741 = vpop.f32.mrf.mxu0
  %v742 = vadd.f32 %v663, %v741
  %v743 = vpop.f32.mrf.mxu0
  %v744 = vadd.f32 %v665, %v743
  %745 = vdwg.mxu0
  %746 = vmatpush.bf16.msra.mxu0 %v538
  %747 = vmatpush.bf16.msra.mxu0 %v536
  %748 = vmatpush.bf16.msra.mxu0 %v534
  %749 = vmatpush.bf16.msra.mxu0 %v532
  %750 = vmatpush.bf16.msra.mxu0 %v530
  %751 = vmatpush.bf16.msra.mxu0 %v528
  %752 = vmatpush.bf16.msra.mxu0 %v526
  %753 = vmatpush.bf16.msra.mxu0 %v524
  %754 = vmatmul.bf16.gmra.mxu0 %v266
  %v755 = vpop.f32.mrf.mxu0
  %v756 = vadd.f32 %v677, %v755
  %v757 = vpop.f32.mrf.mxu0
  %v758 = vadd.f32 %v679, %v757
  %759 = vmatmul.bf16.gmra.mxu0 %v269
  %v760 = vpop.f32.mrf.mxu0
  %v761 = vadd.f32 %v682, %v760
  %v762 = vpop.f32.mrf.mxu0
  %v763 = vadd.f32 %v684, %v762
  %764 = vmatmul.bf16.gmra.mxu0 %v272
  %v765 = vpop.f32.mrf.mxu0
  %v766 = vadd.f32 %v687, %v765
  %v767 = vpop.f32.mrf.mxu0
  %v768 = vadd.f32 %v689, %v767
  %769 = vmatmul.bf16.gmra.mxu0 %v275
  %v770 = vpop.f32.mrf.mxu0
  %v771 = vadd.f32 %v692, %v770
  %v772 = vpop.f32.mrf.mxu0
  %v773 = vadd.f32 %v694, %v772
  %774 = vmatmul.bf16.gmra.mxu0 %v278
  %v775 = vpop.f32.mrf.mxu0
  %v776 = vadd.f32 %v697, %v775
  %v777 = vpop.f32.mrf.mxu0
  %v778 = vadd.f32 %v699, %v777
  %779 = vmatmul.bf16.gmra.mxu0 %v281
  %v780 = vpop.f32.mrf.mxu0
  %v781 = vadd.f32 %v702, %v780
  %v782 = vpop.f32.mrf.mxu0
  %v783 = vadd.f32 %v704, %v782
  %784 = vmatmul.bf16.gmra.mxu0 %v284
  %v785 = vpop.f32.mrf.mxu0
  %v786 = vadd.f32 %v707, %v785
  %v787 = vpop.f32.mrf.mxu0
  %v788 = vadd.f32 %v709, %v787
  %789 = vmatmul.bf16.gmra.mxu0 %v287
  %v790 = vpop.f32.mrf.mxu0
  %v791 = vadd.f32 %v712, %v790
  %v792 = vpop.f32.mrf.mxu0
  %v793 = vadd.f32 %v714, %v792
  %794 = vmatmul.bf16.gmra.mxu0 %v290
  %v795 = vpop.f32.mrf.mxu0
  %v796 = vadd.f32 %v717, %v795
  %v797 = vpop.f32.mrf.mxu0
  %v798 = vadd.f32 %v719, %v797
  %799 = vmatmul.bf16.gmra.mxu0 %v293
  %v800 = vpop.f32.mrf.mxu0
  %v801 = vadd.f32 %v722, %v800
  %v802 = vpop.f32.mrf.mxu0
  %v803 = vadd.f32 %v724, %v802
  %804 = vmatmul.bf16.gmra.mxu0 %v296
  %v805 = vpop.f32.mrf.mxu0
  %v806 = vadd.f32 %v727, %v805
  %v807 = vpop.f32.mrf.mxu0
  %v808 = vadd.f32 %v729, %v807
  %809 = vmatmul.bf16.gmra.mxu0 %v299
  %v810 = vpop.f32.mrf.mxu0
  %v811 = vadd.f32 %v732, %v810
  %v812 = vpop.f32.mrf.mxu0
  %v813 = vadd.f32 %v734, %v812
  %814 = vmatmul.bf16.gmra.mxu0 %v302
  %v815 = vpop.f32.mrf.mxu0
  %v816 = vadd.f32 %v737, %v815
  %v817 = vpop.f32.mrf.mxu0
  %v818 = vadd.f32 %v739, %v817
  %819 = vmatmul.bf16.gmra.mxu0 %v305
  %v820 = vpop.f32.mrf.mxu0
  %v821 = vadd.f32 %v742, %v820
  %v822 = vpop.f32.mrf.mxu0
  %v823 = vadd.f32 %v744, %v822
  %824 = vdwg.mxu0
  %825 = vmatpush.bf16.msra.mxu0 %v507
  %826 = vmatpush.bf16.msra.mxu0 %v505
  %827 = vmatpush.bf16.msra.mxu0 %v503
  %828 = vmatpush.bf16.msra.mxu0 %v501
  %829 = vmatpush.bf16.msra.mxu0 %v499
  %830 = vmatpush.bf16.msra.mxu0 %v497
  %831 = vmatpush.bf16.msra.mxu0 %v495
  %832 = vmatpush.bf16.msra.mxu0 %v493
  %833 = vmatmul.bf16.gmra.mxu0 %v264
  %v834 = vpop.f32.mrf.mxu0
  %v835 = vadd.f32 %v121, %v834
  %v836 = vpop.f32.mrf.mxu0
  %v837 = vadd.f32 %v121, %v836
  %838 = vmatmul.bf16.gmra.mxu0 %v267
  %v839 = vpop.f32.mrf.mxu0
  %v840 = vadd.f32 %v121, %v839
  %v841 = vpop.f32.mrf.mxu0
  %v842 = vadd.f32 %v121, %v841
  %843 = vmatmul.bf16.gmra.mxu0 %v270
  %v844 = vpop.f32.mrf.mxu0
  %v845 = vadd.f32 %v121, %v844
  %v846 = vpop.f32.mrf.mxu0
  %v847 = vadd.f32 %v121, %v846
  %848 = vmatmul.bf16.gmra.mxu0 %v273
  %v849 = vpop.f32.mrf.mxu0
  %v850 = vadd.f32 %v121, %v849
  %v851 = vpop.f32.mrf.mxu0
  %v852 = vadd.f32 %v121, %v851
  %853 = vmatmul.bf16.gmra.mxu0 %v276
  %v854 = vpop.f32.mrf.mxu0
  %v855 = vadd.f32 %v121, %v854
  %v856 = vpop.f32.mrf.mxu0
  %v857 = vadd.f32 %v121, %v856
  %858 = vmatmul.bf16.gmra.mxu0 %v279
  %v859 = vpop.f32.mrf.mxu0
  %v860 = vadd.f32 %v121, %v859
  %v861 = vpop.f32.mrf.mxu0
  %v862 = vadd.f32 %v121, %v861
  %863 = vmatmul.bf16.gmra.mxu0 %v282
  %v864 = vpop.f32.mrf.mxu0
  %v865 = vadd.f32 %v121, %v864
  %v866 = vpop.f32.mrf.mxu0
  %v867 = vadd.f32 %v121, %v866
  %868 = vmatmul.bf16.gmra.mxu0 %v285
  %v869 = vpop.f32.mrf.mxu0
  %v870 = vadd.f32 %v121, %v869
  %v871 = vpop.f32.mrf.mxu0
  %v872 = vadd.f32 %v121, %v871
  %873 = vmatmul.bf16.gmra.mxu0 %v288
  %v874 = vpop.f32.mrf.mxu0
  %v875 = vadd.f32 %v121, %v874
  %v876 = vpop.f32.mrf.mxu0
  %v877 = vadd.f32 %v121, %v876
  %878 = vmatmul.bf16.gmra.mxu0 %v291
  %v879 = vpop.f32.mrf.mxu0
  %v880 = vadd.f32 %v121, %v879
  %v881 = vpop.f32.mrf.mxu0
  %v882 = vadd.f32 %v121, %v881
  %883 = vmatmul.bf16.gmra.mxu0 %v294
  %v884 = vpop.f32.mrf.mxu0
  %v885 = vadd.f32 %v121, %v884
  %v886 = vpop.f32.mrf.mxu0
  %v887 = vadd.f32 %v121, %v886
  %888 = vmatmul.bf16.gmra.mxu0 %v297
  %v889 = vpop.f32.mrf.mxu0
  %v890 = vadd.f32 %v121, %v889
  %v891 = vpop.f32.mrf.mxu0
  %v892 = vadd.f32 %v121, %v891
  %893 = vmatmul.bf16.gmra.mxu0 %v300
  %v894 = vpop.f32.mrf.mxu0
  %v895 = vadd.f32 %v121, %v894
  %v896 = vpop.f32.mrf.mxu0
  %v897 = vadd.f32 %v121, %v896
  %898 = vmatmul.bf16.gmra.mxu0 %v303
  %v899 = vpop.f32.mrf.mxu0
  %v900 = vadd.f32 %v121, %v899
  %v901 = vpop.f32.mrf.mxu0
  %v902 = vadd.f32 %v121, %v901
  %903 = vdwg.mxu0
  %904 = vmatpush.bf16.msra.mxu0 %v523
  %905 = vmatpush.bf16.msra.mxu0 %v521
  %906 = vmatpush.bf16.msra.mxu0 %v519
  %907 = vmatpush.bf16.msra.mxu0 %v517
  %908 = vmatpush.bf16.msra.mxu0 %v515
  %909 = vmatpush.bf16.msra.mxu0 %v513
  %910 = vmatpush.bf16.msra.mxu0 %v511
  %911 = vmatpush.bf16.msra.mxu0 %v509
  %912 = vmatmul.bf16.gmra.mxu0 %v265
  %v913 = vpop.f32.mrf.mxu0
  %v914 = vadd.f32 %v835, %v913
  %v915 = vpop.f32.mrf.mxu0
  %v916 = vadd.f32 %v837, %v915
  %917 = vmatmul.bf16.gmra.mxu0 %v268
  %v918 = vpop.f32.mrf.mxu0
  %v919 = vadd.f32 %v840, %v918
  %v920 = vpop.f32.mrf.mxu0
  %v921 = vadd.f32 %v842, %v920
  %922 = vmatmul.bf16.gmra.mxu0 %v271
  %v923 = vpop.f32.mrf.mxu0
  %v924 = vadd.f32 %v845, %v923
  %v925 = vpop.f32.mrf.mxu0
  %v926 = vadd.f32 %v847, %v925
  %927 = vmatmul.bf16.gmra.mxu0 %v274
  %v928 = vpop.f32.mrf.mxu0
  %v929 = vadd.f32 %v850, %v928
  %v930 = vpop.f32.mrf.mxu0
  %v931 = vadd.f32 %v852, %v930
  %932 = vmatmul.bf16.gmra.mxu0 %v277
  %v933 = vpop.f32.mrf.mxu0
  %v934 = vadd.f32 %v855, %v933
  %v935 = vpop.f32.mrf.mxu0
  %v936 = vadd.f32 %v857, %v935
  %937 = vmatmul.bf16.gmra.mxu0 %v280
  %v938 = vpop.f32.mrf.mxu0
  %v939 = vadd.f32 %v860, %v938
  %v940 = vpop.f32.mrf.mxu0
  %v941 = vadd.f32 %v862, %v940
  %942 = vmatmul.bf16.gmra.mxu0 %v283
  %v943 = vpop.f32.mrf.mxu0
  %v944 = vadd.f32 %v865, %v943
  %v945 = vpop.f32.mrf.mxu0
  %v946 = vadd.f32 %v867, %v945
  %947 = vmatmul.bf16.gmra.mxu0 %v286
  %v948 = vpop.f32.mrf.mxu0
  %v949 = vadd.f32 %v870, %v948
  %v950 = vpop.f32.mrf.mxu0
  %v951 = vadd.f32 %v872, %v950
  %952 = vmatmul.bf16.gmra.mxu0 %v289
  %v953 = vpop.f32.mrf.mxu0
  %v954 = vadd.f32 %v875, %v953
  %v955 = vpop.f32.mrf.mxu0
  %v956 = vadd.f32 %v877, %v955
  %957 = vmatmul.bf16.gmra.mxu0 %v292
  %v958 = vpop.f32.mrf.mxu0
  %v959 = vadd.f32 %v880, %v958
  %v960 = vpop.f32.mrf.mxu0
  %v961 = vadd.f32 %v882, %v960
  %962 = vmatmul.bf16.gmra.mxu0 %v295
  %v963 = vpop.f32.mrf.mxu0
  %v964 = vadd.f32 %v885, %v963
  %v965 = vpop.f32.mrf.mxu0
  %v966 = vadd.f32 %v887, %v965
  %967 = vmatmul.bf16.gmra.mxu0 %v298
  %v968 = vpop.f32.mrf.mxu0
  %v969 = vadd.f32 %v890, %v968
  %v970 = vpop.f32.mrf.mxu0
  %v971 = vadd.f32 %v892, %v970
  %972 = vmatmul.bf16.gmra.mxu0 %v301
  %v973 = vpop.f32.mrf.mxu0
  %v974 = vadd.f32 %v895, %v973
  %v975 = vpop.f32.mrf.mxu0
  %v976 = vadd.f32 %v897, %v975
  %977 = vmatmul.bf16.gmra.mxu0 %v304
  %v978 = vpop.f32.mrf.mxu0
  %v979 = vadd.f32 %v900, %v978
  %v980 = vpop.f32.mrf.mxu0
  %v981 = vadd.f32 %v902, %v980
  %982 = vdwg.mxu0
  %983 = vmatpush.bf16.msra.mxu0 %v539
  %984 = vmatpush.bf16.msra.mxu0 %v537
  %985 = vmatpush.bf16.msra.mxu0 %v535
  %986 = vmatpush.bf16.msra.mxu0 %v533
  %987 = vmatpush.bf16.msra.mxu0 %v531
  %988 = vmatpush.bf16.msra.mxu0 %v529
  %989 = vmatpush.bf16.msra.mxu0 %v527
  %990 = vmatpush.bf16.msra.mxu0 %v525
  %991 = vmatmul.bf16.gmra.mxu0 %v266
  %v992 = vpop.f32.mrf.mxu0
  %v993 = vadd.f32 %v914, %v992
  %v994 = vpop.f32.mrf.mxu0
  %v995 = vadd.f32 %v916, %v994
  %996 = vmatmul.bf16.gmra.mxu0 %v269
  %v997 = vpop.f32.mrf.mxu0
  %v998 = vadd.f32 %v919, %v997
  %v999 = vpop.f32.mrf.mxu0
  %v1000 = vadd.f32 %v921, %v999
  %1001 = vmatmul.bf16.gmra.mxu0 %v272
  %v1002 = vpop.f32.mrf.mxu0
  %v1003 = vadd.f32 %v924, %v1002
  %v1004 = vpop.f32.mrf.mxu0
  %v1005 = vadd.f32 %v926, %v1004
  %1006 = vmatmul.bf16.gmra.mxu0 %v275
  %v1007 = vpop.f32.mrf.mxu0
  %v1008 = vadd.f32 %v929, %v1007
  %v1009 = vpop.f32.mrf.mxu0
  %v1010 = vadd.f32 %v931, %v1009
  %1011 = vmatmul.bf16.gmra.mxu0 %v278
  %v1012 = vpop.f32.mrf.mxu0
  %v1013 = vadd.f32 %v934, %v1012
  %v1014 = vpop.f32.mrf.mxu0
  %v1015 = vadd.f32 %v936, %v1014
  %1016 = vmatmul.bf16.gmra.mxu0 %v281
  %v1017 = vpop.f32.mrf.mxu0
  %v1018 = vadd.f32 %v939, %v1017
  %v1019 = vpop.f32.mrf.mxu0
  %v1020 = vadd.f32 %v941, %v1019
  %1021 = vmatmul.bf16.gmra.mxu0 %v284
  %v1022 = vpop.f32.mrf.mxu0
  %v1023 = vadd.f32 %v944, %v1022
  %v1024 = vpop.f32.mrf.mxu0
  %v1025 = vadd.f32 %v946, %v1024
  %1026 = vmatmul.bf16.gmra.mxu0 %v287
  %v1027 = vpop.f32.mrf.mxu0
  %v1028 = vadd.f32 %v949, %v1027
  %v1029 = vpop.f32.mrf.mxu0
  %v1030 = vadd.f32 %v951, %v1029
  %1031 = vmatmul.bf16.gmra.mxu0 %v290
  %v1032 = vpop.f32.mrf.mxu0
  %v1033 = vadd.f32 %v954, %v1032
  %v1034 = vpop.f32.mrf.mxu0
  %v1035 = vadd.f32 %v956, %v1034
  %1036 = vmatmul.bf16.gmra.mxu0 %v293
  %v1037 = vpop.f32.mrf.mxu0
  %v1038 = vadd.f32 %v959, %v1037
  %v1039 = vpop.f32.mrf.mxu0
  %v1040 = vadd.f32 %v961, %v1039
  %1041 = vmatmul.bf16.gmra.mxu0 %v296
  %v1042 = vpop.f32.mrf.mxu0
  %v1043 = vadd.f32 %v964, %v1042
  %v1044 = vpop.f32.mrf.mxu0
  %v1045 = vadd.f32 %v966, %v1044
  %1046 = vmatmul.bf16.gmra.mxu0 %v299
  %v1047 = vpop.f32.mrf.mxu0
  %v1048 = vadd.f32 %v969, %v1047
  %v1049 = vpop.f32.mrf.mxu0
  %v1050 = vadd.f32 %v971, %v1049
  %1051 = vmatmul.bf16.gmra.mxu0 %v302
  %v1052 = vpop.f32.mrf.mxu0
  %v1053 = vadd.f32 %v974, %v1052
  %v1054 = vpop.f32.mrf.mxu0
  %v1055 = vadd.f32 %v976, %v1054
  %1056 = vmatmul.bf16.gmra.mxu0 %v305
  %v1057 = vpop.f32.mrf.mxu0
  %v1058 = vadd.f32 %v979, %v1057
  %v1059 = vpop.f32.mrf.mxu0
  %v1060 = vadd.f32 %v981, %v1059
  %1061 = vdwg.mxu0
  %v1062 = vmax.f32 %v756, 0.0
  %v1063 = vmax.f32 %v993, 0.0
  %v1064 = vmax.f32 %v758, 0.0
  %v1065 = vmax.f32 %v995, 0.0
  %v1066 = vmax.f32 %v761, 0.0
  %v1067 = vmax.f32 %v998, 0.0
  %v1068 = vmax.f32 %v763, 0.0
  %v1069 = vmax.f32 %v1000, 0.0
  %v1070 = vmax.f32 %v766, 0.0
  %v1071 = vmax.f32 %v1003, 0.0
  %v1072 = vmax.f32 %v768, 0.0
  %v1073 = vmax.f32 %v1005, 0.0
  %v1074 = vmax.f32 %v771, 0.0
  %v1075 = vmax.f32 %v1008, 0.0
  %v1076 = vmax.f32 %v773, 0.0
  %v1077 = vmax.f32 %v1010, 0.0
  %v1078 = vmax.f32 %v776, 0.0
  %v1079 = vmax.f32 %v1013, 0.0
  %v1080 = vmax.f32 %v778, 0.0
  %v1081 = vmax.f32 %v1015, 0.0
  %v1082 = vmax.f32 %v781, 0.0
  %v1083 = vmax.f32 %v1018, 0.0
  %v1084 = vmax.f32 %v783, 0.0
  %v1085 = vmax.f32 %v1020, 0.0
  %v1086 = vmax.f32 %v786, 0.0
  %v1087 = vmax.f32 %v1023, 0.0
  %v1088 = vmax.f32 %v788, 0.0
  %v1089 = vmax.f32 %v1025, 0.0
  %v1090 = vmax.f32 %v791, 0.0
  %v1091 = vmax.f32 %v1028, 0.0
  %v1092 = vmax.f32 %v793, 0.0
  %v1093 = vmax.f32 %v1030, 0.0
  %v1094 = vmax.f32 %v796, 0.0
  %v1095 = vmax.f32 %v1033, 0.0
  %v1096 = vmax.f32 %v798, 0.0
  %v1097 = vmax.f32 %v1035, 0.0
  %v1098 = vmax.f32 %v801, 0.0
  %v1099 = vmax.f32 %v1038, 0.0
  %v1100 = vmax.f32 %v803, 0.0
  %v1101 = vmax.f32 %v1040, 0.0
  %v1102 = vmax.f32 %v806, 0.0
  %v1103 = vmax.f32 %v1043, 0.0
  %v1104 = vmax.f32 %v808, 0.0
  %v1105 = vmax.f32 %v1045, 0.0
  %v1106 = vmax.f32 %v811, 0.0
  %v1107 = vmax.f32 %v1048, 0.0
  %v1108 = vmax.f32 %v813, 0.0
  %v1109 = vmax.f32 %v1050, 0.0
  %v1110 = vmax.f32 %v816, 0.0
  %v1111 = vmax.f32 %v1053, 0.0
  %v1112 = vmax.f32 %v818, 0.0
  %v1113 = vmax.f32 %v1055, 0.0
  %v1114 = vmax.f32 %v821, 0.0
  %v1115 = vmax.f32 %v1058, 0.0
  %v1116 = vmax.f32 %v823, 0.0
  %v1117 = vmax.f32 %v1060, 0.0
  %v1118 = vpack.c.bf16 %v1063, %v1062
  %v1119 = vpack.c.bf16 %v1065, %v1064
  %v1120 = vpack.c.bf16 %v1067, %v1066
  %v1121 = vpack.c.bf16 %v1069, %v1068
  %v1122 = vpack.c.bf16 %v1071, %v1070
  %v1123 = vpack.c.bf16 %v1073, %v1072
  %v1124 = vpack.c.bf16 %v1075, %v1074
  %v1125 = vpack.c.bf16 %v1077, %v1076
  %v1126 = vpack.c.bf16 %v1079, %v1078
  %v1127 = vpack.c.bf16 %v1081, %v1080
  %v1128 = vpack.c.bf16 %v1083, %v1082
  %v1129 = vpack.c.bf16 %v1085, %v1084
  %v1130 = vpack.c.bf16 %v1087, %v1086
  %v1131 = vpack.c.bf16 %v1089, %v1088
  %v1132 = vpack.c.bf16 %v1091, %v1090
  %v1133 = vpack.c.bf16 %v1093, %v1092
  %v1134 = vpack.c.bf16 %v1095, %v1094
  %v1135 = vpack.c.bf16 %v1097, %v1096
  %v1136 = vpack.c.bf16 %v1099, %v1098
  %v1137 = vpack.c.bf16 %v1101, %v1100
  %v1138 = vpack.c.bf16 %v1103, %v1102
  %v1139 = vpack.c.bf16 %v1105, %v1104
  %v1140 = vpack.c.bf16 %v1107, %v1106
  %v1141 = vpack.c.bf16 %v1109, %v1108
  %v1142 = vpack.c.bf16 %v1111, %v1110
  %v1143 = vpack.c.bf16 %v1113, %v1112
  %v1144 = vpack.c.bf16 %v1115, %v1114
  %v1145 = vpack.c.bf16 %v1117, %v1116
  %1146 = vst [vmem:[%s3] sm:$0xff] %v1118
  %1147 = vst [vmem:[%s3 + $0x8] sm:$0xff] %v1119
  %1148 = vst [vmem:[%s3 + $0x10] sm:$0xff] %v1120
  %1149 = vst [vmem:[%s3 + $0x18] sm:$0xff] %v1121
  %1150 = vst [vmem:[%s3 + $0x20] sm:$0xff] %v1122
  %1151 = vst [vmem:[%s3 + $0x28] sm:$0xff] %v1123
  %1152 = vst [vmem:[%s3 + $0x30] sm:$0xff] %v1124
  %1153 = vst [vmem:[%s3 + $0x38] sm:$0xff] %v1125
  %1154 = vst [vmem:[%s3 + $0x40] sm:$0xff] %v1126
  %1155 = vst [vmem:[%s3 + $0x48] sm:$0xff] %v1127
  %1156 = vst [vmem:[%s3 + $0x50] sm:$0xff] %v1128
  %1157 = vst [vmem:[%s3 + $0x58] sm:$0xff] %v1129
  %1158 = vst [vmem:[%s3 + $0x60] sm:$0xff] %v1130
  %1159 = vst [vmem:[%s3 + $0x68] sm:$0xff] %v1131
  %1160 = vst [vmem:[%s3 + $0x70] sm:$0xff] %v1132
  %1161 = vst [vmem:[%s3 + $0x78] sm:$0xff] %v1133
  %1162 = vst [vmem:[%s3 + $0x80] sm:$0xff] %v1134
  %1163 = vst [vmem:[%s3 + $0x88] sm:$0xff] %v1135
  %1164 = vst [vmem:[%s3 + $0x90] sm:$0xff] %v1136
  %1165 = vst [vmem:[%s3 + $0x98] sm:$0xff] %v1137
  %1166 = vst [vmem:[%s3 + $0xa0] sm:$0xff] %v1138
  %1167 = vst [vmem:[%s3 + $0xa8] sm:$0xff] %v1139
  %1168 = vst [vmem:[%s3 + $0xb0] sm:$0xff] %v1140
  %1169 = vst [vmem:[%s3 + $0xb8] sm:$0xff] %v1141
  %1170 = vst [vmem:[%s3 + $0xc0] sm:$0xff] %v1142
  %1171 = vst [vmem:[%s3 + $0xc8] sm:$0xff] %v1143
  %1172 = vst [vmem:[%s3 + $0xd0] sm:$0xff] %v1144
  %1173 = vst [vmem:[%s3 + $0xd8] sm:$0xff] %v1145
  // Predicated region
  $region14: #{cnnae_forward.8} parent=0 // pred_check
    _
  $region15: #{cnnae_forward.8} parent=0 // pred_check_branch
    %1175 = sbr.rel (0) target = $region17
  $region16: #{cnnae_forward.8} parent=0 // pred_region
    _
  $region17: #{cnnae_forward.8} parent=0 // pred_fallthru
    _
  // Predicated region
  $region18: #{cnnae_forward.8} parent=0 // pred_check
    _
  $region19: #{cnnae_forward.8} parent=0 // pred_check_branch
    %1177 = sbr.rel (0) target = $region21
  $region20: #{cnnae_forward.8} parent=0 // pred_region
    _
  $region21: #{cnnae_forward.8} parent=0 // pred_fallthru
    _

// kernel: tile.28
$region0: #{tile.28}
  #allocation0 [shape = 's32[1]{0}', space=sflag, size = 0x4, scoped, tag = 'scoped memory for tile.28']
  %s0 = inlined_call_operand.vmem [shape: f32[3], index: 0, kind: input, shape index: {}]
  %s1 = inlined_call_operand.vmem [shape: f32[4,3], index: 1, kind: output, shape index: {}]
  // Predicated region
  $region2: #{tile.28} parent=0 // pred_check
    _
  $region3: #{tile.28} parent=0 // pred_check_branch
    %3 = sbr.rel (0) target = $region5
  $region4: #{tile.28} parent=0 // pred_region
    _
  $region5: #{tile.28} parent=0 // pred_fallthru
    _
  %v4 = vld [vmem:[%s0] ss:$0 sm:$0xff]
  %5 = vst [vmem:[%s1] sm:$0xf] %v4

// kernel: tile.29
$region0: #{tile.29}
  %s0 = inlined_call_operand.vmem [shape: f32[4,3], index: 0, kind: input, shape index: {}]
  %s1 = inlined_call_operand.vmem [shape: f32[1,12], index: 1, kind: output, shape index: {}]
  $region1: #{tile.29} parent=0
    #allocation0 [shape = 'u8[4096]{0}', space=vmem, size = 0x1000, scoped, tag = 'scoped mem for output reshape']
    #allocation1 [shape = 'u8[4096]{0}', space=vmem, size = 0x1000, scoped, tag = 'scoped mem for input reshape']
    %s3 = ssub.s32 16, 1
    %v4 = vld [vmem:[%s0] sm:%s3]
    %5 = vst [vmem:[#allocation1] sm:%s3] %v4
    %v6 = vld [vmem:[#allocation1] sm:$0x1]
    %vm7 = vcmask 23552
    %8 = vst.msk [vmem:[#allocation0] sm:$0x1] %vm7, %v6
    %s9 = scalar_lea.vmem [#allocation1], 3
    %v10 = vld [vmem:[%s9] sm:$0x1]
    %11 = vrot.lane.b32.xlu0 %v10, 9
    %v12 = vpop.permute.xlu0 %11
    %vm13 = vcmask 97352
    %14 = vst.msk [vmem:[#allocation0] sm:$0x1] %vm13, %v12
    %s15 = scalar_lea.vmem [#allocation1], 2
    %v16 = vld [vmem:[%s15] sm:$0x1]
    %17 = vrot.lane.b32.xlu0 %v16, 6
    %v18 = vpop.permute.xlu0 %17
    %vm19 = vcmask 72752
    %20 = vst.msk [vmem:[#allocation0] sm:$0x1] %vm19, %v18
    %s21 = scalar_lea.vmem [#allocation1], 1
    %v22 = vld [vmem:[%s21] sm:$0x1]
    %23 = vrot.lane.b32.xlu0 %v22, 3
    %v24 = vpop.permute.xlu0 %23
    %vm25 = vcmask 48152
    %26 = vst.msk [vmem:[#allocation0] sm:$0x1] %vm25, %v24
    %s28 = ssub.s32 2, 1
    %v29 = vld [vmem:[#allocation0] sm:%s28]
    %s31 = ssub.s32 2, 1
    %32 = vst [vmem:[%s1] sm:%s31] %v29

// kernel: cnnae_forward.9
$region0: #{cnnae_forward.9}
  #allocation0 [shape = 'u32[]', space=smem, size = 0x4, offset = 0x4, fixed_abs, tag = 'smem constant byte address 0x4 - core index']
  #allocation1 [shape = 'u32[72,128]{1,0:T(1,128)}', space=vmem, size = 0x9000, scoped, tag = 'internal scratch']
  %s0 = inlined_call_operand.vmem [shape: bf16[1056,1024], index: 0, kind: input, shape index: {}]
  %s1 = inlined_call_operand.vmem [shape: bf16[1024,128], index: 1, kind: input, shape index: {}]
  %s2 = inlined_call_operand.vmem [shape: f32[1,128], index: 2, kind: input, shape index: {}]
  %s3 = inlined_call_operand.vmem [shape: f32[1056,128], index: 3, kind: output, shape index: {}]
  %s4 = sld [smem:[#allocation0]]
  $region45: #{cnnae_forward.9} parent=0
    _
  %s6 = ssub.s32 1, %s4
  %s7 = scalar_select 0, %s6, %s4
  loop: start=0, step=1, limit=4
  $region2: #{cnnae_forward.9} parent=0 // loop_pre_header
    _
  $region3: #{cnnae_forward.9} parent=0 // loop_header
    %s9 = sphi 0, %s13
    %p10 = scmp.ge.s32.totalorder %s9, 4
    %s16 = sphi 0, %s28
    %s17 = sphi 0, %s24
    %s18 = sphi 0, %s16
    %s19 = sphi 0, %s17
    %s20 = sphi 0, %s18
    %s21 = sphi 0, %s19
    %s31 = sphi 0, %s33
    %s34 = sphi 0, %s31
    %s35 = sphi 0, %s34
    %s51 = sphi 0, %s35
    %s57 = sphi 0, %s59
    %s60 = sphi 0, %s57
    %s61 = sphi 0, %s60
    %s77 = sphi 0, %s61
    %s83 = sphi 0, %s85
    %s86 = sphi 0, %s83
    %s87 = sphi 0, %s86
    %s103 = sphi 0, %s87
    %s111 = sphi 0, %s113
    %s114 = sphi 0, %s111
    %s115 = sphi 0, %s114
    %s131 = sphi 0, %s115
  $region4: #{cnnae_forward.9} parent=0 // loop_header_branch
    %12 = sbr.rel (%p10) target = $region8
  $region5: #{cnnae_forward.9} parent=0 // loop_body
    %s14 = ssub.s32 %s9, 1
    %s15 = ssub.s32 %s9, 2
    %s22 = sadd.s32 1, %s17
    %p23 = scmp.ge.s32.totalorder %s22, 1
    %s24 = scalar_select %p23, 0, %s22
    %s25 = sadd.s32 1, %s16
    %s26 = scalar_select %p23, %s25, %s16
    %p27 = scmp.ge.s32.totalorder %s26, 2
    %s28 = scalar_select %p27, 0, %s26
    %s29 = ssub.s32 %s16, %s28
    %p30 = scmp.eq.s32.totalorder %s29, 0
    %s32 = sadd.s32 %s31, 1
    %s33 = scalar_select %p30, %s31, %s32
    %p36 = pneg %p30
    %p37 = scmp.eq.s32.totalorder %s9, 1
    %p38 = por %p36, %p37
    %p39 = scmp.ne.s32.totalorder %s31, %s34
    %p40 = scmp.eq.s32.totalorder %s9, 0
    %p41 = por %p39, %p40
    %p42 = scmp.ne.s32.totalorder %s31, %s34
    %p43 = scmp.eq.s32.totalorder %s14, 1
    %p44 = por %p42, %p43
    %p45 = scmp.ne.s32.totalorder %s34, %s35
    %p46 = scmp.eq.s32.totalorder %s14, 0
    %p47 = por %p45, %p46
    %p48 = scmp.ne.s32.totalorder %s34, %s35
    %p49 = scmp.eq.s32.totalorder %s15, 1
    %p50 = por %p48, %p49
    %p52 = scmp.ne.s32.totalorder %s35, %s51
    %p53 = scmp.eq.s32.totalorder %s15, 0
    %p54 = por %p52, %p53
    %s55 = ssub.s32 %s17, %s24
    %p56 = scmp.eq.s32.totalorder %s55, 0
    %s58 = sadd.s32 %s57, 1
    %s59 = scalar_select %p56, %s57, %s58
    %p62 = pneg %p56
    %p63 = scmp.eq.s32.totalorder %s9, 1
    %p64 = por %p62, %p63
    %p65 = scmp.ne.s32.totalorder %s57, %s60
    %p66 = scmp.eq.s32.totalorder %s9, 0
    %p67 = por %p65, %p66
    %p68 = scmp.ne.s32.totalorder %s57, %s60
    %p69 = scmp.eq.s32.totalorder %s14, 1
    %p70 = por %p68, %p69
    %p71 = scmp.ne.s32.totalorder %s60, %s61
    %p72 = scmp.eq.s32.totalorder %s14, 0
    %p73 = por %p71, %p72
    %p74 = scmp.ne.s32.totalorder %s60, %s61
    %p75 = scmp.eq.s32.totalorder %s15, 1
    %p76 = por %p74, %p75
    %p78 = scmp.ne.s32.totalorder %s61, %s77
    %p79 = scmp.eq.s32.totalorder %s15, 0
    %p80 = por %p78, %p79
    %s81 = ssub.s32 %s17, %s24
    %p82 = scmp.eq.s32.totalorder %s81, 0
    %s84 = sadd.s32 %s83, 1
    %s85 = scalar_select %p82, %s83, %s84
    %p88 = pneg %p82
    %p89 = scmp.eq.s32.totalorder %s9, 1
    %p90 = por %p88, %p89
    %p91 = scmp.ne.s32.totalorder %s83, %s86
    %p92 = scmp.eq.s32.totalorder %s9, 0
    %p93 = por %p91, %p92
    %p94 = scmp.ne.s32.totalorder %s83, %s86
    %p95 = scmp.eq.s32.totalorder %s14, 1
    %p96 = por %p94, %p95
    %p97 = scmp.ne.s32.totalorder %s86, %s87
    %p98 = scmp.eq.s32.totalorder %s14, 0
    %p99 = por %p97, %p98
    %p100 = scmp.ne.s32.totalorder %s86, %s87
    %p101 = scmp.eq.s32.totalorder %s15, 1
    %p102 = por %p100, %p101
    %p104 = scmp.ne.s32.totalorder %s87, %s103
    %p105 = scmp.eq.s32.totalorder %s15, 0
    %p106 = por %p104, %p105
    %s107 = ssub.s32 %s16, %s28
    %s108 = ssub.s32 %s17, %s24
    %s109 = sor.u32 %s107, %s108
    %p110 = scmp.eq.s32.totalorder %s109, 0
    %s112 = sadd.s32 %s111, 1
    %s113 = scalar_select %p110, %s111, %s112
    %p116 = pneg %p110
    %p117 = scmp.eq.s32.totalorder %s9, 1
    %p118 = por %p116, %p117
    %p119 = scmp.ne.s32.totalorder %s111, %s114
    %p120 = scmp.eq.s32.totalorder %s9, 0
    %p121 = por %p119, %p120
    %p122 = scmp.ne.s32.totalorder %s111, %s114
    %p123 = scmp.eq.s32.totalorder %s14, 1
    %p124 = por %p122, %p123
    %p125 = scmp.ne.s32.totalorder %s114, %s115
    %p126 = scmp.eq.s32.totalorder %s14, 0
    %p127 = por %p125, %p126
    %p128 = scmp.ne.s32.totalorder %s114, %s115
    %p129 = scmp.eq.s32.totalorder %s15, 1
    %p130 = por %p128, %p129
    %p132 = scmp.ne.s32.totalorder %s115, %s131
    %p133 = scmp.eq.s32.totalorder %s15, 0
    %p134 = por %p132, %p133
    %p135 = scmp.le.s32.totalorder 1, %s9
    %p136 = scmp.lt.s32.totalorder %s9, 3
    %p137 = pnand %p135, %p136
    %p138 = pneg %p137
    // Predicated region
    $region9: #{cnnae_forward.9} parent=5 // pred_check
      _
    $region10: #{cnnae_forward.9} parent=5 // pred_check_branch
      %140 = sbr.rel (%p137) target = $region12
    $region11: #{cnnae_forward.9} parent=5 // pred_region
      %s141 = ssub.s32 %s9, 1
      // Predicated region
      $region13: #{cnnae_forward.9} parent=11 // pred_check
        %p142 = pneg %p73
      $region14: #{cnnae_forward.9} parent=11 // pred_check_branch
        %144 = sbr.rel (%p142) target = $region16
      $region15: #{cnnae_forward.9} parent=11 // pred_region
        %p145 = scmp.lt.s32.totalorder %s19, 0
        %s146 = scalar_select %p145, %s19, 0
        %s147 = smul.addr %s146, 4
        %s148 = scalar_lea.vmem %s1, %s147
      $region16: #{cnnae_forward.9} parent=11 // pred_fallthru
        _
      // Predicated region
      $region17: #{cnnae_forward.9} parent=11 // pred_check
        %p149 = pneg %p99
      $region18: #{cnnae_forward.9} parent=11 // pred_check_branch
        %151 = sbr.rel (%p149) target = $region20
      $region19: #{cnnae_forward.9} parent=11 // pred_region
        %p152 = scmp.lt.s32.totalorder %s19, 0
        %s153 = scalar_select %p152, %s19, 0
        %s154 = scalar_lea.vmem %s2, %s153
      $region20: #{cnnae_forward.9} parent=11 // pred_fallthru
        _
    $region12: #{cnnae_forward.9} parent=5 // pred_fallthru
      _
    %p155 = scmp.lt.s32.totalorder %s9, 2
    // Predicated region
    $region21: #{cnnae_forward.9} parent=5 // pred_check
      %p156 = pneg %p155
    $region22: #{cnnae_forward.9} parent=5 // pred_check_branch
      %158 = sbr.rel (%p156) target = $region24
    $region23: #{cnnae_forward.9} parent=5 // pred_region
      // Predicated region
      $region25: #{cnnae_forward.9} parent=23 // pred_check
        %p159 = pneg %p41
      $region26: #{cnnae_forward.9} parent=23 // pred_check_branch
        %161 = sbr.rel (%p159) target = $region28
      $region27: #{cnnae_forward.9} parent=23 // pred_region
        %s162 = smul.u32 66, %s16
        %p163 = scmp.lt.s32.totalorder %s162, 131
        %s164 = scalar_select %p163, %s162, 131
        %s165 = smul.addr %s164, 8
        %s166 = smul.addr %s165, 4
        %s167 = scalar_lea.vmem %s0, %s166
        %s168 = smul.u32 66, %s16
      $region28: #{cnnae_forward.9} parent=23 // pred_fallthru
        _
    $region24: #{cnnae_forward.9} parent=5 // pred_fallthru
      _
    %p169 = scmp.le.s32.totalorder 1, %s9
    %p170 = scmp.lt.s32.totalorder %s9, 3
    %p171 = pnand %p169, %p170
    %p172 = pneg %p171
    // Predicated region
    $region29: #{cnnae_forward.9} parent=5 // pred_check
      _
    $region30: #{cnnae_forward.9} parent=5 // pred_check_branch
      %174 = sbr.rel (%p171) target = $region32
    $region31: #{cnnae_forward.9} parent=5 // pred_region
      %s175 = ssub.s32 %s9, 1
      %s176 = smul.u32 66, %s18
      %p177 = scmp.lt.s32.totalorder %s176, 131
      %s178 = scalar_select %p177, %s176, 131
      %s179 = smul.addr %s178, 8
      %s180 = smul.addr %s179, 4
      %s181 = scalar_lea.vmem %s0, %s180
      %p182 = pneg %p47
      %p183 = pneg %p44
      %p184 = scmp.lt.s32.totalorder %s19, 0
      %s185 = scalar_select %p184, %s19, 0
      %s186 = smul.addr %s185, 4
      %s187 = scalar_lea.vmem %s1, %s186
      %p188 = pneg %p73
      %p189 = pneg %p70
      %p190 = scmp.lt.s32.totalorder %s19, 0
      %s191 = scalar_select %p190, %s19, 0
      %s192 = scalar_lea.vmem %s2, %s191
      %p193 = pneg %p99
      %p194 = pneg %p96
      %p195 = pneg %p127
      %p196 = pneg %p124
      %s197 = smul.u32 66, %s18
      %p198 = scmp.lt.s32.totalorder %s197, 131
      %s199 = scalar_select %p198, %s197, 131
      %p200 = scmp.lt.s32.totalorder %s19, 0
      %s201 = scalar_select %p200, %s19, 0
      %s202 = sadd.s32 %s201, %s199
      %s203 = smul.addr %s202, 8
      %s204 = scalar_lea.vmem %s3, %s203
      %s205 = smul.u32 66, %s18
      %p206 = scmp.lt.s32.totalorder %s205, 131
      %s207 = scalar_select %p206, %s205, 131
      %s208 = smul.addr %s207, 8
      %s209 = smul.addr %s208, 4
      %s210 = scalar_lea.vmem %s0, %s209
      %s211 = smul.u32 66, %s18
      %p212 = scmp.lt.s32.totalorder %s19, 0
      %s213 = scalar_select %p212, %s19, 0
      %s214 = smul.addr %s213, 4
      %s215 = scalar_lea.vmem %s1, %s214
      %p216 = scmp.lt.s32.totalorder %s19, 0
      %s217 = scalar_select %p216, %s19, 0
      %s218 = scalar_lea.vmem %s2, %s217
      %s219 = smul.u32 66, %s18
      %p220 = scmp.lt.s32.totalorder %s219, 131
      %s221 = scalar_select %p220, %s219, 131
      %p222 = scmp.lt.s32.totalorder %s19, 0
      %s223 = scalar_select %p222, %s19, 0
      %s224 = sadd.s32 %s223, %s221
      %s225 = smul.addr %s224, 8
      %s226 = scalar_lea.vmem %s3, %s225
      %s227 = smul.u32 66, %s18
      %v228 = vld [vmem:[%s210] sm:$0xff]
      %v229 = vld [vmem:[%s210 + $0x8] sm:$0xff]
      %v230 = vld [vmem:[%s210 + $0x10] sm:$0xff]
      %v231 = vld [vmem:[%s210 + $0x18] sm:$0xff]
      %v232 = vld [vmem:[%s210 + $0x20] sm:$0xff]
      %v233 = vld [vmem:[%s210 + $0x28] sm:$0xff]
      %v234 = vld [vmem:[%s210 + $0x30] sm:$0xff]
      %v235 = vld [vmem:[%s210 + $0x38] sm:$0xff]
      %v236 = vld [vmem:[%s210 + $0x40] sm:$0xff]
      %v237 = vld [vmem:[%s210 + $0x48] sm:$0xff]
      %v238 = vld [vmem:[%s210 + $0x50] sm:$0xff]
      %v239 = vld [vmem:[%s210 + $0x58] sm:$0xff]
      %v240 = vld [vmem:[%s210 + $0x60] sm:$0xff]
      %v241 = vld [vmem:[%s210 + $0x68] sm:$0xff]
      %v242 = vld [vmem:[%s210 + $0x70] sm:$0xff]
      %v243 = vld [vmem:[%s210 + $0x78] sm:$0xff]
      %v244 = vld [vmem:[%s210 + $0x80] sm:$0xff]
      %v245 = vld [vmem:[%s210 + $0x88] sm:$0xff]
      %v246 = vld [vmem:[%s210 + $0x90] sm:$0xff]
      %v247 = vld [vmem:[%s210 + $0x98] sm:$0xff]
      %v248 = vld [vmem:[%s210 + $0xa0] sm:$0xff]
      %v249 = vld [vmem:[%s210 + $0xa8] sm:$0xff]
      %v250 = vld [vmem:[%s210 + $0xb0] sm:$0xff]
      %v251 = vld [vmem:[%s210 + $0xb8] sm:$0xff]
      %v252 = vld [vmem:[%s210 + $0xc0] sm:$0xff]
      %v253 = vld [vmem:[%s210 + $0xc8] sm:$0xff]
      %v254 = vld [vmem:[%s210 + $0xd0] sm:$0xff]
      %v255 = vld [vmem:[%s210 + $0xd8] sm:$0xff]
      %v256 = vld [vmem:[%s210 + $0xe0] sm:$0xff]
      %v257 = vld [vmem:[%s210 + $0xe8] sm:$0xff]
      %v258 = vld [vmem:[%s210 + $0xf0] sm:$0xff]
      %v259 = vld [vmem:[%s210 + $0xf8] sm:$0xff]
      %v260 = vld [vmem:[%s210 + $0x100] sm:$0xff]
      %v261 = vld [vmem:[%s210 + $0x108] sm:$0xff]
      %v262 = vld [vmem:[%s210 + $0x110] sm:$0xff]
      %v263 = vld [vmem:[%s210 + $0x118] sm:$0xff]
      %v264 = vld [vmem:[%s210 + $0x120] sm:$0xff]
      %v265 = vld [vmem:[%s210 + $0x128] sm:$0xff]
      %v266 = vld [vmem:[%s210 + $0x130] sm:$0xff]
      %v267 = vld [vmem:[%s210 + $0x138] sm:$0xff]
      %v268 = vld [vmem:[%s210 + $0x140] sm:$0xff]
      %v269 = vld [vmem:[%s210 + $0x148] sm:$0xff]
      %v270 = vld [vmem:[%s210 + $0x150] sm:$0xff]
      %v271 = vld [vmem:[%s210 + $0x158] sm:$0xff]
      %v272 = vld [vmem:[%s210 + $0x160] sm:$0xff]
      %v273 = vld [vmem:[%s210 + $0x168] sm:$0xff]
      %v274 = vld [vmem:[%s210 + $0x170] sm:$0xff]
      %v275 = vld [vmem:[%s210 + $0x178] sm:$0xff]
      %v276 = vld [vmem:[%s210 + $0x180] sm:$0xff]
      %v277 = vld [vmem:[%s210 + $0x188] sm:$0xff]
      %v278 = vld [vmem:[%s210 + $0x190] sm:$0xff]
      %v279 = vld [vmem:[%s210 + $0x198] sm:$0xff]
      %v280 = vld [vmem:[%s210 + $0x1a0] sm:$0xff]
      %v281 = vld [vmem:[%s210 + $0x1a8] sm:$0xff]
      %v282 = vld [vmem:[%s210 + $0x1b0] sm:$0xff]
      %v283 = vld [vmem:[%s210 + $0x1b8] sm:$0xff]
      %v284 = vld [vmem:[%s210 + $0x1c0] sm:$0xff]
      %v285 = vld [vmem:[%s210 + $0x1c8] sm:$0xff]
      %v286 = vld [vmem:[%s210 + $0x1d0] sm:$0xff]
      %v287 = vld [vmem:[%s210 + $0x1d8] sm:$0xff]
      %v288 = vld [vmem:[%s210 + $0x1e0] sm:$0xff]
      %v289 = vld [vmem:[%s210 + $0x1e8] sm:$0xff]
      %v290 = vld [vmem:[%s210 + $0x1f0] sm:$0xff]
      %v291 = vld [vmem:[%s210 + $0x1f8] sm:$0xff]
      %v292 = vld [vmem:[%s210 + $0x200] sm:$0xff]
      %v293 = vld [vmem:[%s210 + $0x208] sm:$0xff]
      %v294 = vld [vmem:[%s210 + $0x210] sm:$0xff]
      %v295 = vld [vmem:[%s210 + $0x218] sm:$0xff]
      %v296 = vld [vmem:[%s210 + $0x220] sm:$0xff]
      %v297 = vld [vmem:[%s210 + $0x228] sm:$0xff]
      %v298 = vld [vmem:[%s210 + $0x230] sm:$0xff]
      %v299 = vld [vmem:[%s210 + $0x238] sm:$0xff]
      %v300 = vld [vmem:[%s210 + $0x240] sm:$0xff]
      %v301 = vld [vmem:[%s210 + $0x248] sm:$0xff]
      %v302 = vld [vmem:[%s210 + $0x250] sm:$0xff]
      %v303 = vld [vmem:[%s210 + $0x258] sm:$0xff]
      %v304 = vld [vmem:[%s210 + $0x260] sm:$0xff]
      %v305 = vld [vmem:[%s210 + $0x268] sm:$0xff]
      %v306 = vld [vmem:[%s210 + $0x270] sm:$0xff]
      %v307 = vld [vmem:[%s210 + $0x278] sm:$0xff]
      %v308 = vld [vmem:[%s210 + $0x280] sm:$0xff]
      %v309 = vld [vmem:[%s210 + $0x288] sm:$0xff]
      %v310 = vld [vmem:[%s210 + $0x290] sm:$0xff]
      %v311 = vld [vmem:[%s210 + $0x298] sm:$0xff]
      %v312 = vld [vmem:[%s210 + $0x2a0] sm:$0xff]
      %v313 = vld [vmem:[%s210 + $0x2a8] sm:$0xff]
      %v314 = vld [vmem:[%s210 + $0x2b0] sm:$0xff]
      %v315 = vld [vmem:[%s210 + $0x2b8] sm:$0xff]
      %v316 = vld [vmem:[%s210 + $0x2c0] sm:$0xff]
      %v317 = vld [vmem:[%s210 + $0x2c8] sm:$0xff]
      %v318 = vld [vmem:[%s210 + $0x2d0] sm:$0xff]
      %v319 = vld [vmem:[%s210 + $0x2d8] sm:$0xff]
      %v320 = vld [vmem:[%s210 + $0x2e0] sm:$0xff]
      %v321 = vld [vmem:[%s210 + $0x2e8] sm:$0xff]
      %v322 = vld [vmem:[%s210 + $0x2f0] sm:$0xff]
      %v323 = vld [vmem:[%s210 + $0x2f8] sm:$0xff]
      %v324 = vld [vmem:[%s210 + $0x300] sm:$0xff]
      %v325 = vld [vmem:[%s210 + $0x308] sm:$0xff]
      %v326 = vld [vmem:[%s210 + $0x310] sm:$0xff]
      %v327 = vld [vmem:[%s210 + $0x318] sm:$0xff]
      %v328 = vld [vmem:[%s210 + $0x320] sm:$0xff]
      %v329 = vld [vmem:[%s210 + $0x328] sm:$0xff]
      %v330 = vld [vmem:[%s210 + $0x330] sm:$0xff]
      %v331 = vld [vmem:[%s210 + $0x338] sm:$0xff]
      %v332 = vld [vmem:[%s210 + $0x340] sm:$0xff]
      %v333 = vld [vmem:[%s210 + $0x348] sm:$0xff]
      %v334 = vld [vmem:[%s210 + $0x350] sm:$0xff]
      %v335 = vld [vmem:[%s210 + $0x358] sm:$0xff]
      %v336 = vld [vmem:[%s210 + $0x360] sm:$0xff]
      %v337 = vld [vmem:[%s210 + $0x368] sm:$0xff]
      %v338 = vld [vmem:[%s210 + $0x370] sm:$0xff]
      %v339 = vld [vmem:[%s210 + $0x378] sm:$0xff]
      %v340 = vld [vmem:[%s210 + $0x380] sm:$0xff]
      %v341 = vld [vmem:[%s210 + $0x388] sm:$0xff]
      %v342 = vld [vmem:[%s210 + $0x390] sm:$0xff]
      %v343 = vld [vmem:[%s210 + $0x398] sm:$0xff]
      %v344 = vld [vmem:[%s210 + $0x3a0] sm:$0xff]
      %v345 = vld [vmem:[%s210 + $0x3a8] sm:$0xff]
      %v346 = vld [vmem:[%s210 + $0x3b0] sm:$0xff]
      %v347 = vld [vmem:[%s210 + $0x3b8] sm:$0xff]
      %v348 = vld [vmem:[%s210 + $0x3c0] sm:$0xff]
      %v349 = vld [vmem:[%s210 + $0x3c8] sm:$0xff]
      %v350 = vld [vmem:[%s210 + $0x3d0] sm:$0xff]
      %v351 = vld [vmem:[%s210 + $0x3d8] sm:$0xff]
      %v352 = vld [vmem:[%s210 + $0x3e0] sm:$0xff]
      %v353 = vld [vmem:[%s210 + $0x3e8] sm:$0xff]
      %v354 = vld [vmem:[%s210 + $0x3f0] sm:$0xff]
      %v355 = vld [vmem:[%s210 + $0x3f8] sm:$0xff]
      %v356 = vld [vmem:[%s210 + $0x400] sm:$0xff]
      %v357 = vld [vmem:[%s210 + $0x408] sm:$0xff]
      %v358 = vld [vmem:[%s210 + $0x410] sm:$0xff]
      %v359 = vld [vmem:[%s210 + $0x418] sm:$0xff]
      %v360 = vld [vmem:[%s210 + $0x420] sm:$0xff]
      %v361 = vld [vmem:[%s210 + $0x428] sm:$0xff]
      %v362 = vld [vmem:[%s210 + $0x430] sm:$0xff]
      %v363 = vld [vmem:[%s210 + $0x438] sm:$0xff]
      %v364 = vld [vmem:[%s210 + $0x440] sm:$0xff]
      %v365 = vld [vmem:[%s210 + $0x448] sm:$0xff]
      %v366 = vld [vmem:[%s210 + $0x450] sm:$0xff]
      %v367 = vld [vmem:[%s210 + $0x458] sm:$0xff]
      %v368 = vld [vmem:[%s210 + $0x460] sm:$0xff]
      %v369 = vld [vmem:[%s210 + $0x468] sm:$0xff]
      %v370 = vld [vmem:[%s210 + $0x470] sm:$0xff]
      %v371 = vld [vmem:[%s210 + $0x478] sm:$0xff]
      %v372 = vld [vmem:[%s210 + $0x480] sm:$0xff]
      %v373 = vld [vmem:[%s210 + $0x488] sm:$0xff]
      %v374 = vld [vmem:[%s210 + $0x490] sm:$0xff]
      %v375 = vld [vmem:[%s210 + $0x498] sm:$0xff]
      %v376 = vld [vmem:[%s210 + $0x4a0] sm:$0xff]
      %v377 = vld [vmem:[%s210 + $0x4a8] sm:$0xff]
      %v378 = vld [vmem:[%s210 + $0x4b0] sm:$0xff]
      %v379 = vld [vmem:[%s210 + $0x4b8] sm:$0xff]
      %v380 = vld [vmem:[%s210 + $0x4c0] sm:$0xff]
      %v381 = vld [vmem:[%s210 + $0x4c8] sm:$0xff]
      %v382 = vld [vmem:[%s210 + $0x4d0] sm:$0xff]
      %v383 = vld [vmem:[%s210 + $0x4d8] sm:$0xff]
      %v384 = vld [vmem:[%s210 + $0x4e0] sm:$0xff]
      %v385 = vld [vmem:[%s210 + $0x4e8] sm:$0xff]
      %v386 = vld [vmem:[%s210 + $0x4f0] sm:$0xff]
      %v387 = vld [vmem:[%s210 + $0x4f8] sm:$0xff]
      %v388 = vld [vmem:[%s210 + $0x500] sm:$0xff]
      %v389 = vld [vmem:[%s210 + $0x508] sm:$0xff]
      %v390 = vld [vmem:[%s210 + $0x510] sm:$0xff]
      %v391 = vld [vmem:[%s210 + $0x518] sm:$0xff]
      %v392 = vld [vmem:[%s210 + $0x520] sm:$0xff]
      %v393 = vld [vmem:[%s210 + $0x528] sm:$0xff]
      %v394 = vld [vmem:[%s210 + $0x530] sm:$0xff]
      %v395 = vld [vmem:[%s210 + $0x538] sm:$0xff]
      %v396 = vld [vmem:[%s210 + $0x540] sm:$0xff]
      %v397 = vld [vmem:[%s210 + $0x548] sm:$0xff]
      %v398 = vld [vmem:[%s210 + $0x550] sm:$0xff]
      %v399 = vld [vmem:[%s210 + $0x558] sm:$0xff]
      %v400 = vld [vmem:[%s210 + $0x560] sm:$0xff]
      %v401 = vld [vmem:[%s210 + $0x568] sm:$0xff]
      %v402 = vld [vmem:[%s210 + $0x570] sm:$0xff]
      %v403 = vld [vmem:[%s210 + $0x578] sm:$0xff]
      %v404 = vld [vmem:[%s210 + $0x580] sm:$0xff]
      %v405 = vld [vmem:[%s210 + $0x588] sm:$0xff]
      %v406 = vld [vmem:[%s210 + $0x590] sm:$0xff]
      %v407 = vld [vmem:[%s210 + $0x598] sm:$0xff]
      %v408 = vld [vmem:[%s210 + $0x5a0] sm:$0xff]
      %v409 = vld [vmem:[%s210 + $0x5a8] sm:$0xff]
      %v410 = vld [vmem:[%s210 + $0x5b0] sm:$0xff]
      %v411 = vld [vmem:[%s210 + $0x5b8] sm:$0xff]
      %v412 = vld [vmem:[%s210 + $0x5c0] sm:$0xff]
      %v413 = vld [vmem:[%s210 + $0x5c8] sm:$0xff]
      %v414 = vld [vmem:[%s210 + $0x5d0] sm:$0xff]
      %v415 = vld [vmem:[%s210 + $0x5d8] sm:$0xff]
      %v416 = vld [vmem:[%s210 + $0x5e0] sm:$0xff]
      %v417 = vld [vmem:[%s210 + $0x5e8] sm:$0xff]
      %v418 = vld [vmem:[%s210 + $0x5f0] sm:$0xff]
      %v419 = vld [vmem:[%s210 + $0x5f8] sm:$0xff]
      %v420 = vld [vmem:[%s210 + $0x600] sm:$0xff]
      %v421 = vld [vmem:[%s210 + $0x608] sm:$0xff]
      %v422 = vld [vmem:[%s210 + $0x610] sm:$0xff]
      %v423 = vld [vmem:[%s210 + $0x618] sm:$0xff]
      %v424 = vld [vmem:[%s210 + $0x620] sm:$0xff]
      %v425 = vld [vmem:[%s210 + $0x628] sm:$0xff]
      %v426 = vld [vmem:[%s210 + $0x630] sm:$0xff]
      %v427 = vld [vmem:[%s210 + $0x638] sm:$0xff]
      %v428 = vld [vmem:[%s210 + $0x640] sm:$0xff]
      %v429 = vld [vmem:[%s210 + $0x648] sm:$0xff]
      %v430 = vld [vmem:[%s210 + $0x650] sm:$0xff]
      %v431 = vld [vmem:[%s210 + $0x658] sm:$0xff]
      %v432 = vld [vmem:[%s210 + $0x660] sm:$0xff]
      %v433 = vld [vmem:[%s210 + $0x668] sm:$0xff]
      %v434 = vld [vmem:[%s210 + $0x670] sm:$0xff]
      %v435 = vld [vmem:[%s210 + $0x678] sm:$0xff]
      %v436 = vld [vmem:[%s210 + $0x680] sm:$0xff]
      %v437 = vld [vmem:[%s210 + $0x688] sm:$0xff]
      %v438 = vld [vmem:[%s210 + $0x690] sm:$0xff]
      %v439 = vld [vmem:[%s210 + $0x698] sm:$0xff]
      %v440 = vld [vmem:[%s210 + $0x6a0] sm:$0xff]
      %v441 = vld [vmem:[%s210 + $0x6a8] sm:$0xff]
      %v442 = vld [vmem:[%s210 + $0x6b0] sm:$0xff]
      %v443 = vld [vmem:[%s210 + $0x6b8] sm:$0xff]
      %v444 = vld [vmem:[%s210 + $0x6c0] sm:$0xff]
      %v445 = vld [vmem:[%s210 + $0x6c8] sm:$0xff]
      %v446 = vld [vmem:[%s210 + $0x6d0] sm:$0xff]
      %v447 = vld [vmem:[%s210 + $0x6d8] sm:$0xff]
      %v448 = vld [vmem:[%s210 + $0x6e0] sm:$0xff]
      %v449 = vld [vmem:[%s210 + $0x6e8] sm:$0xff]
      %v450 = vld [vmem:[%s210 + $0x6f0] sm:$0xff]
      %v451 = vld [vmem:[%s210 + $0x6f8] sm:$0xff]
      %v452 = vld [vmem:[%s210 + $0x700] sm:$0xff]
      %v453 = vld [vmem:[%s210 + $0x708] sm:$0xff]
      %v454 = vld [vmem:[%s210 + $0x710] sm:$0xff]
      %v455 = vld [vmem:[%s210 + $0x718] sm:$0xff]
      %v456 = vld [vmem:[%s210 + $0x720] sm:$0xff]
      %v457 = vld [vmem:[%s210 + $0x728] sm:$0xff]
      %v458 = vld [vmem:[%s210 + $0x730] sm:$0xff]
      %v459 = vld [vmem:[%s210 + $0x738] sm:$0xff]
      %v460 = vld [vmem:[%s210 + $0x740] sm:$0xff]
      %v461 = vld [vmem:[%s210 + $0x748] sm:$0xff]
      %v462 = vld [vmem:[%s210 + $0x750] sm:$0xff]
      %v463 = vld [vmem:[%s210 + $0x758] sm:$0xff]
      %v464 = vld [vmem:[%s210 + $0x760] sm:$0xff]
      %v465 = vld [vmem:[%s210 + $0x768] sm:$0xff]
      %v466 = vld [vmem:[%s210 + $0x770] sm:$0xff]
      %v467 = vld [vmem:[%s210 + $0x778] sm:$0xff]
      %v468 = vld [vmem:[%s210 + $0x780] sm:$0xff]
      %v469 = vld [vmem:[%s210 + $0x788] sm:$0xff]
      %v470 = vld [vmem:[%s210 + $0x790] sm:$0xff]
      %v471 = vld [vmem:[%s210 + $0x798] sm:$0xff]
      %v472 = vld [vmem:[%s210 + $0x7a0] sm:$0xff]
      %v473 = vld [vmem:[%s210 + $0x7a8] sm:$0xff]
      %v474 = vld [vmem:[%s210 + $0x7b0] sm:$0xff]
      %v475 = vld [vmem:[%s210 + $0x7b8] sm:$0xff]
      %v476 = vld [vmem:[%s210 + $0x7c0] sm:$0xff]
      %v477 = vld [vmem:[%s210 + $0x7c8] sm:$0xff]
      %v478 = vld [vmem:[%s210 + $0x7d0] sm:$0xff]
      %v479 = vld [vmem:[%s210 + $0x7d8] sm:$0xff]
      %v480 = vld [vmem:[%s210 + $0x7e0] sm:$0xff]
      %v481 = vld [vmem:[%s210 + $0x7e8] sm:$0xff]
      %v482 = vld [vmem:[%s210 + $0x7f0] sm:$0xff]
      %v483 = vld [vmem:[%s210 + $0x7f8] sm:$0xff]
      %v484 = vld [vmem:[%s210 + $0x800] sm:$0xff]
      %v485 = vld [vmem:[%s210 + $0x808] sm:$0xff]
      %v486 = vld [vmem:[%s210 + $0x810] sm:$0xff]
      %v487 = vld [vmem:[%s210 + $0x818] sm:$0xff]
      %v488 = vld [vmem:[%s210 + $0x820] sm:$0xff]
      %v489 = vld [vmem:[%s210 + $0x828] sm:$0xff]
      %v490 = vld [vmem:[%s210 + $0x830] sm:$0xff]
      %v491 = vld [vmem:[%s210 + $0x838] sm:$0xff]
      %v492 = vld [vmem:[%s215] sm:$0xf]
      %v493 = vld [vmem:[%s215 + $0x4] sm:$0xf]
      %v494 = vld [vmem:[%s215 + $0x8] sm:$0xf]
      %v495 = vld [vmem:[%s215 + $0xc] sm:$0xf]
      %v496 = vld [vmem:[%s215 + $0x10] sm:$0xf]
      %v497 = vld [vmem:[%s215 + $0x14] sm:$0xf]
      %v498 = vld [vmem:[%s215 + $0x18] sm:$0xf]
      %v499 = vld [vmem:[%s215 + $0x1c] sm:$0xf]
      %v500 = vld [vmem:[%s215 + $0x20] sm:$0xf]
      %v501 = vld [vmem:[%s215 + $0x24] sm:$0xf]
      %v502 = vld [vmem:[%s215 + $0x28] sm:$0xf]
      %v503 = vld [vmem:[%s215 + $0x2c] sm:$0xf]
      %v504 = vld [vmem:[%s215 + $0x30] sm:$0xf]
      %v505 = vld [vmem:[%s215 + $0x34] sm:$0xf]
      %v506 = vld [vmem:[%s215 + $0x38] sm:$0xf]
      %v507 = vld [vmem:[%s215 + $0x3c] sm:$0xf]
      %v508 = vld [vmem:[%s215 + $0x40] sm:$0xf]
      %v509 = vld [vmem:[%s215 + $0x44] sm:$0xf]
      %v510 = vld [vmem:[%s215 + $0x48] sm:$0xf]
      %v511 = vld [vmem:[%s215 + $0x4c] sm:$0xf]
      %v512 = vld [vmem:[%s215 + $0x50] sm:$0xf]
      %v513 = vld [vmem:[%s215 + $0x54] sm:$0xf]
      %v514 = vld [vmem:[%s215 + $0x58] sm:$0xf]
      %v515 = vld [vmem:[%s215 + $0x5c] sm:$0xf]
      %v516 = vld [vmem:[%s215 + $0x60] sm:$0xf]
      %v517 = vld [vmem:[%s215 + $0x64] sm:$0xf]
      %v518 = vld [vmem:[%s215 + $0x68] sm:$0xf]
      %v519 = vld [vmem:[%s215 + $0x6c] sm:$0xf]
      %v520 = vld [vmem:[%s215 + $0x70] sm:$0xf]
      %v521 = vld [vmem:[%s215 + $0x74] sm:$0xf]
      %v522 = vld [vmem:[%s215 + $0x78] sm:$0xf]
      %v523 = vld [vmem:[%s215 + $0x7c] sm:$0xf]
      %v524 = vld [vmem:[%s215 + $0x80] sm:$0xf]
      %v525 = vld [vmem:[%s215 + $0x84] sm:$0xf]
      %v526 = vld [vmem:[%s215 + $0x88] sm:$0xf]
      %v527 = vld [vmem:[%s215 + $0x8c] sm:$0xf]
      %v528 = vld [vmem:[%s215 + $0x90] sm:$0xf]
      %v529 = vld [vmem:[%s215 + $0x94] sm:$0xf]
      %v530 = vld [vmem:[%s215 + $0x98] sm:$0xf]
      %v531 = vld [vmem:[%s215 + $0x9c] sm:$0xf]
      %v532 = vld [vmem:[%s215 + $0xa0] sm:$0xf]
      %v533 = vld [vmem:[%s215 + $0xa4] sm:$0xf]
      %v534 = vld [vmem:[%s215 + $0xa8] sm:$0xf]
      %v535 = vld [vmem:[%s215 + $0xac] sm:$0xf]
      %v536 = vld [vmem:[%s215 + $0xb0] sm:$0xf]
      %v537 = vld [vmem:[%s215 + $0xb4] sm:$0xf]
      %v538 = vld [vmem:[%s215 + $0xb8] sm:$0xf]
      %v539 = vld [vmem:[%s215 + $0xbc] sm:$0xf]
      %v540 = vld [vmem:[%s215 + $0xc0] sm:$0xf]
      %v541 = vld [vmem:[%s215 + $0xc4] sm:$0xf]
      %v542 = vld [vmem:[%s215 + $0xc8] sm:$0xf]
      %v543 = vld [vmem:[%s215 + $0xcc] sm:$0xf]
      %v544 = vld [vmem:[%s215 + $0xd0] sm:$0xf]
      %v545 = vld [vmem:[%s215 + $0xd4] sm:$0xf]
      %v546 = vld [vmem:[%s215 + $0xd8] sm:$0xf]
      %v547 = vld [vmem:[%s215 + $0xdc] sm:$0xf]
      %v548 = vld [vmem:[%s215 + $0xe0] sm:$0xf]
      %v549 = vld [vmem:[%s215 + $0xe4] sm:$0xf]
      %v550 = vld [vmem:[%s215 + $0xe8] sm:$0xf]
      %v551 = vld [vmem:[%s215 + $0xec] sm:$0xf]
      %v552 = vld [vmem:[%s215 + $0xf0] sm:$0xf]
      %v553 = vld [vmem:[%s215 + $0xf4] sm:$0xf]
      %v554 = vld [vmem:[%s215 + $0xf8] sm:$0xf]
      %v555 = vld [vmem:[%s215 + $0xfc] sm:$0xf]
      %v556 = vld [vmem:[%s215 + $0x100] sm:$0xf]
      %v557 = vld [vmem:[%s215 + $0x104] sm:$0xf]
      %v558 = vld [vmem:[%s215 + $0x108] sm:$0xf]
      %v559 = vld [vmem:[%s215 + $0x10c] sm:$0xf]
      %v560 = vld [vmem:[%s215 + $0x110] sm:$0xf]
      %v561 = vld [vmem:[%s215 + $0x114] sm:$0xf]
      %v562 = vld [vmem:[%s215 + $0x118] sm:$0xf]
      %v563 = vld [vmem:[%s215 + $0x11c] sm:$0xf]
      %v564 = vld [vmem:[%s215 + $0x120] sm:$0xf]
      %v565 = vld [vmem:[%s215 + $0x124] sm:$0xf]
      %v566 = vld [vmem:[%s215 + $0x128] sm:$0xf]
      %v567 = vld [vmem:[%s215 + $0x12c] sm:$0xf]
      %v568 = vld [vmem:[%s215 + $0x130] sm:$0xf]
      %v569 = vld [vmem:[%s215 + $0x134] sm:$0xf]
      %v570 = vld [vmem:[%s215 + $0x138] sm:$0xf]
      %v571 = vld [vmem:[%s215 + $0x13c] sm:$0xf]
      %v572 = vld [vmem:[%s215 + $0x140] sm:$0xf]
      %v573 = vld [vmem:[%s215 + $0x144] sm:$0xf]
      %v574 = vld [vmem:[%s215 + $0x148] sm:$0xf]
      %v575 = vld [vmem:[%s215 + $0x14c] sm:$0xf]
      %v576 = vld [vmem:[%s215 + $0x150] sm:$0xf]
      %v577 = vld [vmem:[%s215 + $0x154] sm:$0xf]
      %v578 = vld [vmem:[%s215 + $0x158] sm:$0xf]
      %v579 = vld [vmem:[%s215 + $0x15c] sm:$0xf]
      %v580 = vld [vmem:[%s215 + $0x160] sm:$0xf]
      %v581 = vld [vmem:[%s215 + $0x164] sm:$0xf]
      %v582 = vld [vmem:[%s215 + $0x168] sm:$0xf]
      %v583 = vld [vmem:[%s215 + $0x16c] sm:$0xf]
      %v584 = vld [vmem:[%s215 + $0x170] sm:$0xf]
      %v585 = vld [vmem:[%s215 + $0x174] sm:$0xf]
      %v586 = vld [vmem:[%s215 + $0x178] sm:$0xf]
      %v587 = vld [vmem:[%s215 + $0x17c] sm:$0xf]
      %v588 = vld [vmem:[%s215 + $0x180] sm:$0xf]
      %v589 = vld [vmem:[%s215 + $0x184] sm:$0xf]
      %v590 = vld [vmem:[%s215 + $0x188] sm:$0xf]
      %v591 = vld [vmem:[%s215 + $0x18c] sm:$0xf]
      %v592 = vld [vmem:[%s215 + $0x190] sm:$0xf]
      %v593 = vld [vmem:[%s215 + $0x194] sm:$0xf]
      %v594 = vld [vmem:[%s215 + $0x198] sm:$0xf]
      %v595 = vld [vmem:[%s215 + $0x19c] sm:$0xf]
      %v596 = vld [vmem:[%s215 + $0x1a0] sm:$0xf]
      %v597 = vld [vmem:[%s215 + $0x1a4] sm:$0xf]
      %v598 = vld [vmem:[%s215 + $0x1a8] sm:$0xf]
      %v599 = vld [vmem:[%s215 + $0x1ac] sm:$0xf]
      %v600 = vld [vmem:[%s215 + $0x1b0] sm:$0xf]
      %v601 = vld [vmem:[%s215 + $0x1b4] sm:$0xf]
      %v602 = vld [vmem:[%s215 + $0x1b8] sm:$0xf]
      %v603 = vld [vmem:[%s215 + $0x1bc] sm:$0xf]
      %v604 = vld [vmem:[%s215 + $0x1c0] sm:$0xf]
      %v605 = vld [vmem:[%s215 + $0x1c4] sm:$0xf]
      %v606 = vld [vmem:[%s215 + $0x1c8] sm:$0xf]
      %v607 = vld [vmem:[%s215 + $0x1cc] sm:$0xf]
      %v608 = vld [vmem:[%s215 + $0x1d0] sm:$0xf]
      %v609 = vld [vmem:[%s215 + $0x1d4] sm:$0xf]
      %v610 = vld [vmem:[%s215 + $0x1d8] sm:$0xf]
      %v611 = vld [vmem:[%s215 + $0x1dc] sm:$0xf]
      %v612 = vld [vmem:[%s215 + $0x1e0] sm:$0xf]
      %v613 = vld [vmem:[%s215 + $0x1e4] sm:$0xf]
      %v614 = vld [vmem:[%s215 + $0x1e8] sm:$0xf]
      %v615 = vld [vmem:[%s215 + $0x1ec] sm:$0xf]
      %v616 = vld [vmem:[%s215 + $0x1f0] sm:$0xf]
      %v617 = vld [vmem:[%s215 + $0x1f4] sm:$0xf]
      %v618 = vld [vmem:[%s215 + $0x1f8] sm:$0xf]
      %v619 = vld [vmem:[%s215 + $0x1fc] sm:$0xf]
      %v620 = vld [vmem:[%s218] sm:$0x1]
      %v622 = vperm.slane %v620, 0
      %v888 = vunpack.c.l.b16 %v228
      %v889 = vunpack.c.h.b16 %v228
      %v890 = vunpack.c.l.b16 %v229
      %v891 = vunpack.c.h.b16 %v229
      %v892 = vunpack.c.l.b16 %v230
      %v893 = vunpack.c.h.b16 %v230
      %v894 = vunpack.c.l.b16 %v231
      %v895 = vunpack.c.h.b16 %v231
      %v896 = vunpack.c.l.b16 %v232
      %v897 = vunpack.c.h.b16 %v232
      %v898 = vunpack.c.l.b16 %v233
      %v899 = vunpack.c.h.b16 %v233
      %v900 = vunpack.c.l.b16 %v234
      %v901 = vunpack.c.h.b16 %v234
      %v902 = vunpack.c.l.b16 %v235
      %v903 = vunpack.c.h.b16 %v235
      %v904 = vunpack.c.l.b16 %v236
      %v905 = vunpack.c.h.b16 %v236
      %v906 = vunpack.c.l.b16 %v237
      %v907 = vunpack.c.h.b16 %v237
      %v908 = vunpack.c.l.b16 %v238
      %v909 = vunpack.c.h.b16 %v238
      %v910 = vunpack.c.l.b16 %v239
      %v911 = vunpack.c.h.b16 %v239
      %v912 = vunpack.c.l.b16 %v240
      %v913 = vunpack.c.h.b16 %v240
      %v914 = vunpack.c.l.b16 %v241
      %v915 = vunpack.c.h.b16 %v241
      %v916 = vunpack.c.l.b16 %v242
      %v917 = vunpack.c.h.b16 %v242
      %v918 = vunpack.c.l.b16 %v243
      %v919 = vunpack.c.h.b16 %v243
      %v920 = vunpack.c.l.b16 %v244
      %v921 = vunpack.c.h.b16 %v244
      %v922 = vunpack.c.l.b16 %v245
      %v923 = vunpack.c.h.b16 %v245
      %v924 = vunpack.c.l.b16 %v246
      %v925 = vunpack.c.h.b16 %v246
      %v926 = vunpack.c.l.b16 %v247
      %v927 = vunpack.c.h.b16 %v247
      %v928 = vunpack.c.l.b16 %v248
      %v929 = vunpack.c.h.b16 %v248
      %v930 = vunpack.c.l.b16 %v249
      %v931 = vunpack.c.h.b16 %v249
      %v932 = vunpack.c.l.b16 %v250
      %v933 = vunpack.c.h.b16 %v250
      %v934 = vunpack.c.l.b16 %v251
      %v935 = vunpack.c.h.b16 %v251
      %v936 = vunpack.c.l.b16 %v252
      %v937 = vunpack.c.h.b16 %v252
      %v938 = vunpack.c.l.b16 %v253
      %v939 = vunpack.c.h.b16 %v253
      %v940 = vunpack.c.l.b16 %v254
      %v941 = vunpack.c.h.b16 %v254
      %v942 = vunpack.c.l.b16 %v255
      %v943 = vunpack.c.h.b16 %v255
      %v944 = vunpack.c.l.b16 %v256
      %v945 = vunpack.c.h.b16 %v256
      %v946 = vunpack.c.l.b16 %v257
      %v947 = vunpack.c.h.b16 %v257
      %v948 = vunpack.c.l.b16 %v258
      %v949 = vunpack.c.h.b16 %v258
      %v950 = vunpack.c.l.b16 %v259
      %v951 = vunpack.c.h.b16 %v259
      %v952 = vunpack.c.l.b16 %v260
      %v953 = vunpack.c.h.b16 %v260
      %v954 = vunpack.c.l.b16 %v261
      %v955 = vunpack.c.h.b16 %v261
      %v956 = vunpack.c.l.b16 %v262
      %v957 = vunpack.c.h.b16 %v262
      %v958 = vunpack.c.l.b16 %v263
      %v959 = vunpack.c.h.b16 %v263
      %v960 = vunpack.c.l.b16 %v264
      %v961 = vunpack.c.h.b16 %v264
      %v962 = vunpack.c.l.b16 %v265
      %v963 = vunpack.c.h.b16 %v265
      %v964 = vunpack.c.l.b16 %v266
      %v965 = vunpack.c.h.b16 %v266
      %v966 = vunpack.c.l.b16 %v267
      %v967 = vunpack.c.h.b16 %v267
      %v968 = vunpack.c.l.b16 %v268
      %v969 = vunpack.c.h.b16 %v268
      %v970 = vunpack.c.l.b16 %v269
      %v971 = vunpack.c.h.b16 %v269
      %v972 = vunpack.c.l.b16 %v270
      %v973 = vunpack.c.h.b16 %v270
      %v974 = vunpack.c.l.b16 %v271
      %v975 = vunpack.c.h.b16 %v271
      %v976 = vunpack.c.l.b16 %v272
      %v977 = vunpack.c.h.b16 %v272
      %v978 = vunpack.c.l.b16 %v273
      %v979 = vunpack.c.h.b16 %v273
      %v980 = vunpack.c.l.b16 %v274
      %v981 = vunpack.c.h.b16 %v274
      %v982 = vunpack.c.l.b16 %v275
      %v983 = vunpack.c.h.b16 %v275
      %v984 = vunpack.c.l.b16 %v276
      %v985 = vunpack.c.h.b16 %v276
      %v986 = vunpack.c.l.b16 %v277
      %v987 = vunpack.c.h.b16 %v277
      %v988 = vunpack.c.l.b16 %v278
      %v989 = vunpack.c.h.b16 %v278
      %v990 = vunpack.c.l.b16 %v279
      %v991 = vunpack.c.h.b16 %v279
      %v992 = vunpack.c.l.b16 %v280
      %v993 = vunpack.c.h.b16 %v280
      %v994 = vunpack.c.l.b16 %v281
      %v995 = vunpack.c.h.b16 %v281
      %v996 = vunpack.c.l.b16 %v282
      %v997 = vunpack.c.h.b16 %v282
      %v998 = vunpack.c.l.b16 %v283
      %v999 = vunpack.c.h.b16 %v283
      %v1000 = vunpack.c.l.b16 %v284
      %v1001 = vunpack.c.h.b16 %v284
      %v1002 = vunpack.c.l.b16 %v285
      %v1003 = vunpack.c.h.b16 %v285
      %v1004 = vunpack.c.l.b16 %v286
      %v1005 = vunpack.c.h.b16 %v286
      %v1006 = vunpack.c.l.b16 %v287
      %v1007 = vunpack.c.h.b16 %v287
      %v1008 = vunpack.c.l.b16 %v288
      %v1009 = vunpack.c.h.b16 %v288
      %v1010 = vunpack.c.l.b16 %v289
      %v1011 = vunpack.c.h.b16 %v289
      %v1012 = vunpack.c.l.b16 %v290
      %v1013 = vunpack.c.h.b16 %v290
      %v1014 = vunpack.c.l.b16 %v291
      %v1015 = vunpack.c.h.b16 %v291
      %v1016 = vunpack.c.l.b16 %v292
      %v1017 = vunpack.c.h.b16 %v292
      %v1018 = vunpack.c.l.b16 %v293
      %v1019 = vunpack.c.h.b16 %v293
      %v1020 = vunpack.c.l.b16 %v294
      %v1021 = vunpack.c.h.b16 %v294
      %v1022 = vunpack.c.l.b16 %v295
      %v1023 = vunpack.c.h.b16 %v295
      %v1024 = vunpack.c.l.b16 %v296
      %v1025 = vunpack.c.h.b16 %v296
      %v1026 = vunpack.c.l.b16 %v297
      %v1027 = vunpack.c.h.b16 %v297
      %v1028 = vunpack.c.l.b16 %v298
      %v1029 = vunpack.c.h.b16 %v298
      %v1030 = vunpack.c.l.b16 %v299
      %v1031 = vunpack.c.h.b16 %v299
      %v1032 = vunpack.c.l.b16 %v300
      %v1033 = vunpack.c.h.b16 %v300
      %v1034 = vunpack.c.l.b16 %v301
      %v1035 = vunpack.c.h.b16 %v301
      %v1036 = vunpack.c.l.b16 %v302
      %v1037 = vunpack.c.h.b16 %v302
      %v1038 = vunpack.c.l.b16 %v303
      %v1039 = vunpack.c.h.b16 %v303
      %v1040 = vunpack.c.l.b16 %v304
      %v1041 = vunpack.c.h.b16 %v304
      %v1042 = vunpack.c.l.b16 %v305
      %v1043 = vunpack.c.h.b16 %v305
      %v1044 = vunpack.c.l.b16 %v306
      %v1045 = vunpack.c.h.b16 %v306
      %v1046 = vunpack.c.l.b16 %v307
      %v1047 = vunpack.c.h.b16 %v307
      %v1048 = vunpack.c.l.b16 %v308
      %v1049 = vunpack.c.h.b16 %v308
      %v1050 = vunpack.c.l.b16 %v309
      %v1051 = vunpack.c.h.b16 %v309
      %v1052 = vunpack.c.l.b16 %v310
      %v1053 = vunpack.c.h.b16 %v310
      %v1054 = vunpack.c.l.b16 %v311
      %v1055 = vunpack.c.h.b16 %v311
      %v1056 = vunpack.c.l.b16 %v312
      %v1057 = vunpack.c.h.b16 %v312
      %v1058 = vunpack.c.l.b16 %v313
      %v1059 = vunpack.c.h.b16 %v313
      %v1060 = vunpack.c.l.b16 %v314
      %v1061 = vunpack.c.h.b16 %v314
      %v1062 = vunpack.c.l.b16 %v315
      %v1063 = vunpack.c.h.b16 %v315
      %v1064 = vunpack.c.l.b16 %v316
      %v1065 = vunpack.c.h.b16 %v316
      %v1066 = vunpack.c.l.b16 %v317
      %v1067 = vunpack.c.h.b16 %v317
      %v1068 = vunpack.c.l.b16 %v318
      %v1069 = vunpack.c.h.b16 %v318
      %v1070 = vunpack.c.l.b16 %v319
      %v1071 = vunpack.c.h.b16 %v319
      %v1072 = vunpack.c.l.b16 %v320
      %v1073 = vunpack.c.h.b16 %v320
      %v1074 = vunpack.c.l.b16 %v321
      %v1075 = vunpack.c.h.b16 %v321
      %v1076 = vunpack.c.l.b16 %v322
      %v1077 = vunpack.c.h.b16 %v322
      %v1078 = vunpack.c.l.b16 %v323
      %v1079 = vunpack.c.h.b16 %v323
      %v1080 = vunpack.c.l.b16 %v324
      %v1081 = vunpack.c.h.b16 %v324
      %v1082 = vunpack.c.l.b16 %v325
      %v1083 = vunpack.c.h.b16 %v325
      %v1084 = vunpack.c.l.b16 %v326
      %v1085 = vunpack.c.h.b16 %v326
      %v1086 = vunpack.c.l.b16 %v327
      %v1087 = vunpack.c.h.b16 %v327
      %v1088 = vunpack.c.l.b16 %v328
      %v1089 = vunpack.c.h.b16 %v328
      %v1090 = vunpack.c.l.b16 %v329
      %v1091 = vunpack.c.h.b16 %v329
      %v1092 = vunpack.c.l.b16 %v330
      %v1093 = vunpack.c.h.b16 %v330
      %v1094 = vunpack.c.l.b16 %v331
      %v1095 = vunpack.c.h.b16 %v331
      %v1096 = vunpack.c.l.b16 %v332
      %v1097 = vunpack.c.h.b16 %v332
      %v1098 = vunpack.c.l.b16 %v333
      %v1099 = vunpack.c.h.b16 %v333
      %v1100 = vunpack.c.l.b16 %v334
      %v1101 = vunpack.c.h.b16 %v334
      %v1102 = vunpack.c.l.b16 %v335
      %v1103 = vunpack.c.h.b16 %v335
      %v1104 = vunpack.c.l.b16 %v336
      %v1105 = vunpack.c.h.b16 %v336
      %v1106 = vunpack.c.l.b16 %v337
      %v1107 = vunpack.c.h.b16 %v337
      %v1108 = vunpack.c.l.b16 %v338
      %v1109 = vunpack.c.h.b16 %v338
      %v1110 = vunpack.c.l.b16 %v339
      %v1111 = vunpack.c.h.b16 %v339
      %v1112 = vunpack.c.l.b16 %v340
      %v1113 = vunpack.c.h.b16 %v340
      %v1114 = vunpack.c.l.b16 %v341
      %v1115 = vunpack.c.h.b16 %v341
      %v1116 = vunpack.c.l.b16 %v342
      %v1117 = vunpack.c.h.b16 %v342
      %v1118 = vunpack.c.l.b16 %v343
      %v1119 = vunpack.c.h.b16 %v343
      %v1120 = vunpack.c.l.b16 %v344
      %v1121 = vunpack.c.h.b16 %v344
      %v1122 = vunpack.c.l.b16 %v345
      %v1123 = vunpack.c.h.b16 %v345
      %v1124 = vunpack.c.l.b16 %v346
      %v1125 = vunpack.c.h.b16 %v346
      %v1126 = vunpack.c.l.b16 %v347
      %v1127 = vunpack.c.h.b16 %v347
      %v1128 = vunpack.c.l.b16 %v348
      %v1129 = vunpack.c.h.b16 %v348
      %v1130 = vunpack.c.l.b16 %v349
      %v1131 = vunpack.c.h.b16 %v349
      %v1132 = vunpack.c.l.b16 %v350
      %v1133 = vunpack.c.h.b16 %v350
      %v1134 = vunpack.c.l.b16 %v351
      %v1135 = vunpack.c.h.b16 %v351
      %v1136 = vunpack.c.l.b16 %v352
      %v1137 = vunpack.c.h.b16 %v352
      %v1138 = vunpack.c.l.b16 %v353
      %v1139 = vunpack.c.h.b16 %v353
      %v1140 = vunpack.c.l.b16 %v354
      %v1141 = vunpack.c.h.b16 %v354
      %v1142 = vunpack.c.l.b16 %v355
      %v1143 = vunpack.c.h.b16 %v355
      %v1144 = vunpack.c.l.b16 %v356
      %v1145 = vunpack.c.h.b16 %v356
      %v1146 = vunpack.c.l.b16 %v357
      %v1147 = vunpack.c.h.b16 %v357
      %v1148 = vunpack.c.l.b16 %v358
      %v1149 = vunpack.c.h.b16 %v358
      %v1150 = vunpack.c.l.b16 %v359
      %v1151 = vunpack.c.h.b16 %v359
      %v1152 = vunpack.c.l.b16 %v360
      %v1153 = vunpack.c.h.b16 %v360
      %v1154 = vunpack.c.l.b16 %v361
      %v1155 = vunpack.c.h.b16 %v361
      %v1156 = vunpack.c.l.b16 %v362
      %v1157 = vunpack.c.h.b16 %v362
      %v1158 = vunpack.c.l.b16 %v363
      %v1159 = vunpack.c.h.b16 %v363
      %v1160 = vunpack.c.l.b16 %v364
      %v1161 = vunpack.c.h.b16 %v364
      %v1162 = vunpack.c.l.b16 %v365
      %v1163 = vunpack.c.h.b16 %v365
      %v1164 = vunpack.c.l.b16 %v366
      %v1165 = vunpack.c.h.b16 %v366
      %v1166 = vunpack.c.l.b16 %v367
      %v1167 = vunpack.c.h.b16 %v367
      %v1168 = vunpack.c.l.b16 %v368
      %v1169 = vunpack.c.h.b16 %v368
      %v1170 = vunpack.c.l.b16 %v369
      %v1171 = vunpack.c.h.b16 %v369
      %v1172 = vunpack.c.l.b16 %v370
      %v1173 = vunpack.c.h.b16 %v370
      %v1174 = vunpack.c.l.b16 %v371
      %v1175 = vunpack.c.h.b16 %v371
      %v1176 = vunpack.c.l.b16 %v372
      %v1177 = vunpack.c.h.b16 %v372
      %v1178 = vunpack.c.l.b16 %v373
      %v1179 = vunpack.c.h.b16 %v373
      %v1180 = vunpack.c.l.b16 %v374
      %v1181 = vunpack.c.h.b16 %v374
      %v1182 = vunpack.c.l.b16 %v375
      %v1183 = vunpack.c.h.b16 %v375
      %v1184 = vunpack.c.l.b16 %v376
      %v1185 = vunpack.c.h.b16 %v376
      %v1186 = vunpack.c.l.b16 %v377
      %v1187 = vunpack.c.h.b16 %v377
      %v1188 = vunpack.c.l.b16 %v378
      %v1189 = vunpack.c.h.b16 %v378
      %v1190 = vunpack.c.l.b16 %v379
      %v1191 = vunpack.c.h.b16 %v379
      %v1192 = vunpack.c.l.b16 %v380
      %v1193 = vunpack.c.h.b16 %v380
      %v1194 = vunpack.c.l.b16 %v381
      %v1195 = vunpack.c.h.b16 %v381
      %v1196 = vunpack.c.l.b16 %v382
      %v1197 = vunpack.c.h.b16 %v382
      %v1198 = vunpack.c.l.b16 %v383
      %v1199 = vunpack.c.h.b16 %v383
      %v1200 = vunpack.c.l.b16 %v384
      %v1201 = vunpack.c.h.b16 %v384
      %v1202 = vunpack.c.l.b16 %v385
      %v1203 = vunpack.c.h.b16 %v385
      %v1204 = vunpack.c.l.b16 %v386
      %v1205 = vunpack.c.h.b16 %v386
      %v1206 = vunpack.c.l.b16 %v387
      %v1207 = vunpack.c.h.b16 %v387
      %v1208 = vunpack.c.l.b16 %v388
      %v1209 = vunpack.c.h.b16 %v388
      %v1210 = vunpack.c.l.b16 %v389
      %v1211 = vunpack.c.h.b16 %v389
      %v1212 = vunpack.c.l.b16 %v390
      %v1213 = vunpack.c.h.b16 %v390
      %v1214 = vunpack.c.l.b16 %v391
      %v1215 = vunpack.c.h.b16 %v391
      %v1216 = vunpack.c.l.b16 %v392
      %v1217 = vunpack.c.h.b16 %v392
      %v1218 = vunpack.c.l.b16 %v393
      %v1219 = vunpack.c.h.b16 %v393
      %v1220 = vunpack.c.l.b16 %v394
      %v1221 = vunpack.c.h.b16 %v394
      %v1222 = vunpack.c.l.b16 %v395
      %v1223 = vunpack.c.h.b16 %v395
      %v1224 = vunpack.c.l.b16 %v396
      %v1225 = vunpack.c.h.b16 %v396
      %v1226 = vunpack.c.l.b16 %v397
      %v1227 = vunpack.c.h.b16 %v397
      %v1228 = vunpack.c.l.b16 %v398
      %v1229 = vunpack.c.h.b16 %v398
      %v1230 = vunpack.c.l.b16 %v399
      %v1231 = vunpack.c.h.b16 %v399
      %v1232 = vunpack.c.l.b16 %v400
      %v1233 = vunpack.c.h.b16 %v400
      %v1234 = vunpack.c.l.b16 %v401
      %v1235 = vunpack.c.h.b16 %v401
      %v1236 = vunpack.c.l.b16 %v402
      %v1237 = vunpack.c.h.b16 %v402
      %v1238 = vunpack.c.l.b16 %v403
      %v1239 = vunpack.c.h.b16 %v403
      %v1240 = vunpack.c.l.b16 %v404
      %v1241 = vunpack.c.h.b16 %v404
      %v1242 = vunpack.c.l.b16 %v405
      %v1243 = vunpack.c.h.b16 %v405
      %v1244 = vunpack.c.l.b16 %v406
      %v1245 = vunpack.c.h.b16 %v406
      %v1246 = vunpack.c.l.b16 %v407
      %v1247 = vunpack.c.h.b16 %v407
      %v1248 = vunpack.c.l.b16 %v408
      %v1249 = vunpack.c.h.b16 %v408
      %v1250 = vunpack.c.l.b16 %v409
      %v1251 = vunpack.c.h.b16 %v409
      %v1252 = vunpack.c.l.b16 %v410
      %v1253 = vunpack.c.h.b16 %v410
      %v1254 = vunpack.c.l.b16 %v411
      %v1255 = vunpack.c.h.b16 %v411
      %v1256 = vunpack.c.l.b16 %v412
      %v1257 = vunpack.c.h.b16 %v412
      %v1258 = vunpack.c.l.b16 %v413
      %v1259 = vunpack.c.h.b16 %v413
      %v1260 = vunpack.c.l.b16 %v414
      %v1261 = vunpack.c.h.b16 %v414
      %v1262 = vunpack.c.l.b16 %v415
      %v1263 = vunpack.c.h.b16 %v415
      %v1264 = vunpack.c.l.b16 %v416
      %v1265 = vunpack.c.h.b16 %v416
      %v1266 = vunpack.c.l.b16 %v417
      %v1267 = vunpack.c.h.b16 %v417
      %v1268 = vunpack.c.l.b16 %v418
      %v1269 = vunpack.c.h.b16 %v418
      %v1270 = vunpack.c.l.b16 %v419
      %v1271 = vunpack.c.h.b16 %v419
      %v1272 = vunpack.c.l.b16 %v420
      %v1273 = vunpack.c.h.b16 %v420
      %v1274 = vunpack.c.l.b16 %v421
      %v1275 = vunpack.c.h.b16 %v421
      %v1276 = vunpack.c.l.b16 %v422
      %v1277 = vunpack.c.h.b16 %v422
      %v1278 = vunpack.c.l.b16 %v423
      %v1279 = vunpack.c.h.b16 %v423
      %v1280 = vunpack.c.l.b16 %v424
      %v1281 = vunpack.c.h.b16 %v424
      %v1282 = vunpack.c.l.b16 %v425
      %v1283 = vunpack.c.h.b16 %v425
      %v1284 = vunpack.c.l.b16 %v426
      %v1285 = vunpack.c.h.b16 %v426
      %v1286 = vunpack.c.l.b16 %v427
      %v1287 = vunpack.c.h.b16 %v427
      %v1288 = vunpack.c.l.b16 %v428
      %v1289 = vunpack.c.h.b16 %v428
      %v1290 = vunpack.c.l.b16 %v429
      %v1291 = vunpack.c.h.b16 %v429
      %v1292 = vunpack.c.l.b16 %v430
      %v1293 = vunpack.c.h.b16 %v430
      %v1294 = vunpack.c.l.b16 %v431
      %v1295 = vunpack.c.h.b16 %v431
      %v1296 = vunpack.c.l.b16 %v432
      %v1297 = vunpack.c.h.b16 %v432
      %v1298 = vunpack.c.l.b16 %v433
      %v1299 = vunpack.c.h.b16 %v433
      %v1300 = vunpack.c.l.b16 %v434
      %v1301 = vunpack.c.h.b16 %v434
      %v1302 = vunpack.c.l.b16 %v435
      %v1303 = vunpack.c.h.b16 %v435
      %v1304 = vunpack.c.l.b16 %v436
      %v1305 = vunpack.c.h.b16 %v436
      %v1306 = vunpack.c.l.b16 %v437
      %v1307 = vunpack.c.h.b16 %v437
      %v1308 = vunpack.c.l.b16 %v438
      %v1309 = vunpack.c.h.b16 %v438
      %v1310 = vunpack.c.l.b16 %v439
      %v1311 = vunpack.c.h.b16 %v439
      %v1312 = vunpack.c.l.b16 %v440
      %v1313 = vunpack.c.h.b16 %v440
      %v1314 = vunpack.c.l.b16 %v441
      %v1315 = vunpack.c.h.b16 %v441
      %v1316 = vunpack.c.l.b16 %v442
      %v1317 = vunpack.c.h.b16 %v442
      %v1318 = vunpack.c.l.b16 %v443
      %v1319 = vunpack.c.h.b16 %v443
      %v1320 = vunpack.c.l.b16 %v444
      %v1321 = vunpack.c.h.b16 %v444
      %v1322 = vunpack.c.l.b16 %v445
      %v1323 = vunpack.c.h.b16 %v445
      %v1324 = vunpack.c.l.b16 %v446
      %v1325 = vunpack.c.h.b16 %v446
      %v1326 = vunpack.c.l.b16 %v447
      %v1327 = vunpack.c.h.b16 %v447
      %v1328 = vunpack.c.l.b16 %v448
      %v1329 = vunpack.c.h.b16 %v448
      %v1330 = vunpack.c.l.b16 %v449
      %v1331 = vunpack.c.h.b16 %v449
      %v1332 = vunpack.c.l.b16 %v450
      %v1333 = vunpack.c.h.b16 %v450
      %v1334 = vunpack.c.l.b16 %v451
      %v1335 = vunpack.c.h.b16 %v451
      %v1336 = vunpack.c.l.b16 %v452
      %v1337 = vunpack.c.h.b16 %v452
      %v1338 = vunpack.c.l.b16 %v453
      %v1339 = vunpack.c.h.b16 %v453
      %v1340 = vunpack.c.l.b16 %v454
      %v1341 = vunpack.c.h.b16 %v454
      %v1342 = vunpack.c.l.b16 %v455
      %v1343 = vunpack.c.h.b16 %v455
      %v1344 = vunpack.c.l.b16 %v456
      %v1345 = vunpack.c.h.b16 %v456
      %v1346 = vunpack.c.l.b16 %v457
      %v1347 = vunpack.c.h.b16 %v457
      %v1348 = vunpack.c.l.b16 %v458
      %v1349 = vunpack.c.h.b16 %v458
      %v1350 = vunpack.c.l.b16 %v459
      %v1351 = vunpack.c.h.b16 %v459
      %v1352 = vunpack.c.l.b16 %v460
      %v1353 = vunpack.c.h.b16 %v460
      %v1354 = vunpack.c.l.b16 %v461
      %v1355 = vunpack.c.h.b16 %v461
      %v1356 = vunpack.c.l.b16 %v462
      %v1357 = vunpack.c.h.b16 %v462
      %v1358 = vunpack.c.l.b16 %v463
      %v1359 = vunpack.c.h.b16 %v463
      %v1360 = vunpack.c.l.b16 %v464
      %v1361 = vunpack.c.h.b16 %v464
      %v1362 = vunpack.c.l.b16 %v465
      %v1363 = vunpack.c.h.b16 %v465
      %v1364 = vunpack.c.l.b16 %v466
      %v1365 = vunpack.c.h.b16 %v466
      %v1366 = vunpack.c.l.b16 %v467
      %v1367 = vunpack.c.h.b16 %v467
      %v1368 = vunpack.c.l.b16 %v468
      %v1369 = vunpack.c.h.b16 %v468
      %v1370 = vunpack.c.l.b16 %v469
      %v1371 = vunpack.c.h.b16 %v469
      %v1372 = vunpack.c.l.b16 %v470
      %v1373 = vunpack.c.h.b16 %v470
      %v1374 = vunpack.c.l.b16 %v471
      %v1375 = vunpack.c.h.b16 %v471
      %v1376 = vunpack.c.l.b16 %v472
      %v1377 = vunpack.c.h.b16 %v472
      %v1378 = vunpack.c.l.b16 %v473
      %v1379 = vunpack.c.h.b16 %v473
      %v1380 = vunpack.c.l.b16 %v474
      %v1381 = vunpack.c.h.b16 %v474
      %v1382 = vunpack.c.l.b16 %v475
      %v1383 = vunpack.c.h.b16 %v475
      %v1384 = vunpack.c.l.b16 %v476
      %v1385 = vunpack.c.h.b16 %v476
      %v1386 = vunpack.c.l.b16 %v477
      %v1387 = vunpack.c.h.b16 %v477
      %v1388 = vunpack.c.l.b16 %v478
      %v1389 = vunpack.c.h.b16 %v478
      %v1390 = vunpack.c.l.b16 %v479
      %v1391 = vunpack.c.h.b16 %v479
      %v1392 = vunpack.c.l.b16 %v480
      %v1393 = vunpack.c.h.b16 %v480
      %v1394 = vunpack.c.l.b16 %v481
      %v1395 = vunpack.c.h.b16 %v481
      %v1396 = vunpack.c.l.b16 %v482
      %v1397 = vunpack.c.h.b16 %v482
      %v1398 = vunpack.c.l.b16 %v483
      %v1399 = vunpack.c.h.b16 %v483
      %v1400 = vunpack.c.l.b16 %v484
      %v1401 = vunpack.c.h.b16 %v484
      %v1402 = vunpack.c.l.b16 %v485
      %v1403 = vunpack.c.h.b16 %v485
      %v1404 = vunpack.c.l.b16 %v486
      %v1405 = vunpack.c.h.b16 %v486
      %v1406 = vunpack.c.l.b16 %v487
      %v1407 = vunpack.c.h.b16 %v487
      %v1408 = vunpack.c.l.b16 %v488
      %v1409 = vunpack.c.h.b16 %v488
      %v1410 = vunpack.c.l.b16 %v489
      %v1411 = vunpack.c.h.b16 %v489
      %v1412 = vunpack.c.l.b16 %v490
      %v1413 = vunpack.c.h.b16 %v490
      %v1414 = vunpack.c.l.b16 %v491
      %v1415 = vunpack.c.h.b16 %v491
      %v1416 = vpack.c.b16 %v896, %v888
      %v1417 = vpack.c.b16 %v897, %v889
      %v1418 = vpack.c.b16 %v898, %v890
      %v1419 = vpack.c.b16 %v899, %v891
      %v1420 = vpack.c.b16 %v900, %v892
      %v1421 = vpack.c.b16 %v901, %v893
      %v1422 = vpack.c.b16 %v902, %v894
      %v1423 = vpack.c.b16 %v903, %v895
      %v1424 = vpack.c.b16 %v912, %v904
      %v1425 = vpack.c.b16 %v913, %v905
      %v1426 = vpack.c.b16 %v914, %v906
      %v1427 = vpack.c.b16 %v915, %v907
      %v1428 = vpack.c.b16 %v916, %v908
      %v1429 = vpack.c.b16 %v917, %v909
      %v1430 = vpack.c.b16 %v918, %v910
      %v1431 = vpack.c.b16 %v919, %v911
      %v1432 = vpack.c.b16 %v928, %v920
      %v1433 = vpack.c.b16 %v929, %v921
      %v1434 = vpack.c.b16 %v930, %v922
      %v1435 = vpack.c.b16 %v931, %v923
      %v1436 = vpack.c.b16 %v932, %v924
      %v1437 = vpack.c.b16 %v933, %v925
      %v1438 = vpack.c.b16 %v934, %v926
      %v1439 = vpack.c.b16 %v935, %v927
      %v1440 = vpack.c.b16 %v944, %v936
      %v1441 = vpack.c.b16 %v945, %v937
      %v1442 = vpack.c.b16 %v946, %v938
      %v1443 = vpack.c.b16 %v947, %v939
      %v1444 = vpack.c.b16 %v948, %v940
      %v1445 = vpack.c.b16 %v949, %v941
      %v1446 = vpack.c.b16 %v950, %v942
      %v1447 = vpack.c.b16 %v951, %v943
      %v1448 = vpack.c.b16 %v960, %v952
      %v1449 = vpack.c.b16 %v961, %v953
      %v1450 = vpack.c.b16 %v962, %v954
      %v1451 = vpack.c.b16 %v963, %v955
      %v1452 = vpack.c.b16 %v964, %v956
      %v1453 = vpack.c.b16 %v965, %v957
      %v1454 = vpack.c.b16 %v966, %v958
      %v1455 = vpack.c.b16 %v967, %v959
      %v1456 = vpack.c.b16 %v976, %v968
      %v1457 = vpack.c.b16 %v977, %v969
      %v1458 = vpack.c.b16 %v978, %v970
      %v1459 = vpack.c.b16 %v979, %v971
      %v1460 = vpack.c.b16 %v980, %v972
      %v1461 = vpack.c.b16 %v981, %v973
      %v1462 = vpack.c.b16 %v982, %v974
      %v1463 = vpack.c.b16 %v983, %v975
      %v1464 = vpack.c.b16 %v992, %v984
      %v1465 = vpack.c.b16 %v993, %v985
      %v1466 = vpack.c.b16 %v994, %v986
      %v1467 = vpack.c.b16 %v995, %v987
      %v1468 = vpack.c.b16 %v996, %v988
      %v1469 = vpack.c.b16 %v997, %v989
      %v1470 = vpack.c.b16 %v998, %v990
      %v1471 = vpack.c.b16 %v999, %v991
      %v1472 = vpack.c.b16 %v1008, %v1000
      %v1473 = vpack.c.b16 %v1009, %v1001
      %v1474 = vpack.c.b16 %v1010, %v1002
      %v1475 = vpack.c.b16 %v1011, %v1003
      %v1476 = vpack.c.b16 %v1012, %v1004
      %v1477 = vpack.c.b16 %v1013, %v1005
      %v1478 = vpack.c.b16 %v1014, %v1006
      %v1479 = vpack.c.b16 %v1015, %v1007
      %v1480 = vpack.c.b16 %v1024, %v1016
      %v1481 = vpack.c.b16 %v1025, %v1017
      %v1482 = vpack.c.b16 %v1026, %v1018
      %v1483 = vpack.c.b16 %v1027, %v1019
      %v1484 = vpack.c.b16 %v1028, %v1020
      %v1485 = vpack.c.b16 %v1029, %v1021
      %v1486 = vpack.c.b16 %v1030, %v1022
      %v1487 = vpack.c.b16 %v1031, %v1023
      %v1488 = vpack.c.b16 %v1040, %v1032
      %v1489 = vpack.c.b16 %v1041, %v1033
      %v1490 = vpack.c.b16 %v1042, %v1034
      %v1491 = vpack.c.b16 %v1043, %v1035
      %v1492 = vpack.c.b16 %v1044, %v1036
      %v1493 = vpack.c.b16 %v1045, %v1037
      %v1494 = vpack.c.b16 %v1046, %v1038
      %v1495 = vpack.c.b16 %v1047, %v1039
      %v1496 = vpack.c.b16 %v1056, %v1048
      %v1497 = vpack.c.b16 %v1057, %v1049
      %v1498 = vpack.c.b16 %v1058, %v1050
      %v1499 = vpack.c.b16 %v1059, %v1051
      %v1500 = vpack.c.b16 %v1060, %v1052
      %v1501 = vpack.c.b16 %v1061, %v1053
      %v1502 = vpack.c.b16 %v1062, %v1054
      %v1503 = vpack.c.b16 %v1063, %v1055
      %v1504 = vpack.c.b16 %v1072, %v1064
      %v1505 = vpack.c.b16 %v1073, %v1065
      %v1506 = vpack.c.b16 %v1074, %v1066
      %v1507 = vpack.c.b16 %v1075, %v1067
      %v1508 = vpack.c.b16 %v1076, %v1068
      %v1509 = vpack.c.b16 %v1077, %v1069
      %v1510 = vpack.c.b16 %v1078, %v1070
      %v1511 = vpack.c.b16 %v1079, %v1071
      %v1512 = vpack.c.b16 %v1088, %v1080
      %v1513 = vpack.c.b16 %v1089, %v1081
      %v1514 = vpack.c.b16 %v1090, %v1082
      %v1515 = vpack.c.b16 %v1091, %v1083
      %v1516 = vpack.c.b16 %v1092, %v1084
      %v1517 = vpack.c.b16 %v1093, %v1085
      %v1518 = vpack.c.b16 %v1094, %v1086
      %v1519 = vpack.c.b16 %v1095, %v1087
      %v1520 = vpack.c.b16 %v1104, %v1096
      %v1521 = vpack.c.b16 %v1105, %v1097
      %v1522 = vpack.c.b16 %v1106, %v1098
      %v1523 = vpack.c.b16 %v1107, %v1099
      %v1524 = vpack.c.b16 %v1108, %v1100
      %v1525 = vpack.c.b16 %v1109, %v1101
      %v1526 = vpack.c.b16 %v1110, %v1102
      %v1527 = vpack.c.b16 %v1111, %v1103
      %v1528 = vpack.c.b16 %v1120, %v1112
      %v1529 = vpack.c.b16 %v1121, %v1113
      %v1530 = vpack.c.b16 %v1122, %v1114
      %v1531 = vpack.c.b16 %v1123, %v1115
      %v1532 = vpack.c.b16 %v1124, %v1116
      %v1533 = vpack.c.b16 %v1125, %v1117
      %v1534 = vpack.c.b16 %v1126, %v1118
      %v1535 = vpack.c.b16 %v1127, %v1119
      %v1536 = vpack.c.b16 %v1136, %v1128
      %v1537 = vpack.c.b16 %v1137, %v1129
      %v1538 = vpack.c.b16 %v1138, %v1130
      %v1539 = vpack.c.b16 %v1139, %v1131
      %v1540 = vpack.c.b16 %v1140, %v1132
      %v1541 = vpack.c.b16 %v1141, %v1133
      %v1542 = vpack.c.b16 %v1142, %v1134
      %v1543 = vpack.c.b16 %v1143, %v1135
      %v1544 = vpack.c.b16 %v1152, %v1144
      %v1545 = vpack.c.b16 %v1153, %v1145
      %v1546 = vpack.c.b16 %v1154, %v1146
      %v1547 = vpack.c.b16 %v1155, %v1147
      %v1548 = vpack.c.b16 %v1156, %v1148
      %v1549 = vpack.c.b16 %v1157, %v1149
      %v1550 = vpack.c.b16 %v1158, %v1150
      %v1551 = vpack.c.b16 %v1159, %v1151
      %v1552 = vpack.c.b16 %v1168, %v1160
      %v1553 = vpack.c.b16 %v1169, %v1161
      %v1554 = vpack.c.b16 %v1170, %v1162
      %v1555 = vpack.c.b16 %v1171, %v1163
      %v1556 = vpack.c.b16 %v1172, %v1164
      %v1557 = vpack.c.b16 %v1173, %v1165
      %v1558 = vpack.c.b16 %v1174, %v1166
      %v1559 = vpack.c.b16 %v1175, %v1167
      %v1560 = vpack.c.b16 %v1184, %v1176
      %v1561 = vpack.c.b16 %v1185, %v1177
      %v1562 = vpack.c.b16 %v1186, %v1178
      %v1563 = vpack.c.b16 %v1187, %v1179
      %v1564 = vpack.c.b16 %v1188, %v1180
      %v1565 = vpack.c.b16 %v1189, %v1181
      %v1566 = vpack.c.b16 %v1190, %v1182
      %v1567 = vpack.c.b16 %v1191, %v1183
      %v1568 = vpack.c.b16 %v1200, %v1192
      %v1569 = vpack.c.b16 %v1201, %v1193
      %v1570 = vpack.c.b16 %v1202, %v1194
      %v1571 = vpack.c.b16 %v1203, %v1195
      %v1572 = vpack.c.b16 %v1204, %v1196
      %v1573 = vpack.c.b16 %v1205, %v1197
      %v1574 = vpack.c.b16 %v1206, %v1198
      %v1575 = vpack.c.b16 %v1207, %v1199
      %v1576 = vpack.c.b16 %v1216, %v1208
      %v1577 = vpack.c.b16 %v1217, %v1209
      %v1578 = vpack.c.b16 %v1218, %v1210
      %v1579 = vpack.c.b16 %v1219, %v1211
      %v1580 = vpack.c.b16 %v1220, %v1212
      %v1581 = vpack.c.b16 %v1221, %v1213
      %v1582 = vpack.c.b16 %v1222, %v1214
      %v1583 = vpack.c.b16 %v1223, %v1215
      %v1584 = vpack.c.b16 %v1232, %v1224
      %v1585 = vpack.c.b16 %v1233, %v1225
      %v1586 = vpack.c.b16 %v1234, %v1226
      %v1587 = vpack.c.b16 %v1235, %v1227
      %v1588 = vpack.c.b16 %v1236, %v1228
      %v1589 = vpack.c.b16 %v1237, %v1229
      %v1590 = vpack.c.b16 %v1238, %v1230
      %v1591 = vpack.c.b16 %v1239, %v1231
      %v1592 = vpack.c.b16 %v1248, %v1240
      %v1593 = vpack.c.b16 %v1249, %v1241
      %v1594 = vpack.c.b16 %v1250, %v1242
      %v1595 = vpack.c.b16 %v1251, %v1243
      %v1596 = vpack.c.b16 %v1252, %v1244
      %v1597 = vpack.c.b16 %v1253, %v1245
      %v1598 = vpack.c.b16 %v1254, %v1246
      %v1599 = vpack.c.b16 %v1255, %v1247
      %v1600 = vpack.c.b16 %v1264, %v1256
      %v1601 = vpack.c.b16 %v1265, %v1257
      %v1602 = vpack.c.b16 %v1266, %v1258
      %v1603 = vpack.c.b16 %v1267, %v1259
      %v1604 = vpack.c.b16 %v1268, %v1260
      %v1605 = vpack.c.b16 %v1269, %v1261
      %v1606 = vpack.c.b16 %v1270, %v1262
      %v1607 = vpack.c.b16 %v1271, %v1263
      %v1608 = vpack.c.b16 %v1280, %v1272
      %v1609 = vpack.c.b16 %v1281, %v1273
      %v1610 = vpack.c.b16 %v1282, %v1274
      %v1611 = vpack.c.b16 %v1283, %v1275
      %v1612 = vpack.c.b16 %v1284, %v1276
      %v1613 = vpack.c.b16 %v1285, %v1277
      %v1614 = vpack.c.b16 %v1286, %v1278
      %v1615 = vpack.c.b16 %v1287, %v1279
      %v1616 = vpack.c.b16 %v1296, %v1288
      %v1617 = vpack.c.b16 %v1297, %v1289
      %v1618 = vpack.c.b16 %v1298, %v1290
      %v1619 = vpack.c.b16 %v1299, %v1291
      %v1620 = vpack.c.b16 %v1300, %v1292
      %v1621 = vpack.c.b16 %v1301, %v1293
      %v1622 = vpack.c.b16 %v1302, %v1294
      %v1623 = vpack.c.b16 %v1303, %v1295
      %v1624 = vpack.c.b16 %v1312, %v1304
      %v1625 = vpack.c.b16 %v1313, %v1305
      %v1626 = vpack.c.b16 %v1314, %v1306
      %v1627 = vpack.c.b16 %v1315, %v1307
      %v1628 = vpack.c.b16 %v1316, %v1308
      %v1629 = vpack.c.b16 %v1317, %v1309
      %v1630 = vpack.c.b16 %v1318, %v1310
      %v1631 = vpack.c.b16 %v1319, %v1311
      %v1632 = vpack.c.b16 %v1328, %v1320
      %v1633 = vpack.c.b16 %v1329, %v1321
      %v1634 = vpack.c.b16 %v1330, %v1322
      %v1635 = vpack.c.b16 %v1331, %v1323
      %v1636 = vpack.c.b16 %v1332, %v1324
      %v1637 = vpack.c.b16 %v1333, %v1325
      %v1638 = vpack.c.b16 %v1334, %v1326
      %v1639 = vpack.c.b16 %v1335, %v1327
      %v1640 = vpack.c.b16 %v1344, %v1336
      %v1641 = vpack.c.b16 %v1345, %v1337
      %v1642 = vpack.c.b16 %v1346, %v1338
      %v1643 = vpack.c.b16 %v1347, %v1339
      %v1644 = vpack.c.b16 %v1348, %v1340
      %v1645 = vpack.c.b16 %v1349, %v1341
      %v1646 = vpack.c.b16 %v1350, %v1342
      %v1647 = vpack.c.b16 %v1351, %v1343
      %v1648 = vpack.c.b16 %v1360, %v1352
      %v1649 = vpack.c.b16 %v1361, %v1353
      %v1650 = vpack.c.b16 %v1362, %v1354
      %v1651 = vpack.c.b16 %v1363, %v1355
      %v1652 = vpack.c.b16 %v1364, %v1356
      %v1653 = vpack.c.b16 %v1365, %v1357
      %v1654 = vpack.c.b16 %v1366, %v1358
      %v1655 = vpack.c.b16 %v1367, %v1359
      %v1656 = vpack.c.b16 %v1376, %v1368
      %v1657 = vpack.c.b16 %v1377, %v1369
      %v1658 = vpack.c.b16 %v1378, %v1370
      %v1659 = vpack.c.b16 %v1379, %v1371
      %v1660 = vpack.c.b16 %v1380, %v1372
      %v1661 = vpack.c.b16 %v1381, %v1373
      %v1662 = vpack.c.b16 %v1382, %v1374
      %v1663 = vpack.c.b16 %v1383, %v1375
      %v1664 = vpack.c.b16 %v1392, %v1384
      %v1665 = vpack.c.b16 %v1393, %v1385
      %v1666 = vpack.c.b16 %v1394, %v1386
      %v1667 = vpack.c.b16 %v1395, %v1387
      %v1668 = vpack.c.b16 %v1396, %v1388
      %v1669 = vpack.c.b16 %v1397, %v1389
      %v1670 = vpack.c.b16 %v1398, %v1390
      %v1671 = vpack.c.b16 %v1399, %v1391
      %v1672 = vpack.c.b16 %v1408, %v1400
      %v1673 = vpack.c.b16 %v1409, %v1401
      %v1674 = vpack.c.b16 %v1410, %v1402
      %v1675 = vpack.c.b16 %v1411, %v1403
      %v1676 = vpack.c.b16 %v1412, %v1404
      %v1677 = vpack.c.b16 %v1413, %v1405
      %v1678 = vpack.c.b16 %v1414, %v1406
      %v1679 = vpack.c.b16 %v1415, %v1407
      %v2072 = vunpack.c.l.b16 %v492
      %v2073 = vunpack.c.l.b16 %v493
      %v2074 = vunpack.c.l.b16 %v494
      %v2075 = vunpack.c.l.b16 %v495
      %v2076 = vunpack.c.l.b16 %v496
      %v2077 = vunpack.c.l.b16 %v497
      %v2078 = vunpack.c.l.b16 %v498
      %v2079 = vunpack.c.l.b16 %v499
      %v2080 = vunpack.c.l.b16 %v500
      %v2081 = vunpack.c.l.b16 %v501
      %v2082 = vunpack.c.l.b16 %v502
      %v2083 = vunpack.c.l.b16 %v503
      %v2084 = vunpack.c.l.b16 %v504
      %v2085 = vunpack.c.l.b16 %v505
      %v2086 = vunpack.c.l.b16 %v506
      %v2087 = vunpack.c.l.b16 %v507
      %v2088 = vunpack.c.l.b16 %v508
      %v2089 = vunpack.c.l.b16 %v509
      %v2090 = vunpack.c.l.b16 %v510
      %v2091 = vunpack.c.l.b16 %v511
      %v2092 = vunpack.c.l.b16 %v512
      %v2093 = vunpack.c.l.b16 %v513
      %v2094 = vunpack.c.l.b16 %v514
      %v2095 = vunpack.c.l.b16 %v515
      %v2096 = vunpack.c.l.b16 %v516
      %v2097 = vunpack.c.l.b16 %v517
      %v2098 = vunpack.c.l.b16 %v518
      %v2099 = vunpack.c.l.b16 %v519
      %v2100 = vunpack.c.l.b16 %v520
      %v2101 = vunpack.c.l.b16 %v521
      %v2102 = vunpack.c.l.b16 %v522
      %v2103 = vunpack.c.l.b16 %v523
      %v2104 = vunpack.c.l.b16 %v524
      %v2105 = vunpack.c.l.b16 %v525
      %v2106 = vunpack.c.l.b16 %v526
      %v2107 = vunpack.c.l.b16 %v527
      %v2108 = vunpack.c.l.b16 %v528
      %v2109 = vunpack.c.l.b16 %v529
      %v2110 = vunpack.c.l.b16 %v530
      %v2111 = vunpack.c.l.b16 %v531
      %v2112 = vunpack.c.l.b16 %v532
      %v2113 = vunpack.c.l.b16 %v533
      %v2114 = vunpack.c.l.b16 %v534
      %v2115 = vunpack.c.l.b16 %v535
      %v2116 = vunpack.c.l.b16 %v536
      %v2117 = vunpack.c.l.b16 %v537
      %v2118 = vunpack.c.l.b16 %v538
      %v2119 = vunpack.c.l.b16 %v539
      %v2120 = vunpack.c.l.b16 %v540
      %v2121 = vunpack.c.l.b16 %v541
      %v2122 = vunpack.c.l.b16 %v542
      %v2123 = vunpack.c.l.b16 %v543
      %v2124 = vunpack.c.l.b16 %v544
      %v2125 = vunpack.c.l.b16 %v545
      %v2126 = vunpack.c.l.b16 %v546
      %v2127 = vunpack.c.l.b16 %v547
      %v2128 = vunpack.c.l.b16 %v548
      %v2129 = vunpack.c.l.b16 %v549
      %v2130 = vunpack.c.l.b16 %v550
      %v2131 = vunpack.c.l.b16 %v551
      %v2132 = vunpack.c.l.b16 %v552
      %v2133 = vunpack.c.l.b16 %v553
      %v2134 = vunpack.c.l.b16 %v554
      %v2135 = vunpack.c.l.b16 %v555
      %v2136 = vunpack.c.l.b16 %v556
      %v2137 = vunpack.c.l.b16 %v557
      %v2138 = vunpack.c.l.b16 %v558
      %v2139 = vunpack.c.l.b16 %v559
      %v2140 = vunpack.c.l.b16 %v560
      %v2141 = vunpack.c.l.b16 %v561
      %v2142 = vunpack.c.l.b16 %v562
      %v2143 = vunpack.c.l.b16 %v563
      %v2144 = vunpack.c.l.b16 %v564
      %v2145 = vunpack.c.l.b16 %v565
      %v2146 = vunpack.c.l.b16 %v566
      %v2147 = vunpack.c.l.b16 %v567
      %v2148 = vunpack.c.l.b16 %v568
      %v2149 = vunpack.c.l.b16 %v569
      %v2150 = vunpack.c.l.b16 %v570
      %v2151 = vunpack.c.l.b16 %v571
      %v2152 = vunpack.c.l.b16 %v572
      %v2153 = vunpack.c.l.b16 %v573
      %v2154 = vunpack.c.l.b16 %v574
      %v2155 = vunpack.c.l.b16 %v575
      %v2156 = vunpack.c.l.b16 %v576
      %v2157 = vunpack.c.l.b16 %v577
      %v2158 = vunpack.c.l.b16 %v578
      %v2159 = vunpack.c.l.b16 %v579
      %v2160 = vunpack.c.l.b16 %v580
      %v2161 = vunpack.c.l.b16 %v581
      %v2162 = vunpack.c.l.b16 %v582
      %v2163 = vunpack.c.l.b16 %v583
      %v2164 = vunpack.c.l.b16 %v584
      %v2165 = vunpack.c.l.b16 %v585
      %v2166 = vunpack.c.l.b16 %v586
      %v2167 = vunpack.c.l.b16 %v587
      %v2168 = vunpack.c.l.b16 %v588
      %v2169 = vunpack.c.l.b16 %v589
      %v2170 = vunpack.c.l.b16 %v590
      %v2171 = vunpack.c.l.b16 %v591
      %v2172 = vunpack.c.l.b16 %v592
      %v2173 = vunpack.c.l.b16 %v593
      %v2174 = vunpack.c.l.b16 %v594
      %v2175 = vunpack.c.l.b16 %v595
      %v2176 = vunpack.c.l.b16 %v596
      %v2177 = vunpack.c.l.b16 %v597
      %v2178 = vunpack.c.l.b16 %v598
      %v2179 = vunpack.c.l.b16 %v599
      %v2180 = vunpack.c.l.b16 %v600
      %v2181 = vunpack.c.l.b16 %v601
      %v2182 = vunpack.c.l.b16 %v602
      %v2183 = vunpack.c.l.b16 %v603
      %v2184 = vunpack.c.l.b16 %v604
      %v2185 = vunpack.c.l.b16 %v605
      %v2186 = vunpack.c.l.b16 %v606
      %v2187 = vunpack.c.l.b16 %v607
      %v2188 = vunpack.c.l.b16 %v608
      %v2189 = vunpack.c.l.b16 %v609
      %v2190 = vunpack.c.l.b16 %v610
      %v2191 = vunpack.c.l.b16 %v611
      %v2192 = vunpack.c.l.b16 %v612
      %v2193 = vunpack.c.l.b16 %v613
      %v2194 = vunpack.c.l.b16 %v614
      %v2195 = vunpack.c.l.b16 %v615
      %v2196 = vunpack.c.l.b16 %v616
      %v2197 = vunpack.c.l.b16 %v617
      %v2198 = vunpack.c.l.b16 %v618
      %v2199 = vunpack.c.l.b16 %v619
      %v2200 = vpack.c.b16 %v2073, %v2072
      %v2201 = vpack.c.b16 %v2075, %v2074
      %v2202 = vpack.c.b16 %v2077, %v2076
      %v2203 = vpack.c.b16 %v2079, %v2078
      %v2204 = vpack.c.b16 %v2081, %v2080
      %v2205 = vpack.c.b16 %v2083, %v2082
      %v2206 = vpack.c.b16 %v2085, %v2084
      %v2207 = vpack.c.b16 %v2087, %v2086
      %v2208 = vpack.c.b16 %v2089, %v2088
      %v2209 = vpack.c.b16 %v2091, %v2090
      %v2210 = vpack.c.b16 %v2093, %v2092
      %v2211 = vpack.c.b16 %v2095, %v2094
      %v2212 = vpack.c.b16 %v2097, %v2096
      %v2213 = vpack.c.b16 %v2099, %v2098
      %v2214 = vpack.c.b16 %v2101, %v2100
      %v2215 = vpack.c.b16 %v2103, %v2102
      %v2216 = vpack.c.b16 %v2105, %v2104
      %v2217 = vpack.c.b16 %v2107, %v2106
      %v2218 = vpack.c.b16 %v2109, %v2108
      %v2219 = vpack.c.b16 %v2111, %v2110
      %v2220 = vpack.c.b16 %v2113, %v2112
      %v2221 = vpack.c.b16 %v2115, %v2114
      %v2222 = vpack.c.b16 %v2117, %v2116
      %v2223 = vpack.c.b16 %v2119, %v2118
      %v2224 = vpack.c.b16 %v2121, %v2120
      %v2225 = vpack.c.b16 %v2123, %v2122
      %v2226 = vpack.c.b16 %v2125, %v2124
      %v2227 = vpack.c.b16 %v2127, %v2126
      %v2228 = vpack.c.b16 %v2129, %v2128
      %v2229 = vpack.c.b16 %v2131, %v2130
      %v2230 = vpack.c.b16 %v2133, %v2132
      %v2231 = vpack.c.b16 %v2135, %v2134
      %v2232 = vpack.c.b16 %v2137, %v2136
      %v2233 = vpack.c.b16 %v2139, %v2138
      %v2234 = vpack.c.b16 %v2141, %v2140
      %v2235 = vpack.c.b16 %v2143, %v2142
      %v2236 = vpack.c.b16 %v2145, %v2144
      %v2237 = vpack.c.b16 %v2147, %v2146
      %v2238 = vpack.c.b16 %v2149, %v2148
      %v2239 = vpack.c.b16 %v2151, %v2150
      %v2240 = vpack.c.b16 %v2153, %v2152
      %v2241 = vpack.c.b16 %v2155, %v2154
      %v2242 = vpack.c.b16 %v2157, %v2156
      %v2243 = vpack.c.b16 %v2159, %v2158
      %v2244 = vpack.c.b16 %v2161, %v2160
      %v2245 = vpack.c.b16 %v2163, %v2162
      %v2246 = vpack.c.b16 %v2165, %v2164
      %v2247 = vpack.c.b16 %v2167, %v2166
      %v2248 = vpack.c.b16 %v2169, %v2168
      %v2249 = vpack.c.b16 %v2171, %v2170
      %v2250 = vpack.c.b16 %v2173, %v2172
      %v2251 = vpack.c.b16 %v2175, %v2174
      %v2252 = vpack.c.b16 %v2177, %v2176
      %v2253 = vpack.c.b16 %v2179, %v2178
      %v2254 = vpack.c.b16 %v2181, %v2180
      %v2255 = vpack.c.b16 %v2183, %v2182
      %v2256 = vpack.c.b16 %v2185, %v2184
      %v2257 = vpack.c.b16 %v2187, %v2186
      %v2258 = vpack.c.b16 %v2189, %v2188
      %v2259 = vpack.c.b16 %v2191, %v2190
      %v2260 = vpack.c.b16 %v2193, %v2192
      %v2261 = vpack.c.b16 %v2195, %v2194
      %v2262 = vpack.c.b16 %v2197, %v2196
      %v2263 = vpack.c.b16 %v2199, %v2198
      %2328 = vmatpush.bf16.msra.mxu0 %v2207
      %2329 = vmatpush.bf16.msra.mxu0 %v2206
      %2330 = vmatpush.bf16.msra.mxu0 %v2205
      %2331 = vmatpush.bf16.msra.mxu0 %v2204
      %2332 = vmatpush.bf16.msra.mxu0 %v2203
      %2333 = vmatpush.bf16.msra.mxu0 %v2202
      %2334 = vmatpush.bf16.msra.mxu0 %v2201
      %2335 = vmatpush.bf16.msra.mxu0 %v2200
      %2336 = vmatmul.bf16.gmra.mxu0 %v1416
      %v2337 = vpop.f32.mrf.mxu0
      %v2338 = vadd.f32 %v622, %v2337
      %v2339 = vpop.f32.mrf.mxu0
      %v2340 = vadd.f32 %v622, %v2339
      %2341 = vmatmul.bf16.gmra.mxu0 %v1424
      %v2342 = vpop.f32.mrf.mxu0
      %v2343 = vadd.f32 %v622, %v2342
      %v2344 = vpop.f32.mrf.mxu0
      %v2345 = vadd.f32 %v622, %v2344
      %2346 = vmatmul.bf16.gmra.mxu0 %v1432
      %v2347 = vpop.f32.mrf.mxu0
      %v2348 = vadd.f32 %v622, %v2347
      %v2349 = vpop.f32.mrf.mxu0
      %v2350 = vadd.f32 %v622, %v2349
      %2351 = vmatmul.bf16.gmra.mxu0 %v1440
      %v2352 = vpop.f32.mrf.mxu0
      %v2353 = vadd.f32 %v622, %v2352
      %v2354 = vpop.f32.mrf.mxu0
      %v2355 = vadd.f32 %v622, %v2354
      %2356 = vmatmul.bf16.gmra.mxu0 %v1448
      %v2357 = vpop.f32.mrf.mxu0
      %v2358 = vadd.f32 %v622, %v2357
      %v2359 = vpop.f32.mrf.mxu0
      %v2360 = vadd.f32 %v622, %v2359
      %2361 = vmatmul.bf16.gmra.mxu0 %v1456
      %v2362 = vpop.f32.mrf.mxu0
      %v2363 = vadd.f32 %v622, %v2362
      %v2364 = vpop.f32.mrf.mxu0
      %v2365 = vadd.f32 %v622, %v2364
      %2366 = vmatmul.bf16.gmra.mxu0 %v1464
      %v2367 = vpop.f32.mrf.mxu0
      %v2368 = vadd.f32 %v622, %v2367
      %v2369 = vpop.f32.mrf.mxu0
      %v2370 = vadd.f32 %v622, %v2369
      %2371 = vmatmul.bf16.gmra.mxu0 %v1472
      %v2372 = vpop.f32.mrf.mxu0
      %v2373 = vadd.f32 %v622, %v2372
      %v2374 = vpop.f32.mrf.mxu0
      %v2375 = vadd.f32 %v622, %v2374
      %2376 = vmatmul.bf16.gmra.mxu0 %v1480
      %v2377 = vpop.f32.mrf.mxu0
      %v2378 = vadd.f32 %v622, %v2377
      %v2379 = vpop.f32.mrf.mxu0
      %v2380 = vadd.f32 %v622, %v2379
      %2381 = vmatmul.bf16.gmra.mxu0 %v1488
      %v2382 = vpop.f32.mrf.mxu0
      %v2383 = vadd.f32 %v622, %v2382
      %v2384 = vpop.f32.mrf.mxu0
      %v2385 = vadd.f32 %v622, %v2384
      %2386 = vmatmul.bf16.gmra.mxu0 %v1496
      %v2387 = vpop.f32.mrf.mxu0
      %v2388 = vadd.f32 %v622, %v2387
      %v2389 = vpop.f32.mrf.mxu0
      %v2390 = vadd.f32 %v622, %v2389
      %2391 = vmatmul.bf16.gmra.mxu0 %v1504
      %v2392 = vpop.f32.mrf.mxu0
      %v2393 = vadd.f32 %v622, %v2392
      %v2394 = vpop.f32.mrf.mxu0
      %v2395 = vadd.f32 %v622, %v2394
      %2396 = vmatmul.bf16.gmra.mxu0 %v1512
      %v2397 = vpop.f32.mrf.mxu0
      %v2398 = vadd.f32 %v622, %v2397
      %v2399 = vpop.f32.mrf.mxu0
      %v2400 = vadd.f32 %v622, %v2399
      %2401 = vmatmul.bf16.gmra.mxu0 %v1520
      %v2402 = vpop.f32.mrf.mxu0
      %v2403 = vadd.f32 %v622, %v2402
      %v2404 = vpop.f32.mrf.mxu0
      %v2405 = vadd.f32 %v622, %v2404
      %2406 = vmatmul.bf16.gmra.mxu0 %v1528
      %v2407 = vpop.f32.mrf.mxu0
      %v2408 = vadd.f32 %v622, %v2407
      %v2409 = vpop.f32.mrf.mxu0
      %v2410 = vadd.f32 %v622, %v2409
      %2411 = vmatmul.bf16.gmra.mxu0 %v1536
      %v2412 = vpop.f32.mrf.mxu0
      %v2413 = vadd.f32 %v622, %v2412
      %v2414 = vpop.f32.mrf.mxu0
      %v2415 = vadd.f32 %v622, %v2414
      %2416 = vmatmul.bf16.gmra.mxu0 %v1544
      %v2417 = vpop.f32.mrf.mxu0
      %v2418 = vadd.f32 %v622, %v2417
      %v2419 = vpop.f32.mrf.mxu0
      %v2420 = vadd.f32 %v622, %v2419
      %2421 = vmatmul.bf16.gmra.mxu0 %v1552
      %v2422 = vpop.f32.mrf.mxu0
      %v2423 = vadd.f32 %v622, %v2422
      %v2424 = vpop.f32.mrf.mxu0
      %v2425 = vadd.f32 %v622, %v2424
      %2426 = vmatmul.bf16.gmra.mxu0 %v1560
      %v2427 = vpop.f32.mrf.mxu0
      %v2428 = vadd.f32 %v622, %v2427
      %v2429 = vpop.f32.mrf.mxu0
      %v2430 = vadd.f32 %v622, %v2429
      %2431 = vmatmul.bf16.gmra.mxu0 %v1568
      %v2432 = vpop.f32.mrf.mxu0
      %v2433 = vadd.f32 %v622, %v2432
      %v2434 = vpop.f32.mrf.mxu0
      %v2435 = vadd.f32 %v622, %v2434
      %2436 = vmatmul.bf16.gmra.mxu0 %v1576
      %v2437 = vpop.f32.mrf.mxu0
      %v2438 = vadd.f32 %v622, %v2437
      %v2439 = vpop.f32.mrf.mxu0
      %v2440 = vadd.f32 %v622, %v2439
      %2441 = vmatmul.bf16.gmra.mxu0 %v1584
      %v2442 = vpop.f32.mrf.mxu0
      %v2443 = vadd.f32 %v622, %v2442
      %v2444 = vpop.f32.mrf.mxu0
      %v2445 = vadd.f32 %v622, %v2444
      %2446 = vmatmul.bf16.gmra.mxu0 %v1592
      %v2447 = vpop.f32.mrf.mxu0
      %v2448 = vadd.f32 %v622, %v2447
      %v2449 = vpop.f32.mrf.mxu0
      %v2450 = vadd.f32 %v622, %v2449
      %2451 = vmatmul.bf16.gmra.mxu0 %v1600
      %v2452 = vpop.f32.mrf.mxu0
      %v2453 = vadd.f32 %v622, %v2452
      %v2454 = vpop.f32.mrf.mxu0
      %v2455 = vadd.f32 %v622, %v2454
      %2456 = vmatmul.bf16.gmra.mxu0 %v1608
      %v2457 = vpop.f32.mrf.mxu0
      %v2458 = vadd.f32 %v622, %v2457
      %v2459 = vpop.f32.mrf.mxu0
      %v2460 = vadd.f32 %v622, %v2459
      %2461 = vmatmul.bf16.gmra.mxu0 %v1616
      %v2462 = vpop.f32.mrf.mxu0
      %v2463 = vadd.f32 %v622, %v2462
      %v2464 = vpop.f32.mrf.mxu0
      %v2465 = vadd.f32 %v622, %v2464
      %2466 = vmatmul.bf16.gmra.mxu0 %v1624
      %v2467 = vpop.f32.mrf.mxu0
      %v2468 = vadd.f32 %v622, %v2467
      %v2469 = vpop.f32.mrf.mxu0
      %v2470 = vadd.f32 %v622, %v2469
      %2471 = vmatmul.bf16.gmra.mxu0 %v1632
      %v2472 = vpop.f32.mrf.mxu0
      %v2473 = vadd.f32 %v622, %v2472
      %v2474 = vpop.f32.mrf.mxu0
      %v2475 = vadd.f32 %v622, %v2474
      %2476 = vmatmul.bf16.gmra.mxu0 %v1640
      %v2477 = vpop.f32.mrf.mxu0
      %v2478 = vadd.f32 %v622, %v2477
      %v2479 = vpop.f32.mrf.mxu0
      %v2480 = vadd.f32 %v622, %v2479
      %2481 = vmatmul.bf16.gmra.mxu0 %v1648
      %v2482 = vpop.f32.mrf.mxu0
      %v2483 = vadd.f32 %v622, %v2482
      %v2484 = vpop.f32.mrf.mxu0
      %v2485 = vadd.f32 %v622, %v2484
      %2486 = vmatmul.bf16.gmra.mxu0 %v1656
      %v2487 = vpop.f32.mrf.mxu0
      %v2488 = vadd.f32 %v622, %v2487
      %v2489 = vpop.f32.mrf.mxu0
      %v2490 = vadd.f32 %v622, %v2489
      %2491 = vmatmul.bf16.gmra.mxu0 %v1664
      %v2492 = vpop.f32.mrf.mxu0
      %v2493 = vadd.f32 %v622, %v2492
      %v2494 = vpop.f32.mrf.mxu0
      %v2495 = vadd.f32 %v622, %v2494
      %2496 = vmatmul.bf16.gmra.mxu0 %v1672
      %v2497 = vpop.f32.mrf.mxu0
      %v2498 = vadd.f32 %v622, %v2497
      %v2499 = vpop.f32.mrf.mxu0
      %v2500 = vadd.f32 %v622, %v2499
      %2501 = vdwg.mxu0
      %2502 = vmatpush.bf16.msra.mxu0 %v2215
      %2503 = vmatpush.bf16.msra.mxu0 %v2214
      %2504 = vmatpush.bf16.msra.mxu0 %v2213
      %2505 = vmatpush.bf16.msra.mxu0 %v2212
      %2506 = vmatpush.bf16.msra.mxu0 %v2211
      %2507 = vmatpush.bf16.msra.mxu0 %v2210
      %2508 = vmatpush.bf16.msra.mxu0 %v2209
      %2509 = vmatpush.bf16.msra.mxu0 %v2208
      %2510 = vmatmul.bf16.gmra.mxu0 %v1417
      %v2511 = vpop.f32.mrf.mxu0
      %v2512 = vadd.f32 %v2338, %v2511
      %v2513 = vpop.f32.mrf.mxu0
      %v2514 = vadd.f32 %v2340, %v2513
      %2515 = vmatmul.bf16.gmra.mxu0 %v1425
      %v2516 = vpop.f32.mrf.mxu0
      %v2517 = vadd.f32 %v2343, %v2516
      %v2518 = vpop.f32.mrf.mxu0
      %v2519 = vadd.f32 %v2345, %v2518
      %2520 = vmatmul.bf16.gmra.mxu0 %v1433
      %v2521 = vpop.f32.mrf.mxu0
      %v2522 = vadd.f32 %v2348, %v2521
      %v2523 = vpop.f32.mrf.mxu0
      %v2524 = vadd.f32 %v2350, %v2523
      %2525 = vmatmul.bf16.gmra.mxu0 %v1441
      %v2526 = vpop.f32.mrf.mxu0
      %v2527 = vadd.f32 %v2353, %v2526
      %v2528 = vpop.f32.mrf.mxu0
      %v2529 = vadd.f32 %v2355, %v2528
      %2530 = vmatmul.bf16.gmra.mxu0 %v1449
      %v2531 = vpop.f32.mrf.mxu0
      %v2532 = vadd.f32 %v2358, %v2531
      %v2533 = vpop.f32.mrf.mxu0
      %v2534 = vadd.f32 %v2360, %v2533
      %2535 = vmatmul.bf16.gmra.mxu0 %v1457
      %v2536 = vpop.f32.mrf.mxu0
      %v2537 = vadd.f32 %v2363, %v2536
      %v2538 = vpop.f32.mrf.mxu0
      %v2539 = vadd.f32 %v2365, %v2538
      %2540 = vmatmul.bf16.gmra.mxu0 %v1465
      %v2541 = vpop.f32.mrf.mxu0
      %v2542 = vadd.f32 %v2368, %v2541
      %v2543 = vpop.f32.mrf.mxu0
      %v2544 = vadd.f32 %v2370, %v2543
      %2545 = vmatmul.bf16.gmra.mxu0 %v1473
      %v2546 = vpop.f32.mrf.mxu0
      %v2547 = vadd.f32 %v2373, %v2546
      %v2548 = vpop.f32.mrf.mxu0
      %v2549 = vadd.f32 %v2375, %v2548
      %2550 = vmatmul.bf16.gmra.mxu0 %v1481
      %v2551 = vpop.f32.mrf.mxu0
      %v2552 = vadd.f32 %v2378, %v2551
      %v2553 = vpop.f32.mrf.mxu0
      %v2554 = vadd.f32 %v2380, %v2553
      %2555 = vmatmul.bf16.gmra.mxu0 %v1489
      %v2556 = vpop.f32.mrf.mxu0
      %v2557 = vadd.f32 %v2383, %v2556
      %v2558 = vpop.f32.mrf.mxu0
      %v2559 = vadd.f32 %v2385, %v2558
      %2560 = vmatmul.bf16.gmra.mxu0 %v1497
      %v2561 = vpop.f32.mrf.mxu0
      %v2562 = vadd.f32 %v2388, %v2561
      %v2563 = vpop.f32.mrf.mxu0
      %v2564 = vadd.f32 %v2390, %v2563
      %2565 = vmatmul.bf16.gmra.mxu0 %v1505
      %v2566 = vpop.f32.mrf.mxu0
      %v2567 = vadd.f32 %v2393, %v2566
      %v2568 = vpop.f32.mrf.mxu0
      %v2569 = vadd.f32 %v2395, %v2568
      %2570 = vmatmul.bf16.gmra.mxu0 %v1513
      %v2571 = vpop.f32.mrf.mxu0
      %v2572 = vadd.f32 %v2398, %v2571
      %v2573 = vpop.f32.mrf.mxu0
      %v2574 = vadd.f32 %v2400, %v2573
      %2575 = vmatmul.bf16.gmra.mxu0 %v1521
      %v2576 = vpop.f32.mrf.mxu0
      %v2577 = vadd.f32 %v2403, %v2576
      %v2578 = vpop.f32.mrf.mxu0
      %v2579 = vadd.f32 %v2405, %v2578
      %2580 = vmatmul.bf16.gmra.mxu0 %v1529
      %v2581 = vpop.f32.mrf.mxu0
      %v2582 = vadd.f32 %v2408, %v2581
      %v2583 = vpop.f32.mrf.mxu0
      %v2584 = vadd.f32 %v2410, %v2583
      %2585 = vmatmul.bf16.gmra.mxu0 %v1537
      %v2586 = vpop.f32.mrf.mxu0
      %v2587 = vadd.f32 %v2413, %v2586
      %v2588 = vpop.f32.mrf.mxu0
      %v2589 = vadd.f32 %v2415, %v2588
      %2590 = vmatmul.bf16.gmra.mxu0 %v1545
      %v2591 = vpop.f32.mrf.mxu0
      %v2592 = vadd.f32 %v2418, %v2591
      %v2593 = vpop.f32.mrf.mxu0
      %v2594 = vadd.f32 %v2420, %v2593
      %2595 = vmatmul.bf16.gmra.mxu0 %v1553
      %v2596 = vpop.f32.mrf.mxu0
      %v2597 = vadd.f32 %v2423, %v2596
      %v2598 = vpop.f32.mrf.mxu0
      %v2599 = vadd.f32 %v2425, %v2598
      %2600 = vmatmul.bf16.gmra.mxu0 %v1561
      %v2601 = vpop.f32.mrf.mxu0
      %v2602 = vadd.f32 %v2428, %v2601
      %v2603 = vpop.f32.mrf.mxu0
      %v2604 = vadd.f32 %v2430, %v2603
      %2605 = vmatmul.bf16.gmra.mxu0 %v1569
      %v2606 = vpop.f32.mrf.mxu0
      %v2607 = vadd.f32 %v2433, %v2606
      %v2608 = vpop.f32.mrf.mxu0
      %v2609 = vadd.f32 %v2435, %v2608
      %2610 = vmatmul.bf16.gmra.mxu0 %v1577
      %v2611 = vpop.f32.mrf.mxu0
      %v2612 = vadd.f32 %v2438, %v2611
      %v2613 = vpop.f32.mrf.mxu0
      %v2614 = vadd.f32 %v2440, %v2613
      %2615 = vmatmul.bf16.gmra.mxu0 %v1585
      %v2616 = vpop.f32.mrf.mxu0
      %v2617 = vadd.f32 %v2443, %v2616
      %v2618 = vpop.f32.mrf.mxu0
      %v2619 = vadd.f32 %v2445, %v2618
      %2620 = vmatmul.bf16.gmra.mxu0 %v1593
      %v2621 = vpop.f32.mrf.mxu0
      %v2622 = vadd.f32 %v2448, %v2621
      %v2623 = vpop.f32.mrf.mxu0
      %v2624 = vadd.f32 %v2450, %v2623
      %2625 = vmatmul.bf16.gmra.mxu0 %v1601
      %v2626 = vpop.f32.mrf.mxu0
      %v2627 = vadd.f32 %v2453, %v2626
      %v2628 = vpop.f32.mrf.mxu0
      %v2629 = vadd.f32 %v2455, %v2628
      %2630 = vmatmul.bf16.gmra.mxu0 %v1609
      %v2631 = vpop.f32.mrf.mxu0
      %v2632 = vadd.f32 %v2458, %v2631
      %v2633 = vpop.f32.mrf.mxu0
      %v2634 = vadd.f32 %v2460, %v2633
      %2635 = vmatmul.bf16.gmra.mxu0 %v1617
      %v2636 = vpop.f32.mrf.mxu0
      %v2637 = vadd.f32 %v2463, %v2636
      %v2638 = vpop.f32.mrf.mxu0
      %v2639 = vadd.f32 %v2465, %v2638
      %2640 = vmatmul.bf16.gmra.mxu0 %v1625
      %v2641 = vpop.f32.mrf.mxu0
      %v2642 = vadd.f32 %v2468, %v2641
      %v2643 = vpop.f32.mrf.mxu0
      %v2644 = vadd.f32 %v2470, %v2643
      %2645 = vmatmul.bf16.gmra.mxu0 %v1633
      %v2646 = vpop.f32.mrf.mxu0
      %v2647 = vadd.f32 %v2473, %v2646
      %v2648 = vpop.f32.mrf.mxu0
      %v2649 = vadd.f32 %v2475, %v2648
      %2650 = vmatmul.bf16.gmra.mxu0 %v1641
      %v2651 = vpop.f32.mrf.mxu0
      %v2652 = vadd.f32 %v2478, %v2651
      %v2653 = vpop.f32.mrf.mxu0
      %v2654 = vadd.f32 %v2480, %v2653
      %2655 = vmatmul.bf16.gmra.mxu0 %v1649
      %v2656 = vpop.f32.mrf.mxu0
      %v2657 = vadd.f32 %v2483, %v2656
      %v2658 = vpop.f32.mrf.mxu0
      %v2659 = vadd.f32 %v2485, %v2658
      %2660 = vmatmul.bf16.gmra.mxu0 %v1657
      %v2661 = vpop.f32.mrf.mxu0
      %v2662 = vadd.f32 %v2488, %v2661
      %v2663 = vpop.f32.mrf.mxu0
      %v2664 = vadd.f32 %v2490, %v2663
      %2665 = vmatmul.bf16.gmra.mxu0 %v1665
      %v2666 = vpop.f32.mrf.mxu0
      %v2667 = vadd.f32 %v2493, %v2666
      %v2668 = vpop.f32.mrf.mxu0
      %v2669 = vadd.f32 %v2495, %v2668
      %2670 = vmatmul.bf16.gmra.mxu0 %v1673
      %v2671 = vpop.f32.mrf.mxu0
      %v2672 = vadd.f32 %v2498, %v2671
      %v2673 = vpop.f32.mrf.mxu0
      %v2674 = vadd.f32 %v2500, %v2673
      %2675 = vdwg.mxu0
      %2676 = vmatpush.bf16.msra.mxu0 %v2223
      %2677 = vmatpush.bf16.msra.mxu0 %v2222
      %2678 = vmatpush.bf16.msra.mxu0 %v2221
      %2679 = vmatpush.bf16.msra.mxu0 %v2220
      %2680 = vmatpush.bf16.msra.mxu0 %v2219
      %2681 = vmatpush.bf16.msra.mxu0 %v2218
      %2682 = vmatpush.bf16.msra.mxu0 %v2217
      %2683 = vmatpush.bf16.msra.mxu0 %v2216
      %2684 = vmatmul.bf16.gmra.mxu0 %v1418
      %v2685 = vpop.f32.mrf.mxu0
      %v2686 = vadd.f32 %v2512, %v2685
      %v2687 = vpop.f32.mrf.mxu0
      %v2688 = vadd.f32 %v2514, %v2687
      %2689 = vmatmul.bf16.gmra.mxu0 %v1426
      %v2690 = vpop.f32.mrf.mxu0
      %v2691 = vadd.f32 %v2517, %v2690
      %v2692 = vpop.f32.mrf.mxu0
      %v2693 = vadd.f32 %v2519, %v2692
      %2694 = vmatmul.bf16.gmra.mxu0 %v1434
      %v2695 = vpop.f32.mrf.mxu0
      %v2696 = vadd.f32 %v2522, %v2695
      %v2697 = vpop.f32.mrf.mxu0
      %v2698 = vadd.f32 %v2524, %v2697
      %2699 = vmatmul.bf16.gmra.mxu0 %v1442
      %v2700 = vpop.f32.mrf.mxu0
      %v2701 = vadd.f32 %v2527, %v2700
      %v2702 = vpop.f32.mrf.mxu0
      %v2703 = vadd.f32 %v2529, %v2702
      %2704 = vmatmul.bf16.gmra.mxu0 %v1450
      %v2705 = vpop.f32.mrf.mxu0
      %v2706 = vadd.f32 %v2532, %v2705
      %v2707 = vpop.f32.mrf.mxu0
      %v2708 = vadd.f32 %v2534, %v2707
      %2709 = vmatmul.bf16.gmra.mxu0 %v1458
      %v2710 = vpop.f32.mrf.mxu0
      %v2711 = vadd.f32 %v2537, %v2710
      %v2712 = vpop.f32.mrf.mxu0
      %v2713 = vadd.f32 %v2539, %v2712
      %2714 = vmatmul.bf16.gmra.mxu0 %v1466
      %v2715 = vpop.f32.mrf.mxu0
      %v2716 = vadd.f32 %v2542, %v2715
      %v2717 = vpop.f32.mrf.mxu0
      %v2718 = vadd.f32 %v2544, %v2717
      %2719 = vmatmul.bf16.gmra.mxu0 %v1474
      %v2720 = vpop.f32.mrf.mxu0
      %v2721 = vadd.f32 %v2547, %v2720
      %v2722 = vpop.f32.mrf.mxu0
      %v2723 = vadd.f32 %v2549, %v2722
      %2724 = vmatmul.bf16.gmra.mxu0 %v1482
      %v2725 = vpop.f32.mrf.mxu0
      %v2726 = vadd.f32 %v2552, %v2725
      %v2727 = vpop.f32.mrf.mxu0
      %v2728 = vadd.f32 %v2554, %v2727
      %2729 = vmatmul.bf16.gmra.mxu0 %v1490
      %v2730 = vpop.f32.mrf.mxu0
      %v2731 = vadd.f32 %v2557, %v2730
      %v2732 = vpop.f32.mrf.mxu0
      %v2733 = vadd.f32 %v2559, %v2732
      %2734 = vmatmul.bf16.gmra.mxu0 %v1498
      %v2735 = vpop.f32.mrf.mxu0
      %v2736 = vadd.f32 %v2562, %v2735
      %v2737 = vpop.f32.mrf.mxu0
      %v2738 = vadd.f32 %v2564, %v2737
      %2739 = vmatmul.bf16.gmra.mxu0 %v1506
      %v2740 = vpop.f32.mrf.mxu0
      %v2741 = vadd.f32 %v2567, %v2740
      %v2742 = vpop.f32.mrf.mxu0
      %v2743 = vadd.f32 %v2569, %v2742
      %2744 = vmatmul.bf16.gmra.mxu0 %v1514
      %v2745 = vpop.f32.mrf.mxu0
      %v2746 = vadd.f32 %v2572, %v2745
      %v2747 = vpop.f32.mrf.mxu0
      %v2748 = vadd.f32 %v2574, %v2747
      %2749 = vmatmul.bf16.gmra.mxu0 %v1522
      %v2750 = vpop.f32.mrf.mxu0
      %v2751 = vadd.f32 %v2577, %v2750
      %v2752 = vpop.f32.mrf.mxu0
      %v2753 = vadd.f32 %v2579, %v2752
      %2754 = vmatmul.bf16.gmra.mxu0 %v1530
      %v2755 = vpop.f32.mrf.mxu0
      %v2756 = vadd.f32 %v2582, %v2755
      %v2757 = vpop.f32.mrf.mxu0
      %v2758 = vadd.f32 %v2584, %v2757
      %2759 = vmatmul.bf16.gmra.mxu0 %v1538
      %v2760 = vpop.f32.mrf.mxu0
      %v2761 = vadd.f32 %v2587, %v2760
      %v2762 = vpop.f32.mrf.mxu0
      %v2763 = vadd.f32 %v2589, %v2762
      %2764 = vmatmul.bf16.gmra.mxu0 %v1546
      %v2765 = vpop.f32.mrf.mxu0
      %v2766 = vadd.f32 %v2592, %v2765
      %v2767 = vpop.f32.mrf.mxu0
      %v2768 = vadd.f32 %v2594, %v2767
      %2769 = vmatmul.bf16.gmra.mxu0 %v1554
      %v2770 = vpop.f32.mrf.mxu0
      %v2771 = vadd.f32 %v2597, %v2770
      %v2772 = vpop.f32.mrf.mxu0
      %v2773 = vadd.f32 %v2599, %v2772
      %2774 = vmatmul.bf16.gmra.mxu0 %v1562
      %v2775 = vpop.f32.mrf.mxu0
      %v2776 = vadd.f32 %v2602, %v2775
      %v2777 = vpop.f32.mrf.mxu0
      %v2778 = vadd.f32 %v2604, %v2777
      %2779 = vmatmul.bf16.gmra.mxu0 %v1570
      %v2780 = vpop.f32.mrf.mxu0
      %v2781 = vadd.f32 %v2607, %v2780
      %v2782 = vpop.f32.mrf.mxu0
      %v2783 = vadd.f32 %v2609, %v2782
      %2784 = vmatmul.bf16.gmra.mxu0 %v1578
      %v2785 = vpop.f32.mrf.mxu0
      %v2786 = vadd.f32 %v2612, %v2785
      %v2787 = vpop.f32.mrf.mxu0
      %v2788 = vadd.f32 %v2614, %v2787
      %2789 = vmatmul.bf16.gmra.mxu0 %v1586
      %v2790 = vpop.f32.mrf.mxu0
      %v2791 = vadd.f32 %v2617, %v2790
      %v2792 = vpop.f32.mrf.mxu0
      %v2793 = vadd.f32 %v2619, %v2792
      %2794 = vmatmul.bf16.gmra.mxu0 %v1594
      %v2795 = vpop.f32.mrf.mxu0
      %v2796 = vadd.f32 %v2622, %v2795
      %v2797 = vpop.f32.mrf.mxu0
      %v2798 = vadd.f32 %v2624, %v2797
      %2799 = vmatmul.bf16.gmra.mxu0 %v1602
      %v2800 = vpop.f32.mrf.mxu0
      %v2801 = vadd.f32 %v2627, %v2800
      %v2802 = vpop.f32.mrf.mxu0
      %v2803 = vadd.f32 %v2629, %v2802
      %2804 = vmatmul.bf16.gmra.mxu0 %v1610
      %v2805 = vpop.f32.mrf.mxu0
      %v2806 = vadd.f32 %v2632, %v2805
      %v2807 = vpop.f32.mrf.mxu0
      %v2808 = vadd.f32 %v2634, %v2807
      %2809 = vmatmul.bf16.gmra.mxu0 %v1618
      %v2810 = vpop.f32.mrf.mxu0
      %v2811 = vadd.f32 %v2637, %v2810
      %v2812 = vpop.f32.mrf.mxu0
      %v2813 = vadd.f32 %v2639, %v2812
      %2814 = vmatmul.bf16.gmra.mxu0 %v1626
      %v2815 = vpop.f32.mrf.mxu0
      %v2816 = vadd.f32 %v2642, %v2815
      %v2817 = vpop.f32.mrf.mxu0
      %v2818 = vadd.f32 %v2644, %v2817
      %2819 = vmatmul.bf16.gmra.mxu0 %v1634
      %v2820 = vpop.f32.mrf.mxu0
      %v2821 = vadd.f32 %v2647, %v2820
      %v2822 = vpop.f32.mrf.mxu0
      %v2823 = vadd.f32 %v2649, %v2822
      %2824 = vmatmul.bf16.gmra.mxu0 %v1642
      %v2825 = vpop.f32.mrf.mxu0
      %v2826 = vadd.f32 %v2652, %v2825
      %v2827 = vpop.f32.mrf.mxu0
      %v2828 = vadd.f32 %v2654, %v2827
      %2829 = vmatmul.bf16.gmra.mxu0 %v1650
      %v2830 = vpop.f32.mrf.mxu0
      %v2831 = vadd.f32 %v2657, %v2830
      %v2832 = vpop.f32.mrf.mxu0
      %v2833 = vadd.f32 %v2659, %v2832
      %2834 = vmatmul.bf16.gmra.mxu0 %v1658
      %v2835 = vpop.f32.mrf.mxu0
      %v2836 = vadd.f32 %v2662, %v2835
      %v2837 = vpop.f32.mrf.mxu0
      %v2838 = vadd.f32 %v2664, %v2837
      %2839 = vmatmul.bf16.gmra.mxu0 %v1666
      %v2840 = vpop.f32.mrf.mxu0
      %v2841 = vadd.f32 %v2667, %v2840
      %v2842 = vpop.f32.mrf.mxu0
      %v2843 = vadd.f32 %v2669, %v2842
      %2844 = vmatmul.bf16.gmra.mxu0 %v1674
      %v2845 = vpop.f32.mrf.mxu0
      %v2846 = vadd.f32 %v2672, %v2845
      %v2847 = vpop.f32.mrf.mxu0
      %v2848 = vadd.f32 %v2674, %v2847
      %2849 = vdwg.mxu0
      %2850 = vmatpush.bf16.msra.mxu0 %v2231
      %2851 = vmatpush.bf16.msra.mxu0 %v2230
      %2852 = vmatpush.bf16.msra.mxu0 %v2229
      %2853 = vmatpush.bf16.msra.mxu0 %v2228
      %2854 = vmatpush.bf16.msra.mxu0 %v2227
      %2855 = vmatpush.bf16.msra.mxu0 %v2226
      %2856 = vmatpush.bf16.msra.mxu0 %v2225
      %2857 = vmatpush.bf16.msra.mxu0 %v2224
      %2858 = vmatmul.bf16.gmra.mxu0 %v1419
      %v2859 = vpop.f32.mrf.mxu0
      %v2860 = vadd.f32 %v2686, %v2859
      %v2861 = vpop.f32.mrf.mxu0
      %v2862 = vadd.f32 %v2688, %v2861
      %2863 = vmatmul.bf16.gmra.mxu0 %v1427
      %v2864 = vpop.f32.mrf.mxu0
      %v2865 = vadd.f32 %v2691, %v2864
      %v2866 = vpop.f32.mrf.mxu0
      %v2867 = vadd.f32 %v2693, %v2866
      %2868 = vmatmul.bf16.gmra.mxu0 %v1435
      %v2869 = vpop.f32.mrf.mxu0
      %v2870 = vadd.f32 %v2696, %v2869
      %v2871 = vpop.f32.mrf.mxu0
      %v2872 = vadd.f32 %v2698, %v2871
      %2873 = vmatmul.bf16.gmra.mxu0 %v1443
      %v2874 = vpop.f32.mrf.mxu0
      %v2875 = vadd.f32 %v2701, %v2874
      %v2876 = vpop.f32.mrf.mxu0
      %v2877 = vadd.f32 %v2703, %v2876
      %2878 = vmatmul.bf16.gmra.mxu0 %v1451
      %v2879 = vpop.f32.mrf.mxu0
      %v2880 = vadd.f32 %v2706, %v2879
      %v2881 = vpop.f32.mrf.mxu0
      %v2882 = vadd.f32 %v2708, %v2881
      %2883 = vmatmul.bf16.gmra.mxu0 %v1459
      %v2884 = vpop.f32.mrf.mxu0
      %v2885 = vadd.f32 %v2711, %v2884
      %v2886 = vpop.f32.mrf.mxu0
      %v2887 = vadd.f32 %v2713, %v2886
      %2888 = vmatmul.bf16.gmra.mxu0 %v1467
      %v2889 = vpop.f32.mrf.mxu0
      %v2890 = vadd.f32 %v2716, %v2889
      %v2891 = vpop.f32.mrf.mxu0
      %v2892 = vadd.f32 %v2718, %v2891
      %2893 = vmatmul.bf16.gmra.mxu0 %v1475
      %v2894 = vpop.f32.mrf.mxu0
      %v2895 = vadd.f32 %v2721, %v2894
      %v2896 = vpop.f32.mrf.mxu0
      %v2897 = vadd.f32 %v2723, %v2896
      %2898 = vmatmul.bf16.gmra.mxu0 %v1483
      %v2899 = vpop.f32.mrf.mxu0
      %v2900 = vadd.f32 %v2726, %v2899
      %v2901 = vpop.f32.mrf.mxu0
      %v2902 = vadd.f32 %v2728, %v2901
      %2903 = vmatmul.bf16.gmra.mxu0 %v1491
      %v2904 = vpop.f32.mrf.mxu0
      %v2905 = vadd.f32 %v2731, %v2904
      %v2906 = vpop.f32.mrf.mxu0
      %v2907 = vadd.f32 %v2733, %v2906
      %2908 = vmatmul.bf16.gmra.mxu0 %v1499
      %v2909 = vpop.f32.mrf.mxu0
      %v2910 = vadd.f32 %v2736, %v2909
      %v2911 = vpop.f32.mrf.mxu0
      %v2912 = vadd.f32 %v2738, %v2911
      %2913 = vmatmul.bf16.gmra.mxu0 %v1507
      %v2914 = vpop.f32.mrf.mxu0
      %v2915 = vadd.f32 %v2741, %v2914
      %v2916 = vpop.f32.mrf.mxu0
      %v2917 = vadd.f32 %v2743, %v2916
      %2918 = vmatmul.bf16.gmra.mxu0 %v1515
      %v2919 = vpop.f32.mrf.mxu0
      %v2920 = vadd.f32 %v2746, %v2919
      %v2921 = vpop.f32.mrf.mxu0
      %v2922 = vadd.f32 %v2748, %v2921
      %2923 = vmatmul.bf16.gmra.mxu0 %v1523
      %v2924 = vpop.f32.mrf.mxu0
      %v2925 = vadd.f32 %v2751, %v2924
      %v2926 = vpop.f32.mrf.mxu0
      %v2927 = vadd.f32 %v2753, %v2926
      %2928 = vmatmul.bf16.gmra.mxu0 %v1531
      %v2929 = vpop.f32.mrf.mxu0
      %v2930 = vadd.f32 %v2756, %v2929
      %v2931 = vpop.f32.mrf.mxu0
      %v2932 = vadd.f32 %v2758, %v2931
      %2933 = vmatmul.bf16.gmra.mxu0 %v1539
      %v2934 = vpop.f32.mrf.mxu0
      %v2935 = vadd.f32 %v2761, %v2934
      %v2936 = vpop.f32.mrf.mxu0
      %v2937 = vadd.f32 %v2763, %v2936
      %2938 = vmatmul.bf16.gmra.mxu0 %v1547
      %v2939 = vpop.f32.mrf.mxu0
      %v2940 = vadd.f32 %v2766, %v2939
      %v2941 = vpop.f32.mrf.mxu0
      %v2942 = vadd.f32 %v2768, %v2941
      %2943 = vmatmul.bf16.gmra.mxu0 %v1555
      %v2944 = vpop.f32.mrf.mxu0
      %v2945 = vadd.f32 %v2771, %v2944
      %v2946 = vpop.f32.mrf.mxu0
      %v2947 = vadd.f32 %v2773, %v2946
      %2948 = vmatmul.bf16.gmra.mxu0 %v1563
      %v2949 = vpop.f32.mrf.mxu0
      %v2950 = vadd.f32 %v2776, %v2949
      %v2951 = vpop.f32.mrf.mxu0
      %v2952 = vadd.f32 %v2778, %v2951
      %2953 = vmatmul.bf16.gmra.mxu0 %v1571
      %v2954 = vpop.f32.mrf.mxu0
      %v2955 = vadd.f32 %v2781, %v2954
      %v2956 = vpop.f32.mrf.mxu0
      %v2957 = vadd.f32 %v2783, %v2956
      %2958 = vmatmul.bf16.gmra.mxu0 %v1579
      %v2959 = vpop.f32.mrf.mxu0
      %v2960 = vadd.f32 %v2786, %v2959
      %v2961 = vpop.f32.mrf.mxu0
      %v2962 = vadd.f32 %v2788, %v2961
      %2963 = vmatmul.bf16.gmra.mxu0 %v1587
      %v2964 = vpop.f32.mrf.mxu0
      %v2965 = vadd.f32 %v2791, %v2964
      %v2966 = vpop.f32.mrf.mxu0
      %v2967 = vadd.f32 %v2793, %v2966
      %2968 = vmatmul.bf16.gmra.mxu0 %v1595
      %v2969 = vpop.f32.mrf.mxu0
      %v2970 = vadd.f32 %v2796, %v2969
      %v2971 = vpop.f32.mrf.mxu0
      %v2972 = vadd.f32 %v2798, %v2971
      %2973 = vmatmul.bf16.gmra.mxu0 %v1603
      %v2974 = vpop.f32.mrf.mxu0
      %v2975 = vadd.f32 %v2801, %v2974
      %v2976 = vpop.f32.mrf.mxu0
      %v2977 = vadd.f32 %v2803, %v2976
      %2978 = vmatmul.bf16.gmra.mxu0 %v1611
      %v2979 = vpop.f32.mrf.mxu0
      %v2980 = vadd.f32 %v2806, %v2979
      %v2981 = vpop.f32.mrf.mxu0
      %v2982 = vadd.f32 %v2808, %v2981
      %2983 = vmatmul.bf16.gmra.mxu0 %v1619
      %v2984 = vpop.f32.mrf.mxu0
      %v2985 = vadd.f32 %v2811, %v2984
      %v2986 = vpop.f32.mrf.mxu0
      %v2987 = vadd.f32 %v2813, %v2986
      %2988 = vmatmul.bf16.gmra.mxu0 %v1627
      %v2989 = vpop.f32.mrf.mxu0
      %v2990 = vadd.f32 %v2816, %v2989
      %v2991 = vpop.f32.mrf.mxu0
      %v2992 = vadd.f32 %v2818, %v2991
      %2993 = vmatmul.bf16.gmra.mxu0 %v1635
      %v2994 = vpop.f32.mrf.mxu0
      %v2995 = vadd.f32 %v2821, %v2994
      %v2996 = vpop.f32.mrf.mxu0
      %v2997 = vadd.f32 %v2823, %v2996
      %2998 = vmatmul.bf16.gmra.mxu0 %v1643
      %v2999 = vpop.f32.mrf.mxu0
      %v3000 = vadd.f32 %v2826, %v2999
      %v3001 = vpop.f32.mrf.mxu0
      %v3002 = vadd.f32 %v2828, %v3001
      %3003 = vmatmul.bf16.gmra.mxu0 %v1651
      %v3004 = vpop.f32.mrf.mxu0
      %v3005 = vadd.f32 %v2831, %v3004
      %v3006 = vpop.f32.mrf.mxu0
      %v3007 = vadd.f32 %v2833, %v3006
      %3008 = vmatmul.bf16.gmra.mxu0 %v1659
      %v3009 = vpop.f32.mrf.mxu0
      %v3010 = vadd.f32 %v2836, %v3009
      %v3011 = vpop.f32.mrf.mxu0
      %v3012 = vadd.f32 %v2838, %v3011
      %3013 = vmatmul.bf16.gmra.mxu0 %v1667
      %v3014 = vpop.f32.mrf.mxu0
      %v3015 = vadd.f32 %v2841, %v3014
      %v3016 = vpop.f32.mrf.mxu0
      %v3017 = vadd.f32 %v2843, %v3016
      %3018 = vmatmul.bf16.gmra.mxu0 %v1675
      %v3019 = vpop.f32.mrf.mxu0
      %v3020 = vadd.f32 %v2846, %v3019
      %v3021 = vpop.f32.mrf.mxu0
      %v3022 = vadd.f32 %v2848, %v3021
      %3023 = vdwg.mxu0
      %3024 = vmatpush.bf16.msra.mxu0 %v2239
      %3025 = vmatpush.bf16.msra.mxu0 %v2238
      %3026 = vmatpush.bf16.msra.mxu0 %v2237
      %3027 = vmatpush.bf16.msra.mxu0 %v2236
      %3028 = vmatpush.bf16.msra.mxu0 %v2235
      %3029 = vmatpush.bf16.msra.mxu0 %v2234
      %3030 = vmatpush.bf16.msra.mxu0 %v2233
      %3031 = vmatpush.bf16.msra.mxu0 %v2232
      %3032 = vmatmul.bf16.gmra.mxu0 %v1420
      %v3033 = vpop.f32.mrf.mxu0
      %v3034 = vadd.f32 %v2860, %v3033
      %v3035 = vpop.f32.mrf.mxu0
      %v3036 = vadd.f32 %v2862, %v3035
      %3037 = vmatmul.bf16.gmra.mxu0 %v1428
      %v3038 = vpop.f32.mrf.mxu0
      %v3039 = vadd.f32 %v2865, %v3038
      %v3040 = vpop.f32.mrf.mxu0
      %v3041 = vadd.f32 %v2867, %v3040
      %3042 = vmatmul.bf16.gmra.mxu0 %v1436
      %v3043 = vpop.f32.mrf.mxu0
      %v3044 = vadd.f32 %v2870, %v3043
      %v3045 = vpop.f32.mrf.mxu0
      %v3046 = vadd.f32 %v2872, %v3045
      %3047 = vmatmul.bf16.gmra.mxu0 %v1444
      %v3048 = vpop.f32.mrf.mxu0
      %v3049 = vadd.f32 %v2875, %v3048
      %v3050 = vpop.f32.mrf.mxu0
      %v3051 = vadd.f32 %v2877, %v3050
      %3052 = vmatmul.bf16.gmra.mxu0 %v1452
      %v3053 = vpop.f32.mrf.mxu0
      %v3054 = vadd.f32 %v2880, %v3053
      %v3055 = vpop.f32.mrf.mxu0
      %v3056 = vadd.f32 %v2882, %v3055
      %3057 = vmatmul.bf16.gmra.mxu0 %v1460
      %v3058 = vpop.f32.mrf.mxu0
      %v3059 = vadd.f32 %v2885, %v3058
      %v3060 = vpop.f32.mrf.mxu0
      %v3061 = vadd.f32 %v2887, %v3060
      %3062 = vmatmul.bf16.gmra.mxu0 %v1468
      %v3063 = vpop.f32.mrf.mxu0
      %v3064 = vadd.f32 %v2890, %v3063
      %v3065 = vpop.f32.mrf.mxu0
      %v3066 = vadd.f32 %v2892, %v3065
      %3067 = vmatmul.bf16.gmra.mxu0 %v1476
      %v3068 = vpop.f32.mrf.mxu0
      %v3069 = vadd.f32 %v2895, %v3068
      %v3070 = vpop.f32.mrf.mxu0
      %v3071 = vadd.f32 %v2897, %v3070
      %3072 = vmatmul.bf16.gmra.mxu0 %v1484
      %v3073 = vpop.f32.mrf.mxu0
      %v3074 = vadd.f32 %v2900, %v3073
      %v3075 = vpop.f32.mrf.mxu0
      %v3076 = vadd.f32 %v2902, %v3075
      %3077 = vmatmul.bf16.gmra.mxu0 %v1492
      %v3078 = vpop.f32.mrf.mxu0
      %v3079 = vadd.f32 %v2905, %v3078
      %v3080 = vpop.f32.mrf.mxu0
      %v3081 = vadd.f32 %v2907, %v3080
      %3082 = vmatmul.bf16.gmra.mxu0 %v1500
      %v3083 = vpop.f32.mrf.mxu0
      %v3084 = vadd.f32 %v2910, %v3083
      %v3085 = vpop.f32.mrf.mxu0
      %v3086 = vadd.f32 %v2912, %v3085
      %3087 = vmatmul.bf16.gmra.mxu0 %v1508
      %v3088 = vpop.f32.mrf.mxu0
      %v3089 = vadd.f32 %v2915, %v3088
      %v3090 = vpop.f32.mrf.mxu0
      %v3091 = vadd.f32 %v2917, %v3090
      %3092 = vmatmul.bf16.gmra.mxu0 %v1516
      %v3093 = vpop.f32.mrf.mxu0
      %v3094 = vadd.f32 %v2920, %v3093
      %v3095 = vpop.f32.mrf.mxu0
      %v3096 = vadd.f32 %v2922, %v3095
      %3097 = vmatmul.bf16.gmra.mxu0 %v1524
      %v3098 = vpop.f32.mrf.mxu0
      %v3099 = vadd.f32 %v2925, %v3098
      %v3100 = vpop.f32.mrf.mxu0
      %v3101 = vadd.f32 %v2927, %v3100
      %3102 = vmatmul.bf16.gmra.mxu0 %v1532
      %v3103 = vpop.f32.mrf.mxu0
      %v3104 = vadd.f32 %v2930, %v3103
      %v3105 = vpop.f32.mrf.mxu0
      %v3106 = vadd.f32 %v2932, %v3105
      %3107 = vmatmul.bf16.gmra.mxu0 %v1540
      %v3108 = vpop.f32.mrf.mxu0
      %v3109 = vadd.f32 %v2935, %v3108
      %v3110 = vpop.f32.mrf.mxu0
      %v3111 = vadd.f32 %v2937, %v3110
      %3112 = vmatmul.bf16.gmra.mxu0 %v1548
      %v3113 = vpop.f32.mrf.mxu0
      %v3114 = vadd.f32 %v2940, %v3113
      %v3115 = vpop.f32.mrf.mxu0
      %v3116 = vadd.f32 %v2942, %v3115
      %3117 = vmatmul.bf16.gmra.mxu0 %v1556
      %v3118 = vpop.f32.mrf.mxu0
      %v3119 = vadd.f32 %v2945, %v3118
      %v3120 = vpop.f32.mrf.mxu0
      %v3121 = vadd.f32 %v2947, %v3120
      %3122 = vmatmul.bf16.gmra.mxu0 %v1564
      %v3123 = vpop.f32.mrf.mxu0
      %v3124 = vadd.f32 %v2950, %v3123
      %v3125 = vpop.f32.mrf.mxu0
      %v3126 = vadd.f32 %v2952, %v3125
      %3127 = vmatmul.bf16.gmra.mxu0 %v1572
      %v3128 = vpop.f32.mrf.mxu0
      %v3129 = vadd.f32 %v2955, %v3128
      %v3130 = vpop.f32.mrf.mxu0
      %v3131 = vadd.f32 %v2957, %v3130
      %3132 = vmatmul.bf16.gmra.mxu0 %v1580
      %v3133 = vpop.f32.mrf.mxu0
      %v3134 = vadd.f32 %v2960, %v3133
      %v3135 = vpop.f32.mrf.mxu0
      %v3136 = vadd.f32 %v2962, %v3135
      %3137 = vmatmul.bf16.gmra.mxu0 %v1588
      %v3138 = vpop.f32.mrf.mxu0
      %v3139 = vadd.f32 %v2965, %v3138
      %v3140 = vpop.f32.mrf.mxu0
      %v3141 = vadd.f32 %v2967, %v3140
      %3142 = vmatmul.bf16.gmra.mxu0 %v1596
      %v3143 = vpop.f32.mrf.mxu0
      %v3144 = vadd.f32 %v2970, %v3143
      %v3145 = vpop.f32.mrf.mxu0
      %v3146 = vadd.f32 %v2972, %v3145
      %3147 = vmatmul.bf16.gmra.mxu0 %v1604
      %v3148 = vpop.f32.mrf.mxu0
      %v3149 = vadd.f32 %v2975, %v3148
      %v3150 = vpop.f32.mrf.mxu0
      %v3151 = vadd.f32 %v2977, %v3150
      %3152 = vmatmul.bf16.gmra.mxu0 %v1612
      %v3153 = vpop.f32.mrf.mxu0
      %v3154 = vadd.f32 %v2980, %v3153
      %v3155 = vpop.f32.mrf.mxu0
      %v3156 = vadd.f32 %v2982, %v3155
      %3157 = vmatmul.bf16.gmra.mxu0 %v1620
      %v3158 = vpop.f32.mrf.mxu0
      %v3159 = vadd.f32 %v2985, %v3158
      %v3160 = vpop.f32.mrf.mxu0
      %v3161 = vadd.f32 %v2987, %v3160
      %3162 = vmatmul.bf16.gmra.mxu0 %v1628
      %v3163 = vpop.f32.mrf.mxu0
      %v3164 = vadd.f32 %v2990, %v3163
      %v3165 = vpop.f32.mrf.mxu0
      %v3166 = vadd.f32 %v2992, %v3165
      %3167 = vmatmul.bf16.gmra.mxu0 %v1636
      %v3168 = vpop.f32.mrf.mxu0
      %v3169 = vadd.f32 %v2995, %v3168
      %v3170 = vpop.f32.mrf.mxu0
      %v3171 = vadd.f32 %v2997, %v3170
      %3172 = vmatmul.bf16.gmra.mxu0 %v1644
      %v3173 = vpop.f32.mrf.mxu0
      %v3174 = vadd.f32 %v3000, %v3173
      %v3175 = vpop.f32.mrf.mxu0
      %v3176 = vadd.f32 %v3002, %v3175
      %3177 = vmatmul.bf16.gmra.mxu0 %v1652
      %v3178 = vpop.f32.mrf.mxu0
      %v3179 = vadd.f32 %v3005, %v3178
      %v3180 = vpop.f32.mrf.mxu0
      %v3181 = vadd.f32 %v3007, %v3180
      %3182 = vmatmul.bf16.gmra.mxu0 %v1660
      %v3183 = vpop.f32.mrf.mxu0
      %v3184 = vadd.f32 %v3010, %v3183
      %v3185 = vpop.f32.mrf.mxu0
      %v3186 = vadd.f32 %v3012, %v3185
      %3187 = vmatmul.bf16.gmra.mxu0 %v1668
      %v3188 = vpop.f32.mrf.mxu0
      %v3189 = vadd.f32 %v3015, %v3188
      %v3190 = vpop.f32.mrf.mxu0
      %v3191 = vadd.f32 %v3017, %v3190
      %3192 = vmatmul.bf16.gmra.mxu0 %v1676
      %v3193 = vpop.f32.mrf.mxu0
      %v3194 = vadd.f32 %v3020, %v3193
      %v3195 = vpop.f32.mrf.mxu0
      %v3196 = vadd.f32 %v3022, %v3195
      %3197 = vdwg.mxu0
      %3198 = vmatpush.bf16.msra.mxu0 %v2247
      %3199 = vmatpush.bf16.msra.mxu0 %v2246
      %3200 = vmatpush.bf16.msra.mxu0 %v2245
      %3201 = vmatpush.bf16.msra.mxu0 %v2244
      %3202 = vmatpush.bf16.msra.mxu0 %v2243
      %3203 = vmatpush.bf16.msra.mxu0 %v2242
      %3204 = vmatpush.bf16.msra.mxu0 %v2241
      %3205 = vmatpush.bf16.msra.mxu0 %v2240
      %3206 = vmatmul.bf16.gmra.mxu0 %v1421
      %v3207 = vpop.f32.mrf.mxu0
      %v3208 = vadd.f32 %v3034, %v3207
      %v3209 = vpop.f32.mrf.mxu0
      %v3210 = vadd.f32 %v3036, %v3209
      %3211 = vmatmul.bf16.gmra.mxu0 %v1429
      %v3212 = vpop.f32.mrf.mxu0
      %v3213 = vadd.f32 %v3039, %v3212
      %v3214 = vpop.f32.mrf.mxu0
      %v3215 = vadd.f32 %v3041, %v3214
      %3216 = vmatmul.bf16.gmra.mxu0 %v1437
      %v3217 = vpop.f32.mrf.mxu0
      %v3218 = vadd.f32 %v3044, %v3217
      %v3219 = vpop.f32.mrf.mxu0
      %v3220 = vadd.f32 %v3046, %v3219
      %3221 = vmatmul.bf16.gmra.mxu0 %v1445
      %v3222 = vpop.f32.mrf.mxu0
      %v3223 = vadd.f32 %v3049, %v3222
      %v3224 = vpop.f32.mrf.mxu0
      %v3225 = vadd.f32 %v3051, %v3224
      %3226 = vmatmul.bf16.gmra.mxu0 %v1453
      %v3227 = vpop.f32.mrf.mxu0
      %v3228 = vadd.f32 %v3054, %v3227
      %v3229 = vpop.f32.mrf.mxu0
      %v3230 = vadd.f32 %v3056, %v3229
      %3231 = vmatmul.bf16.gmra.mxu0 %v1461
      %v3232 = vpop.f32.mrf.mxu0
      %v3233 = vadd.f32 %v3059, %v3232
      %v3234 = vpop.f32.mrf.mxu0
      %v3235 = vadd.f32 %v3061, %v3234
      %3236 = vmatmul.bf16.gmra.mxu0 %v1469
      %v3237 = vpop.f32.mrf.mxu0
      %v3238 = vadd.f32 %v3064, %v3237
      %v3239 = vpop.f32.mrf.mxu0
      %v3240 = vadd.f32 %v3066, %v3239
      %3241 = vmatmul.bf16.gmra.mxu0 %v1477
      %v3242 = vpop.f32.mrf.mxu0
      %v3243 = vadd.f32 %v3069, %v3242
      %v3244 = vpop.f32.mrf.mxu0
      %v3245 = vadd.f32 %v3071, %v3244
      %3246 = vmatmul.bf16.gmra.mxu0 %v1485
      %v3247 = vpop.f32.mrf.mxu0
      %v3248 = vadd.f32 %v3074, %v3247
      %v3249 = vpop.f32.mrf.mxu0
      %v3250 = vadd.f32 %v3076, %v3249
      %3251 = vmatmul.bf16.gmra.mxu0 %v1493
      %v3252 = vpop.f32.mrf.mxu0
      %v3253 = vadd.f32 %v3079, %v3252
      %v3254 = vpop.f32.mrf.mxu0
      %v3255 = vadd.f32 %v3081, %v3254
      %3256 = vmatmul.bf16.gmra.mxu0 %v1501
      %v3257 = vpop.f32.mrf.mxu0
      %v3258 = vadd.f32 %v3084, %v3257
      %v3259 = vpop.f32.mrf.mxu0
      %v3260 = vadd.f32 %v3086, %v3259
      %3261 = vmatmul.bf16.gmra.mxu0 %v1509
      %v3262 = vpop.f32.mrf.mxu0
      %v3263 = vadd.f32 %v3089, %v3262
      %v3264 = vpop.f32.mrf.mxu0
      %v3265 = vadd.f32 %v3091, %v3264
      %3266 = vmatmul.bf16.gmra.mxu0 %v1517
      %v3267 = vpop.f32.mrf.mxu0
      %v3268 = vadd.f32 %v3094, %v3267
      %v3269 = vpop.f32.mrf.mxu0
      %v3270 = vadd.f32 %v3096, %v3269
      %3271 = vmatmul.bf16.gmra.mxu0 %v1525
      %v3272 = vpop.f32.mrf.mxu0
      %v3273 = vadd.f32 %v3099, %v3272
      %v3274 = vpop.f32.mrf.mxu0
      %v3275 = vadd.f32 %v3101, %v3274
      %3276 = vmatmul.bf16.gmra.mxu0 %v1533
      %v3277 = vpop.f32.mrf.mxu0
      %v3278 = vadd.f32 %v3104, %v3277
      %v3279 = vpop.f32.mrf.mxu0
      %v3280 = vadd.f32 %v3106, %v3279
      %3281 = vmatmul.bf16.gmra.mxu0 %v1541
      %v3282 = vpop.f32.mrf.mxu0
      %v3283 = vadd.f32 %v3109, %v3282
      %v3284 = vpop.f32.mrf.mxu0
      %v3285 = vadd.f32 %v3111, %v3284
      %3286 = vmatmul.bf16.gmra.mxu0 %v1549
      %v3287 = vpop.f32.mrf.mxu0
      %v3288 = vadd.f32 %v3114, %v3287
      %v3289 = vpop.f32.mrf.mxu0
      %v3290 = vadd.f32 %v3116, %v3289
      %3291 = vmatmul.bf16.gmra.mxu0 %v1557
      %v3292 = vpop.f32.mrf.mxu0
      %v3293 = vadd.f32 %v3119, %v3292
      %v3294 = vpop.f32.mrf.mxu0
      %v3295 = vadd.f32 %v3121, %v3294
      %3296 = vmatmul.bf16.gmra.mxu0 %v1565
      %v3297 = vpop.f32.mrf.mxu0
      %v3298 = vadd.f32 %v3124, %v3297
      %v3299 = vpop.f32.mrf.mxu0
      %v3300 = vadd.f32 %v3126, %v3299
      %3301 = vmatmul.bf16.gmra.mxu0 %v1573
      %v3302 = vpop.f32.mrf.mxu0
      %v3303 = vadd.f32 %v3129, %v3302
      %v3304 = vpop.f32.mrf.mxu0
      %v3305 = vadd.f32 %v3131, %v3304
      %3306 = vmatmul.bf16.gmra.mxu0 %v1581
      %v3307 = vpop.f32.mrf.mxu0
      %v3308 = vadd.f32 %v3134, %v3307
      %v3309 = vpop.f32.mrf.mxu0
      %v3310 = vadd.f32 %v3136, %v3309
      %3311 = vmatmul.bf16.gmra.mxu0 %v1589
      %v3312 = vpop.f32.mrf.mxu0
      %v3313 = vadd.f32 %v3139, %v3312
      %v3314 = vpop.f32.mrf.mxu0
      %v3315 = vadd.f32 %v3141, %v3314
      %3316 = vmatmul.bf16.gmra.mxu0 %v1597
      %v3317 = vpop.f32.mrf.mxu0
      %v3318 = vadd.f32 %v3144, %v3317
      %v3319 = vpop.f32.mrf.mxu0
      %v3320 = vadd.f32 %v3146, %v3319
      %3321 = vmatmul.bf16.gmra.mxu0 %v1605
      %v3322 = vpop.f32.mrf.mxu0
      %v3323 = vadd.f32 %v3149, %v3322
      %v3324 = vpop.f32.mrf.mxu0
      %v3325 = vadd.f32 %v3151, %v3324
      %3326 = vmatmul.bf16.gmra.mxu0 %v1613
      %v3327 = vpop.f32.mrf.mxu0
      %v3328 = vadd.f32 %v3154, %v3327
      %v3329 = vpop.f32.mrf.mxu0
      %v3330 = vadd.f32 %v3156, %v3329
      %3331 = vmatmul.bf16.gmra.mxu0 %v1621
      %v3332 = vpop.f32.mrf.mxu0
      %v3333 = vadd.f32 %v3159, %v3332
      %v3334 = vpop.f32.mrf.mxu0
      %v3335 = vadd.f32 %v3161, %v3334
      %3336 = vmatmul.bf16.gmra.mxu0 %v1629
      %v3337 = vpop.f32.mrf.mxu0
      %v3338 = vadd.f32 %v3164, %v3337
      %v3339 = vpop.f32.mrf.mxu0
      %v3340 = vadd.f32 %v3166, %v3339
      %3341 = vmatmul.bf16.gmra.mxu0 %v1637
      %v3342 = vpop.f32.mrf.mxu0
      %v3343 = vadd.f32 %v3169, %v3342
      %v3344 = vpop.f32.mrf.mxu0
      %v3345 = vadd.f32 %v3171, %v3344
      %3346 = vmatmul.bf16.gmra.mxu0 %v1645
      %v3347 = vpop.f32.mrf.mxu0
      %v3348 = vadd.f32 %v3174, %v3347
      %v3349 = vpop.f32.mrf.mxu0
      %v3350 = vadd.f32 %v3176, %v3349
      %3351 = vmatmul.bf16.gmra.mxu0 %v1653
      %v3352 = vpop.f32.mrf.mxu0
      %v3353 = vadd.f32 %v3179, %v3352
      %v3354 = vpop.f32.mrf.mxu0
      %v3355 = vadd.f32 %v3181, %v3354
      %3356 = vmatmul.bf16.gmra.mxu0 %v1661
      %v3357 = vpop.f32.mrf.mxu0
      %v3358 = vadd.f32 %v3184, %v3357
      %v3359 = vpop.f32.mrf.mxu0
      %v3360 = vadd.f32 %v3186, %v3359
      %3361 = vmatmul.bf16.gmra.mxu0 %v1669
      %v3362 = vpop.f32.mrf.mxu0
      %v3363 = vadd.f32 %v3189, %v3362
      %v3364 = vpop.f32.mrf.mxu0
      %v3365 = vadd.f32 %v3191, %v3364
      %3366 = vmatmul.bf16.gmra.mxu0 %v1677
      %v3367 = vpop.f32.mrf.mxu0
      %v3368 = vadd.f32 %v3194, %v3367
      %v3369 = vpop.f32.mrf.mxu0
      %v3370 = vadd.f32 %v3196, %v3369
      %3371 = vdwg.mxu0
      %3372 = vmatpush.bf16.msra.mxu0 %v2255
      %3373 = vmatpush.bf16.msra.mxu0 %v2254
      %3374 = vmatpush.bf16.msra.mxu0 %v2253
      %3375 = vmatpush.bf16.msra.mxu0 %v2252
      %3376 = vmatpush.bf16.msra.mxu0 %v2251
      %3377 = vmatpush.bf16.msra.mxu0 %v2250
      %3378 = vmatpush.bf16.msra.mxu0 %v2249
      %3379 = vmatpush.bf16.msra.mxu0 %v2248
      %3380 = vmatmul.bf16.gmra.mxu0 %v1422
      %v3381 = vpop.f32.mrf.mxu0
      %v3382 = vadd.f32 %v3208, %v3381
      %v3383 = vpop.f32.mrf.mxu0
      %v3384 = vadd.f32 %v3210, %v3383
      %3385 = vmatmul.bf16.gmra.mxu0 %v1430
      %v3386 = vpop.f32.mrf.mxu0
      %v3387 = vadd.f32 %v3213, %v3386
      %v3388 = vpop.f32.mrf.mxu0
      %v3389 = vadd.f32 %v3215, %v3388
      %3390 = vmatmul.bf16.gmra.mxu0 %v1438
      %v3391 = vpop.f32.mrf.mxu0
      %v3392 = vadd.f32 %v3218, %v3391
      %v3393 = vpop.f32.mrf.mxu0
      %v3394 = vadd.f32 %v3220, %v3393
      %3395 = vmatmul.bf16.gmra.mxu0 %v1446
      %v3396 = vpop.f32.mrf.mxu0
      %v3397 = vadd.f32 %v3223, %v3396
      %v3398 = vpop.f32.mrf.mxu0
      %v3399 = vadd.f32 %v3225, %v3398
      %3400 = vmatmul.bf16.gmra.mxu0 %v1454
      %v3401 = vpop.f32.mrf.mxu0
      %v3402 = vadd.f32 %v3228, %v3401
      %v3403 = vpop.f32.mrf.mxu0
      %v3404 = vadd.f32 %v3230, %v3403
      %3405 = vmatmul.bf16.gmra.mxu0 %v1462
      %v3406 = vpop.f32.mrf.mxu0
      %v3407 = vadd.f32 %v3233, %v3406
      %v3408 = vpop.f32.mrf.mxu0
      %v3409 = vadd.f32 %v3235, %v3408
      %3410 = vmatmul.bf16.gmra.mxu0 %v1470
      %v3411 = vpop.f32.mrf.mxu0
      %v3412 = vadd.f32 %v3238, %v3411
      %v3413 = vpop.f32.mrf.mxu0
      %v3414 = vadd.f32 %v3240, %v3413
      %3415 = vmatmul.bf16.gmra.mxu0 %v1478
      %v3416 = vpop.f32.mrf.mxu0
      %v3417 = vadd.f32 %v3243, %v3416
      %v3418 = vpop.f32.mrf.mxu0
      %v3419 = vadd.f32 %v3245, %v3418
      %3420 = vmatmul.bf16.gmra.mxu0 %v1486
      %v3421 = vpop.f32.mrf.mxu0
      %v3422 = vadd.f32 %v3248, %v3421
      %v3423 = vpop.f32.mrf.mxu0
      %v3424 = vadd.f32 %v3250, %v3423
      %3425 = vmatmul.bf16.gmra.mxu0 %v1494
      %v3426 = vpop.f32.mrf.mxu0
      %v3427 = vadd.f32 %v3253, %v3426
      %v3428 = vpop.f32.mrf.mxu0
      %v3429 = vadd.f32 %v3255, %v3428
      %3430 = vmatmul.bf16.gmra.mxu0 %v1502
      %v3431 = vpop.f32.mrf.mxu0
      %v3432 = vadd.f32 %v3258, %v3431
      %v3433 = vpop.f32.mrf.mxu0
      %v3434 = vadd.f32 %v3260, %v3433
      %3435 = vmatmul.bf16.gmra.mxu0 %v1510
      %v3436 = vpop.f32.mrf.mxu0
      %v3437 = vadd.f32 %v3263, %v3436
      %v3438 = vpop.f32.mrf.mxu0
      %v3439 = vadd.f32 %v3265, %v3438
      %3440 = vmatmul.bf16.gmra.mxu0 %v1518
      %v3441 = vpop.f32.mrf.mxu0
      %v3442 = vadd.f32 %v3268, %v3441
      %v3443 = vpop.f32.mrf.mxu0
      %v3444 = vadd.f32 %v3270, %v3443
      %3445 = vmatmul.bf16.gmra.mxu0 %v1526
      %v3446 = vpop.f32.mrf.mxu0
      %v3447 = vadd.f32 %v3273, %v3446
      %v3448 = vpop.f32.mrf.mxu0
      %v3449 = vadd.f32 %v3275, %v3448
      %3450 = vmatmul.bf16.gmra.mxu0 %v1534
      %v3451 = vpop.f32.mrf.mxu0
      %v3452 = vadd.f32 %v3278, %v3451
      %v3453 = vpop.f32.mrf.mxu0
      %v3454 = vadd.f32 %v3280, %v3453
      %3455 = vmatmul.bf16.gmra.mxu0 %v1542
      %v3456 = vpop.f32.mrf.mxu0
      %v3457 = vadd.f32 %v3283, %v3456
      %v3458 = vpop.f32.mrf.mxu0
      %v3459 = vadd.f32 %v3285, %v3458
      %3460 = vmatmul.bf16.gmra.mxu0 %v1550
      %v3461 = vpop.f32.mrf.mxu0
      %v3462 = vadd.f32 %v3288, %v3461
      %v3463 = vpop.f32.mrf.mxu0
      %v3464 = vadd.f32 %v3290, %v3463
      %3465 = vmatmul.bf16.gmra.mxu0 %v1558
      %v3466 = vpop.f32.mrf.mxu0
      %v3467 = vadd.f32 %v3293, %v3466
      %v3468 = vpop.f32.mrf.mxu0
      %v3469 = vadd.f32 %v3295, %v3468
      %3470 = vmatmul.bf16.gmra.mxu0 %v1566
      %v3471 = vpop.f32.mrf.mxu0
      %v3472 = vadd.f32 %v3298, %v3471
      %v3473 = vpop.f32.mrf.mxu0
      %v3474 = vadd.f32 %v3300, %v3473
      %3475 = vmatmul.bf16.gmra.mxu0 %v1574
      %v3476 = vpop.f32.mrf.mxu0
      %v3477 = vadd.f32 %v3303, %v3476
      %v3478 = vpop.f32.mrf.mxu0
      %v3479 = vadd.f32 %v3305, %v3478
      %3480 = vmatmul.bf16.gmra.mxu0 %v1582
      %v3481 = vpop.f32.mrf.mxu0
      %v3482 = vadd.f32 %v3308, %v3481
      %v3483 = vpop.f32.mrf.mxu0
      %v3484 = vadd.f32 %v3310, %v3483
      %3485 = vmatmul.bf16.gmra.mxu0 %v1590
      %v3486 = vpop.f32.mrf.mxu0
      %v3487 = vadd.f32 %v3313, %v3486
      %v3488 = vpop.f32.mrf.mxu0
      %v3489 = vadd.f32 %v3315, %v3488
      %3490 = vmatmul.bf16.gmra.mxu0 %v1598
      %v3491 = vpop.f32.mrf.mxu0
      %v3492 = vadd.f32 %v3318, %v3491
      %v3493 = vpop.f32.mrf.mxu0
      %v3494 = vadd.f32 %v3320, %v3493
      %3495 = vmatmul.bf16.gmra.mxu0 %v1606
      %v3496 = vpop.f32.mrf.mxu0
      %v3497 = vadd.f32 %v3323, %v3496
      %v3498 = vpop.f32.mrf.mxu0
      %v3499 = vadd.f32 %v3325, %v3498
      %3500 = vmatmul.bf16.gmra.mxu0 %v1614
      %v3501 = vpop.f32.mrf.mxu0
      %v3502 = vadd.f32 %v3328, %v3501
      %v3503 = vpop.f32.mrf.mxu0
      %v3504 = vadd.f32 %v3330, %v3503
      %3505 = vmatmul.bf16.gmra.mxu0 %v1622
      %v3506 = vpop.f32.mrf.mxu0
      %v3507 = vadd.f32 %v3333, %v3506
      %v3508 = vpop.f32.mrf.mxu0
      %v3509 = vadd.f32 %v3335, %v3508
      %3510 = vmatmul.bf16.gmra.mxu0 %v1630
      %v3511 = vpop.f32.mrf.mxu0
      %v3512 = vadd.f32 %v3338, %v3511
      %v3513 = vpop.f32.mrf.mxu0
      %v3514 = vadd.f32 %v3340, %v3513
      %3515 = vmatmul.bf16.gmra.mxu0 %v1638
      %v3516 = vpop.f32.mrf.mxu0
      %v3517 = vadd.f32 %v3343, %v3516
      %v3518 = vpop.f32.mrf.mxu0
      %v3519 = vadd.f32 %v3345, %v3518
      %3520 = vmatmul.bf16.gmra.mxu0 %v1646
      %v3521 = vpop.f32.mrf.mxu0
      %v3522 = vadd.f32 %v3348, %v3521
      %v3523 = vpop.f32.mrf.mxu0
      %v3524 = vadd.f32 %v3350, %v3523
      %3525 = vmatmul.bf16.gmra.mxu0 %v1654
      %v3526 = vpop.f32.mrf.mxu0
      %v3527 = vadd.f32 %v3353, %v3526
      %v3528 = vpop.f32.mrf.mxu0
      %v3529 = vadd.f32 %v3355, %v3528
      %3530 = vmatmul.bf16.gmra.mxu0 %v1662
      %v3531 = vpop.f32.mrf.mxu0
      %v3532 = vadd.f32 %v3358, %v3531
      %v3533 = vpop.f32.mrf.mxu0
      %v3534 = vadd.f32 %v3360, %v3533
      %3535 = vmatmul.bf16.gmra.mxu0 %v1670
      %v3536 = vpop.f32.mrf.mxu0
      %v3537 = vadd.f32 %v3363, %v3536
      %v3538 = vpop.f32.mrf.mxu0
      %v3539 = vadd.f32 %v3365, %v3538
      %3540 = vmatmul.bf16.gmra.mxu0 %v1678
      %v3541 = vpop.f32.mrf.mxu0
      %v3542 = vadd.f32 %v3368, %v3541
      %v3543 = vpop.f32.mrf.mxu0
      %v3544 = vadd.f32 %v3370, %v3543
      %3545 = vdwg.mxu0
      %3546 = vmatpush.bf16.msra.mxu0 %v2263
      %3547 = vmatpush.bf16.msra.mxu0 %v2262
      %3548 = vmatpush.bf16.msra.mxu0 %v2261
      %3549 = vmatpush.bf16.msra.mxu0 %v2260
      %3550 = vmatpush.bf16.msra.mxu0 %v2259
      %3551 = vmatpush.bf16.msra.mxu0 %v2258
      %3552 = vmatpush.bf16.msra.mxu0 %v2257
      %3553 = vmatpush.bf16.msra.mxu0 %v2256
      %3554 = vmatmul.bf16.gmra.mxu0 %v1423
      %v3555 = vpop.f32.mrf.mxu0
      %v3556 = vadd.f32 %v3382, %v3555
      %v3557 = vpop.f32.mrf.mxu0
      %v3558 = vadd.f32 %v3384, %v3557
      %3559 = vmatmul.bf16.gmra.mxu0 %v1431
      %v3560 = vpop.f32.mrf.mxu0
      %v3561 = vadd.f32 %v3387, %v3560
      %v3562 = vpop.f32.mrf.mxu0
      %v3563 = vadd.f32 %v3389, %v3562
      %3564 = vmatmul.bf16.gmra.mxu0 %v1439
      %v3565 = vpop.f32.mrf.mxu0
      %v3566 = vadd.f32 %v3392, %v3565
      %v3567 = vpop.f32.mrf.mxu0
      %v3568 = vadd.f32 %v3394, %v3567
      %3569 = vmatmul.bf16.gmra.mxu0 %v1447
      %v3570 = vpop.f32.mrf.mxu0
      %v3571 = vadd.f32 %v3397, %v3570
      %v3572 = vpop.f32.mrf.mxu0
      %v3573 = vadd.f32 %v3399, %v3572
      %3574 = vmatmul.bf16.gmra.mxu0 %v1455
      %v3575 = vpop.f32.mrf.mxu0
      %v3576 = vadd.f32 %v3402, %v3575
      %v3577 = vpop.f32.mrf.mxu0
      %v3578 = vadd.f32 %v3404, %v3577
      %3579 = vmatmul.bf16.gmra.mxu0 %v1463
      %v3580 = vpop.f32.mrf.mxu0
      %v3581 = vadd.f32 %v3407, %v3580
      %v3582 = vpop.f32.mrf.mxu0
      %v3583 = vadd.f32 %v3409, %v3582
      %3584 = vmatmul.bf16.gmra.mxu0 %v1471
      %v3585 = vpop.f32.mrf.mxu0
      %v3586 = vadd.f32 %v3412, %v3585
      %v3587 = vpop.f32.mrf.mxu0
      %v3588 = vadd.f32 %v3414, %v3587
      %3589 = vmatmul.bf16.gmra.mxu0 %v1479
      %v3590 = vpop.f32.mrf.mxu0
      %v3591 = vadd.f32 %v3417, %v3590
      %v3592 = vpop.f32.mrf.mxu0
      %v3593 = vadd.f32 %v3419, %v3592
      %3594 = vmatmul.bf16.gmra.mxu0 %v1487
      %v3595 = vpop.f32.mrf.mxu0
      %v3596 = vadd.f32 %v3422, %v3595
      %v3597 = vpop.f32.mrf.mxu0
      %v3598 = vadd.f32 %v3424, %v3597
      %3599 = vmatmul.bf16.gmra.mxu0 %v1495
      %v3600 = vpop.f32.mrf.mxu0
      %v3601 = vadd.f32 %v3427, %v3600
      %v3602 = vpop.f32.mrf.mxu0
      %v3603 = vadd.f32 %v3429, %v3602
      %3604 = vmatmul.bf16.gmra.mxu0 %v1503
      %v3605 = vpop.f32.mrf.mxu0
      %v3606 = vadd.f32 %v3432, %v3605
      %v3607 = vpop.f32.mrf.mxu0
      %v3608 = vadd.f32 %v3434, %v3607
      %3609 = vmatmul.bf16.gmra.mxu0 %v1511
      %v3610 = vpop.f32.mrf.mxu0
      %v3611 = vadd.f32 %v3437, %v3610
      %v3612 = vpop.f32.mrf.mxu0
      %v3613 = vadd.f32 %v3439, %v3612
      %3614 = vmatmul.bf16.gmra.mxu0 %v1519
      %v3615 = vpop.f32.mrf.mxu0
      %v3616 = vadd.f32 %v3442, %v3615
      %v3617 = vpop.f32.mrf.mxu0
      %v3618 = vadd.f32 %v3444, %v3617
      %3619 = vmatmul.bf16.gmra.mxu0 %v1527
      %v3620 = vpop.f32.mrf.mxu0
      %v3621 = vadd.f32 %v3447, %v3620
      %v3622 = vpop.f32.mrf.mxu0
      %v3623 = vadd.f32 %v3449, %v3622
      %3624 = vmatmul.bf16.gmra.mxu0 %v1535
      %v3625 = vpop.f32.mrf.mxu0
      %v3626 = vadd.f32 %v3452, %v3625
      %v3627 = vpop.f32.mrf.mxu0
      %v3628 = vadd.f32 %v3454, %v3627
      %3629 = vmatmul.bf16.gmra.mxu0 %v1543
      %v3630 = vpop.f32.mrf.mxu0
      %v3631 = vadd.f32 %v3457, %v3630
      %v3632 = vpop.f32.mrf.mxu0
      %v3633 = vadd.f32 %v3459, %v3632
      %3634 = vmatmul.bf16.gmra.mxu0 %v1551
      %v3635 = vpop.f32.mrf.mxu0
      %v3636 = vadd.f32 %v3462, %v3635
      %v3637 = vpop.f32.mrf.mxu0
      %v3638 = vadd.f32 %v3464, %v3637
      %3639 = vmatmul.bf16.gmra.mxu0 %v1559
      %v3640 = vpop.f32.mrf.mxu0
      %v3641 = vadd.f32 %v3467, %v3640
      %v3642 = vpop.f32.mrf.mxu0
      %v3643 = vadd.f32 %v3469, %v3642
      %3644 = vmatmul.bf16.gmra.mxu0 %v1567
      %v3645 = vpop.f32.mrf.mxu0
      %v3646 = vadd.f32 %v3472, %v3645
      %v3647 = vpop.f32.mrf.mxu0
      %v3648 = vadd.f32 %v3474, %v3647
      %3649 = vmatmul.bf16.gmra.mxu0 %v1575
      %v3650 = vpop.f32.mrf.mxu0
      %v3651 = vadd.f32 %v3477, %v3650
      %v3652 = vpop.f32.mrf.mxu0
      %v3653 = vadd.f32 %v3479, %v3652
      %3654 = vmatmul.bf16.gmra.mxu0 %v1583
      %v3655 = vpop.f32.mrf.mxu0
      %v3656 = vadd.f32 %v3482, %v3655
      %v3657 = vpop.f32.mrf.mxu0
      %v3658 = vadd.f32 %v3484, %v3657
      %3659 = vmatmul.bf16.gmra.mxu0 %v1591
      %v3660 = vpop.f32.mrf.mxu0
      %v3661 = vadd.f32 %v3487, %v3660
      %v3662 = vpop.f32.mrf.mxu0
      %v3663 = vadd.f32 %v3489, %v3662
      %3664 = vmatmul.bf16.gmra.mxu0 %v1599
      %v3665 = vpop.f32.mrf.mxu0
      %v3666 = vadd.f32 %v3492, %v3665
      %v3667 = vpop.f32.mrf.mxu0
      %v3668 = vadd.f32 %v3494, %v3667
      %3669 = vmatmul.bf16.gmra.mxu0 %v1607
      %v3670 = vpop.f32.mrf.mxu0
      %v3671 = vadd.f32 %v3497, %v3670
      %v3672 = vpop.f32.mrf.mxu0
      %v3673 = vadd.f32 %v3499, %v3672
      %3674 = vmatmul.bf16.gmra.mxu0 %v1615
      %v3675 = vpop.f32.mrf.mxu0
      %v3676 = vadd.f32 %v3502, %v3675
      %v3677 = vpop.f32.mrf.mxu0
      %v3678 = vadd.f32 %v3504, %v3677
      %3679 = vmatmul.bf16.gmra.mxu0 %v1623
      %v3680 = vpop.f32.mrf.mxu0
      %v3681 = vadd.f32 %v3507, %v3680
      %v3682 = vpop.f32.mrf.mxu0
      %v3683 = vadd.f32 %v3509, %v3682
      %3684 = vmatmul.bf16.gmra.mxu0 %v1631
      %v3685 = vpop.f32.mrf.mxu0
      %v3686 = vadd.f32 %v3512, %v3685
      %v3687 = vpop.f32.mrf.mxu0
      %v3688 = vadd.f32 %v3514, %v3687
      %3689 = vmatmul.bf16.gmra.mxu0 %v1639
      %v3690 = vpop.f32.mrf.mxu0
      %v3691 = vadd.f32 %v3517, %v3690
      %v3692 = vpop.f32.mrf.mxu0
      %v3693 = vadd.f32 %v3519, %v3692
      %3694 = vmatmul.bf16.gmra.mxu0 %v1647
      %v3695 = vpop.f32.mrf.mxu0
      %v3696 = vadd.f32 %v3522, %v3695
      %v3697 = vpop.f32.mrf.mxu0
      %v3698 = vadd.f32 %v3524, %v3697
      %3699 = vmatmul.bf16.gmra.mxu0 %v1655
      %v3700 = vpop.f32.mrf.mxu0
      %v3701 = vadd.f32 %v3527, %v3700
      %v3702 = vpop.f32.mrf.mxu0
      %v3703 = vadd.f32 %v3529, %v3702
      %3704 = vmatmul.bf16.gmra.mxu0 %v1663
      %v3705 = vpop.f32.mrf.mxu0
      %v3706 = vadd.f32 %v3532, %v3705
      %v3707 = vpop.f32.mrf.mxu0
      %v3708 = vadd.f32 %v3534, %v3707
      %3709 = vmatmul.bf16.gmra.mxu0 %v1671
      %v3710 = vpop.f32.mrf.mxu0
      %v3711 = vadd.f32 %v3537, %v3710
      %v3712 = vpop.f32.mrf.mxu0
      %v3713 = vadd.f32 %v3539, %v3712
      %3714 = vmatmul.bf16.gmra.mxu0 %v1679
      %v3715 = vpop.f32.mrf.mxu0
      %v3716 = vadd.f32 %v3542, %v3715
      %v3717 = vpop.f32.mrf.mxu0
      %v3718 = vadd.f32 %v3544, %v3717
      %3719 = vdwg.mxu0
      %v3720 = vtanh.pop %v3556
      %v3721 = vtanh.pop %v3558
      %v3722 = vtanh.pop %v3561
      %v3723 = vtanh.pop %v3563
      %v3724 = vtanh.pop %v3566
      %v3725 = vtanh.pop %v3568
      %v3726 = vtanh.pop %v3571
      %v3727 = vtanh.pop %v3573
      %v3728 = vtanh.pop %v3576
      %v3729 = vtanh.pop %v3578
      %v3730 = vtanh.pop %v3581
      %v3731 = vtanh.pop %v3583
      %v3732 = vtanh.pop %v3586
      %v3733 = vtanh.pop %v3588
      %v3734 = vtanh.pop %v3591
      %v3735 = vtanh.pop %v3593
      %v3736 = vtanh.pop %v3596
      %v3737 = vtanh.pop %v3598
      %v3738 = vtanh.pop %v3601
      %v3739 = vtanh.pop %v3603
      %v3740 = vtanh.pop %v3606
      %v3741 = vtanh.pop %v3608
      %v3742 = vtanh.pop %v3611
      %v3743 = vtanh.pop %v3613
      %v3744 = vtanh.pop %v3616
      %v3745 = vtanh.pop %v3618
      %v3746 = vtanh.pop %v3621
      %v3747 = vtanh.pop %v3623
      %v3748 = vtanh.pop %v3626
      %v3749 = vtanh.pop %v3628
      %v3750 = vtanh.pop %v3631
      %v3751 = vtanh.pop %v3633
      %v3752 = vtanh.pop %v3636
      %v3753 = vtanh.pop %v3638
      %v3754 = vtanh.pop %v3641
      %v3755 = vtanh.pop %v3643
      %v3756 = vtanh.pop %v3646
      %v3757 = vtanh.pop %v3648
      %v3758 = vtanh.pop %v3651
      %v3759 = vtanh.pop %v3653
      %v3760 = vtanh.pop %v3656
      %v3761 = vtanh.pop %v3658
      %v3762 = vtanh.pop %v3661
      %v3763 = vtanh.pop %v3663
      %v3764 = vtanh.pop %v3666
      %v3765 = vtanh.pop %v3668
      %v3766 = vtanh.pop %v3671
      %v3767 = vtanh.pop %v3673
      %v3768 = vtanh.pop %v3676
      %v3769 = vtanh.pop %v3678
      %v3770 = vtanh.pop %v3681
      %v3771 = vtanh.pop %v3683
      %v3772 = vtanh.pop %v3686
      %v3773 = vtanh.pop %v3688
      %v3774 = vtanh.pop %v3691
      %v3775 = vtanh.pop %v3693
      %v3776 = vtanh.pop %v3696
      %v3777 = vtanh.pop %v3698
      %v3778 = vtanh.pop %v3701
      %v3779 = vtanh.pop %v3703
      %v3780 = vtanh.pop %v3706
      %v3781 = vtanh.pop %v3708
      %v3782 = vtanh.pop %v3711
      %v3783 = vtanh.pop %v3713
      %v3784 = vtanh.pop %v3716
      %v3785 = vtanh.pop %v3718
      %v3786 = vadd.f32 %v3720, 1.0
      %v3787 = vadd.f32 %v3721, 1.0
      %v3788 = vadd.f32 %v3722, 1.0
      %v3789 = vadd.f32 %v3723, 1.0
      %v3790 = vadd.f32 %v3724, 1.0
      %v3791 = vadd.f32 %v3725, 1.0
      %v3792 = vadd.f32 %v3726, 1.0
      %v3793 = vadd.f32 %v3727, 1.0
      %v3794 = vadd.f32 %v3728, 1.0
      %v3795 = vadd.f32 %v3729, 1.0
      %v3796 = vadd.f32 %v3730, 1.0
      %v3797 = vadd.f32 %v3731, 1.0
      %v3798 = vadd.f32 %v3732, 1.0
      %v3799 = vadd.f32 %v3733, 1.0
      %v3800 = vadd.f32 %v3734, 1.0
      %v3801 = vadd.f32 %v3735, 1.0
      %v3802 = vadd.f32 %v3736, 1.0
      %v3803 = vadd.f32 %v3737, 1.0
      %v3804 = vadd.f32 %v3738, 1.0
      %v3805 = vadd.f32 %v3739, 1.0
      %v3806 = vadd.f32 %v3740, 1.0
      %v3807 = vadd.f32 %v3741, 1.0
      %v3808 = vadd.f32 %v3742, 1.0
      %v3809 = vadd.f32 %v3743, 1.0
      %v3810 = vadd.f32 %v3744, 1.0
      %v3811 = vadd.f32 %v3745, 1.0
      %v3812 = vadd.f32 %v3746, 1.0
      %v3813 = vadd.f32 %v3747, 1.0
      %v3814 = vadd.f32 %v3748, 1.0
      %v3815 = vadd.f32 %v3749, 1.0
      %v3816 = vadd.f32 %v3750, 1.0
      %v3817 = vadd.f32 %v3751, 1.0
      %v3818 = vadd.f32 %v3752, 1.0
      %v3819 = vadd.f32 %v3753, 1.0
      %v3820 = vadd.f32 %v3754, 1.0
      %v3821 = vadd.f32 %v3755, 1.0
      %v3822 = vadd.f32 %v3756, 1.0
      %v3823 = vadd.f32 %v3757, 1.0
      %v3824 = vadd.f32 %v3758, 1.0
      %v3825 = vadd.f32 %v3759, 1.0
      %v3826 = vadd.f32 %v3760, 1.0
      %v3827 = vadd.f32 %v3761, 1.0
      %v3828 = vadd.f32 %v3762, 1.0
      %v3829 = vadd.f32 %v3763, 1.0
      %v3830 = vadd.f32 %v3764, 1.0
      %v3831 = vadd.f32 %v3765, 1.0
      %v3832 = vadd.f32 %v3766, 1.0
      %v3833 = vadd.f32 %v3767, 1.0
      %v3834 = vadd.f32 %v3768, 1.0
      %v3835 = vadd.f32 %v3769, 1.0
      %v3836 = vadd.f32 %v3770, 1.0
      %v3837 = vadd.f32 %v3771, 1.0
      %v3838 = vadd.f32 %v3772, 1.0
      %v3839 = vadd.f32 %v3773, 1.0
      %v3840 = vadd.f32 %v3774, 1.0
      %v3841 = vadd.f32 %v3775, 1.0
      %v3842 = vadd.f32 %v3776, 1.0
      %v3843 = vadd.f32 %v3777, 1.0
      %v3844 = vadd.f32 %v3778, 1.0
      %v3845 = vadd.f32 %v3779, 1.0
      %v3846 = vadd.f32 %v3780, 1.0
      %v3847 = vadd.f32 %v3781, 1.0
      %v3848 = vadd.f32 %v3782, 1.0
      %v3849 = vadd.f32 %v3783, 1.0
      %v3850 = vadd.f32 %v3784, 1.0
      %v3851 = vadd.f32 %v3785, 1.0
      %v3852 = vmul.f32 %v3786, 0.5
      %v3853 = vmul.f32 %v3787, 0.5
      %v3854 = vmul.f32 %v3788, 0.5
      %v3855 = vmul.f32 %v3789, 0.5
      %v3856 = vmul.f32 %v3790, 0.5
      %v3857 = vmul.f32 %v3791, 0.5
      %v3858 = vmul.f32 %v3792, 0.5
      %v3859 = vmul.f32 %v3793, 0.5
      %v3860 = vmul.f32 %v3794, 0.5
      %v3861 = vmul.f32 %v3795, 0.5
      %v3862 = vmul.f32 %v3796, 0.5
      %v3863 = vmul.f32 %v3797, 0.5
      %v3864 = vmul.f32 %v3798, 0.5
      %v3865 = vmul.f32 %v3799, 0.5
      %v3866 = vmul.f32 %v3800, 0.5
      %v3867 = vmul.f32 %v3801, 0.5
      %v3868 = vmul.f32 %v3802, 0.5
      %v3869 = vmul.f32 %v3803, 0.5
      %v3870 = vmul.f32 %v3804, 0.5
      %v3871 = vmul.f32 %v3805, 0.5
      %v3872 = vmul.f32 %v3806, 0.5
      %v3873 = vmul.f32 %v3807, 0.5
      %v3874 = vmul.f32 %v3808, 0.5
      %v3875 = vmul.f32 %v3809, 0.5
      %v3876 = vmul.f32 %v3810, 0.5
      %v3877 = vmul.f32 %v3811, 0.5
      %v3878 = vmul.f32 %v3812, 0.5
      %v3879 = vmul.f32 %v3813, 0.5
      %v3880 = vmul.f32 %v3814, 0.5
      %v3881 = vmul.f32 %v3815, 0.5
      %v3882 = vmul.f32 %v3816, 0.5
      %v3883 = vmul.f32 %v3817, 0.5
      %v3884 = vmul.f32 %v3818, 0.5
      %v3885 = vmul.f32 %v3819, 0.5
      %v3886 = vmul.f32 %v3820, 0.5
      %v3887 = vmul.f32 %v3821, 0.5
      %v3888 = vmul.f32 %v3822, 0.5
      %v3889 = vmul.f32 %v3823, 0.5
      %v3890 = vmul.f32 %v3824, 0.5
      %v3891 = vmul.f32 %v3825, 0.5
      %v3892 = vmul.f32 %v3826, 0.5
      %v3893 = vmul.f32 %v3827, 0.5
      %v3894 = vmul.f32 %v3828, 0.5
      %v3895 = vmul.f32 %v3829, 0.5
      %v3896 = vmul.f32 %v3830, 0.5
      %v3897 = vmul.f32 %v3831, 0.5
      %v3898 = vmul.f32 %v3832, 0.5
      %v3899 = vmul.f32 %v3833, 0.5
      %v3900 = vmul.f32 %v3834, 0.5
      %v3901 = vmul.f32 %v3835, 0.5
      %v3902 = vmul.f32 %v3836, 0.5
      %v3903 = vmul.f32 %v3837, 0.5
      %v3904 = vmul.f32 %v3838, 0.5
      %v3905 = vmul.f32 %v3839, 0.5
      %v3906 = vmul.f32 %v3840, 0.5
      %v3907 = vmul.f32 %v3841, 0.5
      %v3908 = vmul.f32 %v3842, 0.5
      %v3909 = vmul.f32 %v3843, 0.5
      %v3910 = vmul.f32 %v3844, 0.5
      %v3911 = vmul.f32 %v3845, 0.5
      %v3912 = vmul.f32 %v3846, 0.5
      %v3913 = vmul.f32 %v3847, 0.5
      %v3914 = vmul.f32 %v3848, 0.5
      %v3915 = vmul.f32 %v3849, 0.5
      %v3916 = vmul.f32 %v3850, 0.5
      %v3917 = vmul.f32 %v3851, 0.5
      %v3918 = vmax.f32 %v3852, 0.0
      %v3919 = vmax.f32 %v3853, 0.0
      %v3920 = vmax.f32 %v3854, 0.0
      %v3921 = vmax.f32 %v3855, 0.0
      %v3922 = vmax.f32 %v3856, 0.0
      %v3923 = vmax.f32 %v3857, 0.0
      %v3924 = vmax.f32 %v3858, 0.0
      %v3925 = vmax.f32 %v3859, 0.0
      %v3926 = vmax.f32 %v3860, 0.0
      %v3927 = vmax.f32 %v3861, 0.0
      %v3928 = vmax.f32 %v3862, 0.0
      %v3929 = vmax.f32 %v3863, 0.0
      %v3930 = vmax.f32 %v3864, 0.0
      %v3931 = vmax.f32 %v3865, 0.0
      %v3932 = vmax.f32 %v3866, 0.0
      %v3933 = vmax.f32 %v3867, 0.0
      %v3934 = vmax.f32 %v3868, 0.0
      %v3935 = vmax.f32 %v3869, 0.0
      %v3936 = vmax.f32 %v3870, 0.0
      %v3937 = vmax.f32 %v3871, 0.0
      %v3938 = vmax.f32 %v3872, 0.0
      %v3939 = vmax.f32 %v3873, 0.0
      %v3940 = vmax.f32 %v3874, 0.0
      %v3941 = vmax.f32 %v3875, 0.0
      %v3942 = vmax.f32 %v3876, 0.0
      %v3943 = vmax.f32 %v3877, 0.0
      %v3944 = vmax.f32 %v3878, 0.0
      %v3945 = vmax.f32 %v3879, 0.0
      %v3946 = vmax.f32 %v3880, 0.0
      %v3947 = vmax.f32 %v3881, 0.0
      %v3948 = vmax.f32 %v3882, 0.0
      %v3949 = vmax.f32 %v3883, 0.0
      %v3950 = vmax.f32 %v3884, 0.0
      %v3951 = vmax.f32 %v3885, 0.0
      %v3952 = vmax.f32 %v3886, 0.0
      %v3953 = vmax.f32 %v3887, 0.0
      %v3954 = vmax.f32 %v3888, 0.0
      %v3955 = vmax.f32 %v3889, 0.0
      %v3956 = vmax.f32 %v3890, 0.0
      %v3957 = vmax.f32 %v3891, 0.0
      %v3958 = vmax.f32 %v3892, 0.0
      %v3959 = vmax.f32 %v3893, 0.0
      %v3960 = vmax.f32 %v3894, 0.0
      %v3961 = vmax.f32 %v3895, 0.0
      %v3962 = vmax.f32 %v3896, 0.0
      %v3963 = vmax.f32 %v3897, 0.0
      %v3964 = vmax.f32 %v3898, 0.0
      %v3965 = vmax.f32 %v3899, 0.0
      %v3966 = vmax.f32 %v3900, 0.0
      %v3967 = vmax.f32 %v3901, 0.0
      %v3968 = vmax.f32 %v3902, 0.0
      %v3969 = vmax.f32 %v3903, 0.0
      %v3970 = vmax.f32 %v3904, 0.0
      %v3971 = vmax.f32 %v3905, 0.0
      %v3972 = vmax.f32 %v3906, 0.0
      %v3973 = vmax.f32 %v3907, 0.0
      %v3974 = vmax.f32 %v3908, 0.0
      %v3975 = vmax.f32 %v3909, 0.0
      %v3976 = vmax.f32 %v3910, 0.0
      %v3977 = vmax.f32 %v3911, 0.0
      %v3978 = vmax.f32 %v3912, 0.0
      %v3979 = vmax.f32 %v3913, 0.0
      %v3980 = vmax.f32 %v3914, 0.0
      %v3981 = vmax.f32 %v3915, 0.0
      %v3982 = vmax.f32 %v3916, 0.0
      %v3983 = vmax.f32 %v3917, 0.0
      %v3984 = vmin.f32 %v3918, 1.0
      %v3985 = vmin.f32 %v3919, 1.0
      %v3986 = vmin.f32 %v3920, 1.0
      %v3987 = vmin.f32 %v3921, 1.0
      %v3988 = vmin.f32 %v3922, 1.0
      %v3989 = vmin.f32 %v3923, 1.0
      %v3990 = vmin.f32 %v3924, 1.0
      %v3991 = vmin.f32 %v3925, 1.0
      %v3992 = vmin.f32 %v3926, 1.0
      %v3993 = vmin.f32 %v3927, 1.0
      %v3994 = vmin.f32 %v3928, 1.0
      %v3995 = vmin.f32 %v3929, 1.0
      %v3996 = vmin.f32 %v3930, 1.0
      %v3997 = vmin.f32 %v3931, 1.0
      %v3998 = vmin.f32 %v3932, 1.0
      %v3999 = vmin.f32 %v3933, 1.0
      %v4000 = vmin.f32 %v3934, 1.0
      %v4001 = vmin.f32 %v3935, 1.0
      %v4002 = vmin.f32 %v3936, 1.0
      %v4003 = vmin.f32 %v3937, 1.0
      %v4004 = vmin.f32 %v3938, 1.0
      %v4005 = vmin.f32 %v3939, 1.0
      %v4006 = vmin.f32 %v3940, 1.0
      %v4007 = vmin.f32 %v3941, 1.0
      %v4008 = vmin.f32 %v3942, 1.0
      %v4009 = vmin.f32 %v3943, 1.0
      %v4010 = vmin.f32 %v3944, 1.0
      %v4011 = vmin.f32 %v3945, 1.0
      %v4012 = vmin.f32 %v3946, 1.0
      %v4013 = vmin.f32 %v3947, 1.0
      %v4014 = vmin.f32 %v3948, 1.0
      %v4015 = vmin.f32 %v3949, 1.0
      %v4016 = vmin.f32 %v3950, 1.0
      %v4017 = vmin.f32 %v3951, 1.0
      %v4018 = vmin.f32 %v3952, 1.0
      %v4019 = vmin.f32 %v3953, 1.0
      %v4020 = vmin.f32 %v3954, 1.0
      %v4021 = vmin.f32 %v3955, 1.0
      %v4022 = vmin.f32 %v3956, 1.0
      %v4023 = vmin.f32 %v3957, 1.0
      %v4024 = vmin.f32 %v3958, 1.0
      %v4025 = vmin.f32 %v3959, 1.0
      %v4026 = vmin.f32 %v3960, 1.0
      %v4027 = vmin.f32 %v3961, 1.0
      %v4028 = vmin.f32 %v3962, 1.0
      %v4029 = vmin.f32 %v3963, 1.0
      %v4030 = vmin.f32 %v3964, 1.0
      %v4031 = vmin.f32 %v3965, 1.0
      %v4032 = vmin.f32 %v3966, 1.0
      %v4033 = vmin.f32 %v3967, 1.0
      %v4034 = vmin.f32 %v3968, 1.0
      %v4035 = vmin.f32 %v3969, 1.0
      %v4036 = vmin.f32 %v3970, 1.0
      %v4037 = vmin.f32 %v3971, 1.0
      %v4038 = vmin.f32 %v3972, 1.0
      %v4039 = vmin.f32 %v3973, 1.0
      %v4040 = vmin.f32 %v3974, 1.0
      %v4041 = vmin.f32 %v3975, 1.0
      %v4042 = vmin.f32 %v3976, 1.0
      %v4043 = vmin.f32 %v3977, 1.0
      %v4044 = vmin.f32 %v3978, 1.0
      %v4045 = vmin.f32 %v3979, 1.0
      %v4046 = vmin.f32 %v3980, 1.0
      %v4047 = vmin.f32 %v3981, 1.0
      %v4048 = vmin.f32 %v3982, 1.0
      %v4049 = vmin.f32 %v3983, 1.0
      %v4050 = vmul.f32 %v3984, 255.0
      %v4051 = vmul.f32 %v3985, 255.0
      %v4052 = vmul.f32 %v3986, 255.0
      %v4053 = vmul.f32 %v3987, 255.0
      %v4054 = vmul.f32 %v3988, 255.0
      %v4055 = vmul.f32 %v3989, 255.0
      %v4056 = vmul.f32 %v3990, 255.0
      %v4057 = vmul.f32 %v3991, 255.0
      %v4058 = vmul.f32 %v3992, 255.0
      %v4059 = vmul.f32 %v3993, 255.0
      %v4060 = vmul.f32 %v3994, 255.0
      %v4061 = vmul.f32 %v3995, 255.0
      %v4062 = vmul.f32 %v3996, 255.0
      %v4063 = vmul.f32 %v3997, 255.0
      %v4064 = vmul.f32 %v3998, 255.0
      %v4065 = vmul.f32 %v3999, 255.0
      %v4066 = vmul.f32 %v4000, 255.0
      %v4067 = vmul.f32 %v4001, 255.0
      %v4068 = vmul.f32 %v4002, 255.0
      %v4069 = vmul.f32 %v4003, 255.0
      %v4070 = vmul.f32 %v4004, 255.0
      %v4071 = vmul.f32 %v4005, 255.0
      %v4072 = vmul.f32 %v4006, 255.0
      %v4073 = vmul.f32 %v4007, 255.0
      %v4074 = vmul.f32 %v4008, 255.0
      %v4075 = vmul.f32 %v4009, 255.0
      %v4076 = vmul.f32 %v4010, 255.0
      %v4077 = vmul.f32 %v4011, 255.0
      %v4078 = vmul.f32 %v4012, 255.0
      %v4079 = vmul.f32 %v4013, 255.0
      %v4080 = vmul.f32 %v4014, 255.0
      %v4081 = vmul.f32 %v4015, 255.0
      %v4082 = vmul.f32 %v4016, 255.0
      %v4083 = vmul.f32 %v4017, 255.0
      %v4084 = vmul.f32 %v4018, 255.0
      %v4085 = vmul.f32 %v4019, 255.0
      %v4086 = vmul.f32 %v4020, 255.0
      %v4087 = vmul.f32 %v4021, 255.0
      %v4088 = vmul.f32 %v4022, 255.0
      %v4089 = vmul.f32 %v4023, 255.0
      %v4090 = vmul.f32 %v4024, 255.0
      %v4091 = vmul.f32 %v4025, 255.0
      %v4092 = vmul.f32 %v4026, 255.0
      %v4093 = vmul.f32 %v4027, 255.0
      %v4094 = vmul.f32 %v4028, 255.0
      %v4095 = vmul.f32 %v4029, 255.0
      %v4096 = vmul.f32 %v4030, 255.0
      %v4097 = vmul.f32 %v4031, 255.0
      %v4098 = vmul.f32 %v4032, 255.0
      %v4099 = vmul.f32 %v4033, 255.0
      %v4100 = vmul.f32 %v4034, 255.0
      %v4101 = vmul.f32 %v4035, 255.0
      %v4102 = vmul.f32 %v4036, 255.0
      %v4103 = vmul.f32 %v4037, 255.0
      %v4104 = vmul.f32 %v4038, 255.0
      %v4105 = vmul.f32 %v4039, 255.0
      %v4106 = vmul.f32 %v4040, 255.0
      %v4107 = vmul.f32 %v4041, 255.0
      %v4108 = vmul.f32 %v4042, 255.0
      %v4109 = vmul.f32 %v4043, 255.0
      %v4110 = vmul.f32 %v4044, 255.0
      %v4111 = vmul.f32 %v4045, 255.0
      %v4112 = vmul.f32 %v4046, 255.0
      %v4113 = vmul.f32 %v4047, 255.0
      %v4114 = vmul.f32 %v4048, 255.0
      %v4115 = vmul.f32 %v4049, 255.0
      %4116 = vst [vmem:[%s226] sm:$0xff] %v4050
      %4117 = vst [vmem:[%s226 + $0x8] sm:$0xff] %v4051
      %4118 = vst [vmem:[%s226 + $0x10] sm:$0xff] %v4052
      %4119 = vst [vmem:[%s226 + $0x18] sm:$0xff] %v4053
      %4120 = vst [vmem:[%s226 + $0x20] sm:$0xff] %v4054
      %4121 = vst [vmem:[%s226 + $0x28] sm:$0xff] %v4055
      %4122 = vst [vmem:[%s226 + $0x30] sm:$0xff] %v4056
      %4123 = vst [vmem:[%s226 + $0x38] sm:$0xff] %v4057
      %4124 = vst [vmem:[%s226 + $0x40] sm:$0xff] %v4058
      %4125 = vst [vmem:[%s226 + $0x48] sm:$0xff] %v4059
      %4126 = vst [vmem:[%s226 + $0x50] sm:$0xff] %v4060
      %4127 = vst [vmem:[%s226 + $0x58] sm:$0xff] %v4061
      %4128 = vst [vmem:[%s226 + $0x60] sm:$0xff] %v4062
      %4129 = vst [vmem:[%s226 + $0x68] sm:$0xff] %v4063
      %4130 = vst [vmem:[%s226 + $0x70] sm:$0xff] %v4064
      %4131 = vst [vmem:[%s226 + $0x78] sm:$0xff] %v4065
      %4132 = vst [vmem:[%s226 + $0x80] sm:$0xff] %v4066
      %4133 = vst [vmem:[%s226 + $0x88] sm:$0xff] %v4067
      %4134 = vst [vmem:[%s226 + $0x90] sm:$0xff] %v4068
      %4135 = vst [vmem:[%s226 + $0x98] sm:$0xff] %v4069
      %4136 = vst [vmem:[%s226 + $0xa0] sm:$0xff] %v4070
      %4137 = vst [vmem:[%s226 + $0xa8] sm:$0xff] %v4071
      %4138 = vst [vmem:[%s226 + $0xb0] sm:$0xff] %v4072
      %4139 = vst [vmem:[%s226 + $0xb8] sm:$0xff] %v4073
      %4140 = vst [vmem:[%s226 + $0xc0] sm:$0xff] %v4074
      %4141 = vst [vmem:[%s226 + $0xc8] sm:$0xff] %v4075
      %4142 = vst [vmem:[%s226 + $0xd0] sm:$0xff] %v4076
      %4143 = vst [vmem:[%s226 + $0xd8] sm:$0xff] %v4077
      %4144 = vst [vmem:[%s226 + $0xe0] sm:$0xff] %v4078
      %4145 = vst [vmem:[%s226 + $0xe8] sm:$0xff] %v4079
      %4146 = vst [vmem:[%s226 + $0xf0] sm:$0xff] %v4080
      %4147 = vst [vmem:[%s226 + $0xf8] sm:$0xff] %v4081
      %4148 = vst [vmem:[%s226 + $0x100] sm:$0xff] %v4082
      %4149 = vst [vmem:[%s226 + $0x108] sm:$0xff] %v4083
      %4150 = vst [vmem:[%s226 + $0x110] sm:$0xff] %v4084
      %4151 = vst [vmem:[%s226 + $0x118] sm:$0xff] %v4085
      %4152 = vst [vmem:[%s226 + $0x120] sm:$0xff] %v4086
      %4153 = vst [vmem:[%s226 + $0x128] sm:$0xff] %v4087
      %4154 = vst [vmem:[%s226 + $0x130] sm:$0xff] %v4088
      %4155 = vst [vmem:[%s226 + $0x138] sm:$0xff] %v4089
      %4156 = vst [vmem:[%s226 + $0x140] sm:$0xff] %v4090
      %4157 = vst [vmem:[%s226 + $0x148] sm:$0xff] %v4091
      %4158 = vst [vmem:[%s226 + $0x150] sm:$0xff] %v4092
      %4159 = vst [vmem:[%s226 + $0x158] sm:$0xff] %v4093
      %4160 = vst [vmem:[%s226 + $0x160] sm:$0xff] %v4094
      %4161 = vst [vmem:[%s226 + $0x168] sm:$0xff] %v4095
      %4162 = vst [vmem:[%s226 + $0x170] sm:$0xff] %v4096
      %4163 = vst [vmem:[%s226 + $0x178] sm:$0xff] %v4097
      %4164 = vst [vmem:[%s226 + $0x180] sm:$0xff] %v4098
      %4165 = vst [vmem:[%s226 + $0x188] sm:$0xff] %v4099
      %4166 = vst [vmem:[%s226 + $0x190] sm:$0xff] %v4100
      %4167 = vst [vmem:[%s226 + $0x198] sm:$0xff] %v4101
      %4168 = vst [vmem:[%s226 + $0x1a0] sm:$0xff] %v4102
      %4169 = vst [vmem:[%s226 + $0x1a8] sm:$0xff] %v4103
      %4170 = vst [vmem:[%s226 + $0x1b0] sm:$0xff] %v4104
      %4171 = vst [vmem:[%s226 + $0x1b8] sm:$0xff] %v4105
      %4172 = vst [vmem:[%s226 + $0x1c0] sm:$0xff] %v4106
      %4173 = vst [vmem:[%s226 + $0x1c8] sm:$0xff] %v4107
      %4174 = vst [vmem:[%s226 + $0x1d0] sm:$0xff] %v4108
      %4175 = vst [vmem:[%s226 + $0x1d8] sm:$0xff] %v4109
      %4176 = vst [vmem:[%s226 + $0x1e0] sm:$0xff] %v4110
      %4177 = vst [vmem:[%s226 + $0x1e8] sm:$0xff] %v4111
      %4178 = vst [vmem:[%s226 + $0x1f0] sm:$0xff] %v4112
      %4179 = vst [vmem:[%s226 + $0x1f8] sm:$0xff] %v4113
      %4180 = vst [vmem:[%s226 + $0x200] sm:$0xff] %v4114
      %4181 = vst [vmem:[%s226 + $0x208] sm:$0xff] %v4115
      %s4182 = smul.u32 66, %s18
      %p4183 = scmp.lt.s32.totalorder %s4182, 131
      %s4184 = scalar_select %p4183, %s4182, 131
      %p4185 = scmp.lt.s32.totalorder %s19, 0
      %s4186 = scalar_select %p4185, %s19, 0
      %s4187 = sadd.s32 %s4186, %s4184
      %s4188 = smul.addr %s4187, 8
      %s4189 = scalar_lea.vmem %s3, %s4188
      // Predicated region
      $region33: #{cnnae_forward.9} parent=31 // pred_check
        %p4190 = pneg %p124
      $region34: #{cnnae_forward.9} parent=31 // pred_check_branch
        %4192 = sbr.rel (%p4190) target = $region36
      $region35: #{cnnae_forward.9} parent=31 // pred_region
        %s4193 = smul.u32 66, %s18
      $region36: #{cnnae_forward.9} parent=31 // pred_fallthru
        _
    $region32: #{cnnae_forward.9} parent=5 // pred_fallthru
      _
    %p4194 = scmp.le.s32.totalorder 2, %s9
    // Predicated region
    $region37: #{cnnae_forward.9} parent=5 // pred_check
      %p4195 = pneg %p4194
    $region38: #{cnnae_forward.9} parent=5 // pred_check_branch
      %4197 = sbr.rel (%p4195) target = $region40
    $region39: #{cnnae_forward.9} parent=5 // pred_region
      %s4198 = ssub.s32 %s9, 2
      // Predicated region
      $region41: #{cnnae_forward.9} parent=39 // pred_check
        %p4199 = pneg %p130
      $region42: #{cnnae_forward.9} parent=39 // pred_check_branch
        %4201 = sbr.rel (%p4199) target = $region44
      $region43: #{cnnae_forward.9} parent=39 // pred_region
        %s4202 = smul.u32 66, %s20
        %p4203 = scmp.lt.s32.totalorder %s4202, 131
        %s4204 = scalar_select %p4203, %s4202, 131
        %p4205 = scmp.lt.s32.totalorder %s21, 0
        %s4206 = scalar_select %p4205, %s21, 0
        %s4207 = sadd.s32 %s4206, %s4204
        %s4208 = smul.addr %s4207, 8
        %s4209 = scalar_lea.vmem %s3, %s4208
      $region44: #{cnnae_forward.9} parent=39 // pred_fallthru
        _
    $region40: #{cnnae_forward.9} parent=5 // pred_fallthru
      _
  $region6: #{cnnae_forward.9} parent=0 // loop_footer
    %s13 = sadd.s32 1, %s9
  $region7: #{cnnae_forward.9} parent=0 // loop_footer_branch
    %8 = sbr.rel target = $region3
  $region8: #{cnnae_forward.9} parent=0 // loop_exit
    _

</llo_original>
